<compile_context>
chip_gen: v7x
topology: tpu7x:2x2x1
jax: 0.10.0
libtpu: 0.0.40
codegen_flags: <defaults>
</compile_context>

<pallas_src>
import numpy as np
import jax
import jax.numpy as jnp
from jax.experimental import pallas as pl
from jax.experimental.pallas import tpu as pltpu

LANE = 128                      # TPU lane width; channel dims are padded to this.
_VMEM_LIMIT = 64 * 1024 * 1024


def _round_up(x, m):
    return (x + m - 1) // m * m


# ----------------------------------------------------------------------------
# Pallas kernels
# ----------------------------------------------------------------------------
def _upsample_kernel(x_ref, w_ref, b_ref, o_ref):
    """ConvTranspose2d(k=2, s=2) for one batch element as 4 tap matmuls.

    x_ref: (H*W, Cin) bf16        w_ref: (2, 2, Cin, Cp) bf16
    b_ref: (1, Cp) f32            o_ref: (2, 2, H*W, Cp) bf16
    o_ref[ki, kj, h*W+w, :] = x[h, w, :] @ w[ki, kj] + bias
    """
    x = x_ref[...]
    b = b_ref[...]
    for ki in range(2):
        for kj in range(2):
            y = jax.lax.dot_general(
                x, w_ref[ki, kj],
                dimension_numbers=(((1,), (0,)), ((), ())),
                preferred_element_type=jnp.float32,
            )
            o_ref[ki, kj] = (y + b).astype(o_ref.dtype)


def _make_conv3x3_relu_kernel(n_in, w_phys, m_out):
    """Valid 3x3 conv + bias + ReLU on row-flattened images (row stride w_phys).

    The channel concat of the `n_in` inputs is fused: one accumulation stream per
    input.  Each (kh, kw) tap is a 2-D shifted-window matmul on the flat rows.
    """
    def kernel(*refs):
        x_refs = refs[:n_in]
        w_refs = refs[n_in:2 * n_in]
        b_ref = refs[2 * n_in]
        o_ref = refs[2 * n_in + 1]
        c = o_ref.shape[-1]
        acc = jnp.zeros((m_out, c), jnp.float32) + b_ref[...]          # fused bias
        for x_ref, w_ref in zip(x_refs, w_refs):
            x = x_ref[...]                                             # (M_in, Cp)
            for kh in range(3):
                for kw in range(3):
                    off = kh * w_phys + kw
                    acc = acc + jax.lax.dot_general(
                        x[off:off + m_out],                            # (M_out, Cp)
                        w_ref[kh, kw],                                 # (Cp, Cp)
                        dimension_numbers=(((1,), (0,)), ((), ())),
                        preferred_element_type=jnp.float32,
                    )
        o_ref[...] = jnp.maximum(acc, 0.0).astype(o_ref.dtype)         # fused ReLU
    return kernel


# ----------------------------------------------------------------------------
# pallas_call wrappers
# ----------------------------------------------------------------------------
def upsample_pallas(x_flat, w4, b2):
    """x_flat (B, H*W, Cin) bf16, w4 (2, 2, Cin, Cp) bf16, b2 (1, Cp) f32
       -> (B, 2, 2, H*W, Cp) bf16 (one slab per (ki, kj) tap)."""
    B, HW, Cin = x_flat.shape
    cp = w4.shape[-1]
    cost = pl.CostEstimate(
        flops=int(2 * 4 * B * HW * Cin * cp),
        transcendentals=0,
        bytes_accessed=int(x_flat.size * 2 + w4.size * 2 + b2.size * 4
                           + B * 4 * HW * cp * 2),
    )
    return pl.pallas_call(
        _upsample_kernel,
        out_shape=jax.ShapeDtypeStruct((B, 2, 2, HW, cp), jnp.bfloat16),
        grid=(B,),
        in_specs=[
            pl.BlockSpec((None, HW, Cin), lambda b: (b, 0, 0)),
            pl.BlockSpec((2, 2, Cin, cp), lambda b: (0, 0, 0, 0)),
            pl.BlockSpec((1, cp), lambda b: (0, 0)),
        ],
        out_specs=pl.BlockSpec((None, 2, 2, HW, cp), lambda b: (b, 0, 0, 0, 0)),
        compiler_params=pltpu.CompilerParams(
            dimension_semantics=("parallel",),
            vmem_limit_bytes=_VMEM_LIMIT),
        cost_estimate=cost,
    )(x_flat, w4, b2)


def conv3x3_relu_pallas(xs, ws, b, w_phys, h_valid, w_valid):
    """Valid 3x3 conv + ReLU on the fused channel-concat of `xs`.

    xs: list of (B, M_in, Cp) bf16 row-flattened images (row stride w_phys, valid
        size h_valid x w_valid); ws: matching list of (3, 3, Cp, Cp) bf16 weights;
    b: (Cp,) f32.  Returns (B, M_out, Cp) bf16 with M_out = (Ho-1)*w_phys + Wo.
    """
    n_in = len(xs)
    B, m_in, cp = xs[0].shape
    ho, wo = h_valid - 2, w_valid - 2
    m_out = (ho - 1) * w_phys + wo
    assert m_in >= m_out + 2 * w_phys + 2, (m_in, m_out, w_phys)
    b2 = b.reshape(1, cp).astype(jnp.float32)

    in_specs = (
        [pl.BlockSpec((None, m_in, cp), lambda bi: (bi, 0, 0)) for _ in xs]
        + [pl.BlockSpec((3, 3, cp, cp), lambda bi: (0, 0, 0, 0)) for _ in ws]
        + [pl.BlockSpec((1, cp), lambda bi: (0, 0))]
    )
    cost = pl.CostEstimate(
        flops=int(2 * 9 * n_in * B * m_out * cp * cp),
        transcendentals=0,
        bytes_accessed=int(sum(int(x.size) for x in xs) * 2
                           + sum(int(w.size) for w in ws) * 2
                           + cp * 4 + B * m_out * cp * 2),
    )
    # TODO(synk): for large images, add an output-row-block grid axis (with a
    # 2-row halo on the input windows) instead of whole-image-per-batch blocks.
    return pl.pallas_call(
        _make_conv3x3_relu_kernel(n_in, w_phys, m_out),
        out_shape=jax.ShapeDtypeStruct((B, m_out, cp), jnp.bfloat16),
        grid=(B,),
        in_specs=in_specs,
        out_specs=pl.BlockSpec((None, m_out, cp), lambda bi: (bi, 0, 0)),
        compiler_params=pltpu.CompilerParams(
            dimension_semantics=("parallel",),
            vmem_limit_bytes=_VMEM_LIMIT),
        cost_estimate=cost,
    )(*xs, *ws, b2)


# ----------------------------------------------------------------------------
# Weight plumbing (torch layouts -> padded HWIO bf16)
# ----------------------------------------------------------------------------
def _pad_conv_w(w_oihw, cp):
    o, i = w_oihw.shape[0], w_oihw.shape[1]
    w = jnp.transpose(w_oihw, (2, 3, 1, 0))                         # (3, 3, I, O)
    return jnp.pad(w, ((0, 0), (0, 0), (0, cp - i), (0, cp - o))).astype(jnp.bfloat16)


def _split_pad_conv1(w, out_c, cp):
    # conv1 input channels = [up(out_c) | cropped(out_c)]; split so the concat
    # can be fused as two accumulation streams.
    return _pad_conv_w(w[:, :out_c], cp), _pad_conv_w(w[:, out_c:], cp)


def decoder_forward(x_nchw, skip_nchw, params):
    """Pallas implementation of Decoder.forward (NCHW in / NCHW out)."""
    B, Cin, H, W = x_nchw.shape
    out_c = params["up_w"].shape[1]
    cp = _round_up(out_c, LANE)
    w_phys = 2 * W                                                   # flat row stride

    # NOTE: boundary NCHW<->NHWC transposes kept only to preserve the module's
    # interface; callers already holding NHWC should drop them.
    x_flat = jnp.transpose(x_nchw, (0, 2, 3, 1)).reshape(B, H * W, Cin)
    x_flat = x_flat.astype(jnp.bfloat16)

    # 1) ConvTranspose2d(k=2, s=2): 4 tap matmuls, then a small XLA interleave
    #    transpose to the row-flattened NHWC slab (B, 2H*2W, cp).
    w_up = jnp.transpose(params["up_w"], (2, 3, 0, 1))               # (2, 2, Cin, out_c)
    w_up = jnp.pad(w_up, ((0, 0), (0, 0), (0, 0), (0, cp - out_c))).astype(jnp.bfloat16)
    b_up = jnp.pad(params["up_b"], (0, cp - out_c)).reshape(1, cp).astype(jnp.float32)
    up4 = upsample_pallas(x_flat, w_up, b_up)                        # (B, 2, 2, HW, cp)
    up_flat = (up4.reshape(B, 2, 2, H, W, cp)
                  .transpose(0, 3, 1, 4, 2, 5)                      # (B, H, 2, W, 2, cp)
                  .reshape(B, 4 * H * W, cp))                       # row = (2h+ki)*2W + 2w+kj

    # 2) center-crop skip + channel pad + flatten (cheap XLA glue); the concat
    #    itself is fused into the first conv kernel below.
    Hs, Ws = skip_nchw.shape[2], skip_nchw.shape[3]
    hrem = (Hs - 2 * H) // 2
    wrem = (Ws - 2 * W) // 2
    sk = skip_nchw[:, :, hrem:hrem + 2 * H, wrem:wrem + 2 * W]
    sk = jnp.transpose(sk, (0, 2, 3, 1))
    sk = jnp.pad(sk, ((0, 0), (0, 0), (0, 0), (0, cp - out_c))).astype(jnp.bfloat16)
    sk_flat = sk.reshape(B, 4 * H * W, cp)

    # 3) conv1: ReLU(conv3x3([up | cropped])) with fused concat + bias + ReLU.
    w1a, w1b = _split_pad_conv1(params["c1_w"], out_c, cp)
    b1 = jnp.pad(params["c1_b"], (0, cp - out_c))
    h1 = conv3x3_relu_pallas([up_flat, sk_flat], [w1a, w1b], b1,
                             w_phys, 2 * H, 2 * W)                   # (B, M1, cp)

    # 4) conv2: ReLU(conv3x3(h1)); garbage columns from conv1 are never read.
    w2 = _pad_conv_w(params["c2_w"], cp)
    b2 = jnp.pad(params["c2_b"], (0, cp - out_c))
    h2 = conv3x3_relu_pallas([h1], [w2], b2,
                             w_phys, 2 * H - 2, 2 * W - 2)           # (B, M2, cp)

    # 5) unflatten + crop garbage columns / padded channels, back to NCHW.
    h_out, w_out = 2 * H - 4, 2 * W - 4
    m2 = h2.shape[1]
    h2p = jnp.pad(h2, ((0, 0), (0, h_out * w_phys - m2), (0, 0)))
    out = h2p.reshape(B, h_out, w_phys, cp)[:, :, :w_out, :out_c].astype(jnp.float32)
    return jnp.transpose(out, (0, 3, 1, 2))                          # NCHW


# ----------------------------------------------------------------------------
# Numerics-matched pure-JAX reference (f32 math on bf16-quantized weights/acts)
# ----------------------------------------------------------------------------
def decoder_reference(x, skip, p):
    bf = lambda t: t.astype(jnp.bfloat16).astype(jnp.float32)
    x = bf(x)
    skip = bf(skip)
    up_w, c1_w, c2_w = bf(p["up_w"]), bf(p["c1_w"]), bf(p["c2_w"])

    B, Cin, H, W = x.shape
    Cout = p["up_w"].shape[1]
    # ConvTranspose2d(k=2,s=2): out[b,o,2h+k,2w+l] = sum_c x[b,c,h,w]*W[c,o,k,l] + b[o]
    y = jnp.einsum("bchw,cokl->bohkwl", x, up_w).reshape(B, Cout, 2 * H, 2 * W)
    y = bf(y + p["up_b"][None, :, None, None])           # kernel stores `up` as bf16

    Hs, Ws = skip.shape[-2:]
    hrem = (Hs - 2 * H) // 2
    wrem = (Ws - 2 * W) // 2
    cropped = skip[:, :, hrem:hrem + 2 * H, wrem:wrem + 2 * W]
    cat = jnp.concatenate([y, cropped], axis=1)

    dn = ("NCHW", "OIHW", "NCHW")
    h1 = jax.lax.conv_general_dilated(cat, c1_w, (1, 1), "VALID",
                                      dimension_numbers=dn) + p["c1_b"][None, :, None, None]
    h1 = bf(jnp.maximum(h1, 0.0))                         # kernel stores h1 as bf16
    h2 = jax.lax.conv_general_dilated(h1, c2_w, (1, 1), "VALID",
                                      dimension_numbers=dn) + p["c2_b"][None, :, None, None]
    return jnp.maximum(h2, 0.0)


# ----------------------------------------------------------------------------
# Deterministic parameter init (shapes follow the PyTorch module __init__)
# ----------------------------------------------------------------------------
def init_params(key, in_c, out_c):
    ks = jax.random.split(key, 6)

    def u(k, shape, fan_in):
        bound = 1.0 / np.sqrt(fan_in)
        return jax.random.uniform(k, shape, jnp.float32, -bound, bound)

    return {
        "up_w": u(ks[0], (in_c, out_c, 2, 2), in_c * 4),
        "up_b": u(ks[1], (out_c,), in_c * 4),
        "c1_w": u(ks[2], (out_c, 2 * out_c, 3, 3), 2 * out_c * 9),
        "c1_b": u(ks[3], (out_c,), 2 * out_c * 9),
        "c2_w": u(ks[4], (out_c, out_c, 3, 3), out_c * 9),
        "c2_b": u(ks[5], (out_c,), out_c * 9),
    }


if __name__ == "__main__":
    key = jax.random.PRNGKey(0)
    k_x, k_skip, k_p = jax.random.split(key, 3)

    B, in_c, out_c = 2, 8, 4
    H = W = 8                    # x spatial -> upsampled to 16x16
    Hs = Ws = 20                 # skip spatial, center-cropped to 16x16

    x = jax.random.normal(k_x, (B, in_c, H, W), jnp.float32)             # NCHW
    skip = jax.random.normal(k_skip, (B, out_c, Hs, Ws), jnp.float32)    # NCHW
    params = init_params(k_p, in_c, out_c)

    fwd = jax.jit(decoder_forward)
    out = jax.block_until_ready(fwd(x, skip, params))

    ref = jax.block_until_ready(decoder_reference(x, skip, params))
    assert out.shape == (B, out_c, 2 * H - 4, 2 * W - 4), out.shape
    np.testing.assert_allclose(np.asarray(out), np.asarray(ref), rtol=2e-2, atol=2e-2)

    print("KERNEL_OK")
</pallas_src>

<mosaic_0001>
module attributes {stable_mosaic.version = 11 : i64} {
  func.func @_upsample_kernel(%arg0: i32, %arg1: memref<1x64x8xbf16, #tpu.memory_space<vmem>>, %arg2: memref<2x2x8x128xbf16, #tpu.memory_space<vmem>>, %arg3: memref<1x128xf32, #tpu.memory_space<vmem>>, %arg4: memref<1x2x2x64x128xbf16, #tpu.memory_space<vmem>>) attributes {dimension_semantics = [#tpu.dimension_semantics<parallel>], iteration_bounds = array<i64: 2>, scalar_prefetch = 0 : i64, scratch_operands = 0 : i64, tpu.core_type = #tpu.core_type<tc>, window_params = [{transform_indices = @transform_0, window_bounds = array<i64: 1, 64, 8>}, {pipeline_mode = #tpu.pipeline_mode<synchronous>, transform_indices = @transform_1, window_bounds = array<i64: 2, 2, 8, 128>}, {pipeline_mode = #tpu.pipeline_mode<synchronous>, transform_indices = @transform_2, window_bounds = array<i64: 1, 128>}, {transform_indices = @transform_3, window_bounds = array<i64: 1, 2, 2, 64, 128>}]} {
    %c0 = arith.constant 0 : index
    %c0_0 = arith.constant 0 : index
    %c0_1 = arith.constant 0 : index
    %0 = vector.load %arg1[%c0, %c0_0, %c0_1] : memref<1x64x8xbf16, #tpu.memory_space<vmem>>, vector<1x64x8xbf16>
    %1 = vector.shape_cast %0 : vector<1x64x8xbf16> to vector<64x8xbf16>
    %c0_2 = arith.constant 0 : index
    %c0_3 = arith.constant 0 : index
    %2 = vector.load %arg3[%c0_2, %c0_3] : memref<1x128xf32, #tpu.memory_space<vmem>>, vector<1x128xf32>
    %c0_4 = arith.constant 0 : index
    %c0_5 = arith.constant 0 : index
    %c0_6 = arith.constant 0 : index
    %c0_7 = arith.constant 0 : index
    %3 = vector.load %arg2[%c0_4, %c0_5, %c0_6, %c0_7] : memref<2x2x8x128xbf16, #tpu.memory_space<vmem>>, vector<1x1x8x128xbf16>
    %4 = vector.shape_cast %3 : vector<1x1x8x128xbf16> to vector<8x128xbf16>
    %cst = arith.constant dense<0.000000e+00> : vector<64x128xf32>
    %5 = tpu.matmul %1, %4, %cst {dimension_numbers = #tpu.dot_dimension_numbers<[1], [0], [0], [1], [0, 0, 1, 1], [], []>} : vector<64x8xbf16>, vector<8x128xbf16>, vector<64x128xf32> -> vector<64x128xf32>
    %6 = vector.broadcast %2 : vector<1x128xf32> to vector<64x128xf32>
    %7 = arith.addf %5, %6 : vector<64x128xf32>
    %8 = arith.truncf %7 : vector<64x128xf32> to vector<64x128xbf16>
    %c0_8 = arith.constant 0 : index
    %c0_9 = arith.constant 0 : index
    %c0_10 = arith.constant 0 : index
    %c0_11 = arith.constant 0 : index
    %c0_12 = arith.constant 0 : index
    %9 = vector.load %arg4[%c0_8, %c0_9, %c0_10, %c0_11, %c0_12] : memref<1x2x2x64x128xbf16, #tpu.memory_space<vmem>>, vector<1x1x1x64x128xbf16>
    %10 = vector.shape_cast %9 : vector<1x1x1x64x128xbf16> to vector<64x128xbf16>
    %11 = vector.shape_cast %8 : vector<64x128xbf16> to vector<1x1x1x64x128xbf16>
    tpu.vector_store %arg4[%c0_8, %c0_9, %c0_10, %c0_11, %c0_12], %11 {strides = array<i32>} : memref<1x2x2x64x128xbf16, #tpu.memory_space<vmem>>, vector<1x1x1x64x128xbf16>,
    %c0_13 = arith.constant 0 : index
    %c1 = arith.constant 1 : index
    %c0_14 = arith.constant 0 : index
    %c0_15 = arith.constant 0 : index
    %12 = vector.load %arg2[%c0_13, %c1, %c0_14, %c0_15] : memref<2x2x8x128xbf16, #tpu.memory_space<vmem>>, vector<1x1x8x128xbf16>
    %13 = vector.shape_cast %12 : vector<1x1x8x128xbf16> to vector<8x128xbf16>
    %cst_16 = arith.constant dense<0.000000e+00> : vector<64x128xf32>
    %14 = tpu.matmul %1, %13, %cst_16 {dimension_numbers = #tpu.dot_dimension_numbers<[1], [0], [0], [1], [0, 0, 1, 1], [], []>} : vector<64x8xbf16>, vector<8x128xbf16>, vector<64x128xf32> -> vector<64x128xf32>
    %15 = vector.broadcast %2 : vector<1x128xf32> to vector<64x128xf32>
    %16 = arith.addf %14, %15 : vector<64x128xf32>
    %17 = arith.truncf %16 : vector<64x128xf32> to vector<64x128xbf16>
    %c0_17 = arith.constant 0 : index
    %c0_18 = arith.constant 0 : index
    %c1_19 = arith.constant 1 : index
    %c0_20 = arith.constant 0 : index
    %c0_21 = arith.constant 0 : index
    %18 = vector.load %arg4[%c0_17, %c0_18, %c1_19, %c0_20, %c0_21] : memref<1x2x2x64x128xbf16, #tpu.memory_space<vmem>>, vector<1x1x1x64x128xbf16>
    %19 = vector.shape_cast %18 : vector<1x1x1x64x128xbf16> to vector<64x128xbf16>
    %20 = vector.shape_cast %17 : vector<64x128xbf16> to vector<1x1x1x64x128xbf16>
    tpu.vector_store %arg4[%c0_17, %c0_18, %c1_19, %c0_20, %c0_21], %20 {strides = array<i32>} : memref<1x2x2x64x128xbf16, #tpu.memory_space<vmem>>, vector<1x1x1x64x128xbf16>,
    %c1_22 = arith.constant 1 : index
    %c0_23 = arith.constant 0 : index
    %c0_24 = arith.constant 0 : index
    %c0_25 = arith.constant 0 : index
    %21 = vector.load %arg2[%c1_22, %c0_23, %c0_24, %c0_25] : memref<2x2x8x128xbf16, #tpu.memory_space<vmem>>, vector<1x1x8x128xbf16>
    %22 = vector.shape_cast %21 : vector<1x1x8x128xbf16> to vector<8x128xbf16>
    %cst_26 = arith.constant dense<0.000000e+00> : vector<64x128xf32>
    %23 = tpu.matmul %1, %22, %cst_26 {dimension_numbers = #tpu.dot_dimension_numbers<[1], [0], [0], [1], [0, 0, 1, 1], [], []>} : vector<64x8xbf16>, vector<8x128xbf16>, vector<64x128xf32> -> vector<64x128xf32>
    %24 = vector.broadcast %2 : vector<1x128xf32> to vector<64x128xf32>
    %25 = arith.addf %23, %24 : vector<64x128xf32>
    %26 = arith.truncf %25 : vector<64x128xf32> to vector<64x128xbf16>
    %c0_27 = arith.constant 0 : index
    %c1_28 = arith.constant 1 : index
    %c0_29 = arith.constant 0 : index
    %c0_30 = arith.constant 0 : index
    %c0_31 = arith.constant 0 : index
    %27 = vector.load %arg4[%c0_27, %c1_28, %c0_29, %c0_30, %c0_31] : memref<1x2x2x64x128xbf16, #tpu.memory_space<vmem>>, vector<1x1x1x64x128xbf16>
    %28 = vector.shape_cast %27 : vector<1x1x1x64x128xbf16> to vector<64x128xbf16>
    %29 = vector.shape_cast %26 : vector<64x128xbf16> to vector<1x1x1x64x128xbf16>
    tpu.vector_store %arg4[%c0_27, %c1_28, %c0_29, %c0_30, %c0_31], %29 {strides = array<i32>} : memref<1x2x2x64x128xbf16, #tpu.memory_space<vmem>>, vector<1x1x1x64x128xbf16>,
    %c1_32 = arith.constant 1 : index
    %c1_33 = arith.constant 1 : index
    %c0_34 = arith.constant 0 : index
    %c0_35 = arith.constant 0 : index
    %30 = vector.load %arg2[%c1_32, %c1_33, %c0_34, %c0_35] : memref<2x2x8x128xbf16, #tpu.memory_space<vmem>>, vector<1x1x8x128xbf16>
    %31 = vector.shape_cast %30 : vector<1x1x8x128xbf16> to vector<8x128xbf16>
    %cst_36 = arith.constant dense<0.000000e+00> : vector<64x128xf32>
    %32 = tpu.matmul %1, %31, %cst_36 {dimension_numbers = #tpu.dot_dimension_numbers<[1], [0], [0], [1], [0, 0, 1, 1], [], []>} : vector<64x8xbf16>, vector<8x128xbf16>, vector<64x128xf32> -> vector<64x128xf32>
    %33 = vector.broadcast %2 : vector<1x128xf32> to vector<64x128xf32>
    %34 = arith.addf %32, %33 : vector<64x128xf32>
    %35 = arith.truncf %34 : vector<64x128xf32> to vector<64x128xbf16>
    %c0_37 = arith.constant 0 : index
    %c1_38 = arith.constant 1 : index
    %c1_39 = arith.constant 1 : index
    %c0_40 = arith.constant 0 : index
    %c0_41 = arith.constant 0 : index
    %36 = vector.load %arg4[%c0_37, %c1_38, %c1_39, %c0_40, %c0_41] : memref<1x2x2x64x128xbf16, #tpu.memory_space<vmem>>, vector<1x1x1x64x128xbf16>
    %37 = vector.shape_cast %36 : vector<1x1x1x64x128xbf16> to vector<64x128xbf16>
    %38 = vector.shape_cast %35 : vector<64x128xbf16> to vector<1x1x1x64x128xbf16>
    tpu.vector_store %arg4[%c0_37, %c1_38, %c1_39, %c0_40, %c0_41], %38 {strides = array<i32>} : memref<1x2x2x64x128xbf16, #tpu.memory_space<vmem>>, vector<1x1x1x64x128xbf16>,
    return
  }
  func.func @transform_0(%arg0: i32) -> (i32, i32, i32) {
    %c0_i32 = arith.constant 0 : i32
    %c0_i32_0 = arith.constant 0 : i32
    %c0_i32_1 = arith.constant 0 : i32
    return %arg0, %c0_i32, %c0_i32_0 : i32, i32, i32
  }
  func.func @transform_1(%arg0: i32) -> (i32, i32, i32, i32) {
    %c0_i32 = arith.constant 0 : i32
    %c0_i32_0 = arith.constant 0 : i32
    %c0_i32_1 = arith.constant 0 : i32
    %c0_i32_2 = arith.constant 0 : i32
    %c0_i32_3 = arith.constant 0 : i32
    return %c0_i32, %c0_i32_0, %c0_i32_1, %c0_i32_2 : i32, i32, i32, i32
  }
  func.func @transform_2(%arg0: i32) -> (i32, i32) {
    %c0_i32 = arith.constant 0 : i32
    %c0_i32_0 = arith.constant 0 : i32
    %c0_i32_1 = arith.constant 0 : i32
    return %c0_i32, %c0_i32_0 : i32, i32
  }
  func.func @transform_3(%arg0: i32) -> (i32, i32, i32, i32, i32) {
    %c0_i32 = arith.constant 0 : i32
    %c0_i32_0 = arith.constant 0 : i32
    %c0_i32_1 = arith.constant 0 : i32
    %c0_i32_2 = arith.constant 0 : i32
    %c0_i32_3 = arith.constant 0 : i32
    return %arg0, %c0_i32, %c0_i32_0, %c0_i32_1, %c0_i32_2 : i32, i32, i32, i32, i32
  }
}

module attributes {stable_mosaic.version = 11 : i64} {
  func.func @kernel(%arg0: i32, %arg1: memref<1x256x128xbf16, #tpu.memory_space<vmem>>, %arg2: memref<1x256x128xbf16, #tpu.memory_space<vmem>>, %arg3: memref<3x3x128x128xbf16, #tpu.memory_space<vmem>>, %arg4: memref<3x3x128x128xbf16, #tpu.memory_space<vmem>>, %arg5: memref<1x128xf32, #tpu.memory_space<vmem>>, %arg6: memref<1x222x128xbf16, #tpu.memory_space<vmem>>) attributes {dimension_semantics = [#tpu.dimension_semantics<parallel>], iteration_bounds = array<i64: 2>, scalar_prefetch = 0 : i64, scratch_operands = 0 : i64, tpu.core_type = #tpu.core_type<tc>, window_params = [{transform_indices = @transform_0, window_bounds = array<i64: 1, 256, 128>}, {transform_indices = @transform_1, window_bounds = array<i64: 1, 256, 128>}, {pipeline_mode = #tpu.pipeline_mode<synchronous>, transform_indices = @transform_2, window_bounds = array<i64: 3, 3, 128, 128>}, {pipeline_mode = #tpu.pipeline_mode<synchronous>, transform_indices = @transform_3, window_bounds = array<i64: 3, 3, 128, 128>}, {pipeline_mode = #tpu.pipeline_mode<synchronous>, transform_indices = @transform_4, window_bounds = array<i64: 1, 128>}, {transform_indices = @transform_5, window_bounds = array<i64: 1, 222, 128>}]} {
    %cst = arith.constant 0.000000e+00 : f32
    %0 = vector.broadcast %cst : f32 to vector<222x128xf32>
    %c0 = arith.constant 0 : index
    %c0_0 = arith.constant 0 : index
    %1 = vector.load %arg5[%c0, %c0_0] : memref<1x128xf32, #tpu.memory_space<vmem>>, vector<1x128xf32>
    %2 = vector.broadcast %1 : vector<1x128xf32> to vector<222x128xf32>
    %3 = arith.addf %0, %2 : vector<222x128xf32>
    %c0_1 = arith.constant 0 : index
    %c0_2 = arith.constant 0 : index
    %c0_3 = arith.constant 0 : index
    %4 = vector.load %arg1[%c0_1, %c0_2, %c0_3] : memref<1x256x128xbf16, #tpu.memory_space<vmem>>, vector<1x256x128xbf16>
    %5 = vector.shape_cast %4 : vector<1x256x128xbf16> to vector<256x128xbf16>
    %6 = vector.extract_strided_slice %5 {offsets = [0, 0], sizes = [222, 128], strides = [1, 1]} : vector<256x128xbf16> to vector<222x128xbf16>
    %c0_4 = arith.constant 0 : index
    %c0_5 = arith.constant 0 : index
    %c0_6 = arith.constant 0 : index
    %c0_7 = arith.constant 0 : index
    %7 = vector.load %arg3[%c0_4, %c0_5, %c0_6, %c0_7] : memref<3x3x128x128xbf16, #tpu.memory_space<vmem>>, vector<1x1x128x128xbf16>
    %8 = vector.shape_cast %7 : vector<1x1x128x128xbf16> to vector<128x128xbf16>
    %cst_8 = arith.constant dense<0.000000e+00> : vector<222x128xf32>
    %9 = tpu.matmul %6, %8, %cst_8 {dimension_numbers = #tpu.dot_dimension_numbers<[1], [0], [0], [1], [0, 0, 1, 1], [], []>} : vector<222x128xbf16>, vector<128x128xbf16>, vector<222x128xf32> -> vector<222x128xf32>
    %10 = arith.addf %3, %9 : vector<222x128xf32>
    %11 = vector.extract_strided_slice %5 {offsets = [1, 0], sizes = [222, 128], strides = [1, 1]} : vector<256x128xbf16> to vector<222x128xbf16>
    %c0_9 = arith.constant 0 : index
    %c1 = arith.constant 1 : index
    %c0_10 = arith.constant 0 : index
    %c0_11 = arith.constant 0 : index
    %12 = vector.load %arg3[%c0_9, %c1, %c0_10, %c0_11] : memref<3x3x128x128xbf16, #tpu.memory_space<vmem>>, vector<1x1x128x128xbf16>
    %13 = vector.shape_cast %12 : vector<1x1x128x128xbf16> to vector<128x128xbf16>
    %cst_12 = arith.constant dense<0.000000e+00> : vector<222x128xf32>
    %14 = tpu.matmul %11, %13, %cst_12 {dimension_numbers = #tpu.dot_dimension_numbers<[1], [0], [0], [1], [0, 0, 1, 1], [], []>} : vector<222x128xbf16>, vector<128x128xbf16>, vector<222x128xf32> -> vector<222x128xf32>
    %15 = arith.addf %10, %14 : vector<222x128xf32>
    %16 = vector.extract_strided_slice %5 {offsets = [2, 0], sizes = [222, 128], strides = [1, 1]} : vector<256x128xbf16> to vector<222x128xbf16>
    %c0_13 = arith.constant 0 : index
    %c2 = arith.constant 2 : index
    %c0_14 = arith.constant 0 : index
    %c0_15 = arith.constant 0 : index
    %17 = vector.load %arg3[%c0_13, %c2, %c0_14, %c0_15] : memref<3x3x128x128xbf16, #tpu.memory_space<vmem>>, vector<1x1x128x128xbf16>
    %18 = vector.shape_cast %17 : vector<1x1x128x128xbf16> to vector<128x128xbf16>
    %cst_16 = arith.constant dense<0.000000e+00> : vector<222x128xf32>
    %19 = tpu.matmul %16, %18, %cst_16 {dimension_numbers = #tpu.dot_dimension_numbers<[1], [0], [0], [1], [0, 0, 1, 1], [], []>} : vector<222x128xbf16>, vector<128x128xbf16>, vector<222x128xf32> -> vector<222x128xf32>
    %20 = arith.addf %15, %19 : vector<222x128xf32>
    %21 = vector.extract_strided_slice %5 {offsets = [16, 0], sizes = [222, 128], strides = [1, 1]} : vector<256x128xbf16> to vector<222x128xbf16>
    %c1_17 = arith.constant 1 : index
    %c0_18 = arith.constant 0 : index
    %c0_19 = arith.constant 0 : index
    %c0_20 = arith.constant 0 : index
    %22 = vector.load %arg3[%c1_17, %c0_18, %c0_19, %c0_20] : memref<3x3x128x128xbf16, #tpu.memory_space<vmem>>, vector<1x1x128x128xbf16>
    %23 = vector.shape_cast %22 : vector<1x1x128x128xbf16> to vector<128x128xbf16>
    %cst_21 = arith.constant dense<0.000000e+00> : vector<222x128xf32>
    %24 = tpu.matmul %21, %23, %cst_21 {dimension_numbers = #tpu.dot_dimension_numbers<[1], [0], [0], [1], [0, 0, 1, 1], [], []>} : vector<222x128xbf16>, vector<128x128xbf16>, vector<222x128xf32> -> vector<222x128xf32>
    %25 = arith.addf %20, %24 : vector<222x128xf32>
    %26 = vector.extract_strided_slice %5 {offsets = [17, 0], sizes = [222, 128], strides = [1, 1]} : vector<256x128xbf16> to vector<222x128xbf16>
    %c1_22 = arith.constant 1 : index
    %c1_23 = arith.constant 1 : index
    %c0_24 = arith.constant 0 : index
    %c0_25 = arith.constant 0 : index
    %27 = vector.load %arg3[%c1_22, %c1_23, %c0_24, %c0_25] : memref<3x3x128x128xbf16, #tpu.memory_space<vmem>>, vector<1x1x128x128xbf16>
    %28 = vector.shape_cast %27 : vector<1x1x128x128xbf16> to vector<128x128xbf16>
    %cst_26 = arith.constant dense<0.000000e+00> : vector<222x128xf32>
    %29 = tpu.matmul %26, %28, %cst_26 {dimension_numbers = #tpu.dot_dimension_numbers<[1], [0], [0], [1], [0, 0, 1, 1], [], []>} : vector<222x128xbf16>, vector<128x128xbf16>, vector<222x128xf32> -> vector<222x128xf32>
    %30 = arith.addf %25, %29 : vector<222x128xf32>
    %31 = vector.extract_strided_slice %5 {offsets = [18, 0], sizes = [222, 128], strides = [1, 1]} : vector<256x128xbf16> to vector<222x128xbf16>
    %c1_27 = arith.constant 1 : index
    %c2_28 = arith.constant 2 : index
    %c0_29 = arith.constant 0 : index
    %c0_30 = arith.constant 0 : index
    %32 = vector.load %arg3[%c1_27, %c2_28, %c0_29, %c0_30] : memref<3x3x128x128xbf16, #tpu.memory_space<vmem>>, vector<1x1x128x128xbf16>
    %33 = vector.shape_cast %32 : vector<1x1x128x128xbf16> to vector<128x128xbf16>
    %cst_31 = arith.constant dense<0.000000e+00> : vector<222x128xf32>
    %34 = tpu.matmul %31, %33, %cst_31 {dimension_numbers = #tpu.dot_dimension_numbers<[1], [0], [0], [1], [0, 0, 1, 1], [], []>} : vector<222x128xbf16>, vector<128x128xbf16>, vector<222x128xf32> -> vector<222x128xf32>
    %35 = arith.addf %30, %34 : vector<222x128xf32>
    %36 = vector.extract_strided_slice %5 {offsets = [32, 0], sizes = [222, 128], strides = [1, 1]} : vector<256x128xbf16> to vector<222x128xbf16>
    %c2_32 = arith.constant 2 : index
    %c0_33 = arith.constant 0 : index
    %c0_34 = arith.constant 0 : index
    %c0_35 = arith.constant 0 : index
    %37 = vector.load %arg3[%c2_32, %c0_33, %c0_34, %c0_35] : memref<3x3x128x128xbf16, #tpu.memory_space<vmem>>, vector<1x1x128x128xbf16>
    %38 = vector.shape_cast %37 : vector<1x1x128x128xbf16> to vector<128x128xbf16>
    %cst_36 = arith.constant dense<0.000000e+00> : vector<222x128xf32>
    %39 = tpu.matmul %36, %38, %cst_36 {dimension_numbers = #tpu.dot_dimension_numbers<[1], [0], [0], [1], [0, 0, 1, 1], [], []>} : vector<222x128xbf16>, vector<128x128xbf16>, vector<222x128xf32> -> vector<222x128xf32>
    %40 = arith.addf %35, %39 : vector<222x128xf32>
    %41 = vector.extract_strided_slice %5 {offsets = [33, 0], sizes = [222, 128], strides = [1, 1]} : vector<256x128xbf16> to vector<222x128xbf16>
    %c2_37 = arith.constant 2 : index
    %c1_38 = arith.constant 1 : index
    %c0_39 = arith.constant 0 : index
    %c0_40 = arith.constant 0 : index
    %42 = vector.load %arg3[%c2_37, %c1_38, %c0_39, %c0_40] : memref<3x3x128x128xbf16, #tpu.memory_space<vmem>>, vector<1x1x128x128xbf16>
    %43 = vector.shape_cast %42 : vector<1x1x128x128xbf16> to vector<128x128xbf16>
    %cst_41 = arith.constant dense<0.000000e+00> : vector<222x128xf32>
    %44 = tpu.matmul %41, %43, %cst_41 {dimension_numbers = #tpu.dot_dimension_numbers<[1], [0], [0], [1], [0, 0, 1, 1], [], []>} : vector<222x128xbf16>, vector<128x128xbf16>, vector<222x128xf32> -> vector<222x128xf32>
    %45 = arith.addf %40, %44 : vector<222x128xf32>
    %46 = vector.extract_strided_slice %5 {offsets = [34, 0], sizes = [222, 128], strides = [1, 1]} : vector<256x128xbf16> to vector<222x128xbf16>
    %c2_42 = arith.constant 2 : index
    %c2_43 = arith.constant 2 : index
    %c0_44 = arith.constant 0 : index
    %c0_45 = arith.constant 0 : index
    %47 = vector.load %arg3[%c2_42, %c2_43, %c0_44, %c0_45] : memref<3x3x128x128xbf16, #tpu.memory_space<vmem>>, vector<1x1x128x128xbf16>
    %48 = vector.shape_cast %47 : vector<1x1x128x128xbf16> to vector<128x128xbf16>
    %cst_46 = arith.constant dense<0.000000e+00> : vector<222x128xf32>
    %49 = tpu.matmul %46, %48, %cst_46 {dimension_numbers = #tpu.dot_dimension_numbers<[1], [0], [0], [1], [0, 0, 1, 1], [], []>} : vector<222x128xbf16>, vector<128x128xbf16>, vector<222x128xf32> -> vector<222x128xf32>
    %50 = arith.addf %45, %49 : vector<222x128xf32>
    %c0_47 = arith.constant 0 : index
    %c0_48 = arith.constant 0 : index
    %c0_49 = arith.constant 0 : index
    %51 = vector.load %arg2[%c0_47, %c0_48, %c0_49] : memref<1x256x128xbf16, #tpu.memory_space<vmem>>, vector<1x256x128xbf16>
    %52 = vector.shape_cast %51 : vector<1x256x128xbf16> to vector<256x128xbf16>
    %53 = vector.extract_strided_slice %52 {offsets = [0, 0], sizes = [222, 128], strides = [1, 1]} : vector<256x128xbf16> to vector<222x128xbf16>
    %c0_50 = arith.constant 0 : index
    %c0_51 = arith.constant 0 : index
    %c0_52 = arith.constant 0 : index
    %c0_53 = arith.constant 0 : index
    %54 = vector.load %arg4[%c0_50, %c0_51, %c0_52, %c0_53] : memref<3x3x128x128xbf16, #tpu.memory_space<vmem>>, vector<1x1x128x128xbf16>
    %55 = vector.shape_cast %54 : vector<1x1x128x128xbf16> to vector<128x128xbf16>
    %cst_54 = arith.constant dense<0.000000e+00> : vector<222x128xf32>
    %56 = tpu.matmul %53, %55, %cst_54 {dimension_numbers = #tpu.dot_dimension_numbers<[1], [0], [0], [1], [0, 0, 1, 1], [], []>} : vector<222x128xbf16>, vector<128x128xbf16>, vector<222x128xf32> -> vector<222x128xf32>
    %57 = arith.addf %50, %56 : vector<222x128xf32>
    %58 = vector.extract_strided_slice %52 {offsets = [1, 0], sizes = [222, 128], strides = [1, 1]} : vector<256x128xbf16> to vector<222x128xbf16>
    %c0_55 = arith.constant 0 : index
    %c1_56 = arith.constant 1 : index
    %c0_57 = arith.constant 0 : index
    %c0_58 = arith.constant 0 : index
    %59 = vector.load %arg4[%c0_55, %c1_56, %c0_57, %c0_58] : memref<3x3x128x128xbf16, #tpu.memory_space<vmem>>, vector<1x1x128x128xbf16>
    %60 = vector.shape_cast %59 : vector<1x1x128x128xbf16> to vector<128x128xbf16>
    %cst_59 = arith.constant dense<0.000000e+00> : vector<222x128xf32>
    %61 = tpu.matmul %58, %60, %cst_59 {dimension_numbers = #tpu.dot_dimension_numbers<[1], [0], [0], [1], [0, 0, 1, 1], [], []>} : vector<222x128xbf16>, vector<128x128xbf16>, vector<222x128xf32> -> vector<222x128xf32>
    %62 = arith.addf %57, %61 : vector<222x128xf32>
    %63 = vector.extract_strided_slice %52 {offsets = [2, 0], sizes = [222, 128], strides = [1, 1]} : vector<256x128xbf16> to vector<222x128xbf16>
    %c0_60 = arith.constant 0 : index
    %c2_61 = arith.constant 2 : index
    %c0_62 = arith.constant 0 : index
    %c0_63 = arith.constant 0 : index
    %64 = vector.load %arg4[%c0_60, %c2_61, %c0_62, %c0_63] : memref<3x3x128x128xbf16, #tpu.memory_space<vmem>>, vector<1x1x128x128xbf16>
    %65 = vector.shape_cast %64 : vector<1x1x128x128xbf16> to vector<128x128xbf16>
    %cst_64 = arith.constant dense<0.000000e+00> : vector<222x128xf32>
    %66 = tpu.matmul %63, %65, %cst_64 {dimension_numbers = #tpu.dot_dimension_numbers<[1], [0], [0], [1], [0, 0, 1, 1], [], []>} : vector<222x128xbf16>, vector<128x128xbf16>, vector<222x128xf32> -> vector<222x128xf32>
    %67 = arith.addf %62, %66 : vector<222x128xf32>
    %68 = vector.extract_strided_slice %52 {offsets = [16, 0], sizes = [222, 128], strides = [1, 1]} : vector<256x128xbf16> to vector<222x128xbf16>
    %c1_65 = arith.constant 1 : index
    %c0_66 = arith.constant 0 : index
    %c0_67 = arith.constant 0 : index
    %c0_68 = arith.constant 0 : index
    %69 = vector.load %arg4[%c1_65, %c0_66, %c0_67, %c0_68] : memref<3x3x128x128xbf16, #tpu.memory_space<vmem>>, vector<1x1x128x128xbf16>
    %70 = vector.shape_cast %69 : vector<1x1x128x128xbf16> to vector<128x128xbf16>
    %cst_69 = arith.constant dense<0.000000e+00> : vector<222x128xf32>
    %71 = tpu.matmul %68, %70, %cst_69 {dimension_numbers = #tpu.dot_dimension_numbers<[1], [0], [0], [1], [0, 0, 1, 1], [], []>} : vector<222x128xbf16>, vector<128x128xbf16>, vector<222x128xf32> -> vector<222x128xf32>
    %72 = arith.addf %67, %71 : vector<222x128xf32>
    %73 = vector.extract_strided_slice %52 {offsets = [17, 0], sizes = [222, 128], strides = [1, 1]} : vector<256x128xbf16> to vector<222x128xbf16>
    %c1_70 = arith.constant 1 : index
    %c1_71 = arith.constant 1 : index
    %c0_72 = arith.constant 0 : index
    %c0_73 = arith.constant 0 : index
    %74 = vector.load %arg4[%c1_70, %c1_71, %c0_72, %c0_73] : memref<3x3x128x128xbf16, #tpu.memory_space<vmem>>, vector<1x1x128x128xbf16>
    %75 = vector.shape_cast %74 : vector<1x1x128x128xbf16> to vector<128x128xbf16>
    %cst_74 = arith.constant dense<0.000000e+00> : vector<222x128xf32>
    %76 = tpu.matmul %73, %75, %cst_74 {dimension_numbers = #tpu.dot_dimension_numbers<[1], [0], [0], [1], [0, 0, 1, 1], [], []>} : vector<222x128xbf16>, vector<128x128xbf16>, vector<222x128xf32> -> vector<222x128xf32>
    %77 = arith.addf %72, %76 : vector<222x128xf32>
    %78 = vector.extract_strided_slice %52 {offsets = [18, 0], sizes = [222, 128], strides = [1, 1]} : vector<256x128xbf16> to vector<222x128xbf16>
    %c1_75 = arith.constant 1 : index
    %c2_76 = arith.constant 2 : index
    %c0_77 = arith.constant 0 : index
    %c0_78 = arith.constant 0 : index
    %79 = vector.load %arg4[%c1_75, %c2_76, %c0_77, %c0_78] : memref<3x3x128x128xbf16, #tpu.memory_space<vmem>>, vector<1x1x128x128xbf16>
    %80 = vector.shape_cast %79 : vector<1x1x128x128xbf16> to vector<128x128xbf16>
    %cst_79 = arith.constant dense<0.000000e+00> : vector<222x128xf32>
    %81 = tpu.matmul %78, %80, %cst_79 {dimension_numbers = #tpu.dot_dimension_numbers<[1], [0], [0], [1], [0, 0, 1, 1], [], []>} : vector<222x128xbf16>, vector<128x128xbf16>, vector<222x128xf32> -> vector<222x128xf32>
    %82 = arith.addf %77, %81 : vector<222x128xf32>
    %83 = vector.extract_strided_slice %52 {offsets = [32, 0], sizes = [222, 128], strides = [1, 1]} : vector<256x128xbf16> to vector<222x128xbf16>
    %c2_80 = arith.constant 2 : index
    %c0_81 = arith.constant 0 : index
    %c0_82 = arith.constant 0 : index
    %c0_83 = arith.constant 0 : index
    %84 = vector.load %arg4[%c2_80, %c0_81, %c0_82, %c0_83] : memref<3x3x128x128xbf16, #tpu.memory_space<vmem>>, vector<1x1x128x128xbf16>
    %85 = vector.shape_cast %84 : vector<1x1x128x128xbf16> to vector<128x128xbf16>
    %cst_84 = arith.constant dense<0.000000e+00> : vector<222x128xf32>
    %86 = tpu.matmul %83, %85, %cst_84 {dimension_numbers = #tpu.dot_dimension_numbers<[1], [0], [0], [1], [0, 0, 1, 1], [], []>} : vector<222x128xbf16>, vector<128x128xbf16>, vector<222x128xf32> -> vector<222x128xf32>
    %87 = arith.addf %82, %86 : vector<222x128xf32>
    %88 = vector.extract_strided_slice %52 {offsets = [33, 0], sizes = [222, 128], strides = [1, 1]} : vector<256x128xbf16> to vector<222x128xbf16>
    %c2_85 = arith.constant 2 : index
    %c1_86 = arith.constant 1 : index
    %c0_87 = arith.constant 0 : index
    %c0_88 = arith.constant 0 : index
    %89 = vector.load %arg4[%c2_85, %c1_86, %c0_87, %c0_88] : memref<3x3x128x128xbf16, #tpu.memory_space<vmem>>, vector<1x1x128x128xbf16>
    %90 = vector.shape_cast %89 : vector<1x1x128x128xbf16> to vector<128x128xbf16>
    %cst_89 = arith.constant dense<0.000000e+00> : vector<222x128xf32>
    %91 = tpu.matmul %88, %90, %cst_89 {dimension_numbers = #tpu.dot_dimension_numbers<[1], [0], [0], [1], [0, 0, 1, 1], [], []>} : vector<222x128xbf16>, vector<128x128xbf16>, vector<222x128xf32> -> vector<222x128xf32>
    %92 = arith.addf %87, %91 : vector<222x128xf32>
    %93 = vector.extract_strided_slice %52 {offsets = [34, 0], sizes = [222, 128], strides = [1, 1]} : vector<256x128xbf16> to vector<222x128xbf16>
    %c2_90 = arith.constant 2 : index
    %c2_91 = arith.constant 2 : index
    %c0_92 = arith.constant 0 : index
    %c0_93 = arith.constant 0 : index
    %94 = vector.load %arg4[%c2_90, %c2_91, %c0_92, %c0_93] : memref<3x3x128x128xbf16, #tpu.memory_space<vmem>>, vector<1x1x128x128xbf16>
    %95 = vector.shape_cast %94 : vector<1x1x128x128xbf16> to vector<128x128xbf16>
    %cst_94 = arith.constant dense<0.000000e+00> : vector<222x128xf32>
    %96 = tpu.matmul %93, %95, %cst_94 {dimension_numbers = #tpu.dot_dimension_numbers<[1], [0], [0], [1], [0, 0, 1, 1], [], []>} : vector<222x128xbf16>, vector<128x128xbf16>, vector<222x128xf32> -> vector<222x128xf32>
    %97 = arith.addf %92, %96 : vector<222x128xf32>
    %cst_95 = arith.constant 0.000000e+00 : f32
    %98 = vector.broadcast %cst_95 : f32 to vector<222x128xf32>
    %99 = arith.maximumf %97, %98 : vector<222x128xf32>
    %100 = arith.truncf %99 : vector<222x128xf32> to vector<222x128xbf16>
    %c0_96 = arith.constant 0 : index
    %c0_97 = arith.constant 0 : index
    %c0_98 = arith.constant 0 : index
    %101 = vector.load %arg6[%c0_96, %c0_97, %c0_98] : memref<1x222x128xbf16, #tpu.memory_space<vmem>>, vector<1x222x128xbf16>
    %102 = vector.shape_cast %101 : vector<1x222x128xbf16> to vector<222x128xbf16>
    %103 = vector.shape_cast %100 : vector<222x128xbf16> to vector<1x222x128xbf16>
    tpu.vector_store %arg6[%c0_96, %c0_97, %c0_98], %103 {strides = array<i32>} : memref<1x222x128xbf16, #tpu.memory_space<vmem>>, vector<1x222x128xbf16>,
    return
  }
  func.func @transform_0(%arg0: i32) -> (i32, i32, i32) {
    %c0_i32 = arith.constant 0 : i32
    %c0_i32_0 = arith.constant 0 : i32
    %c0_i32_1 = arith.constant 0 : i32
    return %arg0, %c0_i32, %c0_i32_0 : i32, i32, i32
  }
  func.func @transform_1(%arg0: i32) -> (i32, i32, i32) {
    %c0_i32 = arith.constant 0 : i32
    %c0_i32_0 = arith.constant 0 : i32
    %c0_i32_1 = arith.constant 0 : i32
    return %arg0, %c0_i32, %c0_i32_0 : i32, i32, i32
  }
  func.func @transform_2(%arg0: i32) -> (i32, i32, i32, i32) {
    %c0_i32 = arith.constant 0 : i32
    %c0_i32_0 = arith.constant 0 : i32
    %c0_i32_1 = arith.constant 0 : i32
    %c0_i32_2 = arith.constant 0 : i32
    %c0_i32_3 = arith.constant 0 : i32
    return %c0_i32, %c0_i32_0, %c0_i32_1, %c0_i32_2 : i32, i32, i32, i32
  }
  func.func @transform_3(%arg0: i32) -> (i32, i32, i32, i32) {
    %c0_i32 = arith.constant 0 : i32
    %c0_i32_0 = arith.constant 0 : i32
    %c0_i32_1 = arith.constant 0 : i32
    %c0_i32_2 = arith.constant 0 : i32
    %c0_i32_3 = arith.constant 0 : i32
    return %c0_i32, %c0_i32_0, %c0_i32_1, %c0_i32_2 : i32, i32, i32, i32
  }
  func.func @transform_4(%arg0: i32) -> (i32, i32) {
    %c0_i32 = arith.constant 0 : i32
    %c0_i32_0 = arith.constant 0 : i32
    %c0_i32_1 = arith.constant 0 : i32
    return %c0_i32, %c0_i32_0 : i32, i32
  }
  func.func @transform_5(%arg0: i32) -> (i32, i32, i32) {
    %c0_i32 = arith.constant 0 : i32
    %c0_i32_0 = arith.constant 0 : i32
    %c0_i32_1 = arith.constant 0 : i32
    return %arg0, %c0_i32, %c0_i32_0 : i32, i32, i32
  }
}

module attributes {stable_mosaic.version = 11 : i64} {
  func.func @kernel(%arg0: i32, %arg1: memref<1x222x128xbf16, #tpu.memory_space<vmem>>, %arg2: memref<3x3x128x128xbf16, #tpu.memory_space<vmem>>, %arg3: memref<1x128xf32, #tpu.memory_space<vmem>>, %arg4: memref<1x188x128xbf16, #tpu.memory_space<vmem>>) attributes {dimension_semantics = [#tpu.dimension_semantics<parallel>], iteration_bounds = array<i64: 2>, scalar_prefetch = 0 : i64, scratch_operands = 0 : i64, tpu.core_type = #tpu.core_type<tc>, window_params = [{transform_indices = @transform_0, window_bounds = array<i64: 1, 222, 128>}, {pipeline_mode = #tpu.pipeline_mode<synchronous>, transform_indices = @transform_1, window_bounds = array<i64: 3, 3, 128, 128>}, {pipeline_mode = #tpu.pipeline_mode<synchronous>, transform_indices = @transform_2, window_bounds = array<i64: 1, 128>}, {transform_indices = @transform_3, window_bounds = array<i64: 1, 188, 128>}]} {
    %cst = arith.constant 0.000000e+00 : f32
    %0 = vector.broadcast %cst : f32 to vector<188x128xf32>
    %c0 = arith.constant 0 : index
    %c0_0 = arith.constant 0 : index
    %1 = vector.load %arg3[%c0, %c0_0] : memref<1x128xf32, #tpu.memory_space<vmem>>, vector<1x128xf32>
    %2 = vector.broadcast %1 : vector<1x128xf32> to vector<188x128xf32>
    %3 = arith.addf %0, %2 : vector<188x128xf32>
    %c0_1 = arith.constant 0 : index
    %c0_2 = arith.constant 0 : index
    %c0_3 = arith.constant 0 : index
    %4 = vector.load %arg1[%c0_1, %c0_2, %c0_3] : memref<1x222x128xbf16, #tpu.memory_space<vmem>>, vector<1x222x128xbf16>
    %5 = vector.shape_cast %4 : vector<1x222x128xbf16> to vector<222x128xbf16>
    %6 = vector.extract_strided_slice %5 {offsets = [0, 0], sizes = [188, 128], strides = [1, 1]} : vector<222x128xbf16> to vector<188x128xbf16>
    %c0_4 = arith.constant 0 : index
    %c0_5 = arith.constant 0 : index
    %c0_6 = arith.constant 0 : index
    %c0_7 = arith.constant 0 : index
    %7 = vector.load %arg2[%c0_4, %c0_5, %c0_6, %c0_7] : memref<3x3x128x128xbf16, #tpu.memory_space<vmem>>, vector<1x1x128x128xbf16>
    %8 = vector.shape_cast %7 : vector<1x1x128x128xbf16> to vector<128x128xbf16>
    %cst_8 = arith.constant dense<0.000000e+00> : vector<188x128xf32>
    %9 = tpu.matmul %6, %8, %cst_8 {dimension_numbers = #tpu.dot_dimension_numbers<[1], [0], [0], [1], [0, 0, 1, 1], [], []>} : vector<188x128xbf16>, vector<128x128xbf16>, vector<188x128xf32> -> vector<188x128xf32>
    %10 = arith.addf %3, %9 : vector<188x128xf32>
    %11 = vector.extract_strided_slice %5 {offsets = [1, 0], sizes = [188, 128], strides = [1, 1]} : vector<222x128xbf16> to vector<188x128xbf16>
    %c0_9 = arith.constant 0 : index
    %c1 = arith.constant 1 : index
    %c0_10 = arith.constant 0 : index
    %c0_11 = arith.constant 0 : index
    %12 = vector.load %arg2[%c0_9, %c1, %c0_10, %c0_11] : memref<3x3x128x128xbf16, #tpu.memory_space<vmem>>, vector<1x1x128x128xbf16>
    %13 = vector.shape_cast %12 : vector<1x1x128x128xbf16> to vector<128x128xbf16>
    %cst_12 = arith.constant dense<0.000000e+00> : vector<188x128xf32>
    %14 = tpu.matmul %11, %13, %cst_12 {dimension_numbers = #tpu.dot_dimension_numbers<[1], [0], [0], [1], [0, 0, 1, 1], [], []>} : vector<188x128xbf16>, vector<128x128xbf16>, vector<188x128xf32> -> vector<188x128xf32>
    %15 = arith.addf %10, %14 : vector<188x128xf32>
    %16 = vector.extract_strided_slice %5 {offsets = [2, 0], sizes = [188, 128], strides = [1, 1]} : vector<222x128xbf16> to vector<188x128xbf16>
    %c0_13 = arith.constant 0 : index
    %c2 = arith.constant 2 : index
    %c0_14 = arith.constant 0 : index
    %c0_15 = arith.constant 0 : index
    %17 = vector.load %arg2[%c0_13, %c2, %c0_14, %c0_15] : memref<3x3x128x128xbf16, #tpu.memory_space<vmem>>, vector<1x1x128x128xbf16>
    %18 = vector.shape_cast %17 : vector<1x1x128x128xbf16> to vector<128x128xbf16>
    %cst_16 = arith.constant dense<0.000000e+00> : vector<188x128xf32>
    %19 = tpu.matmul %16, %18, %cst_16 {dimension_numbers = #tpu.dot_dimension_numbers<[1], [0], [0], [1], [0, 0, 1, 1], [], []>} : vector<188x128xbf16>, vector<128x128xbf16>, vector<188x128xf32> -> vector<188x128xf32>
    %20 = arith.addf %15, %19 : vector<188x128xf32>
    %21 = vector.extract_strided_slice %5 {offsets = [16, 0], sizes = [188, 128], strides = [1, 1]} : vector<222x128xbf16> to vector<188x128xbf16>
    %c1_17 = arith.constant 1 : index
    %c0_18 = arith.constant 0 : index
    %c0_19 = arith.constant 0 : index
    %c0_20 = arith.constant 0 : index
    %22 = vector.load %arg2[%c1_17, %c0_18, %c0_19, %c0_20] : memref<3x3x128x128xbf16, #tpu.memory_space<vmem>>, vector<1x1x128x128xbf16>
    %23 = vector.shape_cast %22 : vector<1x1x128x128xbf16> to vector<128x128xbf16>
    %cst_21 = arith.constant dense<0.000000e+00> : vector<188x128xf32>
    %24 = tpu.matmul %21, %23, %cst_21 {dimension_numbers = #tpu.dot_dimension_numbers<[1], [0], [0], [1], [0, 0, 1, 1], [], []>} : vector<188x128xbf16>, vector<128x128xbf16>, vector<188x128xf32> -> vector<188x128xf32>
    %25 = arith.addf %20, %24 : vector<188x128xf32>
    %26 = vector.extract_strided_slice %5 {offsets = [17, 0], sizes = [188, 128], strides = [1, 1]} : vector<222x128xbf16> to vector<188x128xbf16>
    %c1_22 = arith.constant 1 : index
    %c1_23 = arith.constant 1 : index
    %c0_24 = arith.constant 0 : index
    %c0_25 = arith.constant 0 : index
    %27 = vector.load %arg2[%c1_22, %c1_23, %c0_24, %c0_25] : memref<3x3x128x128xbf16, #tpu.memory_space<vmem>>, vector<1x1x128x128xbf16>
    %28 = vector.shape_cast %27 : vector<1x1x128x128xbf16> to vector<128x128xbf16>
    %cst_26 = arith.constant dense<0.000000e+00> : vector<188x128xf32>
    %29 = tpu.matmul %26, %28, %cst_26 {dimension_numbers = #tpu.dot_dimension_numbers<[1], [0], [0], [1], [0, 0, 1, 1], [], []>} : vector<188x128xbf16>, vector<128x128xbf16>, vector<188x128xf32> -> vector<188x128xf32>
    %30 = arith.addf %25, %29 : vector<188x128xf32>
    %31 = vector.extract_strided_slice %5 {offsets = [18, 0], sizes = [188, 128], strides = [1, 1]} : vector<222x128xbf16> to vector<188x128xbf16>
    %c1_27 = arith.constant 1 : index
    %c2_28 = arith.constant 2 : index
    %c0_29 = arith.constant 0 : index
    %c0_30 = arith.constant 0 : index
    %32 = vector.load %arg2[%c1_27, %c2_28, %c0_29, %c0_30] : memref<3x3x128x128xbf16, #tpu.memory_space<vmem>>, vector<1x1x128x128xbf16>
    %33 = vector.shape_cast %32 : vector<1x1x128x128xbf16> to vector<128x128xbf16>
    %cst_31 = arith.constant dense<0.000000e+00> : vector<188x128xf32>
    %34 = tpu.matmul %31, %33, %cst_31 {dimension_numbers = #tpu.dot_dimension_numbers<[1], [0], [0], [1], [0, 0, 1, 1], [], []>} : vector<188x128xbf16>, vector<128x128xbf16>, vector<188x128xf32> -> vector<188x128xf32>
    %35 = arith.addf %30, %34 : vector<188x128xf32>
    %36 = vector.extract_strided_slice %5 {offsets = [32, 0], sizes = [188, 128], strides = [1, 1]} : vector<222x128xbf16> to vector<188x128xbf16>
    %c2_32 = arith.constant 2 : index
    %c0_33 = arith.constant 0 : index
    %c0_34 = arith.constant 0 : index
    %c0_35 = arith.constant 0 : index
    %37 = vector.load %arg2[%c2_32, %c0_33, %c0_34, %c0_35] : memref<3x3x128x128xbf16, #tpu.memory_space<vmem>>, vector<1x1x128x128xbf16>
    %38 = vector.shape_cast %37 : vector<1x1x128x128xbf16> to vector<128x128xbf16>
    %cst_36 = arith.constant dense<0.000000e+00> : vector<188x128xf32>
    %39 = tpu.matmul %36, %38, %cst_36 {dimension_numbers = #tpu.dot_dimension_numbers<[1], [0], [0], [1], [0, 0, 1, 1], [], []>} : vector<188x128xbf16>, vector<128x128xbf16>, vector<188x128xf32> -> vector<188x128xf32>
    %40 = arith.addf %35, %39 : vector<188x128xf32>
    %41 = vector.extract_strided_slice %5 {offsets = [33, 0], sizes = [188, 128], strides = [1, 1]} : vector<222x128xbf16> to vector<188x128xbf16>
    %c2_37 = arith.constant 2 : index
    %c1_38 = arith.constant 1 : index
    %c0_39 = arith.constant 0 : index
    %c0_40 = arith.constant 0 : index
    %42 = vector.load %arg2[%c2_37, %c1_38, %c0_39, %c0_40] : memref<3x3x128x128xbf16, #tpu.memory_space<vmem>>, vector<1x1x128x128xbf16>
    %43 = vector.shape_cast %42 : vector<1x1x128x128xbf16> to vector<128x128xbf16>
    %cst_41 = arith.constant dense<0.000000e+00> : vector<188x128xf32>
    %44 = tpu.matmul %41, %43, %cst_41 {dimension_numbers = #tpu.dot_dimension_numbers<[1], [0], [0], [1], [0, 0, 1, 1], [], []>} : vector<188x128xbf16>, vector<128x128xbf16>, vector<188x128xf32> -> vector<188x128xf32>
    %45 = arith.addf %40, %44 : vector<188x128xf32>
    %46 = vector.extract_strided_slice %5 {offsets = [34, 0], sizes = [188, 128], strides = [1, 1]} : vector<222x128xbf16> to vector<188x128xbf16>
    %c2_42 = arith.constant 2 : index
    %c2_43 = arith.constant 2 : index
    %c0_44 = arith.constant 0 : index
    %c0_45 = arith.constant 0 : index
    %47 = vector.load %arg2[%c2_42, %c2_43, %c0_44, %c0_45] : memref<3x3x128x128xbf16, #tpu.memory_space<vmem>>, vector<1x1x128x128xbf16>
    %48 = vector.shape_cast %47 : vector<1x1x128x128xbf16> to vector<128x128xbf16>
    %cst_46 = arith.constant dense<0.000000e+00> : vector<188x128xf32>
    %49 = tpu.matmul %46, %48, %cst_46 {dimension_numbers = #tpu.dot_dimension_numbers<[1], [0], [0], [1], [0, 0, 1, 1], [], []>} : vector<188x128xbf16>, vector<128x128xbf16>, vector<188x128xf32> -> vector<188x128xf32>
    %50 = arith.addf %45, %49 : vector<188x128xf32>
    %cst_47 = arith.constant 0.000000e+00 : f32
    %51 = vector.broadcast %cst_47 : f32 to vector<188x128xf32>
    %52 = arith.maximumf %50, %51 : vector<188x128xf32>
    %53 = arith.truncf %52 : vector<188x128xf32> to vector<188x128xbf16>
    %c0_48 = arith.constant 0 : index
    %c0_49 = arith.constant 0 : index
    %c0_50 = arith.constant 0 : index
    %54 = vector.load %arg4[%c0_48, %c0_49, %c0_50] : memref<1x188x128xbf16, #tpu.memory_space<vmem>>, vector<1x188x128xbf16>
    %55 = vector.shape_cast %54 : vector<1x188x128xbf16> to vector<188x128xbf16>
    %56 = vector.shape_cast %53 : vector<188x128xbf16> to vector<1x188x128xbf16>
    tpu.vector_store %arg4[%c0_48, %c0_49, %c0_50], %56 {strides = array<i32>} : memref<1x188x128xbf16, #tpu.memory_space<vmem>>, vector<1x188x128xbf16>,
    return
  }
  func.func @transform_0(%arg0: i32) -> (i32, i32, i32) {
    %c0_i32 = arith.constant 0 : i32
    %c0_i32_0 = arith.constant 0 : i32
    %c0_i32_1 = arith.constant 0 : i32
    return %arg0, %c0_i32, %c0_i32_0 : i32, i32, i32
  }
  func.func @transform_1(%arg0: i32) -> (i32, i32, i32, i32) {
    %c0_i32 = arith.constant 0 : i32
    %c0_i32_0 = arith.constant 0 : i32
    %c0_i32_1 = arith.constant 0 : i32
    %c0_i32_2 = arith.constant 0 : i32
    %c0_i32_3 = arith.constant 0 : i32
    return %c0_i32, %c0_i32_0, %c0_i32_1, %c0_i32_2 : i32, i32, i32, i32
  }
  func.func @transform_2(%arg0: i32) -> (i32, i32) {
    %c0_i32 = arith.constant 0 : i32
    %c0_i32_0 = arith.constant 0 : i32
    %c0_i32_1 = arith.constant 0 : i32
    return %c0_i32, %c0_i32_0 : i32, i32
  }
  func.func @transform_3(%arg0: i32) -> (i32, i32, i32) {
    %c0_i32 = arith.constant 0 : i32
    %c0_i32_0 = arith.constant 0 : i32
    %c0_i32_1 = arith.constant 0 : i32
    return %arg0, %c0_i32, %c0_i32_0 : i32, i32, i32
  }
}

</mosaic_0001>

<llo_original>
// kernel: decoder_forward.3
$region0: #{decoder_forward.3}
  #allocation0 [shape = 'u32[]', space=smem, size = 0x4, offset = 0x4, fixed_abs, tag = 'smem constant byte address 0x4 - core index']
  #allocation1 [shape = 'u32[144,128]{1,0:T(1,128)}', space=vmem, size = 0x12000, scoped, tag = 'internal scratch']
  %s0 = inlined_call_operand.hbm [shape: bf16[2,64,8], index: 0, kind: input, shape index: {}]
  %s1 = inlined_call_operand.hbm [shape: bf16[2,2,8,128], index: 1, kind: input, shape index: {}]
  %s2 = inlined_call_operand.hbm [shape: f32[1,128], index: 2, kind: input, shape index: {}]
  %s3 = inlined_call_operand.hbm [shape: bf16[2,2,2,64,128], index: 3, kind: output, shape index: {}]
  %s4 = sld [smem:[#allocation0]]
  $region57: #{decoder_forward.3} parent=0
    _
  %s6 = ssub.s32 1, %s4
  %s7 = scalar_select 0, %s6, %s4
  $region1: #{decoder_forward.3} parent=0
    #allocation2 [shape = 'u8[32768]{0}', space=vmem, size = 0x8000, scoped, tag = 'input window, operand 0']
    #allocation3 [shape = 's32[2]{0}', space=sflag, size = 0x8, scoped, tag = 'scoped memory for decoder_forward.3']
    #allocation4 [shape = 's32[2]{0}', space=sflag, size = 0x8, scoped, tag = 'scoped memory for decoder_forward.3']
    #allocation5 [shape = 'u8[8192]{0}', space=vmem, size = 0x2000, scoped, tag = 'input window, operand 1, single buffered']
    #allocation6 [shape = 's32[1]{0}', space=sflag, size = 0x4, scoped, tag = 'scoped memory for decoder_forward.3']
    #allocation7 [shape = 'u8[512]{0}', space=vmem, size = 0x400, scoped, tag = 'input window, operand 2, single buffered']
    #allocation8 [shape = 'u8[131072]{0}', space=vmem, size = 0x20000, scoped, tag = 'output window, operand 0']
    %8 = vsyncpa [#allocation3], 0
    %s9 = scalar_lea.sflag [#allocation3], 1
    %10 = vsyncpa %s9, 0
    %11 = vsyncpa [#allocation6], 0
    %12 = vsyncpa [#allocation4], 0
    %s13 = scalar_lea.sflag [#allocation4], 1
    %14 = vsyncpa %s13, 0
    loop: start=0, step=1, limit=4
    $region2: #{decoder_forward.3} parent=1 // loop_pre_header
      _
    $region3: #{decoder_forward.3} parent=1 // loop_header
      %s16 = sphi 0, %s20
      %p17 = scmp.ge.s32.totalorder %s16, 4
      %s26 = sphi 0, %s28
      %s29 = sphi 0, %s26
      %s30 = sphi 0, %s29
      %s46 = sphi 0, %s30
      %s50 = sphi 0, %s50
      %s52 = sphi 0, %s50
      %s53 = sphi 0, %s52
      %s67 = sphi 0, %s53
      %s71 = sphi 0, %s71
      %s73 = sphi 0, %s71
      %s74 = sphi 0, %s73
      %s88 = sphi 0, %s74
      %s94 = sphi 0, %s96
      %s97 = sphi 0, %s94
      %s98 = sphi 0, %s97
      %s114 = sphi 0, %s98
    $region4: #{decoder_forward.3} parent=1 // loop_header_branch
      %19 = sbr.rel (%p17) target = $region8
    $region5: #{decoder_forward.3} parent=1 // loop_body
      %s21 = ssub.s32 %s16, 1
      %s22 = ssub.s32 %s16, 2
      %s23 = sadd.s32 %s16, 1
      %s24 = ssub.s32 %s16, %s23
      %p25 = scmp.eq.s32.totalorder %s24, 0
      %s27 = sadd.s32 %s26, 1
      %s28 = scalar_select %p25, %s26, %s27
      %p31 = pneg %p25
      %p32 = scmp.eq.s32.totalorder %s16, 1
      %p33 = por %p31, %p32
      %p34 = scmp.ne.s32.totalorder %s26, %s29
      %p35 = scmp.eq.s32.totalorder %s16, 0
      %p36 = por %p34, %p35
      %p37 = scmp.ne.s32.totalorder %s26, %s29
      %p38 = scmp.eq.s32.totalorder %s21, 1
      %p39 = por %p37, %p38
      %p40 = scmp.ne.s32.totalorder %s29, %s30
      %p41 = scmp.eq.s32.totalorder %s21, 0
      %p42 = por %p40, %p41
      %p43 = scmp.ne.s32.totalorder %s29, %s30
      %p44 = scmp.eq.s32.totalorder %s22, 1
      %p45 = por %p43, %p44
      %p47 = scmp.ne.s32.totalorder %s30, %s46
      %p48 = scmp.eq.s32.totalorder %s22, 0
      %p49 = por %p47, %p48
      %s51 = sadd.s32 %s50, 1
      %p54 = scmp.eq.s32.totalorder %s16, 1
      %p55 = scmp.ne.s32.totalorder %s50, %s52
      %p56 = scmp.eq.s32.totalorder %s16, 0
      %p57 = por %p55, %p56
      %p58 = scmp.ne.s32.totalorder %s50, %s52
      %p59 = scmp.eq.s32.totalorder %s21, 1
      %p60 = por %p58, %p59
      %p61 = scmp.ne.s32.totalorder %s52, %s53
      %p62 = scmp.eq.s32.totalorder %s21, 0
      %p63 = por %p61, %p62
      %p64 = scmp.ne.s32.totalorder %s52, %s53
      %p65 = scmp.eq.s32.totalorder %s22, 1
      %p66 = por %p64, %p65
      %p68 = scmp.ne.s32.totalorder %s53, %s67
      %p69 = scmp.eq.s32.totalorder %s22, 0
      %p70 = por %p68, %p69
      %s72 = sadd.s32 %s71, 1
      %p75 = scmp.eq.s32.totalorder %s16, 1
      %p76 = scmp.ne.s32.totalorder %s71, %s73
      %p77 = scmp.eq.s32.totalorder %s16, 0
      %p78 = por %p76, %p77
      %p79 = scmp.ne.s32.totalorder %s71, %s73
      %p80 = scmp.eq.s32.totalorder %s21, 1
      %p81 = por %p79, %p80
      %p82 = scmp.ne.s32.totalorder %s73, %s74
      %p83 = scmp.eq.s32.totalorder %s21, 0
      %p84 = por %p82, %p83
      %p85 = scmp.ne.s32.totalorder %s73, %s74
      %p86 = scmp.eq.s32.totalorder %s22, 1
      %p87 = por %p85, %p86
      %p89 = scmp.ne.s32.totalorder %s74, %s88
      %p90 = scmp.eq.s32.totalorder %s22, 0
      %p91 = por %p89, %p90
      %s92 = ssub.s32 %s16, %s23
      %p93 = scmp.eq.s32.totalorder %s92, 0
      %s95 = sadd.s32 %s94, 1
      %s96 = scalar_select %p93, %s94, %s95
      %p99 = pneg %p93
      %p100 = scmp.eq.s32.totalorder %s16, 1
      %p101 = por %p99, %p100
      %p102 = scmp.ne.s32.totalorder %s94, %s97
      %p103 = scmp.eq.s32.totalorder %s16, 0
      %p104 = por %p102, %p103
      %p105 = scmp.ne.s32.totalorder %s94, %s97
      %p106 = scmp.eq.s32.totalorder %s21, 1
      %p107 = por %p105, %p106
      %p108 = scmp.ne.s32.totalorder %s97, %s98
      %p109 = scmp.eq.s32.totalorder %s21, 0
      %p110 = por %p108, %p109
      %p111 = scmp.ne.s32.totalorder %s97, %s98
      %p112 = scmp.eq.s32.totalorder %s22, 1
      %p113 = por %p111, %p112
      %p115 = scmp.ne.s32.totalorder %s98, %s114
      %p116 = scmp.eq.s32.totalorder %s22, 0
      %p117 = por %p115, %p116
      %p118 = scmp.le.s32.totalorder 1, %s16
      %p119 = scmp.lt.s32.totalorder %s16, 3
      %p120 = pnand %p118, %p119
      %p121 = pneg %p120
      // Predicated region
      $region9: #{decoder_forward.3} parent=5 // pred_check
        _
      $region10: #{decoder_forward.3} parent=5 // pred_check_branch
        %123 = sbr.rel (%p120) target = $region12
      $region11: #{decoder_forward.3} parent=5 // pred_region
        %s124 = ssub.s32 %s16, 1
        // Predicated region
        $region13: #{decoder_forward.3} parent=11 // pred_check
          %p125 = pneg %p63
        $region14: #{decoder_forward.3} parent=11 // pred_check_branch
          %127 = sbr.rel (%p125) target = $region16
        $region15: #{decoder_forward.3} parent=11 // pred_region
          %s129 = ssub.s32 256, 256
          %130 = vsyncadd [#allocation6], %s129
          %s131 = sshll.u32 [#allocation5], 4
          %s132 = int_to_ptr.vmem [resolvable:$true] %s131
          %137 = dma.hbm_to_vmem [thread:$0]  %s1, 256, %s132, [#allocation6], 64, 64, 4
        $region16: #{decoder_forward.3} parent=11 // pred_fallthru
          _
        // Predicated region
        $region17: #{decoder_forward.3} parent=11 // pred_check
          %p138 = pneg %p84
        $region18: #{decoder_forward.3} parent=11 // pred_check_branch
          %140 = sbr.rel (%p138) target = $region20
        $region19: #{decoder_forward.3} parent=11 // pred_region
          %s142 = ssub.s32 16, 16
          %143 = vsyncadd [#allocation6], %s142
          %s145 = sshll.u32 [#allocation7], 4
          %s146 = int_to_ptr.vmem [resolvable:$true] %s145
          %148 = dma.hbm_to_vmem [thread:$0]  %s2, 16, %s146, [#allocation6]
        $region20: #{decoder_forward.3} parent=11 // pred_fallthru
          _
      $region12: #{decoder_forward.3} parent=5 // pred_fallthru
        _
      %p149 = scmp.lt.s32.totalorder %s16, 2
      // Predicated region
      $region21: #{decoder_forward.3} parent=5 // pred_check
        %p150 = pneg %p149
      $region22: #{decoder_forward.3} parent=5 // pred_check_branch
        %152 = sbr.rel (%p150) target = $region24
      $region23: #{decoder_forward.3} parent=5 // pred_region
        // Predicated region
        $region25: #{decoder_forward.3} parent=23 // pred_check
          %p153 = pneg %p36
        $region26: #{decoder_forward.3} parent=23 // pred_check_branch
          %155 = sbr.rel (%p153) target = $region28
        $region27: #{decoder_forward.3} parent=23 // pred_region
          %s156 = sand.u32 %s26, 1
          %s157 = scalar_lea.sflag [#allocation3], %s156
          %s158 = sand.u32 %s26, 1
          %s159 = smul.addr %s158, 32
          %s160 = scalar_lea.vmem [#allocation2], %s159
          %s162 = ssub.s32 512, 512
          %163 = vsyncadd %s157, %s162
          %s164 = smul.addr %s16, 8
          %s165 = smul.addr %s164, 64
          %s166 = scalar_lea.hbm %s0, %s165
          %s167 = sshll.u32 %s160, 4
          %s168 = int_to_ptr.vmem [resolvable:$true] %s167
          %173 = dma.hbm_to_vmem [thread:$0]  %s166, 512, %s168, %s157, 64, 64, 4
        $region28: #{decoder_forward.3} parent=23 // pred_fallthru
          _
      $region24: #{decoder_forward.3} parent=5 // pred_fallthru
        _
      %p174 = scmp.le.s32.totalorder 1, %s16
      %p175 = scmp.lt.s32.totalorder %s16, 3
      %p176 = pnand %p174, %p175
      %p177 = pneg %p176
      // Predicated region
      $region29: #{decoder_forward.3} parent=5 // pred_check
        _
      $region30: #{decoder_forward.3} parent=5 // pred_check_branch
        %179 = sbr.rel (%p176) target = $region32
      $region31: #{decoder_forward.3} parent=5 // pred_region
        %s180 = ssub.s32 %s16, 1
        %s181 = sand.u32 %s29, 1
        %s182 = scalar_lea.sflag [#allocation3], %s181
        %s183 = sand.u32 %s29, 1
        %s184 = smul.addr %s183, 32
        %s185 = scalar_lea.vmem [#allocation2], %s184
        // Predicated region
        $region33: #{decoder_forward.3} parent=31 // pred_check
          %p186 = pneg %p42
        $region34: #{decoder_forward.3} parent=31 // pred_check_branch
          %188 = sbr.rel (%p186) target = $region36
        $region35: #{decoder_forward.3} parent=31 // pred_region
          %189 = dma.done %s182, 512
        $region36: #{decoder_forward.3} parent=31 // pred_fallthru
          _
        // Predicated region
        $region37: #{decoder_forward.3} parent=31 // pred_check
          %p190 = pneg %p63
        $region38: #{decoder_forward.3} parent=31 // pred_check_branch
          %192 = sbr.rel (%p190) target = $region40
        $region39: #{decoder_forward.3} parent=31 // pred_region
          %193 = dma.done [#allocation6], 256
        $region40: #{decoder_forward.3} parent=31 // pred_fallthru
          _
        // Predicated region
        $region41: #{decoder_forward.3} parent=31 // pred_check
          %p194 = pneg %p84
        $region42: #{decoder_forward.3} parent=31 // pred_check_branch
          %196 = sbr.rel (%p194) target = $region44
        $region43: #{decoder_forward.3} parent=31 // pred_region
          %197 = dma.done [#allocation6], 16
        $region44: #{decoder_forward.3} parent=31 // pred_fallthru
          _
        %s198 = sand.u32 %s29, 1
        %s199 = scalar_lea.sflag [#allocation3], %s198
        %s200 = sand.u32 %s29, 1
        %s201 = smul.addr %s200, 32
        %s202 = scalar_lea.vmem [#allocation2], %s201
        %p203 = pneg %p42
        %p204 = pneg %p39
        %p205 = pneg %p63
        %p206 = pneg %p60
        %p207 = pneg %p84
        %p208 = pneg %p81
        %p209 = pneg %p110
        %p210 = pneg %p107
        %s211 = sand.u32 %s97, 1
        %s212 = scalar_lea.sflag [#allocation4], %s211
        %s213 = sand.u32 %s97, 1
        %s214 = smul.addr %s213, 128
        %s215 = scalar_lea.vmem [#allocation8], %s214
        %v217 = vld [vmem:[%s185] sm:$0xf]
        %v218 = vld [vmem:[%s185 + $0x4] sm:$0xf]
        %v219 = vld [vmem:[%s185 + $0x8] sm:$0xf]
        %v220 = vld [vmem:[%s185 + $0xc] sm:$0xf]
        %v221 = vld [vmem:[%s185 + $0x10] sm:$0xf]
        %v222 = vld [vmem:[%s185 + $0x14] sm:$0xf]
        %v223 = vld [vmem:[%s185 + $0x18] sm:$0xf]
        %v224 = vld [vmem:[%s185 + $0x1c] sm:$0xf]
        %v225 = vld [vmem:[#allocation7] sm:$0x1]
        %v226 = vld [vmem:[#allocation5] sm:$0xf]
        %v228 = vlaneseq
        %v229 = vshrl.u32 %v228, 7
        %v230 = vsub.s32 0, %v229
        %v231 = vrot.slane %v225, %v230
        %v241 = vunpack.c.l.b16 %v217
        %v242 = vunpack.c.l.b16 %v218
        %v243 = vunpack.c.l.b16 %v219
        %v244 = vunpack.c.l.b16 %v220
        %v245 = vunpack.c.l.b16 %v221
        %v246 = vunpack.c.l.b16 %v222
        %v247 = vunpack.c.l.b16 %v223
        %v248 = vunpack.c.l.b16 %v224
        %v249 = vpack.c.b16 %v242, %v241
        %v250 = vpack.c.b16 %v244, %v243
        %v251 = vpack.c.b16 %v246, %v245
        %v252 = vpack.c.b16 %v248, %v247
        %vm253 = vcmask 64512
        %v255 = vsel %vm253, %v249, 0
        %v258 = vsel %vm253, %v250, 0
        %v261 = vsel %vm253, %v251, 0
        %v264 = vsel %vm253, %v252, 0
        %vm266 = vcmask 1043456
        %v268 = vsel %vm266, %v226, 0
        %270 = vmatprep.subr.bf16.mxu0 0
        %271 = vmatpush1.bf16.msra.mxu0 %v268
        %272 = vmatprep.subr.bf16.mxu0 0
        %273 = vmatpush1.bf16.msra.mxu0 0
        %274 = vmatprep.subr.bf16.mxu0 0
        %275 = vmatpush1.bf16.msra.mxu0 0
        %276 = vmatprep.subr.bf16.mxu0 0
        %277 = vmatpush1.bf16.msra.mxu0 0
        %278 = vmatprep.subr.bf16.mxu0 0
        %279 = vmatpush1.bf16.msra.mxu0 0
        %280 = vmatprep.subr.bf16.mxu0 0
        %281 = vmatpush1.bf16.msra.mxu0 0
        %282 = vmatprep.subr.bf16.mxu0 0
        %283 = vmatpush1.bf16.msra.mxu0 0
        %284 = vmatprep.subr.bf16.mxu0 0
        %285 = vmatpush1.bf16.msra.mxu0 0
        %286 = vmatprep.subr.bf16.mxu0 0
        %287 = vmatpush1.bf16.msra.mxu0 0
        %288 = vmatprep.subr.bf16.mxu0 0
        %289 = vmatpush1.bf16.msra.mxu0 0
        %290 = vmatprep.subr.bf16.mxu0 0
        %291 = vmatpush1.bf16.msra.mxu0 0
        %292 = vmatprep.subr.bf16.mxu0 0
        %293 = vmatpush1.bf16.msra.mxu0 0
        %294 = vmatprep.subr.bf16.mxu0 0
        %295 = vmatpush1.bf16.msra.mxu0 0
        %296 = vmatprep.subr.bf16.mxu0 0
        %297 = vmatpush1.bf16.msra.mxu0 0
        %298 = vmatprep.subr.bf16.mxu0 0
        %299 = vmatpush1.bf16.msra.mxu0 0
        %300 = vmatprep.subr.bf16.mxu0 0
        %301 = vmatpush1.bf16.msra.mxu0 0
        %302 = vmatprep.mubr.bf16.mxu0 0
        %303 = vmatmul.mubr.bf16.gmra.mrb[0].mxu0 %v255
        %v304 = vpop.f32.mrb[0].mxu0
        %v305 = vadd.f32 %v231, %v304
        %v306 = vpop.f32.mrb[0].mxu0
        %v307 = vpop.f32.mrb[0].mxu0
        %v308 = vadd.f32 %v231, %v307
        %v309 = vpop.f32.mrb[0].mxu0
        %310 = vmatprep.mubr.bf16.mxu0 0
        %311 = vmatmul.mubr.bf16.gmra.mrb[0].mxu0 %v258
        %v312 = vpop.f32.mrb[0].mxu0
        %v313 = vadd.f32 %v231, %v312
        %v314 = vpop.f32.mrb[0].mxu0
        %v315 = vpop.f32.mrb[0].mxu0
        %v316 = vadd.f32 %v231, %v315
        %v317 = vpop.f32.mrb[0].mxu0
        %318 = vmatprep.mubr.bf16.mxu0 0
        %319 = vmatmul.mubr.bf16.gmra.mrb[0].mxu0 %v261
        %v320 = vpop.f32.mrb[0].mxu0
        %v321 = vadd.f32 %v231, %v320
        %v322 = vpop.f32.mrb[0].mxu0
        %v323 = vpop.f32.mrb[0].mxu0
        %v324 = vadd.f32 %v231, %v323
        %v325 = vpop.f32.mrb[0].mxu0
        %326 = vmatprep.mubr.bf16.mxu0 0
        %327 = vmatmul.mubr.bf16.gmra.mrb[0].mxu0 %v264
        %v328 = vpop.f32.mrb[0].mxu0
        %v329 = vadd.f32 %v231, %v328
        %v330 = vpop.f32.mrb[0].mxu0
        %v331 = vpop.f32.mrb[0].mxu0
        %v332 = vadd.f32 %v231, %v331
        %v333 = vpop.f32.mrb[0].mxu0
        %334 = vdwg.mxu0
        %v335 = vpack.c.bf16 %v308, %v305
        %v336 = vpack.c.bf16 %v316, %v313
        %v337 = vpack.c.bf16 %v324, %v321
        %v338 = vpack.c.bf16 %v332, %v329
        %v343 = vunpack.c.l.b16 %v335
        %v344 = vunpack.c.h.b16 %v335
        %v345 = vunpack.c.l.b16 %v336
        %v346 = vunpack.c.h.b16 %v336
        %v347 = vunpack.c.l.b16 %v337
        %v348 = vunpack.c.h.b16 %v337
        %v349 = vunpack.c.l.b16 %v338
        %v350 = vunpack.c.h.b16 %v338
        %v351 = vpack.c.b16 %v343, %v343
        %v352 = vpack.c.b16 %v344, %v344
        %v353 = vpack.c.b16 %v345, %v345
        %v354 = vpack.c.b16 %v346, %v346
        %v355 = vpack.c.b16 %v347, %v347
        %v356 = vpack.c.b16 %v348, %v348
        %v357 = vpack.c.b16 %v349, %v349
        %v358 = vpack.c.b16 %v350, %v350
        %367 = vst [vmem:[%s215] sm:$0xf] %v351
        %368 = vst [vmem:[%s215 + $0x4] sm:$0xf] %v352
        %369 = vst [vmem:[%s215 + $0x8] sm:$0xf] %v353
        %370 = vst [vmem:[%s215 + $0xc] sm:$0xf] %v354
        %371 = vst [vmem:[%s215 + $0x10] sm:$0xf] %v355
        %372 = vst [vmem:[%s215 + $0x14] sm:$0xf] %v356
        %373 = vst [vmem:[%s215 + $0x18] sm:$0xf] %v357
        %374 = vst [vmem:[%s215 + $0x1c] sm:$0xf] %v358
        %s375 = scalar_lea.vmem [#allocation5], 4
        %v376 = vld [vmem:[%s375] sm:$0xf]
        %v378 = vsel %vm266, %v376, 0
        %380 = vmatprep.subr.bf16.mxu0 0
        %381 = vmatpush1.bf16.msra.mxu0 %v378
        %382 = vmatprep.subr.bf16.mxu0 0
        %383 = vmatpush1.bf16.msra.mxu0 0
        %384 = vmatprep.subr.bf16.mxu0 0
        %385 = vmatpush1.bf16.msra.mxu0 0
        %386 = vmatprep.subr.bf16.mxu0 0
        %387 = vmatpush1.bf16.msra.mxu0 0
        %388 = vmatprep.subr.bf16.mxu0 0
        %389 = vmatpush1.bf16.msra.mxu0 0
        %390 = vmatprep.subr.bf16.mxu0 0
        %391 = vmatpush1.bf16.msra.mxu0 0
        %392 = vmatprep.subr.bf16.mxu0 0
        %393 = vmatpush1.bf16.msra.mxu0 0
        %394 = vmatprep.subr.bf16.mxu0 0
        %395 = vmatpush1.bf16.msra.mxu0 0
        %396 = vmatprep.subr.bf16.mxu0 0
        %397 = vmatpush1.bf16.msra.mxu0 0
        %398 = vmatprep.subr.bf16.mxu0 0
        %399 = vmatpush1.bf16.msra.mxu0 0
        %400 = vmatprep.subr.bf16.mxu0 0
        %401 = vmatpush1.bf16.msra.mxu0 0
        %402 = vmatprep.subr.bf16.mxu0 0
        %403 = vmatpush1.bf16.msra.mxu0 0
        %404 = vmatprep.subr.bf16.mxu0 0
        %405 = vmatpush1.bf16.msra.mxu0 0
        %406 = vmatprep.subr.bf16.mxu0 0
        %407 = vmatpush1.bf16.msra.mxu0 0
        %408 = vmatprep.subr.bf16.mxu0 0
        %409 = vmatpush1.bf16.msra.mxu0 0
        %410 = vmatprep.subr.bf16.mxu0 0
        %411 = vmatpush1.bf16.msra.mxu0 0
        %412 = vmatprep.mubr.bf16.mxu0 0
        %413 = vmatmul.mubr.bf16.gmra.mrb[0].mxu0 %v255
        %v414 = vpop.f32.mrb[0].mxu0
        %v415 = vadd.f32 %v231, %v414
        %v416 = vpop.f32.mrb[0].mxu0
        %v417 = vpop.f32.mrb[0].mxu0
        %v418 = vadd.f32 %v231, %v417
        %v419 = vpop.f32.mrb[0].mxu0
        %420 = vmatprep.mubr.bf16.mxu0 0
        %421 = vmatmul.mubr.bf16.gmra.mrb[0].mxu0 %v258
        %v422 = vpop.f32.mrb[0].mxu0
        %v423 = vadd.f32 %v231, %v422
        %v424 = vpop.f32.mrb[0].mxu0
        %v425 = vpop.f32.mrb[0].mxu0
        %v426 = vadd.f32 %v231, %v425
        %v427 = vpop.f32.mrb[0].mxu0
        %428 = vmatprep.mubr.bf16.mxu0 0
        %429 = vmatmul.mubr.bf16.gmra.mrb[0].mxu0 %v261
        %v430 = vpop.f32.mrb[0].mxu0
        %v431 = vadd.f32 %v231, %v430
        %v432 = vpop.f32.mrb[0].mxu0
        %v433 = vpop.f32.mrb[0].mxu0
        %v434 = vadd.f32 %v231, %v433
        %v435 = vpop.f32.mrb[0].mxu0
        %436 = vmatprep.mubr.bf16.mxu0 0
        %437 = vmatmul.mubr.bf16.gmra.mrb[0].mxu0 %v264
        %v438 = vpop.f32.mrb[0].mxu0
        %v439 = vadd.f32 %v231, %v438
        %v440 = vpop.f32.mrb[0].mxu0
        %v441 = vpop.f32.mrb[0].mxu0
        %v442 = vadd.f32 %v231, %v441
        %v443 = vpop.f32.mrb[0].mxu0
        %444 = vdwg.mxu0
        %v445 = vpack.c.bf16 %v418, %v415
        %v446 = vpack.c.bf16 %v426, %v423
        %v447 = vpack.c.bf16 %v434, %v431
        %v448 = vpack.c.bf16 %v442, %v439
        %v453 = vunpack.c.l.b16 %v445
        %v454 = vunpack.c.h.b16 %v445
        %v455 = vunpack.c.l.b16 %v446
        %v456 = vunpack.c.h.b16 %v446
        %v457 = vunpack.c.l.b16 %v447
        %v458 = vunpack.c.h.b16 %v447
        %v459 = vunpack.c.l.b16 %v448
        %v460 = vunpack.c.h.b16 %v448
        %v461 = vpack.c.b16 %v453, %v453
        %v462 = vpack.c.b16 %v454, %v454
        %v463 = vpack.c.b16 %v455, %v455
        %v464 = vpack.c.b16 %v456, %v456
        %v465 = vpack.c.b16 %v457, %v457
        %v466 = vpack.c.b16 %v458, %v458
        %v467 = vpack.c.b16 %v459, %v459
        %v468 = vpack.c.b16 %v460, %v460
        %s477 = scalar_lea.vmem %s215, 32 [#allocation8]
        %478 = vst [vmem:[%s477] sm:$0xf] %v461
        %479 = vst [vmem:[%s477 + $0x4] sm:$0xf] %v462
        %480 = vst [vmem:[%s477 + $0x8] sm:$0xf] %v463
        %481 = vst [vmem:[%s477 + $0xc] sm:$0xf] %v464
        %482 = vst [vmem:[%s477 + $0x10] sm:$0xf] %v465
        %483 = vst [vmem:[%s477 + $0x14] sm:$0xf] %v466
        %484 = vst [vmem:[%s477 + $0x18] sm:$0xf] %v467
        %485 = vst [vmem:[%s477 + $0x1c] sm:$0xf] %v468
        %s486 = scalar_lea.vmem [#allocation5], 8
        %v487 = vld [vmem:[%s486] sm:$0xf]
        %v489 = vsel %vm266, %v487, 0
        %491 = vmatprep.subr.bf16.mxu0 0
        %492 = vmatpush1.bf16.msra.mxu0 %v489
        %493 = vmatprep.subr.bf16.mxu0 0
        %494 = vmatpush1.bf16.msra.mxu0 0
        %495 = vmatprep.subr.bf16.mxu0 0
        %496 = vmatpush1.bf16.msra.mxu0 0
        %497 = vmatprep.subr.bf16.mxu0 0
        %498 = vmatpush1.bf16.msra.mxu0 0
        %499 = vmatprep.subr.bf16.mxu0 0
        %500 = vmatpush1.bf16.msra.mxu0 0
        %501 = vmatprep.subr.bf16.mxu0 0
        %502 = vmatpush1.bf16.msra.mxu0 0
        %503 = vmatprep.subr.bf16.mxu0 0
        %504 = vmatpush1.bf16.msra.mxu0 0
        %505 = vmatprep.subr.bf16.mxu0 0
        %506 = vmatpush1.bf16.msra.mxu0 0
        %507 = vmatprep.subr.bf16.mxu0 0
        %508 = vmatpush1.bf16.msra.mxu0 0
        %509 = vmatprep.subr.bf16.mxu0 0
        %510 = vmatpush1.bf16.msra.mxu0 0
        %511 = vmatprep.subr.bf16.mxu0 0
        %512 = vmatpush1.bf16.msra.mxu0 0
        %513 = vmatprep.subr.bf16.mxu0 0
        %514 = vmatpush1.bf16.msra.mxu0 0
        %515 = vmatprep.subr.bf16.mxu0 0
        %516 = vmatpush1.bf16.msra.mxu0 0
        %517 = vmatprep.subr.bf16.mxu0 0
        %518 = vmatpush1.bf16.msra.mxu0 0
        %519 = vmatprep.subr.bf16.mxu0 0
        %520 = vmatpush1.bf16.msra.mxu0 0
        %521 = vmatprep.subr.bf16.mxu0 0
        %522 = vmatpush1.bf16.msra.mxu0 0
        %523 = vmatprep.mubr.bf16.mxu0 0
        %524 = vmatmul.mubr.bf16.gmra.mrb[0].mxu0 %v255
        %v525 = vpop.f32.mrb[0].mxu0
        %v526 = vadd.f32 %v231, %v525
        %v527 = vpop.f32.mrb[0].mxu0
        %v528 = vpop.f32.mrb[0].mxu0
        %v529 = vadd.f32 %v231, %v528
        %v530 = vpop.f32.mrb[0].mxu0
        %531 = vmatprep.mubr.bf16.mxu0 0
        %532 = vmatmul.mubr.bf16.gmra.mrb[0].mxu0 %v258
        %v533 = vpop.f32.mrb[0].mxu0
        %v534 = vadd.f32 %v231, %v533
        %v535 = vpop.f32.mrb[0].mxu0
        %v536 = vpop.f32.mrb[0].mxu0
        %v537 = vadd.f32 %v231, %v536
        %v538 = vpop.f32.mrb[0].mxu0
        %539 = vmatprep.mubr.bf16.mxu0 0
        %540 = vmatmul.mubr.bf16.gmra.mrb[0].mxu0 %v261
        %v541 = vpop.f32.mrb[0].mxu0
        %v542 = vadd.f32 %v231, %v541
        %v543 = vpop.f32.mrb[0].mxu0
        %v544 = vpop.f32.mrb[0].mxu0
        %v545 = vadd.f32 %v231, %v544
        %v546 = vpop.f32.mrb[0].mxu0
        %547 = vmatprep.mubr.bf16.mxu0 0
        %548 = vmatmul.mubr.bf16.gmra.mrb[0].mxu0 %v264
        %v549 = vpop.f32.mrb[0].mxu0
        %v550 = vadd.f32 %v231, %v549
        %v551 = vpop.f32.mrb[0].mxu0
        %v552 = vpop.f32.mrb[0].mxu0
        %v553 = vadd.f32 %v231, %v552
        %v554 = vpop.f32.mrb[0].mxu0
        %555 = vdwg.mxu0
        %v556 = vpack.c.bf16 %v529, %v526
        %v557 = vpack.c.bf16 %v537, %v534
        %v558 = vpack.c.bf16 %v545, %v542
        %v559 = vpack.c.bf16 %v553, %v550
        %v564 = vunpack.c.l.b16 %v556
        %v565 = vunpack.c.h.b16 %v556
        %v566 = vunpack.c.l.b16 %v557
        %v567 = vunpack.c.h.b16 %v557
        %v568 = vunpack.c.l.b16 %v558
        %v569 = vunpack.c.h.b16 %v558
        %v570 = vunpack.c.l.b16 %v559
        %v571 = vunpack.c.h.b16 %v559
        %v572 = vpack.c.b16 %v564, %v564
        %v573 = vpack.c.b16 %v565, %v565
        %v574 = vpack.c.b16 %v566, %v566
        %v575 = vpack.c.b16 %v567, %v567
        %v576 = vpack.c.b16 %v568, %v568
        %v577 = vpack.c.b16 %v569, %v569
        %v578 = vpack.c.b16 %v570, %v570
        %v579 = vpack.c.b16 %v571, %v571
        %s588 = scalar_lea.vmem %s215, 64 [#allocation8]
        %589 = vst [vmem:[%s588] sm:$0xf] %v572
        %590 = vst [vmem:[%s588 + $0x4] sm:$0xf] %v573
        %591 = vst [vmem:[%s588 + $0x8] sm:$0xf] %v574
        %592 = vst [vmem:[%s588 + $0xc] sm:$0xf] %v575
        %593 = vst [vmem:[%s588 + $0x10] sm:$0xf] %v576
        %594 = vst [vmem:[%s588 + $0x14] sm:$0xf] %v577
        %595 = vst [vmem:[%s588 + $0x18] sm:$0xf] %v578
        %596 = vst [vmem:[%s588 + $0x1c] sm:$0xf] %v579
        %s597 = scalar_lea.vmem [#allocation5], 12
        %v598 = vld [vmem:[%s597] sm:$0xf]
        %v600 = vsel %vm266, %v598, 0
        %602 = vmatprep.subr.bf16.mxu0 0
        %603 = vmatpush1.bf16.msra.mxu0 %v600
        %604 = vmatprep.subr.bf16.mxu0 0
        %605 = vmatpush1.bf16.msra.mxu0 0
        %606 = vmatprep.subr.bf16.mxu0 0
        %607 = vmatpush1.bf16.msra.mxu0 0
        %608 = vmatprep.subr.bf16.mxu0 0
        %609 = vmatpush1.bf16.msra.mxu0 0
        %610 = vmatprep.subr.bf16.mxu0 0
        %611 = vmatpush1.bf16.msra.mxu0 0
        %612 = vmatprep.subr.bf16.mxu0 0
        %613 = vmatpush1.bf16.msra.mxu0 0
        %614 = vmatprep.subr.bf16.mxu0 0
        %615 = vmatpush1.bf16.msra.mxu0 0
        %616 = vmatprep.subr.bf16.mxu0 0
        %617 = vmatpush1.bf16.msra.mxu0 0
        %618 = vmatprep.subr.bf16.mxu0 0
        %619 = vmatpush1.bf16.msra.mxu0 0
        %620 = vmatprep.subr.bf16.mxu0 0
        %621 = vmatpush1.bf16.msra.mxu0 0
        %622 = vmatprep.subr.bf16.mxu0 0
        %623 = vmatpush1.bf16.msra.mxu0 0
        %624 = vmatprep.subr.bf16.mxu0 0
        %625 = vmatpush1.bf16.msra.mxu0 0
        %626 = vmatprep.subr.bf16.mxu0 0
        %627 = vmatpush1.bf16.msra.mxu0 0
        %628 = vmatprep.subr.bf16.mxu0 0
        %629 = vmatpush1.bf16.msra.mxu0 0
        %630 = vmatprep.subr.bf16.mxu0 0
        %631 = vmatpush1.bf16.msra.mxu0 0
        %632 = vmatprep.subr.bf16.mxu0 0
        %633 = vmatpush1.bf16.msra.mxu0 0
        %634 = vmatprep.mubr.bf16.mxu0 0
        %635 = vmatmul.mubr.bf16.gmra.mrb[0].mxu0 %v255
        %v636 = vpop.f32.mrb[0].mxu0
        %v637 = vadd.f32 %v231, %v636
        %v638 = vpop.f32.mrb[0].mxu0
        %v639 = vpop.f32.mrb[0].mxu0
        %v640 = vadd.f32 %v231, %v639
        %v641 = vpop.f32.mrb[0].mxu0
        %642 = vmatprep.mubr.bf16.mxu0 0
        %643 = vmatmul.mubr.bf16.gmra.mrb[0].mxu0 %v258
        %v644 = vpop.f32.mrb[0].mxu0
        %v645 = vadd.f32 %v231, %v644
        %v646 = vpop.f32.mrb[0].mxu0
        %v647 = vpop.f32.mrb[0].mxu0
        %v648 = vadd.f32 %v231, %v647
        %v649 = vpop.f32.mrb[0].mxu0
        %650 = vmatprep.mubr.bf16.mxu0 0
        %651 = vmatmul.mubr.bf16.gmra.mrb[0].mxu0 %v261
        %v652 = vpop.f32.mrb[0].mxu0
        %v653 = vadd.f32 %v231, %v652
        %v654 = vpop.f32.mrb[0].mxu0
        %v655 = vpop.f32.mrb[0].mxu0
        %v656 = vadd.f32 %v231, %v655
        %v657 = vpop.f32.mrb[0].mxu0
        %658 = vmatprep.mubr.bf16.mxu0 0
        %659 = vmatmul.mubr.bf16.gmra.mrb[0].mxu0 %v264
        %v660 = vpop.f32.mrb[0].mxu0
        %v661 = vadd.f32 %v231, %v660
        %v662 = vpop.f32.mrb[0].mxu0
        %v663 = vpop.f32.mrb[0].mxu0
        %v664 = vadd.f32 %v231, %v663
        %v665 = vpop.f32.mrb[0].mxu0
        %666 = vdwg.mxu0
        %v667 = vpack.c.bf16 %v640, %v637
        %v668 = vpack.c.bf16 %v648, %v645
        %v669 = vpack.c.bf16 %v656, %v653
        %v670 = vpack.c.bf16 %v664, %v661
        %v675 = vunpack.c.l.b16 %v667
        %v676 = vunpack.c.h.b16 %v667
        %v677 = vunpack.c.l.b16 %v668
        %v678 = vunpack.c.h.b16 %v668
        %v679 = vunpack.c.l.b16 %v669
        %v680 = vunpack.c.h.b16 %v669
        %v681 = vunpack.c.l.b16 %v670
        %v682 = vunpack.c.h.b16 %v670
        %v683 = vpack.c.b16 %v675, %v675
        %v684 = vpack.c.b16 %v676, %v676
        %v685 = vpack.c.b16 %v677, %v677
        %v686 = vpack.c.b16 %v678, %v678
        %v687 = vpack.c.b16 %v679, %v679
        %v688 = vpack.c.b16 %v680, %v680
        %v689 = vpack.c.b16 %v681, %v681
        %v690 = vpack.c.b16 %v682, %v682
        %s699 = scalar_lea.vmem %s215, 96 [#allocation8]
        %700 = vst [vmem:[%s699] sm:$0xf] %v683
        %701 = vst [vmem:[%s699 + $0x4] sm:$0xf] %v684
        %702 = vst [vmem:[%s699 + $0x8] sm:$0xf] %v685
        %703 = vst [vmem:[%s699 + $0xc] sm:$0xf] %v686
        %704 = vst [vmem:[%s699 + $0x10] sm:$0xf] %v687
        %705 = vst [vmem:[%s699 + $0x14] sm:$0xf] %v688
        %706 = vst [vmem:[%s699 + $0x18] sm:$0xf] %v689
        %707 = vst [vmem:[%s699 + $0x1c] sm:$0xf] %v690
        %s708 = sand.u32 %s97, 1
        %s709 = scalar_lea.sflag [#allocation4], %s708
        %s710 = sand.u32 %s97, 1
        %s711 = smul.addr %s710, 128
        %s712 = scalar_lea.vmem [#allocation8], %s711
        // Predicated region
        $region45: #{decoder_forward.3} parent=31 // pred_check
          %p713 = pneg %p107
        $region46: #{decoder_forward.3} parent=31 // pred_check_branch
          %715 = sbr.rel (%p713) target = $region48
        $region47: #{decoder_forward.3} parent=31 // pred_region
          %s717 = ssub.s32 2048, 2048
          %718 = vsyncadd %s709, %s717
          %s719 = smul.addr %s21, 32
          %s720 = smul.addr %s719, 64
          %s721 = scalar_lea.hbm %s3, %s720
          %s722 = sshll.u32 %s712, 4
          %s723 = int_to_ptr.vmem [resolvable:$true] %s722
          %728 = dma.vmem_to_hbm [thread:$0]  %s723, 2048, %s721, %s709, 64, 64, 4
        $region48: #{decoder_forward.3} parent=31 // pred_fallthru
          _
      $region32: #{decoder_forward.3} parent=5 // pred_fallthru
        _
      %p729 = scmp.le.s32.totalorder 2, %s16
      // Predicated region
      $region49: #{decoder_forward.3} parent=5 // pred_check
        %p730 = pneg %p729
      $region50: #{decoder_forward.3} parent=5 // pred_check_branch
        %732 = sbr.rel (%p730) target = $region52
      $region51: #{decoder_forward.3} parent=5 // pred_region
        %s733 = ssub.s32 %s16, 2
        // Predicated region
        $region53: #{decoder_forward.3} parent=51 // pred_check
          %p734 = pneg %p113
        $region54: #{decoder_forward.3} parent=51 // pred_check_branch
          %736 = sbr.rel (%p734) target = $region56
        $region55: #{decoder_forward.3} parent=51 // pred_region
          %s737 = sand.u32 %s98, 1
          %s738 = scalar_lea.sflag [#allocation4], %s737
          %s739 = sand.u32 %s98, 1
          %s740 = smul.addr %s739, 128
          %s741 = scalar_lea.vmem [#allocation8], %s740
          %742 = dma.done %s738, 2048
        $region56: #{decoder_forward.3} parent=51 // pred_fallthru
          _
      $region52: #{decoder_forward.3} parent=5 // pred_fallthru
        _
    $region6: #{decoder_forward.3} parent=1 // loop_footer
      %s20 = sadd.s32 1, %s16
    $region7: #{decoder_forward.3} parent=1 // loop_footer_branch
      %15 = sbr.rel target = $region3
    $region8: #{decoder_forward.3} parent=1 // loop_exit
      _
    %743 = vsyncpa [#allocation3], 1
    %s744 = scalar_lea.sflag [#allocation3], 1
    %745 = vsyncpa %s744, 1
    %746 = vsyncpa [#allocation6], 1
    %747 = vsyncpa [#allocation4], 1
    %s748 = scalar_lea.sflag [#allocation4], 1
    %749 = vsyncpa %s748, 1

// kernel: decoder_forward.5
$region0: #{decoder_forward.5}
  #allocation0 [shape = 'u32[]', space=smem, size = 0x4, offset = 0x4, fixed_abs, tag = 'smem constant byte address 0x4 - core index']
  #allocation1 [shape = 'u32[144,128]{1,0:T(1,128)}', space=vmem, size = 0x12000, scoped, tag = 'internal scratch']
  %s0 = inlined_call_operand.hbm [shape: bf16[2,222,128], index: 0, kind: input, shape index: {}]
  %s1 = inlined_call_operand.hbm [shape: bf16[3,3,128,128], index: 1, kind: input, shape index: {}]
  %s2 = inlined_call_operand.hbm [shape: f32[1,128], index: 2, kind: input, shape index: {}]
  %s3 = inlined_call_operand.hbm [shape: bf16[2,188,128], index: 3, kind: output, shape index: {}]
  %s4 = sld [smem:[#allocation0]]
  $region57: #{decoder_forward.5} parent=0
    _
  %s6 = ssub.s32 1, %s4
  %s7 = scalar_select 0, %s6, %s4
  $region1: #{decoder_forward.5} parent=0
    #allocation2 [shape = 'u8[114688]{0}', space=vmem, size = 0x1c000, scoped, tag = 'input window, operand 0']
    #allocation3 [shape = 's32[2]{0}', space=sflag, size = 0x8, scoped, tag = 'scoped memory for decoder_forward.5']
    #allocation4 [shape = 's32[2]{0}', space=sflag, size = 0x8, scoped, tag = 'scoped memory for decoder_forward.5']
    #allocation5 [shape = 'u8[294912]{0}', space=vmem, size = 0x48000, scoped, tag = 'input window, operand 1, single buffered']
    #allocation6 [shape = 's32[1]{0}', space=sflag, size = 0x4, scoped, tag = 'scoped memory for decoder_forward.5']
    #allocation7 [shape = 'u8[512]{0}', space=vmem, size = 0x400, scoped, tag = 'input window, operand 2, single buffered']
    #allocation8 [shape = 'u8[98304]{0}', space=vmem, size = 0x18000, scoped, tag = 'output window, operand 0']
    %8 = vsyncpa [#allocation3], 0
    %s9 = scalar_lea.sflag [#allocation3], 1
    %10 = vsyncpa %s9, 0
    %11 = vsyncpa [#allocation6], 0
    %12 = vsyncpa [#allocation4], 0
    %s13 = scalar_lea.sflag [#allocation4], 1
    %14 = vsyncpa %s13, 0
    loop: start=0, step=1, limit=4
    $region2: #{decoder_forward.5} parent=1 // loop_pre_header
      _
    $region3: #{decoder_forward.5} parent=1 // loop_header
      %s16 = sphi 0, %s20
      %p17 = scmp.ge.s32.totalorder %s16, 4
      %s26 = sphi 0, %s28
      %s29 = sphi 0, %s26
      %s30 = sphi 0, %s29
      %s46 = sphi 0, %s30
      %s50 = sphi 0, %s50
      %s52 = sphi 0, %s50
      %s53 = sphi 0, %s52
      %s67 = sphi 0, %s53
      %s71 = sphi 0, %s71
      %s73 = sphi 0, %s71
      %s74 = sphi 0, %s73
      %s88 = sphi 0, %s74
      %s94 = sphi 0, %s96
      %s97 = sphi 0, %s94
      %s98 = sphi 0, %s97
      %s114 = sphi 0, %s98
    $region4: #{decoder_forward.5} parent=1 // loop_header_branch
      %19 = sbr.rel (%p17) target = $region8
    $region5: #{decoder_forward.5} parent=1 // loop_body
      %s21 = ssub.s32 %s16, 1
      %s22 = ssub.s32 %s16, 2
      %s23 = sadd.s32 %s16, 1
      %s24 = ssub.s32 %s16, %s23
      %p25 = scmp.eq.s32.totalorder %s24, 0
      %s27 = sadd.s32 %s26, 1
      %s28 = scalar_select %p25, %s26, %s27
      %p31 = pneg %p25
      %p32 = scmp.eq.s32.totalorder %s16, 1
      %p33 = por %p31, %p32
      %p34 = scmp.ne.s32.totalorder %s26, %s29
      %p35 = scmp.eq.s32.totalorder %s16, 0
      %p36 = por %p34, %p35
      %p37 = scmp.ne.s32.totalorder %s26, %s29
      %p38 = scmp.eq.s32.totalorder %s21, 1
      %p39 = por %p37, %p38
      %p40 = scmp.ne.s32.totalorder %s29, %s30
      %p41 = scmp.eq.s32.totalorder %s21, 0
      %p42 = por %p40, %p41
      %p43 = scmp.ne.s32.totalorder %s29, %s30
      %p44 = scmp.eq.s32.totalorder %s22, 1
      %p45 = por %p43, %p44
      %p47 = scmp.ne.s32.totalorder %s30, %s46
      %p48 = scmp.eq.s32.totalorder %s22, 0
      %p49 = por %p47, %p48
      %s51 = sadd.s32 %s50, 1
      %p54 = scmp.eq.s32.totalorder %s16, 1
      %p55 = scmp.ne.s32.totalorder %s50, %s52
      %p56 = scmp.eq.s32.totalorder %s16, 0
      %p57 = por %p55, %p56
      %p58 = scmp.ne.s32.totalorder %s50, %s52
      %p59 = scmp.eq.s32.totalorder %s21, 1
      %p60 = por %p58, %p59
      %p61 = scmp.ne.s32.totalorder %s52, %s53
      %p62 = scmp.eq.s32.totalorder %s21, 0
      %p63 = por %p61, %p62
      %p64 = scmp.ne.s32.totalorder %s52, %s53
      %p65 = scmp.eq.s32.totalorder %s22, 1
      %p66 = por %p64, %p65
      %p68 = scmp.ne.s32.totalorder %s53, %s67
      %p69 = scmp.eq.s32.totalorder %s22, 0
      %p70 = por %p68, %p69
      %s72 = sadd.s32 %s71, 1
      %p75 = scmp.eq.s32.totalorder %s16, 1
      %p76 = scmp.ne.s32.totalorder %s71, %s73
      %p77 = scmp.eq.s32.totalorder %s16, 0
      %p78 = por %p76, %p77
      %p79 = scmp.ne.s32.totalorder %s71, %s73
      %p80 = scmp.eq.s32.totalorder %s21, 1
      %p81 = por %p79, %p80
      %p82 = scmp.ne.s32.totalorder %s73, %s74
      %p83 = scmp.eq.s32.totalorder %s21, 0
      %p84 = por %p82, %p83
      %p85 = scmp.ne.s32.totalorder %s73, %s74
      %p86 = scmp.eq.s32.totalorder %s22, 1
      %p87 = por %p85, %p86
      %p89 = scmp.ne.s32.totalorder %s74, %s88
      %p90 = scmp.eq.s32.totalorder %s22, 0
      %p91 = por %p89, %p90
      %s92 = ssub.s32 %s16, %s23
      %p93 = scmp.eq.s32.totalorder %s92, 0
      %s95 = sadd.s32 %s94, 1
      %s96 = scalar_select %p93, %s94, %s95
      %p99 = pneg %p93
      %p100 = scmp.eq.s32.totalorder %s16, 1
      %p101 = por %p99, %p100
      %p102 = scmp.ne.s32.totalorder %s94, %s97
      %p103 = scmp.eq.s32.totalorder %s16, 0
      %p104 = por %p102, %p103
      %p105 = scmp.ne.s32.totalorder %s94, %s97
      %p106 = scmp.eq.s32.totalorder %s21, 1
      %p107 = por %p105, %p106
      %p108 = scmp.ne.s32.totalorder %s97, %s98
      %p109 = scmp.eq.s32.totalorder %s21, 0
      %p110 = por %p108, %p109
      %p111 = scmp.ne.s32.totalorder %s97, %s98
      %p112 = scmp.eq.s32.totalorder %s22, 1
      %p113 = por %p111, %p112
      %p115 = scmp.ne.s32.totalorder %s98, %s114
      %p116 = scmp.eq.s32.totalorder %s22, 0
      %p117 = por %p115, %p116
      %p118 = scmp.le.s32.totalorder 1, %s16
      %p119 = scmp.lt.s32.totalorder %s16, 3
      %p120 = pnand %p118, %p119
      %p121 = pneg %p120
      // Predicated region
      $region9: #{decoder_forward.5} parent=5 // pred_check
        _
      $region10: #{decoder_forward.5} parent=5 // pred_check_branch
        %123 = sbr.rel (%p120) target = $region12
      $region11: #{decoder_forward.5} parent=5 // pred_region
        %s124 = ssub.s32 %s16, 1
        // Predicated region
        $region13: #{decoder_forward.5} parent=11 // pred_check
          %p125 = pneg %p63
        $region14: #{decoder_forward.5} parent=11 // pred_check_branch
          %127 = sbr.rel (%p125) target = $region16
        $region15: #{decoder_forward.5} parent=11 // pred_region
          %s129 = ssub.s32 9216, 9216
          %130 = vsyncadd [#allocation6], %s129
          %s131 = sshll.u32 [#allocation5], 4
          %s132 = int_to_ptr.vmem [resolvable:$true] %s131
          %137 = dma.hbm_to_vmem [thread:$0]  %s1, 9216, %s132, [#allocation6], 64, 64, 4
        $region16: #{decoder_forward.5} parent=11 // pred_fallthru
          _
        // Predicated region
        $region17: #{decoder_forward.5} parent=11 // pred_check
          %p138 = pneg %p84
        $region18: #{decoder_forward.5} parent=11 // pred_check_branch
          %140 = sbr.rel (%p138) target = $region20
        $region19: #{decoder_forward.5} parent=11 // pred_region
          %s142 = ssub.s32 16, 16
          %143 = vsyncadd [#allocation6], %s142
          %s145 = sshll.u32 [#allocation7], 4
          %s146 = int_to_ptr.vmem [resolvable:$true] %s145
          %148 = dma.hbm_to_vmem [thread:$0]  %s2, 16, %s146, [#allocation6]
        $region20: #{decoder_forward.5} parent=11 // pred_fallthru
          _
      $region12: #{decoder_forward.5} parent=5 // pred_fallthru
        _
      %p149 = scmp.lt.s32.totalorder %s16, 2
      // Predicated region
      $region21: #{decoder_forward.5} parent=5 // pred_check
        %p150 = pneg %p149
      $region22: #{decoder_forward.5} parent=5 // pred_check_branch
        %152 = sbr.rel (%p150) target = $region24
      $region23: #{decoder_forward.5} parent=5 // pred_region
        // Predicated region
        $region25: #{decoder_forward.5} parent=23 // pred_check
          %p153 = pneg %p36
        $region26: #{decoder_forward.5} parent=23 // pred_check_branch
          %155 = sbr.rel (%p153) target = $region28
        $region27: #{decoder_forward.5} parent=23 // pred_region
          %s156 = sand.u32 %s26, 1
          %s157 = scalar_lea.sflag [#allocation3], %s156
          %s158 = sand.u32 %s26, 1
          %s159 = smul.addr %s158, 112
          %s160 = scalar_lea.vmem [#allocation2], %s159
          %s162 = ssub.s32 1792, 1792
          %163 = vsyncadd %s157, %s162
          %s164 = smul.addr %s16, 28
          %s165 = smul.addr %s164, 64
          %s166 = scalar_lea.hbm %s0, %s165
          %s167 = sshll.u32 %s160, 4
          %s168 = int_to_ptr.vmem [resolvable:$true] %s167
          %173 = dma.hbm_to_vmem [thread:$0]  %s166, 1792, %s168, %s157, 64, 64, 4
        $region28: #{decoder_forward.5} parent=23 // pred_fallthru
          _
      $region24: #{decoder_forward.5} parent=5 // pred_fallthru
        _
      %p174 = scmp.le.s32.totalorder 1, %s16
      %p175 = scmp.lt.s32.totalorder %s16, 3
      %p176 = pnand %p174, %p175
      %p177 = pneg %p176
      // Predicated region
      $region29: #{decoder_forward.5} parent=5 // pred_check
        _
      $region30: #{decoder_forward.5} parent=5 // pred_check_branch
        %179 = sbr.rel (%p176) target = $region32
      $region31: #{decoder_forward.5} parent=5 // pred_region
        %s180 = ssub.s32 %s16, 1
        %s181 = sand.u32 %s29, 1
        %s182 = scalar_lea.sflag [#allocation3], %s181
        %s183 = sand.u32 %s29, 1
        %s184 = smul.addr %s183, 112
        %s185 = scalar_lea.vmem [#allocation2], %s184
        // Predicated region
        $region33: #{decoder_forward.5} parent=31 // pred_check
          %p186 = pneg %p42
        $region34: #{decoder_forward.5} parent=31 // pred_check_branch
          %188 = sbr.rel (%p186) target = $region36
        $region35: #{decoder_forward.5} parent=31 // pred_region
          %189 = dma.done %s182, 1792
        $region36: #{decoder_forward.5} parent=31 // pred_fallthru
          _
        // Predicated region
        $region37: #{decoder_forward.5} parent=31 // pred_check
          %p190 = pneg %p63
        $region38: #{decoder_forward.5} parent=31 // pred_check_branch
          %192 = sbr.rel (%p190) target = $region40
        $region39: #{decoder_forward.5} parent=31 // pred_region
          %193 = dma.done [#allocation6], 9216
        $region40: #{decoder_forward.5} parent=31 // pred_fallthru
          _
        // Predicated region
        $region41: #{decoder_forward.5} parent=31 // pred_check
          %p194 = pneg %p84
        $region42: #{decoder_forward.5} parent=31 // pred_check_branch
          %196 = sbr.rel (%p194) target = $region44
        $region43: #{decoder_forward.5} parent=31 // pred_region
          %197 = dma.done [#allocation6], 16
        $region44: #{decoder_forward.5} parent=31 // pred_fallthru
          _
        %s198 = sand.u32 %s29, 1
        %s199 = scalar_lea.sflag [#allocation3], %s198
        %s200 = sand.u32 %s29, 1
        %s201 = smul.addr %s200, 112
        %s202 = scalar_lea.vmem [#allocation2], %s201
        %p203 = pneg %p42
        %p204 = pneg %p39
        %p205 = pneg %p63
        %p206 = pneg %p60
        %p207 = pneg %p84
        %p208 = pneg %p81
        %p209 = pneg %p110
        %p210 = pneg %p107
        %s211 = sand.u32 %s97, 1
        %s212 = scalar_lea.sflag [#allocation4], %s211
        %s213 = sand.u32 %s97, 1
        %s214 = smul.addr %s213, 96
        %s215 = scalar_lea.vmem [#allocation8], %s214
        %v217 = vld [vmem:[#allocation7] sm:$0x1]
        %v219 = vlaneseq
        %v220 = vshrl.u32 %v219, 7
        %v221 = vsub.s32 0, %v220
        %v222 = vrot.slane %v217, %v221
        %v224 = vadd.f32 %v222, 0.0
        %v225 = vld [vmem:[%s185] sm:$0xf]
        %v226 = vld [vmem:[%s185 + $0x4] sm:$0xf]
        %v227 = vld [vmem:[%s185 + $0x8] sm:$0xf]
        %v228 = vld [vmem:[%s185 + $0xc] sm:$0xf]
        %v229 = vld [vmem:[%s185 + $0x10] sm:$0xf]
        %v230 = vld [vmem:[%s185 + $0x14] sm:$0xf]
        %v231 = vld [vmem:[%s185 + $0x18] sm:$0xf]
        %v232 = vld [vmem:[%s185 + $0x1c] sm:$0xf]
        %v233 = vld [vmem:[%s185 + $0x20] sm:$0xf]
        %v234 = vld [vmem:[%s185 + $0x24] sm:$0xf]
        %v235 = vld [vmem:[%s185 + $0x28] sm:$0xf]
        %v236 = vld [vmem:[%s185 + $0x2c] sm:$0xf]
        %v237 = vld [vmem:[%s185 + $0x30] sm:$0xf]
        %v238 = vld [vmem:[%s185 + $0x34] sm:$0xf]
        %v239 = vld [vmem:[%s185 + $0x38] sm:$0xf]
        %v240 = vld [vmem:[%s185 + $0x3c] sm:$0xf]
        %v241 = vld [vmem:[%s185 + $0x40] sm:$0xf]
        %v242 = vld [vmem:[%s185 + $0x44] sm:$0xf]
        %v243 = vld [vmem:[%s185 + $0x48] sm:$0xf]
        %v244 = vld [vmem:[%s185 + $0x4c] sm:$0xf]
        %v245 = vld [vmem:[%s185 + $0x50] sm:$0xf]
        %v246 = vld [vmem:[%s185 + $0x54] sm:$0xf]
        %v247 = vld [vmem:[%s185 + $0x58] sm:$0xf]
        %v248 = vld [vmem:[%s185 + $0x5c] sm:$0xf]
        %v249 = vld [vmem:[%s185 + $0x60] sm:$0xf]
        %v250 = vld [vmem:[%s185 + $0x64] sm:$0xf]
        %v251 = vld [vmem:[%s185 + $0x68] sm:$0xf]
        %v252 = vld [vmem:[%s185 + $0x6c] sm:$0x7]
        %v253 = vld [vmem:[#allocation5] sm:$0xf]
        %v254 = vld [vmem:[#allocation5 + $0x4] sm:$0xf]
        %v255 = vld [vmem:[#allocation5 + $0x8] sm:$0xf]
        %v256 = vld [vmem:[#allocation5 + $0xc] sm:$0xf]
        %v257 = vld [vmem:[#allocation5 + $0x10] sm:$0xf]
        %v258 = vld [vmem:[#allocation5 + $0x14] sm:$0xf]
        %v259 = vld [vmem:[#allocation5 + $0x18] sm:$0xf]
        %v260 = vld [vmem:[#allocation5 + $0x1c] sm:$0xf]
        %v261 = vld [vmem:[#allocation5 + $0x20] sm:$0xf]
        %v262 = vld [vmem:[#allocation5 + $0x24] sm:$0xf]
        %v263 = vld [vmem:[#allocation5 + $0x28] sm:$0xf]
        %v264 = vld [vmem:[#allocation5 + $0x2c] sm:$0xf]
        %v265 = vld [vmem:[#allocation5 + $0x30] sm:$0xf]
        %v266 = vld [vmem:[#allocation5 + $0x34] sm:$0xf]
        %v267 = vld [vmem:[#allocation5 + $0x38] sm:$0xf]
        %v268 = vld [vmem:[#allocation5 + $0x3c] sm:$0xf]
        %v293 = vunpack.c.l.b16 %v225
        %v294 = vunpack.c.l.b16 %v226
        %v295 = vunpack.c.l.b16 %v227
        %v296 = vunpack.c.l.b16 %v228
        %v297 = vunpack.c.l.b16 %v229
        %v298 = vunpack.c.l.b16 %v230
        %v299 = vunpack.c.l.b16 %v231
        %v300 = vunpack.c.l.b16 %v232
        %v301 = vunpack.c.l.b16 %v233
        %v302 = vunpack.c.l.b16 %v234
        %v303 = vunpack.c.l.b16 %v235
        %v304 = vunpack.c.l.b16 %v236
        %v305 = vunpack.c.l.b16 %v237
        %v306 = vunpack.c.l.b16 %v238
        %v307 = vunpack.c.l.b16 %v239
        %v308 = vunpack.c.l.b16 %v240
        %v309 = vunpack.c.l.b16 %v241
        %v310 = vunpack.c.l.b16 %v242
        %v311 = vunpack.c.l.b16 %v243
        %v312 = vunpack.c.l.b16 %v244
        %v313 = vunpack.c.l.b16 %v245
        %v314 = vunpack.c.l.b16 %v246
        %v315 = vunpack.c.l.b16 %v247
        %v316 = vunpack.c.l.b16 %v248
        %v317 = vpack.c.b16 %v294, %v293
        %v318 = vpack.c.b16 %v296, %v295
        %v319 = vpack.c.b16 %v298, %v297
        %v320 = vpack.c.b16 %v300, %v299
        %v321 = vpack.c.b16 %v302, %v301
        %v322 = vpack.c.b16 %v304, %v303
        %v323 = vpack.c.b16 %v306, %v305
        %v324 = vpack.c.b16 %v308, %v307
        %v325 = vpack.c.b16 %v310, %v309
        %v326 = vpack.c.b16 %v312, %v311
        %v327 = vpack.c.b16 %v314, %v313
        %v328 = vpack.c.b16 %v316, %v315
        %v357 = vunpack.c.l.b16 %v253
        %v358 = vunpack.c.l.b16 %v254
        %v359 = vunpack.c.l.b16 %v255
        %v360 = vunpack.c.l.b16 %v256
        %v361 = vunpack.c.l.b16 %v257
        %v362 = vunpack.c.l.b16 %v258
        %v363 = vunpack.c.l.b16 %v259
        %v364 = vunpack.c.l.b16 %v260
        %v365 = vunpack.c.l.b16 %v261
        %v366 = vunpack.c.l.b16 %v262
        %v367 = vunpack.c.l.b16 %v263
        %v368 = vunpack.c.l.b16 %v264
        %v369 = vunpack.c.l.b16 %v265
        %v370 = vunpack.c.l.b16 %v266
        %v371 = vunpack.c.l.b16 %v267
        %v372 = vunpack.c.l.b16 %v268
        %v373 = vpack.c.b16 %v358, %v357
        %v374 = vpack.c.b16 %v360, %v359
        %v375 = vpack.c.b16 %v362, %v361
        %v376 = vpack.c.b16 %v364, %v363
        %v377 = vpack.c.b16 %v366, %v365
        %v378 = vpack.c.b16 %v368, %v367
        %v379 = vpack.c.b16 %v370, %v369
        %v380 = vpack.c.b16 %v372, %v371
        %389 = vmatprep.subr.bf16.mxu0 0
        %390 = vmatpush1.bf16.msra.mxu0 %v373
        %391 = vmatprep.subr.bf16.mxu0 0
        %392 = vmatpush1.bf16.msra.mxu0 %v374
        %393 = vmatprep.subr.bf16.mxu0 0
        %394 = vmatpush1.bf16.msra.mxu0 %v375
        %395 = vmatprep.subr.bf16.mxu0 0
        %396 = vmatpush1.bf16.msra.mxu0 %v376
        %397 = vmatprep.subr.bf16.mxu0 0
        %398 = vmatpush1.bf16.msra.mxu0 %v377
        %399 = vmatprep.subr.bf16.mxu0 0
        %400 = vmatpush1.bf16.msra.mxu0 %v378
        %401 = vmatprep.subr.bf16.mxu0 0
        %402 = vmatpush1.bf16.msra.mxu0 %v379
        %403 = vmatprep.subr.bf16.mxu0 0
        %404 = vmatpush1.bf16.msra.mxu0 %v380
        %405 = vmatprep.subr.bf16.mxu0 0
        %406 = vmatpush1.bf16.msra.mxu0 0
        %407 = vmatprep.subr.bf16.mxu0 0
        %408 = vmatpush1.bf16.msra.mxu0 0
        %409 = vmatprep.subr.bf16.mxu0 0
        %410 = vmatpush1.bf16.msra.mxu0 0
        %411 = vmatprep.subr.bf16.mxu0 0
        %412 = vmatpush1.bf16.msra.mxu0 0
        %413 = vmatprep.subr.bf16.mxu0 0
        %414 = vmatpush1.bf16.msra.mxu0 0
        %415 = vmatprep.subr.bf16.mxu0 0
        %416 = vmatpush1.bf16.msra.mxu0 0
        %417 = vmatprep.subr.bf16.mxu0 0
        %418 = vmatpush1.bf16.msra.mxu0 0
        %419 = vmatprep.subr.bf16.mxu0 0
        %420 = vmatpush1.bf16.msra.mxu0 0
        %421 = vmatprep.mubr.bf16.mxu0 0
        %422 = vmatmul.mubr.bf16.gmra.mrb[0].mxu0 %v317
        %v423 = vpop.f32.mrb[0].mxu0
        %v424 = vadd.f32 0.0, %v423
        %v425 = vpop.f32.mrb[0].mxu0
        %v426 = vpop.f32.mrb[0].mxu0
        %v427 = vadd.f32 0.0, %v426
        %v428 = vpop.f32.mrb[0].mxu0
        %429 = vmatprep.mubr.bf16.mxu0 0
        %430 = vmatmul.mubr.bf16.gmra.mrb[0].mxu0 %v318
        %v431 = vpop.f32.mrb[0].mxu0
        %v432 = vadd.f32 0.0, %v431
        %v433 = vpop.f32.mrb[0].mxu0
        %v434 = vpop.f32.mrb[0].mxu0
        %v435 = vadd.f32 0.0, %v434
        %v436 = vpop.f32.mrb[0].mxu0
        %437 = vmatprep.mubr.bf16.mxu0 0
        %438 = vmatmul.mubr.bf16.gmra.mrb[0].mxu0 %v319
        %v439 = vpop.f32.mrb[0].mxu0
        %v440 = vadd.f32 0.0, %v439
        %v441 = vpop.f32.mrb[0].mxu0
        %v442 = vpop.f32.mrb[0].mxu0
        %v443 = vadd.f32 0.0, %v442
        %v444 = vpop.f32.mrb[0].mxu0
        %445 = vmatprep.mubr.bf16.mxu0 0
        %446 = vmatmul.mubr.bf16.gmra.mrb[0].mxu0 %v320
        %v447 = vpop.f32.mrb[0].mxu0
        %v448 = vadd.f32 0.0, %v447
        %v449 = vpop.f32.mrb[0].mxu0
        %v450 = vpop.f32.mrb[0].mxu0
        %v451 = vadd.f32 0.0, %v450
        %v452 = vpop.f32.mrb[0].mxu0
        %453 = vmatprep.mubr.bf16.mxu0 0
        %454 = vmatmul.mubr.bf16.gmra.mrb[0].mxu0 %v321
        %v455 = vpop.f32.mrb[0].mxu0
        %v456 = vadd.f32 0.0, %v455
        %v457 = vpop.f32.mrb[0].mxu0
        %v458 = vpop.f32.mrb[0].mxu0
        %v459 = vadd.f32 0.0, %v458
        %v460 = vpop.f32.mrb[0].mxu0
        %461 = vmatprep.mubr.bf16.mxu0 0
        %462 = vmatmul.mubr.bf16.gmra.mrb[0].mxu0 %v322
        %v463 = vpop.f32.mrb[0].mxu0
        %v464 = vadd.f32 0.0, %v463
        %v465 = vpop.f32.mrb[0].mxu0
        %v466 = vpop.f32.mrb[0].mxu0
        %v467 = vadd.f32 0.0, %v466
        %v468 = vpop.f32.mrb[0].mxu0
        %469 = vmatprep.mubr.bf16.mxu0 0
        %470 = vmatmul.mubr.bf16.gmra.mrb[0].mxu0 %v323
        %v471 = vpop.f32.mrb[0].mxu0
        %v472 = vadd.f32 0.0, %v471
        %v473 = vpop.f32.mrb[0].mxu0
        %v474 = vpop.f32.mrb[0].mxu0
        %v475 = vadd.f32 0.0, %v474
        %v476 = vpop.f32.mrb[0].mxu0
        %477 = vmatprep.mubr.bf16.mxu0 0
        %478 = vmatmul.mubr.bf16.gmra.mrb[0].mxu0 %v324
        %v479 = vpop.f32.mrb[0].mxu0
        %v480 = vadd.f32 0.0, %v479
        %v481 = vpop.f32.mrb[0].mxu0
        %v482 = vpop.f32.mrb[0].mxu0
        %v483 = vadd.f32 0.0, %v482
        %v484 = vpop.f32.mrb[0].mxu0
        %485 = vmatprep.mubr.bf16.mxu0 0
        %486 = vmatmul.mubr.bf16.gmra.mrb[0].mxu0 %v325
        %v487 = vpop.f32.mrb[0].mxu0
        %v488 = vadd.f32 0.0, %v487
        %v489 = vpop.f32.mrb[0].mxu0
        %v490 = vpop.f32.mrb[0].mxu0
        %v491 = vadd.f32 0.0, %v490
        %v492 = vpop.f32.mrb[0].mxu0
        %493 = vmatprep.mubr.bf16.mxu0 0
        %494 = vmatmul.mubr.bf16.gmra.mrb[0].mxu0 %v326
        %v495 = vpop.f32.mrb[0].mxu0
        %v496 = vadd.f32 0.0, %v495
        %v497 = vpop.f32.mrb[0].mxu0
        %v498 = vpop.f32.mrb[0].mxu0
        %v499 = vadd.f32 0.0, %v498
        %v500 = vpop.f32.mrb[0].mxu0
        %501 = vmatprep.mubr.bf16.mxu0 0
        %502 = vmatmul.mubr.bf16.gmra.mrb[0].mxu0 %v327
        %v503 = vpop.f32.mrb[0].mxu0
        %v504 = vadd.f32 0.0, %v503
        %v505 = vpop.f32.mrb[0].mxu0
        %v506 = vpop.f32.mrb[0].mxu0
        %v507 = vadd.f32 0.0, %v506
        %v508 = vpop.f32.mrb[0].mxu0
        %509 = vmatprep.mubr.bf16.mxu0 0
        %510 = vmatmul.mubr.bf16.gmra.mrb[0].mxu0 %v328
        %v511 = vpop.f32.mrb[0].mxu0
        %v512 = vadd.f32 0.0, %v511
        %v513 = vpop.f32.mrb[0].mxu0
        %v514 = vpop.f32.mrb[0].mxu0
        %v515 = vadd.f32 0.0, %v514
        %v516 = vpop.f32.mrb[0].mxu0
        %517 = vdwg.mxu0
        %v518 = vadd.f32 %v224, %v424
        %v519 = vadd.f32 %v224, %v427
        %v520 = vadd.f32 %v224, %v432
        %v521 = vadd.f32 %v224, %v435
        %v522 = vadd.f32 %v224, %v440
        %v523 = vadd.f32 %v224, %v443
        %v524 = vadd.f32 %v224, %v448
        %v525 = vadd.f32 %v224, %v451
        %v526 = vadd.f32 %v224, %v456
        %v527 = vadd.f32 %v224, %v459
        %v528 = vadd.f32 %v224, %v464
        %v529 = vadd.f32 %v224, %v467
        %v530 = vadd.f32 %v224, %v472
        %v531 = vadd.f32 %v224, %v475
        %v532 = vadd.f32 %v224, %v480
        %v533 = vadd.f32 %v224, %v483
        %v534 = vadd.f32 %v224, %v488
        %v535 = vadd.f32 %v224, %v491
        %v536 = vadd.f32 %v224, %v496
        %v537 = vadd.f32 %v224, %v499
        %v538 = vadd.f32 %v224, %v504
        %v539 = vadd.f32 %v224, %v507
        %v540 = vadd.f32 %v224, %v512
        %v541 = vadd.f32 %v224, %v515
        %s542 = scalar_lea.vmem [#allocation5], 64
        %v543 = vld [vmem:[%s542] sm:$0xf]
        %v544 = vld [vmem:[%s542 + $0x4] sm:$0xf]
        %v545 = vld [vmem:[%s542 + $0x8] sm:$0xf]
        %v546 = vld [vmem:[%s542 + $0xc] sm:$0xf]
        %v547 = vld [vmem:[%s542 + $0x10] sm:$0xf]
        %v548 = vld [vmem:[%s542 + $0x14] sm:$0xf]
        %v549 = vld [vmem:[%s542 + $0x18] sm:$0xf]
        %v550 = vld [vmem:[%s542 + $0x1c] sm:$0xf]
        %v551 = vld [vmem:[%s542 + $0x20] sm:$0xf]
        %v552 = vld [vmem:[%s542 + $0x24] sm:$0xf]
        %v553 = vld [vmem:[%s542 + $0x28] sm:$0xf]
        %v554 = vld [vmem:[%s542 + $0x2c] sm:$0xf]
        %v555 = vld [vmem:[%s542 + $0x30] sm:$0xf]
        %v556 = vld [vmem:[%s542 + $0x34] sm:$0xf]
        %v557 = vld [vmem:[%s542 + $0x38] sm:$0xf]
        %v558 = vld [vmem:[%s542 + $0x3c] sm:$0xf]
        %vm559 = vsmask.f32 7424
        %v561 = vshrl.u32 %v317, 16
        %v563 = vshll.u32 %v317, 16
        %v565 = vrot.slane %v563, 1
        %v566 = vor.u32 %v561, %v565
        %v568 = vshll.u32 %v318, 16
        %v570 = vrot.slane %v568, 1
        %v571 = vsel %vm559, %v566, %v570
        %v572 = vshrl.u32 %v318, 16
        %v574 = vor.u32 %v572, %v570
        %v576 = vshll.u32 %v319, 16
        %v578 = vrot.slane %v576, 1
        %v579 = vsel %vm559, %v574, %v578
        %v580 = vshrl.u32 %v319, 16
        %v582 = vor.u32 %v580, %v578
        %v584 = vshll.u32 %v320, 16
        %v586 = vrot.slane %v584, 1
        %v587 = vsel %vm559, %v582, %v586
        %v588 = vshrl.u32 %v320, 16
        %v590 = vor.u32 %v588, %v586
        %v592 = vshll.u32 %v321, 16
        %v594 = vrot.slane %v592, 1
        %v595 = vsel %vm559, %v590, %v594
        %v596 = vshrl.u32 %v321, 16
        %v598 = vor.u32 %v596, %v594
        %v600 = vshll.u32 %v322, 16
        %v602 = vrot.slane %v600, 1
        %v603 = vsel %vm559, %v598, %v602
        %v604 = vshrl.u32 %v322, 16
        %v606 = vor.u32 %v604, %v602
        %v608 = vshll.u32 %v323, 16
        %v610 = vrot.slane %v608, 1
        %v611 = vsel %vm559, %v606, %v610
        %v612 = vshrl.u32 %v323, 16
        %v614 = vor.u32 %v612, %v610
        %v616 = vshll.u32 %v324, 16
        %v618 = vrot.slane %v616, 1
        %v619 = vsel %vm559, %v614, %v618
        %v620 = vshrl.u32 %v324, 16
        %v622 = vor.u32 %v620, %v618
        %v624 = vshll.u32 %v325, 16
        %v626 = vrot.slane %v624, 1
        %v627 = vsel %vm559, %v622, %v626
        %v628 = vshrl.u32 %v325, 16
        %v630 = vor.u32 %v628, %v626
        %v632 = vshll.u32 %v326, 16
        %v634 = vrot.slane %v632, 1
        %v635 = vsel %vm559, %v630, %v634
        %v636 = vshrl.u32 %v326, 16
        %v638 = vor.u32 %v636, %v634
        %v640 = vshll.u32 %v327, 16
        %v642 = vrot.slane %v640, 1
        %v643 = vsel %vm559, %v638, %v642
        %v644 = vshrl.u32 %v327, 16
        %v646 = vor.u32 %v644, %v642
        %v648 = vshll.u32 %v328, 16
        %v650 = vrot.slane %v648, 1
        %v651 = vsel %vm559, %v646, %v650
        %v652 = vshrl.u32 %v328, 16
        %v654 = vor.u32 %v652, %v650
        %v683 = vunpack.c.l.b16 %v543
        %v684 = vunpack.c.l.b16 %v544
        %v685 = vunpack.c.l.b16 %v545
        %v686 = vunpack.c.l.b16 %v546
        %v687 = vunpack.c.l.b16 %v547
        %v688 = vunpack.c.l.b16 %v548
        %v689 = vunpack.c.l.b16 %v549
        %v690 = vunpack.c.l.b16 %v550
        %v691 = vunpack.c.l.b16 %v551
        %v692 = vunpack.c.l.b16 %v552
        %v693 = vunpack.c.l.b16 %v553
        %v694 = vunpack.c.l.b16 %v554
        %v695 = vunpack.c.l.b16 %v555
        %v696 = vunpack.c.l.b16 %v556
        %v697 = vunpack.c.l.b16 %v557
        %v698 = vunpack.c.l.b16 %v558
        %v699 = vpack.c.b16 %v684, %v683
        %v700 = vpack.c.b16 %v686, %v685
        %v701 = vpack.c.b16 %v688, %v687
        %v702 = vpack.c.b16 %v690, %v689
        %v703 = vpack.c.b16 %v692, %v691
        %v704 = vpack.c.b16 %v694, %v693
        %v705 = vpack.c.b16 %v696, %v695
        %v706 = vpack.c.b16 %v698, %v697
        %715 = vmatprep.subr.bf16.mxu0 0
        %716 = vmatpush1.bf16.msra.mxu0 %v699
        %717 = vmatprep.subr.bf16.mxu0 0
        %718 = vmatpush1.bf16.msra.mxu0 %v700
        %719 = vmatprep.subr.bf16.mxu0 0
        %720 = vmatpush1.bf16.msra.mxu0 %v701
        %721 = vmatprep.subr.bf16.mxu0 0
        %722 = vmatpush1.bf16.msra.mxu0 %v702
        %723 = vmatprep.subr.bf16.mxu0 0
        %724 = vmatpush1.bf16.msra.mxu0 %v703
        %725 = vmatprep.subr.bf16.mxu0 0
        %726 = vmatpush1.bf16.msra.mxu0 %v704
        %727 = vmatprep.subr.bf16.mxu0 0
        %728 = vmatpush1.bf16.msra.mxu0 %v705
        %729 = vmatprep.subr.bf16.mxu0 0
        %730 = vmatpush1.bf16.msra.mxu0 %v706
        %731 = vmatprep.subr.bf16.mxu0 0
        %732 = vmatpush1.bf16.msra.mxu0 0
        %733 = vmatprep.subr.bf16.mxu0 0
        %734 = vmatpush1.bf16.msra.mxu0 0
        %735 = vmatprep.subr.bf16.mxu0 0
        %736 = vmatpush1.bf16.msra.mxu0 0
        %737 = vmatprep.subr.bf16.mxu0 0
        %738 = vmatpush1.bf16.msra.mxu0 0
        %739 = vmatprep.subr.bf16.mxu0 0
        %740 = vmatpush1.bf16.msra.mxu0 0
        %741 = vmatprep.subr.bf16.mxu0 0
        %742 = vmatpush1.bf16.msra.mxu0 0
        %743 = vmatprep.subr.bf16.mxu0 0
        %744 = vmatpush1.bf16.msra.mxu0 0
        %745 = vmatprep.subr.bf16.mxu0 0
        %746 = vmatpush1.bf16.msra.mxu0 0
        %747 = vmatprep.mubr.bf16.mxu0 0
        %748 = vmatmul.mubr.bf16.gmra.mrb[0].mxu0 %v571
        %v749 = vpop.f32.mrb[0].mxu0
        %v750 = vadd.f32 0.0, %v749
        %v751 = vpop.f32.mrb[0].mxu0
        %v752 = vpop.f32.mrb[0].mxu0
        %v753 = vadd.f32 0.0, %v752
        %v754 = vpop.f32.mrb[0].mxu0
        %755 = vmatprep.mubr.bf16.mxu0 0
        %756 = vmatmul.mubr.bf16.gmra.mrb[0].mxu0 %v579
        %v757 = vpop.f32.mrb[0].mxu0
        %v758 = vadd.f32 0.0, %v757
        %v759 = vpop.f32.mrb[0].mxu0
        %v760 = vpop.f32.mrb[0].mxu0
        %v761 = vadd.f32 0.0, %v760
        %v762 = vpop.f32.mrb[0].mxu0
        %763 = vmatprep.mubr.bf16.mxu0 0
        %764 = vmatmul.mubr.bf16.gmra.mrb[0].mxu0 %v587
        %v765 = vpop.f32.mrb[0].mxu0
        %v766 = vadd.f32 0.0, %v765
        %v767 = vpop.f32.mrb[0].mxu0
        %v768 = vpop.f32.mrb[0].mxu0
        %v769 = vadd.f32 0.0, %v768
        %v770 = vpop.f32.mrb[0].mxu0
        %771 = vmatprep.mubr.bf16.mxu0 0
        %772 = vmatmul.mubr.bf16.gmra.mrb[0].mxu0 %v595
        %v773 = vpop.f32.mrb[0].mxu0
        %v774 = vadd.f32 0.0, %v773
        %v775 = vpop.f32.mrb[0].mxu0
        %v776 = vpop.f32.mrb[0].mxu0
        %v777 = vadd.f32 0.0, %v776
        %v778 = vpop.f32.mrb[0].mxu0
        %779 = vmatprep.mubr.bf16.mxu0 0
        %780 = vmatmul.mubr.bf16.gmra.mrb[0].mxu0 %v603
        %v781 = vpop.f32.mrb[0].mxu0
        %v782 = vadd.f32 0.0, %v781
        %v783 = vpop.f32.mrb[0].mxu0
        %v784 = vpop.f32.mrb[0].mxu0
        %v785 = vadd.f32 0.0, %v784
        %v786 = vpop.f32.mrb[0].mxu0
        %787 = vmatprep.mubr.bf16.mxu0 0
        %788 = vmatmul.mubr.bf16.gmra.mrb[0].mxu0 %v611
        %v789 = vpop.f32.mrb[0].mxu0
        %v790 = vadd.f32 0.0, %v789
        %v791 = vpop.f32.mrb[0].mxu0
        %v792 = vpop.f32.mrb[0].mxu0
        %v793 = vadd.f32 0.0, %v792
        %v794 = vpop.f32.mrb[0].mxu0
        %795 = vmatprep.mubr.bf16.mxu0 0
        %796 = vmatmul.mubr.bf16.gmra.mrb[0].mxu0 %v619
        %v797 = vpop.f32.mrb[0].mxu0
        %v798 = vadd.f32 0.0, %v797
        %v799 = vpop.f32.mrb[0].mxu0
        %v800 = vpop.f32.mrb[0].mxu0
        %v801 = vadd.f32 0.0, %v800
        %v802 = vpop.f32.mrb[0].mxu0
        %803 = vmatprep.mubr.bf16.mxu0 0
        %804 = vmatmul.mubr.bf16.gmra.mrb[0].mxu0 %v627
        %v805 = vpop.f32.mrb[0].mxu0
        %v806 = vadd.f32 0.0, %v805
        %v807 = vpop.f32.mrb[0].mxu0
        %v808 = vpop.f32.mrb[0].mxu0
        %v809 = vadd.f32 0.0, %v808
        %v810 = vpop.f32.mrb[0].mxu0
        %811 = vmatprep.mubr.bf16.mxu0 0
        %812 = vmatmul.mubr.bf16.gmra.mrb[0].mxu0 %v635
        %v813 = vpop.f32.mrb[0].mxu0
        %v814 = vadd.f32 0.0, %v813
        %v815 = vpop.f32.mrb[0].mxu0
        %v816 = vpop.f32.mrb[0].mxu0
        %v817 = vadd.f32 0.0, %v816
        %v818 = vpop.f32.mrb[0].mxu0
        %819 = vmatprep.mubr.bf16.mxu0 0
        %820 = vmatmul.mubr.bf16.gmra.mrb[0].mxu0 %v643
        %v821 = vpop.f32.mrb[0].mxu0
        %v822 = vadd.f32 0.0, %v821
        %v823 = vpop.f32.mrb[0].mxu0
        %v824 = vpop.f32.mrb[0].mxu0
        %v825 = vadd.f32 0.0, %v824
        %v826 = vpop.f32.mrb[0].mxu0
        %827 = vmatprep.mubr.bf16.mxu0 0
        %828 = vmatmul.mubr.bf16.gmra.mrb[0].mxu0 %v651
        %v829 = vpop.f32.mrb[0].mxu0
        %v830 = vadd.f32 0.0, %v829
        %v831 = vpop.f32.mrb[0].mxu0
        %v832 = vpop.f32.mrb[0].mxu0
        %v833 = vadd.f32 0.0, %v832
        %v834 = vpop.f32.mrb[0].mxu0
        %835 = vmatprep.mubr.bf16.mxu0 0
        %836 = vmatmul.mubr.bf16.gmra.mrb[0].mxu0 %v654
        %v837 = vpop.f32.mrb[0].mxu0
        %v838 = vadd.f32 0.0, %v837
        %v839 = vpop.f32.mrb[0].mxu0
        %v840 = vpop.f32.mrb[0].mxu0
        %v841 = vadd.f32 0.0, %v840
        %v842 = vpop.f32.mrb[0].mxu0
        %843 = vdwg.mxu0
        %v844 = vadd.f32 %v518, %v750
        %v845 = vadd.f32 %v519, %v753
        %v846 = vadd.f32 %v520, %v758
        %v847 = vadd.f32 %v521, %v761
        %v848 = vadd.f32 %v522, %v766
        %v849 = vadd.f32 %v523, %v769
        %v850 = vadd.f32 %v524, %v774
        %v851 = vadd.f32 %v525, %v777
        %v852 = vadd.f32 %v526, %v782
        %v853 = vadd.f32 %v527, %v785
        %v854 = vadd.f32 %v528, %v790
        %v855 = vadd.f32 %v529, %v793
        %v856 = vadd.f32 %v530, %v798
        %v857 = vadd.f32 %v531, %v801
        %v858 = vadd.f32 %v532, %v806
        %v859 = vadd.f32 %v533, %v809
        %v860 = vadd.f32 %v534, %v814
        %v861 = vadd.f32 %v535, %v817
        %v862 = vadd.f32 %v536, %v822
        %v863 = vadd.f32 %v537, %v825
        %v864 = vadd.f32 %v538, %v830
        %v865 = vadd.f32 %v539, %v833
        %v866 = vadd.f32 %v540, %v838
        %v867 = vadd.f32 %v541, %v841
        %s868 = scalar_lea.vmem [#allocation5], 128
        %v869 = vld [vmem:[%s868] sm:$0xf]
        %v870 = vld [vmem:[%s868 + $0x4] sm:$0xf]
        %v871 = vld [vmem:[%s868 + $0x8] sm:$0xf]
        %v872 = vld [vmem:[%s868 + $0xc] sm:$0xf]
        %v873 = vld [vmem:[%s868 + $0x10] sm:$0xf]
        %v874 = vld [vmem:[%s868 + $0x14] sm:$0xf]
        %v875 = vld [vmem:[%s868 + $0x18] sm:$0xf]
        %v876 = vld [vmem:[%s868 + $0x1c] sm:$0xf]
        %v877 = vld [vmem:[%s868 + $0x20] sm:$0xf]
        %v878 = vld [vmem:[%s868 + $0x24] sm:$0xf]
        %v879 = vld [vmem:[%s868 + $0x28] sm:$0xf]
        %v880 = vld [vmem:[%s868 + $0x2c] sm:$0xf]
        %v881 = vld [vmem:[%s868 + $0x30] sm:$0xf]
        %v882 = vld [vmem:[%s868 + $0x34] sm:$0xf]
        %v883 = vld [vmem:[%s868 + $0x38] sm:$0xf]
        %v884 = vld [vmem:[%s868 + $0x3c] sm:$0xf]
        %vm885 = vcmask 1046528
        %v886 = vrot.slane %v317, 1
        %v887 = vrot.slane %v318, 1
        %v888 = vsel %vm885, %v886, %v887
        %v889 = vrot.slane %v319, 1
        %v890 = vsel %vm885, %v887, %v889
        %v891 = vrot.slane %v320, 1
        %v892 = vsel %vm885, %v889, %v891
        %v893 = vrot.slane %v321, 1
        %v894 = vsel %vm885, %v891, %v893
        %v895 = vrot.slane %v322, 1
        %v896 = vsel %vm885, %v893, %v895
        %v897 = vrot.slane %v323, 1
        %v898 = vsel %vm885, %v895, %v897
        %v899 = vrot.slane %v324, 1
        %v900 = vsel %vm885, %v897, %v899
        %v901 = vrot.slane %v325, 1
        %v902 = vsel %vm885, %v899, %v901
        %v903 = vrot.slane %v326, 1
        %v904 = vsel %vm885, %v901, %v903
        %v905 = vrot.slane %v327, 1
        %v906 = vsel %vm885, %v903, %v905
        %v907 = vrot.slane %v328, 1
        %v908 = vsel %vm885, %v905, %v907
        %v937 = vunpack.c.l.b16 %v869
        %v938 = vunpack.c.l.b16 %v870
        %v939 = vunpack.c.l.b16 %v871
        %v940 = vunpack.c.l.b16 %v872
        %v941 = vunpack.c.l.b16 %v873
        %v942 = vunpack.c.l.b16 %v874
        %v943 = vunpack.c.l.b16 %v875
        %v944 = vunpack.c.l.b16 %v876
        %v945 = vunpack.c.l.b16 %v877
        %v946 = vunpack.c.l.b16 %v878
        %v947 = vunpack.c.l.b16 %v879
        %v948 = vunpack.c.l.b16 %v880
        %v949 = vunpack.c.l.b16 %v881
        %v950 = vunpack.c.l.b16 %v882
        %v951 = vunpack.c.l.b16 %v883
        %v952 = vunpack.c.l.b16 %v884
        %v953 = vpack.c.b16 %v938, %v937
        %v954 = vpack.c.b16 %v940, %v939
        %v955 = vpack.c.b16 %v942, %v941
        %v956 = vpack.c.b16 %v944, %v943
        %v957 = vpack.c.b16 %v946, %v945
        %v958 = vpack.c.b16 %v948, %v947
        %v959 = vpack.c.b16 %v950, %v949
        %v960 = vpack.c.b16 %v952, %v951
        %969 = vmatprep.subr.bf16.mxu0 0
        %970 = vmatpush1.bf16.msra.mxu0 %v953
        %971 = vmatprep.subr.bf16.mxu0 0
        %972 = vmatpush1.bf16.msra.mxu0 %v954
        %973 = vmatprep.subr.bf16.mxu0 0
        %974 = vmatpush1.bf16.msra.mxu0 %v955
        %975 = vmatprep.subr.bf16.mxu0 0
        %976 = vmatpush1.bf16.msra.mxu0 %v956
        %977 = vmatprep.subr.bf16.mxu0 0
        %978 = vmatpush1.bf16.msra.mxu0 %v957
        %979 = vmatprep.subr.bf16.mxu0 0
        %980 = vmatpush1.bf16.msra.mxu0 %v958
        %981 = vmatprep.subr.bf16.mxu0 0
        %982 = vmatpush1.bf16.msra.mxu0 %v959
        %983 = vmatprep.subr.bf16.mxu0 0
        %984 = vmatpush1.bf16.msra.mxu0 %v960
        %985 = vmatprep.subr.bf16.mxu0 0
        %986 = vmatpush1.bf16.msra.mxu0 0
        %987 = vmatprep.subr.bf16.mxu0 0
        %988 = vmatpush1.bf16.msra.mxu0 0
        %989 = vmatprep.subr.bf16.mxu0 0
        %990 = vmatpush1.bf16.msra.mxu0 0
        %991 = vmatprep.subr.bf16.mxu0 0
        %992 = vmatpush1.bf16.msra.mxu0 0
        %993 = vmatprep.subr.bf16.mxu0 0
        %994 = vmatpush1.bf16.msra.mxu0 0
        %995 = vmatprep.subr.bf16.mxu0 0
        %996 = vmatpush1.bf16.msra.mxu0 0
        %997 = vmatprep.subr.bf16.mxu0 0
        %998 = vmatpush1.bf16.msra.mxu0 0
        %999 = vmatprep.subr.bf16.mxu0 0
        %1000 = vmatpush1.bf16.msra.mxu0 0
        %1001 = vmatprep.mubr.bf16.mxu0 0
        %1002 = vmatmul.mubr.bf16.gmra.mrb[0].mxu0 %v888
        %v1003 = vpop.f32.mrb[0].mxu0
        %v1004 = vadd.f32 0.0, %v1003
        %v1005 = vpop.f32.mrb[0].mxu0
        %v1006 = vpop.f32.mrb[0].mxu0
        %v1007 = vadd.f32 0.0, %v1006
        %v1008 = vpop.f32.mrb[0].mxu0
        %1009 = vmatprep.mubr.bf16.mxu0 0
        %1010 = vmatmul.mubr.bf16.gmra.mrb[0].mxu0 %v890
        %v1011 = vpop.f32.mrb[0].mxu0
        %v1012 = vadd.f32 0.0, %v1011
        %v1013 = vpop.f32.mrb[0].mxu0
        %v1014 = vpop.f32.mrb[0].mxu0
        %v1015 = vadd.f32 0.0, %v1014
        %v1016 = vpop.f32.mrb[0].mxu0
        %1017 = vmatprep.mubr.bf16.mxu0 0
        %1018 = vmatmul.mubr.bf16.gmra.mrb[0].mxu0 %v892
        %v1019 = vpop.f32.mrb[0].mxu0
        %v1020 = vadd.f32 0.0, %v1019
        %v1021 = vpop.f32.mrb[0].mxu0
        %v1022 = vpop.f32.mrb[0].mxu0
        %v1023 = vadd.f32 0.0, %v1022
        %v1024 = vpop.f32.mrb[0].mxu0
        %1025 = vmatprep.mubr.bf16.mxu0 0
        %1026 = vmatmul.mubr.bf16.gmra.mrb[0].mxu0 %v894
        %v1027 = vpop.f32.mrb[0].mxu0
        %v1028 = vadd.f32 0.0, %v1027
        %v1029 = vpop.f32.mrb[0].mxu0
        %v1030 = vpop.f32.mrb[0].mxu0
        %v1031 = vadd.f32 0.0, %v1030
        %v1032 = vpop.f32.mrb[0].mxu0
        %1033 = vmatprep.mubr.bf16.mxu0 0
        %1034 = vmatmul.mubr.bf16.gmra.mrb[0].mxu0 %v896
        %v1035 = vpop.f32.mrb[0].mxu0
        %v1036 = vadd.f32 0.0, %v1035
        %v1037 = vpop.f32.mrb[0].mxu0
        %v1038 = vpop.f32.mrb[0].mxu0
        %v1039 = vadd.f32 0.0, %v1038
        %v1040 = vpop.f32.mrb[0].mxu0
        %1041 = vmatprep.mubr.bf16.mxu0 0
        %1042 = vmatmul.mubr.bf16.gmra.mrb[0].mxu0 %v898
        %v1043 = vpop.f32.mrb[0].mxu0
        %v1044 = vadd.f32 0.0, %v1043
        %v1045 = vpop.f32.mrb[0].mxu0
        %v1046 = vpop.f32.mrb[0].mxu0
        %v1047 = vadd.f32 0.0, %v1046
        %v1048 = vpop.f32.mrb[0].mxu0
        %1049 = vmatprep.mubr.bf16.mxu0 0
        %1050 = vmatmul.mubr.bf16.gmra.mrb[0].mxu0 %v900
        %v1051 = vpop.f32.mrb[0].mxu0
        %v1052 = vadd.f32 0.0, %v1051
        %v1053 = vpop.f32.mrb[0].mxu0
        %v1054 = vpop.f32.mrb[0].mxu0
        %v1055 = vadd.f32 0.0, %v1054
        %v1056 = vpop.f32.mrb[0].mxu0
        %1057 = vmatprep.mubr.bf16.mxu0 0
        %1058 = vmatmul.mubr.bf16.gmra.mrb[0].mxu0 %v902
        %v1059 = vpop.f32.mrb[0].mxu0
        %v1060 = vadd.f32 0.0, %v1059
        %v1061 = vpop.f32.mrb[0].mxu0
        %v1062 = vpop.f32.mrb[0].mxu0
        %v1063 = vadd.f32 0.0, %v1062
        %v1064 = vpop.f32.mrb[0].mxu0
        %1065 = vmatprep.mubr.bf16.mxu0 0
        %1066 = vmatmul.mubr.bf16.gmra.mrb[0].mxu0 %v904
        %v1067 = vpop.f32.mrb[0].mxu0
        %v1068 = vadd.f32 0.0, %v1067
        %v1069 = vpop.f32.mrb[0].mxu0
        %v1070 = vpop.f32.mrb[0].mxu0
        %v1071 = vadd.f32 0.0, %v1070
        %v1072 = vpop.f32.mrb[0].mxu0
        %1073 = vmatprep.mubr.bf16.mxu0 0
        %1074 = vmatmul.mubr.bf16.gmra.mrb[0].mxu0 %v906
        %v1075 = vpop.f32.mrb[0].mxu0
        %v1076 = vadd.f32 0.0, %v1075
        %v1077 = vpop.f32.mrb[0].mxu0
        %v1078 = vpop.f32.mrb[0].mxu0
        %v1079 = vadd.f32 0.0, %v1078
        %v1080 = vpop.f32.mrb[0].mxu0
        %1081 = vmatprep.mubr.bf16.mxu0 0
        %1082 = vmatmul.mubr.bf16.gmra.mrb[0].mxu0 %v908
        %v1083 = vpop.f32.mrb[0].mxu0
        %v1084 = vadd.f32 0.0, %v1083
        %v1085 = vpop.f32.mrb[0].mxu0
        %v1086 = vpop.f32.mrb[0].mxu0
        %v1087 = vadd.f32 0.0, %v1086
        %v1088 = vpop.f32.mrb[0].mxu0
        %1089 = vmatprep.mubr.bf16.mxu0 0
        %1090 = vmatmul.mubr.bf16.gmra.mrb[0].mxu0 %v907
        %v1091 = vpop.f32.mrb[0].mxu0
        %v1092 = vadd.f32 0.0, %v1091
        %v1093 = vpop.f32.mrb[0].mxu0
        %v1094 = vpop.f32.mrb[0].mxu0
        %v1095 = vadd.f32 0.0, %v1094
        %v1096 = vpop.f32.mrb[0].mxu0
        %1097 = vdwg.mxu0
        %v1098 = vadd.f32 %v844, %v1004
        %v1099 = vadd.f32 %v845, %v1007
        %v1100 = vadd.f32 %v846, %v1012
        %v1101 = vadd.f32 %v847, %v1015
        %v1102 = vadd.f32 %v848, %v1020
        %v1103 = vadd.f32 %v849, %v1023
        %v1104 = vadd.f32 %v850, %v1028
        %v1105 = vadd.f32 %v851, %v1031
        %v1106 = vadd.f32 %v852, %v1036
        %v1107 = vadd.f32 %v853, %v1039
        %v1108 = vadd.f32 %v854, %v1044
        %v1109 = vadd.f32 %v855, %v1047
        %v1110 = vadd.f32 %v856, %v1052
        %v1111 = vadd.f32 %v857, %v1055
        %v1112 = vadd.f32 %v858, %v1060
        %v1113 = vadd.f32 %v859, %v1063
        %v1114 = vadd.f32 %v860, %v1068
        %v1115 = vadd.f32 %v861, %v1071
        %v1116 = vadd.f32 %v862, %v1076
        %v1117 = vadd.f32 %v863, %v1079
        %v1118 = vadd.f32 %v864, %v1084
        %v1119 = vadd.f32 %v865, %v1087
        %v1120 = vadd.f32 %v866, %v1092
        %v1121 = vadd.f32 %v867, %v1095
        %s1122 = scalar_lea.vmem [#allocation5], 192
        %v1123 = vld [vmem:[%s1122] sm:$0xf]
        %v1124 = vld [vmem:[%s1122 + $0x4] sm:$0xf]
        %v1125 = vld [vmem:[%s1122 + $0x8] sm:$0xf]
        %v1126 = vld [vmem:[%s1122 + $0xc] sm:$0xf]
        %v1127 = vld [vmem:[%s1122 + $0x10] sm:$0xf]
        %v1128 = vld [vmem:[%s1122 + $0x14] sm:$0xf]
        %v1129 = vld [vmem:[%s1122 + $0x18] sm:$0xf]
        %v1130 = vld [vmem:[%s1122 + $0x1c] sm:$0xf]
        %v1131 = vld [vmem:[%s1122 + $0x20] sm:$0xf]
        %v1132 = vld [vmem:[%s1122 + $0x24] sm:$0xf]
        %v1133 = vld [vmem:[%s1122 + $0x28] sm:$0xf]
        %v1134 = vld [vmem:[%s1122 + $0x2c] sm:$0xf]
        %v1135 = vld [vmem:[%s1122 + $0x30] sm:$0xf]
        %v1136 = vld [vmem:[%s1122 + $0x34] sm:$0xf]
        %v1137 = vld [vmem:[%s1122 + $0x38] sm:$0xf]
        %v1138 = vld [vmem:[%s1122 + $0x3c] sm:$0xf]
        %v1141 = vunpack.c.l.b16 %v249
        %v1142 = vunpack.c.l.b16 %v250
        %v1143 = vpack.c.b16 %v1142, %v1141
        %v1161 = vunpack.c.l.b16 %v1123
        %v1162 = vunpack.c.l.b16 %v1124
        %v1163 = vunpack.c.l.b16 %v1125
        %v1164 = vunpack.c.l.b16 %v1126
        %v1165 = vunpack.c.l.b16 %v1127
        %v1166 = vunpack.c.l.b16 %v1128
        %v1167 = vunpack.c.l.b16 %v1129
        %v1168 = vunpack.c.l.b16 %v1130
        %v1169 = vunpack.c.l.b16 %v1131
        %v1170 = vunpack.c.l.b16 %v1132
        %v1171 = vunpack.c.l.b16 %v1133
        %v1172 = vunpack.c.l.b16 %v1134
        %v1173 = vunpack.c.l.b16 %v1135
        %v1174 = vunpack.c.l.b16 %v1136
        %v1175 = vunpack.c.l.b16 %v1137
        %v1176 = vunpack.c.l.b16 %v1138
        %v1177 = vpack.c.b16 %v1162, %v1161
        %v1178 = vpack.c.b16 %v1164, %v1163
        %v1179 = vpack.c.b16 %v1166, %v1165
        %v1180 = vpack.c.b16 %v1168, %v1167
        %v1181 = vpack.c.b16 %v1170, %v1169
        %v1182 = vpack.c.b16 %v1172, %v1171
        %v1183 = vpack.c.b16 %v1174, %v1173
        %v1184 = vpack.c.b16 %v1176, %v1175
        %1193 = vmatprep.subr.bf16.mxu0 0
        %1194 = vmatpush1.bf16.msra.mxu0 %v1177
        %1195 = vmatprep.subr.bf16.mxu0 0
        %1196 = vmatpush1.bf16.msra.mxu0 %v1178
        %1197 = vmatprep.subr.bf16.mxu0 0
        %1198 = vmatpush1.bf16.msra.mxu0 %v1179
        %1199 = vmatprep.subr.bf16.mxu0 0
        %1200 = vmatpush1.bf16.msra.mxu0 %v1180
        %1201 = vmatprep.subr.bf16.mxu0 0
        %1202 = vmatpush1.bf16.msra.mxu0 %v1181
        %1203 = vmatprep.subr.bf16.mxu0 0
        %1204 = vmatpush1.bf16.msra.mxu0 %v1182
        %1205 = vmatprep.subr.bf16.mxu0 0
        %1206 = vmatpush1.bf16.msra.mxu0 %v1183
        %1207 = vmatprep.subr.bf16.mxu0 0
        %1208 = vmatpush1.bf16.msra.mxu0 %v1184
        %1209 = vmatprep.subr.bf16.mxu0 0
        %1210 = vmatpush1.bf16.msra.mxu0 0
        %1211 = vmatprep.subr.bf16.mxu0 0
        %1212 = vmatpush1.bf16.msra.mxu0 0
        %1213 = vmatprep.subr.bf16.mxu0 0
        %1214 = vmatpush1.bf16.msra.mxu0 0
        %1215 = vmatprep.subr.bf16.mxu0 0
        %1216 = vmatpush1.bf16.msra.mxu0 0
        %1217 = vmatprep.subr.bf16.mxu0 0
        %1218 = vmatpush1.bf16.msra.mxu0 0
        %1219 = vmatprep.subr.bf16.mxu0 0
        %1220 = vmatpush1.bf16.msra.mxu0 0
        %1221 = vmatprep.subr.bf16.mxu0 0
        %1222 = vmatpush1.bf16.msra.mxu0 0
        %1223 = vmatprep.subr.bf16.mxu0 0
        %1224 = vmatpush1.bf16.msra.mxu0 0
        %1225 = vmatprep.mubr.bf16.mxu0 0
        %1226 = vmatmul.mubr.bf16.gmra.mrb[0].mxu0 %v318
        %v1227 = vpop.f32.mrb[0].mxu0
        %v1228 = vadd.f32 0.0, %v1227
        %v1229 = vpop.f32.mrb[0].mxu0
        %v1230 = vpop.f32.mrb[0].mxu0
        %v1231 = vadd.f32 0.0, %v1230
        %v1232 = vpop.f32.mrb[0].mxu0
        %1233 = vmatprep.mubr.bf16.mxu0 0
        %1234 = vmatmul.mubr.bf16.gmra.mrb[0].mxu0 %v319
        %v1235 = vpop.f32.mrb[0].mxu0
        %v1236 = vadd.f32 0.0, %v1235
        %v1237 = vpop.f32.mrb[0].mxu0
        %v1238 = vpop.f32.mrb[0].mxu0
        %v1239 = vadd.f32 0.0, %v1238
        %v1240 = vpop.f32.mrb[0].mxu0
        %1241 = vmatprep.mubr.bf16.mxu0 0
        %1242 = vmatmul.mubr.bf16.gmra.mrb[0].mxu0 %v320
        %v1243 = vpop.f32.mrb[0].mxu0
        %v1244 = vadd.f32 0.0, %v1243
        %v1245 = vpop.f32.mrb[0].mxu0
        %v1246 = vpop.f32.mrb[0].mxu0
        %v1247 = vadd.f32 0.0, %v1246
        %v1248 = vpop.f32.mrb[0].mxu0
        %1249 = vmatprep.mubr.bf16.mxu0 0
        %1250 = vmatmul.mubr.bf16.gmra.mrb[0].mxu0 %v321
        %v1251 = vpop.f32.mrb[0].mxu0
        %v1252 = vadd.f32 0.0, %v1251
        %v1253 = vpop.f32.mrb[0].mxu0
        %v1254 = vpop.f32.mrb[0].mxu0
        %v1255 = vadd.f32 0.0, %v1254
        %v1256 = vpop.f32.mrb[0].mxu0
        %1257 = vmatprep.mubr.bf16.mxu0 0
        %1258 = vmatmul.mubr.bf16.gmra.mrb[0].mxu0 %v322
        %v1259 = vpop.f32.mrb[0].mxu0
        %v1260 = vadd.f32 0.0, %v1259
        %v1261 = vpop.f32.mrb[0].mxu0
        %v1262 = vpop.f32.mrb[0].mxu0
        %v1263 = vadd.f32 0.0, %v1262
        %v1264 = vpop.f32.mrb[0].mxu0
        %1265 = vmatprep.mubr.bf16.mxu0 0
        %1266 = vmatmul.mubr.bf16.gmra.mrb[0].mxu0 %v323
        %v1267 = vpop.f32.mrb[0].mxu0
        %v1268 = vadd.f32 0.0, %v1267
        %v1269 = vpop.f32.mrb[0].mxu0
        %v1270 = vpop.f32.mrb[0].mxu0
        %v1271 = vadd.f32 0.0, %v1270
        %v1272 = vpop.f32.mrb[0].mxu0
        %1273 = vmatprep.mubr.bf16.mxu0 0
        %1274 = vmatmul.mubr.bf16.gmra.mrb[0].mxu0 %v324
        %v1275 = vpop.f32.mrb[0].mxu0
        %v1276 = vadd.f32 0.0, %v1275
        %v1277 = vpop.f32.mrb[0].mxu0
        %v1278 = vpop.f32.mrb[0].mxu0
        %v1279 = vadd.f32 0.0, %v1278
        %v1280 = vpop.f32.mrb[0].mxu0
        %1281 = vmatprep.mubr.bf16.mxu0 0
        %1282 = vmatmul.mubr.bf16.gmra.mrb[0].mxu0 %v325
        %v1283 = vpop.f32.mrb[0].mxu0
        %v1284 = vadd.f32 0.0, %v1283
        %v1285 = vpop.f32.mrb[0].mxu0
        %v1286 = vpop.f32.mrb[0].mxu0
        %v1287 = vadd.f32 0.0, %v1286
        %v1288 = vpop.f32.mrb[0].mxu0
        %1289 = vmatprep.mubr.bf16.mxu0 0
        %1290 = vmatmul.mubr.bf16.gmra.mrb[0].mxu0 %v326
        %v1291 = vpop.f32.mrb[0].mxu0
        %v1292 = vadd.f32 0.0, %v1291
        %v1293 = vpop.f32.mrb[0].mxu0
        %v1294 = vpop.f32.mrb[0].mxu0
        %v1295 = vadd.f32 0.0, %v1294
        %v1296 = vpop.f32.mrb[0].mxu0
        %1297 = vmatprep.mubr.bf16.mxu0 0
        %1298 = vmatmul.mubr.bf16.gmra.mrb[0].mxu0 %v327
        %v1299 = vpop.f32.mrb[0].mxu0
        %v1300 = vadd.f32 0.0, %v1299
        %v1301 = vpop.f32.mrb[0].mxu0
        %v1302 = vpop.f32.mrb[0].mxu0
        %v1303 = vadd.f32 0.0, %v1302
        %v1304 = vpop.f32.mrb[0].mxu0
        %1305 = vmatprep.mubr.bf16.mxu0 0
        %1306 = vmatmul.mubr.bf16.gmra.mrb[0].mxu0 %v328
        %v1307 = vpop.f32.mrb[0].mxu0
        %v1308 = vadd.f32 0.0, %v1307
        %v1309 = vpop.f32.mrb[0].mxu0
        %v1310 = vpop.f32.mrb[0].mxu0
        %v1311 = vadd.f32 0.0, %v1310
        %v1312 = vpop.f32.mrb[0].mxu0
        %1313 = vmatprep.mubr.bf16.mxu0 0
        %1314 = vmatmul.mubr.bf16.gmra.mrb[0].mxu0 %v1143
        %v1315 = vpop.f32.mrb[0].mxu0
        %v1316 = vadd.f32 0.0, %v1315
        %v1317 = vpop.f32.mrb[0].mxu0
        %v1318 = vpop.f32.mrb[0].mxu0
        %v1319 = vadd.f32 0.0, %v1318
        %v1320 = vpop.f32.mrb[0].mxu0
        %1321 = vdwg.mxu0
        %v1322 = vadd.f32 %v1098, %v1228
        %v1323 = vadd.f32 %v1099, %v1231
        %v1324 = vadd.f32 %v1100, %v1236
        %v1325 = vadd.f32 %v1101, %v1239
        %v1326 = vadd.f32 %v1102, %v1244
        %v1327 = vadd.f32 %v1103, %v1247
        %v1328 = vadd.f32 %v1104, %v1252
        %v1329 = vadd.f32 %v1105, %v1255
        %v1330 = vadd.f32 %v1106, %v1260
        %v1331 = vadd.f32 %v1107, %v1263
        %v1332 = vadd.f32 %v1108, %v1268
        %v1333 = vadd.f32 %v1109, %v1271
        %v1334 = vadd.f32 %v1110, %v1276
        %v1335 = vadd.f32 %v1111, %v1279
        %v1336 = vadd.f32 %v1112, %v1284
        %v1337 = vadd.f32 %v1113, %v1287
        %v1338 = vadd.f32 %v1114, %v1292
        %v1339 = vadd.f32 %v1115, %v1295
        %v1340 = vadd.f32 %v1116, %v1300
        %v1341 = vadd.f32 %v1117, %v1303
        %v1342 = vadd.f32 %v1118, %v1308
        %v1343 = vadd.f32 %v1119, %v1311
        %v1344 = vadd.f32 %v1120, %v1316
        %v1345 = vadd.f32 %v1121, %v1319
        %s1346 = scalar_lea.vmem [#allocation5], 256
        %v1347 = vld [vmem:[%s1346] sm:$0xf]
        %v1348 = vld [vmem:[%s1346 + $0x4] sm:$0xf]
        %v1349 = vld [vmem:[%s1346 + $0x8] sm:$0xf]
        %v1350 = vld [vmem:[%s1346 + $0xc] sm:$0xf]
        %v1351 = vld [vmem:[%s1346 + $0x10] sm:$0xf]
        %v1352 = vld [vmem:[%s1346 + $0x14] sm:$0xf]
        %v1353 = vld [vmem:[%s1346 + $0x18] sm:$0xf]
        %v1354 = vld [vmem:[%s1346 + $0x1c] sm:$0xf]
        %v1355 = vld [vmem:[%s1346 + $0x20] sm:$0xf]
        %v1356 = vld [vmem:[%s1346 + $0x24] sm:$0xf]
        %v1357 = vld [vmem:[%s1346 + $0x28] sm:$0xf]
        %v1358 = vld [vmem:[%s1346 + $0x2c] sm:$0xf]
        %v1359 = vld [vmem:[%s1346 + $0x30] sm:$0xf]
        %v1360 = vld [vmem:[%s1346 + $0x34] sm:$0xf]
        %v1361 = vld [vmem:[%s1346 + $0x38] sm:$0xf]
        %v1362 = vld [vmem:[%s1346 + $0x3c] sm:$0xf]
        %v1364 = vshll.u32 %v1143, 16
        %v1366 = vrot.slane %v1364, 1
        %v1367 = vsel %vm559, %v654, %v1366
        %v1368 = vshrl.u32 %v1143, 16
        %v1370 = vor.u32 %v1368, %v1366
        %v1389 = vunpack.c.l.b16 %v1347
        %v1390 = vunpack.c.l.b16 %v1348
        %v1391 = vunpack.c.l.b16 %v1349
        %v1392 = vunpack.c.l.b16 %v1350
        %v1393 = vunpack.c.l.b16 %v1351
        %v1394 = vunpack.c.l.b16 %v1352
        %v1395 = vunpack.c.l.b16 %v1353
        %v1396 = vunpack.c.l.b16 %v1354
        %v1397 = vunpack.c.l.b16 %v1355
        %v1398 = vunpack.c.l.b16 %v1356
        %v1399 = vunpack.c.l.b16 %v1357
        %v1400 = vunpack.c.l.b16 %v1358
        %v1401 = vunpack.c.l.b16 %v1359
        %v1402 = vunpack.c.l.b16 %v1360
        %v1403 = vunpack.c.l.b16 %v1361
        %v1404 = vunpack.c.l.b16 %v1362
        %v1405 = vpack.c.b16 %v1390, %v1389
        %v1406 = vpack.c.b16 %v1392, %v1391
        %v1407 = vpack.c.b16 %v1394, %v1393
        %v1408 = vpack.c.b16 %v1396, %v1395
        %v1409 = vpack.c.b16 %v1398, %v1397
        %v1410 = vpack.c.b16 %v1400, %v1399
        %v1411 = vpack.c.b16 %v1402, %v1401
        %v1412 = vpack.c.b16 %v1404, %v1403
        %1421 = vmatprep.subr.bf16.mxu0 0
        %1422 = vmatpush1.bf16.msra.mxu0 %v1405
        %1423 = vmatprep.subr.bf16.mxu0 0
        %1424 = vmatpush1.bf16.msra.mxu0 %v1406
        %1425 = vmatprep.subr.bf16.mxu0 0
        %1426 = vmatpush1.bf16.msra.mxu0 %v1407
        %1427 = vmatprep.subr.bf16.mxu0 0
        %1428 = vmatpush1.bf16.msra.mxu0 %v1408
        %1429 = vmatprep.subr.bf16.mxu0 0
        %1430 = vmatpush1.bf16.msra.mxu0 %v1409
        %1431 = vmatprep.subr.bf16.mxu0 0
        %1432 = vmatpush1.bf16.msra.mxu0 %v1410
        %1433 = vmatprep.subr.bf16.mxu0 0
        %1434 = vmatpush1.bf16.msra.mxu0 %v1411
        %1435 = vmatprep.subr.bf16.mxu0 0
        %1436 = vmatpush1.bf16.msra.mxu0 %v1412
        %1437 = vmatprep.subr.bf16.mxu0 0
        %1438 = vmatpush1.bf16.msra.mxu0 0
        %1439 = vmatprep.subr.bf16.mxu0 0
        %1440 = vmatpush1.bf16.msra.mxu0 0
        %1441 = vmatprep.subr.bf16.mxu0 0
        %1442 = vmatpush1.bf16.msra.mxu0 0
        %1443 = vmatprep.subr.bf16.mxu0 0
        %1444 = vmatpush1.bf16.msra.mxu0 0
        %1445 = vmatprep.subr.bf16.mxu0 0
        %1446 = vmatpush1.bf16.msra.mxu0 0
        %1447 = vmatprep.subr.bf16.mxu0 0
        %1448 = vmatpush1.bf16.msra.mxu0 0
        %1449 = vmatprep.subr.bf16.mxu0 0
        %1450 = vmatpush1.bf16.msra.mxu0 0
        %1451 = vmatprep.subr.bf16.mxu0 0
        %1452 = vmatpush1.bf16.msra.mxu0 0
        %1453 = vmatprep.mubr.bf16.mxu0 0
        %1454 = vmatmul.mubr.bf16.gmra.mrb[0].mxu0 %v579
        %v1455 = vpop.f32.mrb[0].mxu0
        %v1456 = vadd.f32 0.0, %v1455
        %v1457 = vpop.f32.mrb[0].mxu0
        %v1458 = vpop.f32.mrb[0].mxu0
        %v1459 = vadd.f32 0.0, %v1458
        %v1460 = vpop.f32.mrb[0].mxu0
        %1461 = vmatprep.mubr.bf16.mxu0 0
        %1462 = vmatmul.mubr.bf16.gmra.mrb[0].mxu0 %v587
        %v1463 = vpop.f32.mrb[0].mxu0
        %v1464 = vadd.f32 0.0, %v1463
        %v1465 = vpop.f32.mrb[0].mxu0
        %v1466 = vpop.f32.mrb[0].mxu0
        %v1467 = vadd.f32 0.0, %v1466
        %v1468 = vpop.f32.mrb[0].mxu0
        %1469 = vmatprep.mubr.bf16.mxu0 0
        %1470 = vmatmul.mubr.bf16.gmra.mrb[0].mxu0 %v595
        %v1471 = vpop.f32.mrb[0].mxu0
        %v1472 = vadd.f32 0.0, %v1471
        %v1473 = vpop.f32.mrb[0].mxu0
        %v1474 = vpop.f32.mrb[0].mxu0
        %v1475 = vadd.f32 0.0, %v1474
        %v1476 = vpop.f32.mrb[0].mxu0
        %1477 = vmatprep.mubr.bf16.mxu0 0
        %1478 = vmatmul.mubr.bf16.gmra.mrb[0].mxu0 %v603
        %v1479 = vpop.f32.mrb[0].mxu0
        %v1480 = vadd.f32 0.0, %v1479
        %v1481 = vpop.f32.mrb[0].mxu0
        %v1482 = vpop.f32.mrb[0].mxu0
        %v1483 = vadd.f32 0.0, %v1482
        %v1484 = vpop.f32.mrb[0].mxu0
        %1485 = vmatprep.mubr.bf16.mxu0 0
        %1486 = vmatmul.mubr.bf16.gmra.mrb[0].mxu0 %v611
        %v1487 = vpop.f32.mrb[0].mxu0
        %v1488 = vadd.f32 0.0, %v1487
        %v1489 = vpop.f32.mrb[0].mxu0
        %v1490 = vpop.f32.mrb[0].mxu0
        %v1491 = vadd.f32 0.0, %v1490
        %v1492 = vpop.f32.mrb[0].mxu0
        %1493 = vmatprep.mubr.bf16.mxu0 0
        %1494 = vmatmul.mubr.bf16.gmra.mrb[0].mxu0 %v619
        %v1495 = vpop.f32.mrb[0].mxu0
        %v1496 = vadd.f32 0.0, %v1495
        %v1497 = vpop.f32.mrb[0].mxu0
        %v1498 = vpop.f32.mrb[0].mxu0
        %v1499 = vadd.f32 0.0, %v1498
        %v1500 = vpop.f32.mrb[0].mxu0
        %1501 = vmatprep.mubr.bf16.mxu0 0
        %1502 = vmatmul.mubr.bf16.gmra.mrb[0].mxu0 %v627
        %v1503 = vpop.f32.mrb[0].mxu0
        %v1504 = vadd.f32 0.0, %v1503
        %v1505 = vpop.f32.mrb[0].mxu0
        %v1506 = vpop.f32.mrb[0].mxu0
        %v1507 = vadd.f32 0.0, %v1506
        %v1508 = vpop.f32.mrb[0].mxu0
        %1509 = vmatprep.mubr.bf16.mxu0 0
        %1510 = vmatmul.mubr.bf16.gmra.mrb[0].mxu0 %v635
        %v1511 = vpop.f32.mrb[0].mxu0
        %v1512 = vadd.f32 0.0, %v1511
        %v1513 = vpop.f32.mrb[0].mxu0
        %v1514 = vpop.f32.mrb[0].mxu0
        %v1515 = vadd.f32 0.0, %v1514
        %v1516 = vpop.f32.mrb[0].mxu0
        %1517 = vmatprep.mubr.bf16.mxu0 0
        %1518 = vmatmul.mubr.bf16.gmra.mrb[0].mxu0 %v643
        %v1519 = vpop.f32.mrb[0].mxu0
        %v1520 = vadd.f32 0.0, %v1519
        %v1521 = vpop.f32.mrb[0].mxu0
        %v1522 = vpop.f32.mrb[0].mxu0
        %v1523 = vadd.f32 0.0, %v1522
        %v1524 = vpop.f32.mrb[0].mxu0
        %1525 = vmatprep.mubr.bf16.mxu0 0
        %1526 = vmatmul.mubr.bf16.gmra.mrb[0].mxu0 %v651
        %v1527 = vpop.f32.mrb[0].mxu0
        %v1528 = vadd.f32 0.0, %v1527
        %v1529 = vpop.f32.mrb[0].mxu0
        %v1530 = vpop.f32.mrb[0].mxu0
        %v1531 = vadd.f32 0.0, %v1530
        %v1532 = vpop.f32.mrb[0].mxu0
        %1533 = vmatprep.mubr.bf16.mxu0 0
        %1534 = vmatmul.mubr.bf16.gmra.mrb[0].mxu0 %v1367
        %v1535 = vpop.f32.mrb[0].mxu0
        %v1536 = vadd.f32 0.0, %v1535
        %v1537 = vpop.f32.mrb[0].mxu0
        %v1538 = vpop.f32.mrb[0].mxu0
        %v1539 = vadd.f32 0.0, %v1538
        %v1540 = vpop.f32.mrb[0].mxu0
        %1541 = vmatprep.mubr.bf16.mxu0 0
        %1542 = vmatmul.mubr.bf16.gmra.mrb[0].mxu0 %v1370
        %v1543 = vpop.f32.mrb[0].mxu0
        %v1544 = vadd.f32 0.0, %v1543
        %v1545 = vpop.f32.mrb[0].mxu0
        %v1546 = vpop.f32.mrb[0].mxu0
        %v1547 = vadd.f32 0.0, %v1546
        %v1548 = vpop.f32.mrb[0].mxu0
        %1549 = vdwg.mxu0
        %v1550 = vadd.f32 %v1322, %v1456
        %v1551 = vadd.f32 %v1323, %v1459
        %v1552 = vadd.f32 %v1324, %v1464
        %v1553 = vadd.f32 %v1325, %v1467
        %v1554 = vadd.f32 %v1326, %v1472
        %v1555 = vadd.f32 %v1327, %v1475
        %v1556 = vadd.f32 %v1328, %v1480
        %v1557 = vadd.f32 %v1329, %v1483
        %v1558 = vadd.f32 %v1330, %v1488
        %v1559 = vadd.f32 %v1331, %v1491
        %v1560 = vadd.f32 %v1332, %v1496
        %v1561 = vadd.f32 %v1333, %v1499
        %v1562 = vadd.f32 %v1334, %v1504
        %v1563 = vadd.f32 %v1335, %v1507
        %v1564 = vadd.f32 %v1336, %v1512
        %v1565 = vadd.f32 %v1337, %v1515
        %v1566 = vadd.f32 %v1338, %v1520
        %v1567 = vadd.f32 %v1339, %v1523
        %v1568 = vadd.f32 %v1340, %v1528
        %v1569 = vadd.f32 %v1341, %v1531
        %v1570 = vadd.f32 %v1342, %v1536
        %v1571 = vadd.f32 %v1343, %v1539
        %v1572 = vadd.f32 %v1344, %v1544
        %v1573 = vadd.f32 %v1345, %v1547
        %s1574 = scalar_lea.vmem [#allocation5], 320
        %v1575 = vld [vmem:[%s1574] sm:$0xf]
        %v1576 = vld [vmem:[%s1574 + $0x4] sm:$0xf]
        %v1577 = vld [vmem:[%s1574 + $0x8] sm:$0xf]
        %v1578 = vld [vmem:[%s1574 + $0xc] sm:$0xf]
        %v1579 = vld [vmem:[%s1574 + $0x10] sm:$0xf]
        %v1580 = vld [vmem:[%s1574 + $0x14] sm:$0xf]
        %v1581 = vld [vmem:[%s1574 + $0x18] sm:$0xf]
        %v1582 = vld [vmem:[%s1574 + $0x1c] sm:$0xf]
        %v1583 = vld [vmem:[%s1574 + $0x20] sm:$0xf]
        %v1584 = vld [vmem:[%s1574 + $0x24] sm:$0xf]
        %v1585 = vld [vmem:[%s1574 + $0x28] sm:$0xf]
        %v1586 = vld [vmem:[%s1574 + $0x2c] sm:$0xf]
        %v1587 = vld [vmem:[%s1574 + $0x30] sm:$0xf]
        %v1588 = vld [vmem:[%s1574 + $0x34] sm:$0xf]
        %v1589 = vld [vmem:[%s1574 + $0x38] sm:$0xf]
        %v1590 = vld [vmem:[%s1574 + $0x3c] sm:$0xf]
        %v1591 = vrot.slane %v1143, 1
        %v1592 = vsel %vm885, %v907, %v1591
        %v1611 = vunpack.c.l.b16 %v1575
        %v1612 = vunpack.c.l.b16 %v1576
        %v1613 = vunpack.c.l.b16 %v1577
        %v1614 = vunpack.c.l.b16 %v1578
        %v1615 = vunpack.c.l.b16 %v1579
        %v1616 = vunpack.c.l.b16 %v1580
        %v1617 = vunpack.c.l.b16 %v1581
        %v1618 = vunpack.c.l.b16 %v1582
        %v1619 = vunpack.c.l.b16 %v1583
        %v1620 = vunpack.c.l.b16 %v1584
        %v1621 = vunpack.c.l.b16 %v1585
        %v1622 = vunpack.c.l.b16 %v1586
        %v1623 = vunpack.c.l.b16 %v1587
        %v1624 = vunpack.c.l.b16 %v1588
        %v1625 = vunpack.c.l.b16 %v1589
        %v1626 = vunpack.c.l.b16 %v1590
        %v1627 = vpack.c.b16 %v1612, %v1611
        %v1628 = vpack.c.b16 %v1614, %v1613
        %v1629 = vpack.c.b16 %v1616, %v1615
        %v1630 = vpack.c.b16 %v1618, %v1617
        %v1631 = vpack.c.b16 %v1620, %v1619
        %v1632 = vpack.c.b16 %v1622, %v1621
        %v1633 = vpack.c.b16 %v1624, %v1623
        %v1634 = vpack.c.b16 %v1626, %v1625
        %1643 = vmatprep.subr.bf16.mxu0 0
        %1644 = vmatpush1.bf16.msra.mxu0 %v1627
        %1645 = vmatprep.subr.bf16.mxu0 0
        %1646 = vmatpush1.bf16.msra.mxu0 %v1628
        %1647 = vmatprep.subr.bf16.mxu0 0
        %1648 = vmatpush1.bf16.msra.mxu0 %v1629
        %1649 = vmatprep.subr.bf16.mxu0 0
        %1650 = vmatpush1.bf16.msra.mxu0 %v1630
        %1651 = vmatprep.subr.bf16.mxu0 0
        %1652 = vmatpush1.bf16.msra.mxu0 %v1631
        %1653 = vmatprep.subr.bf16.mxu0 0
        %1654 = vmatpush1.bf16.msra.mxu0 %v1632
        %1655 = vmatprep.subr.bf16.mxu0 0
        %1656 = vmatpush1.bf16.msra.mxu0 %v1633
        %1657 = vmatprep.subr.bf16.mxu0 0
        %1658 = vmatpush1.bf16.msra.mxu0 %v1634
        %1659 = vmatprep.subr.bf16.mxu0 0
        %1660 = vmatpush1.bf16.msra.mxu0 0
        %1661 = vmatprep.subr.bf16.mxu0 0
        %1662 = vmatpush1.bf16.msra.mxu0 0
        %1663 = vmatprep.subr.bf16.mxu0 0
        %1664 = vmatpush1.bf16.msra.mxu0 0
        %1665 = vmatprep.subr.bf16.mxu0 0
        %1666 = vmatpush1.bf16.msra.mxu0 0
        %1667 = vmatprep.subr.bf16.mxu0 0
        %1668 = vmatpush1.bf16.msra.mxu0 0
        %1669 = vmatprep.subr.bf16.mxu0 0
        %1670 = vmatpush1.bf16.msra.mxu0 0
        %1671 = vmatprep.subr.bf16.mxu0 0
        %1672 = vmatpush1.bf16.msra.mxu0 0
        %1673 = vmatprep.subr.bf16.mxu0 0
        %1674 = vmatpush1.bf16.msra.mxu0 0
        %1675 = vmatprep.mubr.bf16.mxu0 0
        %1676 = vmatmul.mubr.bf16.gmra.mrb[0].mxu0 %v890
        %v1677 = vpop.f32.mrb[0].mxu0
        %v1678 = vadd.f32 0.0, %v1677
        %v1679 = vpop.f32.mrb[0].mxu0
        %v1680 = vpop.f32.mrb[0].mxu0
        %v1681 = vadd.f32 0.0, %v1680
        %v1682 = vpop.f32.mrb[0].mxu0
        %1683 = vmatprep.mubr.bf16.mxu0 0
        %1684 = vmatmul.mubr.bf16.gmra.mrb[0].mxu0 %v892
        %v1685 = vpop.f32.mrb[0].mxu0
        %v1686 = vadd.f32 0.0, %v1685
        %v1687 = vpop.f32.mrb[0].mxu0
        %v1688 = vpop.f32.mrb[0].mxu0
        %v1689 = vadd.f32 0.0, %v1688
        %v1690 = vpop.f32.mrb[0].mxu0
        %1691 = vmatprep.mubr.bf16.mxu0 0
        %1692 = vmatmul.mubr.bf16.gmra.mrb[0].mxu0 %v894
        %v1693 = vpop.f32.mrb[0].mxu0
        %v1694 = vadd.f32 0.0, %v1693
        %v1695 = vpop.f32.mrb[0].mxu0
        %v1696 = vpop.f32.mrb[0].mxu0
        %v1697 = vadd.f32 0.0, %v1696
        %v1698 = vpop.f32.mrb[0].mxu0
        %1699 = vmatprep.mubr.bf16.mxu0 0
        %1700 = vmatmul.mubr.bf16.gmra.mrb[0].mxu0 %v896
        %v1701 = vpop.f32.mrb[0].mxu0
        %v1702 = vadd.f32 0.0, %v1701
        %v1703 = vpop.f32.mrb[0].mxu0
        %v1704 = vpop.f32.mrb[0].mxu0
        %v1705 = vadd.f32 0.0, %v1704
        %v1706 = vpop.f32.mrb[0].mxu0
        %1707 = vmatprep.mubr.bf16.mxu0 0
        %1708 = vmatmul.mubr.bf16.gmra.mrb[0].mxu0 %v898
        %v1709 = vpop.f32.mrb[0].mxu0
        %v1710 = vadd.f32 0.0, %v1709
        %v1711 = vpop.f32.mrb[0].mxu0
        %v1712 = vpop.f32.mrb[0].mxu0
        %v1713 = vadd.f32 0.0, %v1712
        %v1714 = vpop.f32.mrb[0].mxu0
        %1715 = vmatprep.mubr.bf16.mxu0 0
        %1716 = vmatmul.mubr.bf16.gmra.mrb[0].mxu0 %v900
        %v1717 = vpop.f32.mrb[0].mxu0
        %v1718 = vadd.f32 0.0, %v1717
        %v1719 = vpop.f32.mrb[0].mxu0
        %v1720 = vpop.f32.mrb[0].mxu0
        %v1721 = vadd.f32 0.0, %v1720
        %v1722 = vpop.f32.mrb[0].mxu0
        %1723 = vmatprep.mubr.bf16.mxu0 0
        %1724 = vmatmul.mubr.bf16.gmra.mrb[0].mxu0 %v902
        %v1725 = vpop.f32.mrb[0].mxu0
        %v1726 = vadd.f32 0.0, %v1725
        %v1727 = vpop.f32.mrb[0].mxu0
        %v1728 = vpop.f32.mrb[0].mxu0
        %v1729 = vadd.f32 0.0, %v1728
        %v1730 = vpop.f32.mrb[0].mxu0
        %1731 = vmatprep.mubr.bf16.mxu0 0
        %1732 = vmatmul.mubr.bf16.gmra.mrb[0].mxu0 %v904
        %v1733 = vpop.f32.mrb[0].mxu0
        %v1734 = vadd.f32 0.0, %v1733
        %v1735 = vpop.f32.mrb[0].mxu0
        %v1736 = vpop.f32.mrb[0].mxu0
        %v1737 = vadd.f32 0.0, %v1736
        %v1738 = vpop.f32.mrb[0].mxu0
        %1739 = vmatprep.mubr.bf16.mxu0 0
        %1740 = vmatmul.mubr.bf16.gmra.mrb[0].mxu0 %v906
        %v1741 = vpop.f32.mrb[0].mxu0
        %v1742 = vadd.f32 0.0, %v1741
        %v1743 = vpop.f32.mrb[0].mxu0
        %v1744 = vpop.f32.mrb[0].mxu0
        %v1745 = vadd.f32 0.0, %v1744
        %v1746 = vpop.f32.mrb[0].mxu0
        %1747 = vmatprep.mubr.bf16.mxu0 0
        %1748 = vmatmul.mubr.bf16.gmra.mrb[0].mxu0 %v908
        %v1749 = vpop.f32.mrb[0].mxu0
        %v1750 = vadd.f32 0.0, %v1749
        %v1751 = vpop.f32.mrb[0].mxu0
        %v1752 = vpop.f32.mrb[0].mxu0
        %v1753 = vadd.f32 0.0, %v1752
        %v1754 = vpop.f32.mrb[0].mxu0
        %1755 = vmatprep.mubr.bf16.mxu0 0
        %1756 = vmatmul.mubr.bf16.gmra.mrb[0].mxu0 %v1592
        %v1757 = vpop.f32.mrb[0].mxu0
        %v1758 = vadd.f32 0.0, %v1757
        %v1759 = vpop.f32.mrb[0].mxu0
        %v1760 = vpop.f32.mrb[0].mxu0
        %v1761 = vadd.f32 0.0, %v1760
        %v1762 = vpop.f32.mrb[0].mxu0
        %1763 = vmatprep.mubr.bf16.mxu0 0
        %1764 = vmatmul.mubr.bf16.gmra.mrb[0].mxu0 %v1591
        %v1765 = vpop.f32.mrb[0].mxu0
        %v1766 = vadd.f32 0.0, %v1765
        %v1767 = vpop.f32.mrb[0].mxu0
        %v1768 = vpop.f32.mrb[0].mxu0
        %v1769 = vadd.f32 0.0, %v1768
        %v1770 = vpop.f32.mrb[0].mxu0
        %1771 = vdwg.mxu0
        %v1772 = vadd.f32 %v1550, %v1678
        %v1773 = vadd.f32 %v1551, %v1681
        %v1774 = vadd.f32 %v1552, %v1686
        %v1775 = vadd.f32 %v1553, %v1689
        %v1776 = vadd.f32 %v1554, %v1694
        %v1777 = vadd.f32 %v1555, %v1697
        %v1778 = vadd.f32 %v1556, %v1702
        %v1779 = vadd.f32 %v1557, %v1705
        %v1780 = vadd.f32 %v1558, %v1710
        %v1781 = vadd.f32 %v1559, %v1713
        %v1782 = vadd.f32 %v1560, %v1718
        %v1783 = vadd.f32 %v1561, %v1721
        %v1784 = vadd.f32 %v1562, %v1726
        %v1785 = vadd.f32 %v1563, %v1729
        %v1786 = vadd.f32 %v1564, %v1734
        %v1787 = vadd.f32 %v1565, %v1737
        %v1788 = vadd.f32 %v1566, %v1742
        %v1789 = vadd.f32 %v1567, %v1745
        %v1790 = vadd.f32 %v1568, %v1750
        %v1791 = vadd.f32 %v1569, %v1753
        %v1792 = vadd.f32 %v1570, %v1758
        %v1793 = vadd.f32 %v1571, %v1761
        %v1794 = vadd.f32 %v1572, %v1766
        %v1795 = vadd.f32 %v1573, %v1769
        %s1796 = scalar_lea.vmem [#allocation5], 384
        %v1797 = vld [vmem:[%s1796] sm:$0xf]
        %v1798 = vld [vmem:[%s1796 + $0x4] sm:$0xf]
        %v1799 = vld [vmem:[%s1796 + $0x8] sm:$0xf]
        %v1800 = vld [vmem:[%s1796 + $0xc] sm:$0xf]
        %v1801 = vld [vmem:[%s1796 + $0x10] sm:$0xf]
        %v1802 = vld [vmem:[%s1796 + $0x14] sm:$0xf]
        %v1803 = vld [vmem:[%s1796 + $0x18] sm:$0xf]
        %v1804 = vld [vmem:[%s1796 + $0x1c] sm:$0xf]
        %v1805 = vld [vmem:[%s1796 + $0x20] sm:$0xf]
        %v1806 = vld [vmem:[%s1796 + $0x24] sm:$0xf]
        %v1807 = vld [vmem:[%s1796 + $0x28] sm:$0xf]
        %v1808 = vld [vmem:[%s1796 + $0x2c] sm:$0xf]
        %v1809 = vld [vmem:[%s1796 + $0x30] sm:$0xf]
        %v1810 = vld [vmem:[%s1796 + $0x34] sm:$0xf]
        %v1811 = vld [vmem:[%s1796 + $0x38] sm:$0xf]
        %v1812 = vld [vmem:[%s1796 + $0x3c] sm:$0xf]
        %v1815 = vunpack.c.l.b16 %v251
        %v1816 = vunpack.c.l.b16 %v252
        %v1817 = vpack.c.b16 %v1816, %v1815
        %v1835 = vunpack.c.l.b16 %v1797
        %v1836 = vunpack.c.l.b16 %v1798
        %v1837 = vunpack.c.l.b16 %v1799
        %v1838 = vunpack.c.l.b16 %v1800
        %v1839 = vunpack.c.l.b16 %v1801
        %v1840 = vunpack.c.l.b16 %v1802
        %v1841 = vunpack.c.l.b16 %v1803
        %v1842 = vunpack.c.l.b16 %v1804
        %v1843 = vunpack.c.l.b16 %v1805
        %v1844 = vunpack.c.l.b16 %v1806
        %v1845 = vunpack.c.l.b16 %v1807
        %v1846 = vunpack.c.l.b16 %v1808
        %v1847 = vunpack.c.l.b16 %v1809
        %v1848 = vunpack.c.l.b16 %v1810
        %v1849 = vunpack.c.l.b16 %v1811
        %v1850 = vunpack.c.l.b16 %v1812
        %v1851 = vpack.c.b16 %v1836, %v1835
        %v1852 = vpack.c.b16 %v1838, %v1837
        %v1853 = vpack.c.b16 %v1840, %v1839
        %v1854 = vpack.c.b16 %v1842, %v1841
        %v1855 = vpack.c.b16 %v1844, %v1843
        %v1856 = vpack.c.b16 %v1846, %v1845
        %v1857 = vpack.c.b16 %v1848, %v1847
        %v1858 = vpack.c.b16 %v1850, %v1849
        %1867 = vmatprep.subr.bf16.mxu0 0
        %1868 = vmatpush1.bf16.msra.mxu0 %v1851
        %1869 = vmatprep.subr.bf16.mxu0 0
        %1870 = vmatpush1.bf16.msra.mxu0 %v1852
        %1871 = vmatprep.subr.bf16.mxu0 0
        %1872 = vmatpush1.bf16.msra.mxu0 %v1853
        %1873 = vmatprep.subr.bf16.mxu0 0
        %1874 = vmatpush1.bf16.msra.mxu0 %v1854
        %1875 = vmatprep.subr.bf16.mxu0 0
        %1876 = vmatpush1.bf16.msra.mxu0 %v1855
        %1877 = vmatprep.subr.bf16.mxu0 0
        %1878 = vmatpush1.bf16.msra.mxu0 %v1856
        %1879 = vmatprep.subr.bf16.mxu0 0
        %1880 = vmatpush1.bf16.msra.mxu0 %v1857
        %1881 = vmatprep.subr.bf16.mxu0 0
        %1882 = vmatpush1.bf16.msra.mxu0 %v1858
        %1883 = vmatprep.subr.bf16.mxu0 0
        %1884 = vmatpush1.bf16.msra.mxu0 0
        %1885 = vmatprep.subr.bf16.mxu0 0
        %1886 = vmatpush1.bf16.msra.mxu0 0
        %1887 = vmatprep.subr.bf16.mxu0 0
        %1888 = vmatpush1.bf16.msra.mxu0 0
        %1889 = vmatprep.subr.bf16.mxu0 0
        %1890 = vmatpush1.bf16.msra.mxu0 0
        %1891 = vmatprep.subr.bf16.mxu0 0
        %1892 = vmatpush1.bf16.msra.mxu0 0
        %1893 = vmatprep.subr.bf16.mxu0 0
        %1894 = vmatpush1.bf16.msra.mxu0 0
        %1895 = vmatprep.subr.bf16.mxu0 0
        %1896 = vmatpush1.bf16.msra.mxu0 0
        %1897 = vmatprep.subr.bf16.mxu0 0
        %1898 = vmatpush1.bf16.msra.mxu0 0
        %1899 = vmatprep.mubr.bf16.mxu0 0
        %1900 = vmatmul.mubr.bf16.gmra.mrb[0].mxu0 %v319
        %v1901 = vpop.f32.mrb[0].mxu0
        %v1902 = vadd.f32 0.0, %v1901
        %v1903 = vpop.f32.mrb[0].mxu0
        %v1904 = vpop.f32.mrb[0].mxu0
        %v1905 = vadd.f32 0.0, %v1904
        %v1906 = vpop.f32.mrb[0].mxu0
        %1907 = vmatprep.mubr.bf16.mxu0 0
        %1908 = vmatmul.mubr.bf16.gmra.mrb[0].mxu0 %v320
        %v1909 = vpop.f32.mrb[0].mxu0
        %v1910 = vadd.f32 0.0, %v1909
        %v1911 = vpop.f32.mrb[0].mxu0
        %v1912 = vpop.f32.mrb[0].mxu0
        %v1913 = vadd.f32 0.0, %v1912
        %v1914 = vpop.f32.mrb[0].mxu0
        %1915 = vmatprep.mubr.bf16.mxu0 0
        %1916 = vmatmul.mubr.bf16.gmra.mrb[0].mxu0 %v321
        %v1917 = vpop.f32.mrb[0].mxu0
        %v1918 = vadd.f32 0.0, %v1917
        %v1919 = vpop.f32.mrb[0].mxu0
        %v1920 = vpop.f32.mrb[0].mxu0
        %v1921 = vadd.f32 0.0, %v1920
        %v1922 = vpop.f32.mrb[0].mxu0
        %1923 = vmatprep.mubr.bf16.mxu0 0
        %1924 = vmatmul.mubr.bf16.gmra.mrb[0].mxu0 %v322
        %v1925 = vpop.f32.mrb[0].mxu0
        %v1926 = vadd.f32 0.0, %v1925
        %v1927 = vpop.f32.mrb[0].mxu0
        %v1928 = vpop.f32.mrb[0].mxu0
        %v1929 = vadd.f32 0.0, %v1928
        %v1930 = vpop.f32.mrb[0].mxu0
        %1931 = vmatprep.mubr.bf16.mxu0 0
        %1932 = vmatmul.mubr.bf16.gmra.mrb[0].mxu0 %v323
        %v1933 = vpop.f32.mrb[0].mxu0
        %v1934 = vadd.f32 0.0, %v1933
        %v1935 = vpop.f32.mrb[0].mxu0
        %v1936 = vpop.f32.mrb[0].mxu0
        %v1937 = vadd.f32 0.0, %v1936
        %v1938 = vpop.f32.mrb[0].mxu0
        %1939 = vmatprep.mubr.bf16.mxu0 0
        %1940 = vmatmul.mubr.bf16.gmra.mrb[0].mxu0 %v324
        %v1941 = vpop.f32.mrb[0].mxu0
        %v1942 = vadd.f32 0.0, %v1941
        %v1943 = vpop.f32.mrb[0].mxu0
        %v1944 = vpop.f32.mrb[0].mxu0
        %v1945 = vadd.f32 0.0, %v1944
        %v1946 = vpop.f32.mrb[0].mxu0
        %1947 = vmatprep.mubr.bf16.mxu0 0
        %1948 = vmatmul.mubr.bf16.gmra.mrb[0].mxu0 %v325
        %v1949 = vpop.f32.mrb[0].mxu0
        %v1950 = vadd.f32 0.0, %v1949
        %v1951 = vpop.f32.mrb[0].mxu0
        %v1952 = vpop.f32.mrb[0].mxu0
        %v1953 = vadd.f32 0.0, %v1952
        %v1954 = vpop.f32.mrb[0].mxu0
        %1955 = vmatprep.mubr.bf16.mxu0 0
        %1956 = vmatmul.mubr.bf16.gmra.mrb[0].mxu0 %v326
        %v1957 = vpop.f32.mrb[0].mxu0
        %v1958 = vadd.f32 0.0, %v1957
        %v1959 = vpop.f32.mrb[0].mxu0
        %v1960 = vpop.f32.mrb[0].mxu0
        %v1961 = vadd.f32 0.0, %v1960
        %v1962 = vpop.f32.mrb[0].mxu0
        %1963 = vmatprep.mubr.bf16.mxu0 0
        %1964 = vmatmul.mubr.bf16.gmra.mrb[0].mxu0 %v327
        %v1965 = vpop.f32.mrb[0].mxu0
        %v1966 = vadd.f32 0.0, %v1965
        %v1967 = vpop.f32.mrb[0].mxu0
        %v1968 = vpop.f32.mrb[0].mxu0
        %v1969 = vadd.f32 0.0, %v1968
        %v1970 = vpop.f32.mrb[0].mxu0
        %1971 = vmatprep.mubr.bf16.mxu0 0
        %1972 = vmatmul.mubr.bf16.gmra.mrb[0].mxu0 %v328
        %v1973 = vpop.f32.mrb[0].mxu0
        %v1974 = vadd.f32 0.0, %v1973
        %v1975 = vpop.f32.mrb[0].mxu0
        %v1976 = vpop.f32.mrb[0].mxu0
        %v1977 = vadd.f32 0.0, %v1976
        %v1978 = vpop.f32.mrb[0].mxu0
        %1979 = vmatprep.mubr.bf16.mxu0 0
        %1980 = vmatmul.mubr.bf16.gmra.mrb[0].mxu0 %v1143
        %v1981 = vpop.f32.mrb[0].mxu0
        %v1982 = vadd.f32 0.0, %v1981
        %v1983 = vpop.f32.mrb[0].mxu0
        %v1984 = vpop.f32.mrb[0].mxu0
        %v1985 = vadd.f32 0.0, %v1984
        %v1986 = vpop.f32.mrb[0].mxu0
        %1987 = vmatprep.mubr.bf16.mxu0 0
        %1988 = vmatmul.mubr.bf16.gmra.mrb[0].mxu0 %v1817
        %v1989 = vpop.f32.mrb[0].mxu0
        %v1990 = vadd.f32 0.0, %v1989
        %v1991 = vpop.f32.mrb[0].mxu0
        %v1992 = vpop.f32.mrb[0].mxu0
        %v1993 = vadd.f32 0.0, %v1992
        %v1994 = vpop.f32.mrb[0].mxu0
        %1995 = vdwg.mxu0
        %v1996 = vadd.f32 %v1772, %v1902
        %v1997 = vadd.f32 %v1773, %v1905
        %v1998 = vadd.f32 %v1774, %v1910
        %v1999 = vadd.f32 %v1775, %v1913
        %v2000 = vadd.f32 %v1776, %v1918
        %v2001 = vadd.f32 %v1777, %v1921
        %v2002 = vadd.f32 %v1778, %v1926
        %v2003 = vadd.f32 %v1779, %v1929
        %v2004 = vadd.f32 %v1780, %v1934
        %v2005 = vadd.f32 %v1781, %v1937
        %v2006 = vadd.f32 %v1782, %v1942
        %v2007 = vadd.f32 %v1783, %v1945
        %v2008 = vadd.f32 %v1784, %v1950
        %v2009 = vadd.f32 %v1785, %v1953
        %v2010 = vadd.f32 %v1786, %v1958
        %v2011 = vadd.f32 %v1787, %v1961
        %v2012 = vadd.f32 %v1788, %v1966
        %v2013 = vadd.f32 %v1789, %v1969
        %v2014 = vadd.f32 %v1790, %v1974
        %v2015 = vadd.f32 %v1791, %v1977
        %v2016 = vadd.f32 %v1792, %v1982
        %v2017 = vadd.f32 %v1793, %v1985
        %v2018 = vadd.f32 %v1794, %v1990
        %v2019 = vadd.f32 %v1795, %v1993
        %s2020 = scalar_lea.vmem [#allocation5], 448
        %v2021 = vld [vmem:[%s2020] sm:$0xf]
        %v2022 = vld [vmem:[%s2020 + $0x4] sm:$0xf]
        %v2023 = vld [vmem:[%s2020 + $0x8] sm:$0xf]
        %v2024 = vld [vmem:[%s2020 + $0xc] sm:$0xf]
        %v2025 = vld [vmem:[%s2020 + $0x10] sm:$0xf]
        %v2026 = vld [vmem:[%s2020 + $0x14] sm:$0xf]
        %v2027 = vld [vmem:[%s2020 + $0x18] sm:$0xf]
        %v2028 = vld [vmem:[%s2020 + $0x1c] sm:$0xf]
        %v2029 = vld [vmem:[%s2020 + $0x20] sm:$0xf]
        %v2030 = vld [vmem:[%s2020 + $0x24] sm:$0xf]
        %v2031 = vld [vmem:[%s2020 + $0x28] sm:$0xf]
        %v2032 = vld [vmem:[%s2020 + $0x2c] sm:$0xf]
        %v2033 = vld [vmem:[%s2020 + $0x30] sm:$0xf]
        %v2034 = vld [vmem:[%s2020 + $0x34] sm:$0xf]
        %v2035 = vld [vmem:[%s2020 + $0x38] sm:$0xf]
        %v2036 = vld [vmem:[%s2020 + $0x3c] sm:$0xf]
        %v2038 = vshll.u32 %v1817, 16
        %v2040 = vrot.slane %v2038, 1
        %v2041 = vsel %vm559, %v1370, %v2040
        %v2042 = vshrl.u32 %v1817, 16
        %v2044 = vor.u32 %v2042, %v2040
        %v2063 = vunpack.c.l.b16 %v2021
        %v2064 = vunpack.c.l.b16 %v2022
        %v2065 = vunpack.c.l.b16 %v2023
        %v2066 = vunpack.c.l.b16 %v2024
        %v2067 = vunpack.c.l.b16 %v2025
        %v2068 = vunpack.c.l.b16 %v2026
        %v2069 = vunpack.c.l.b16 %v2027
        %v2070 = vunpack.c.l.b16 %v2028
        %v2071 = vunpack.c.l.b16 %v2029
        %v2072 = vunpack.c.l.b16 %v2030
        %v2073 = vunpack.c.l.b16 %v2031
        %v2074 = vunpack.c.l.b16 %v2032
        %v2075 = vunpack.c.l.b16 %v2033
        %v2076 = vunpack.c.l.b16 %v2034
        %v2077 = vunpack.c.l.b16 %v2035
        %v2078 = vunpack.c.l.b16 %v2036
        %v2079 = vpack.c.b16 %v2064, %v2063
        %v2080 = vpack.c.b16 %v2066, %v2065
        %v2081 = vpack.c.b16 %v2068, %v2067
        %v2082 = vpack.c.b16 %v2070, %v2069
        %v2083 = vpack.c.b16 %v2072, %v2071
        %v2084 = vpack.c.b16 %v2074, %v2073
        %v2085 = vpack.c.b16 %v2076, %v2075
        %v2086 = vpack.c.b16 %v2078, %v2077
        %2095 = vmatprep.subr.bf16.mxu0 0
        %2096 = vmatpush1.bf16.msra.mxu0 %v2079
        %2097 = vmatprep.subr.bf16.mxu0 0
        %2098 = vmatpush1.bf16.msra.mxu0 %v2080
        %2099 = vmatprep.subr.bf16.mxu0 0
        %2100 = vmatpush1.bf16.msra.mxu0 %v2081
        %2101 = vmatprep.subr.bf16.mxu0 0
        %2102 = vmatpush1.bf16.msra.mxu0 %v2082
        %2103 = vmatprep.subr.bf16.mxu0 0
        %2104 = vmatpush1.bf16.msra.mxu0 %v2083
        %2105 = vmatprep.subr.bf16.mxu0 0
        %2106 = vmatpush1.bf16.msra.mxu0 %v2084
        %2107 = vmatprep.subr.bf16.mxu0 0
        %2108 = vmatpush1.bf16.msra.mxu0 %v2085
        %2109 = vmatprep.subr.bf16.mxu0 0
        %2110 = vmatpush1.bf16.msra.mxu0 %v2086
        %2111 = vmatprep.subr.bf16.mxu0 0
        %2112 = vmatpush1.bf16.msra.mxu0 0
        %2113 = vmatprep.subr.bf16.mxu0 0
        %2114 = vmatpush1.bf16.msra.mxu0 0
        %2115 = vmatprep.subr.bf16.mxu0 0
        %2116 = vmatpush1.bf16.msra.mxu0 0
        %2117 = vmatprep.subr.bf16.mxu0 0
        %2118 = vmatpush1.bf16.msra.mxu0 0
        %2119 = vmatprep.subr.bf16.mxu0 0
        %2120 = vmatpush1.bf16.msra.mxu0 0
        %2121 = vmatprep.subr.bf16.mxu0 0
        %2122 = vmatpush1.bf16.msra.mxu0 0
        %2123 = vmatprep.subr.bf16.mxu0 0
        %2124 = vmatpush1.bf16.msra.mxu0 0
        %2125 = vmatprep.subr.bf16.mxu0 0
        %2126 = vmatpush1.bf16.msra.mxu0 0
        %2127 = vmatprep.mubr.bf16.mxu0 0
        %2128 = vmatmul.mubr.bf16.gmra.mrb[0].mxu0 %v587
        %v2129 = vpop.f32.mrb[0].mxu0
        %v2130 = vadd.f32 0.0, %v2129
        %v2131 = vpop.f32.mrb[0].mxu0
        %v2132 = vpop.f32.mrb[0].mxu0
        %v2133 = vadd.f32 0.0, %v2132
        %v2134 = vpop.f32.mrb[0].mxu0
        %2135 = vmatprep.mubr.bf16.mxu0 0
        %2136 = vmatmul.mubr.bf16.gmra.mrb[0].mxu0 %v595
        %v2137 = vpop.f32.mrb[0].mxu0
        %v2138 = vadd.f32 0.0, %v2137
        %v2139 = vpop.f32.mrb[0].mxu0
        %v2140 = vpop.f32.mrb[0].mxu0
        %v2141 = vadd.f32 0.0, %v2140
        %v2142 = vpop.f32.mrb[0].mxu0
        %2143 = vmatprep.mubr.bf16.mxu0 0
        %2144 = vmatmul.mubr.bf16.gmra.mrb[0].mxu0 %v603
        %v2145 = vpop.f32.mrb[0].mxu0
        %v2146 = vadd.f32 0.0, %v2145
        %v2147 = vpop.f32.mrb[0].mxu0
        %v2148 = vpop.f32.mrb[0].mxu0
        %v2149 = vadd.f32 0.0, %v2148
        %v2150 = vpop.f32.mrb[0].mxu0
        %2151 = vmatprep.mubr.bf16.mxu0 0
        %2152 = vmatmul.mubr.bf16.gmra.mrb[0].mxu0 %v611
        %v2153 = vpop.f32.mrb[0].mxu0
        %v2154 = vadd.f32 0.0, %v2153
        %v2155 = vpop.f32.mrb[0].mxu0
        %v2156 = vpop.f32.mrb[0].mxu0
        %v2157 = vadd.f32 0.0, %v2156
        %v2158 = vpop.f32.mrb[0].mxu0
        %2159 = vmatprep.mubr.bf16.mxu0 0
        %2160 = vmatmul.mubr.bf16.gmra.mrb[0].mxu0 %v619
        %v2161 = vpop.f32.mrb[0].mxu0
        %v2162 = vadd.f32 0.0, %v2161
        %v2163 = vpop.f32.mrb[0].mxu0
        %v2164 = vpop.f32.mrb[0].mxu0
        %v2165 = vadd.f32 0.0, %v2164
        %v2166 = vpop.f32.mrb[0].mxu0
        %2167 = vmatprep.mubr.bf16.mxu0 0
        %2168 = vmatmul.mubr.bf16.gmra.mrb[0].mxu0 %v627
        %v2169 = vpop.f32.mrb[0].mxu0
        %v2170 = vadd.f32 0.0, %v2169
        %v2171 = vpop.f32.mrb[0].mxu0
        %v2172 = vpop.f32.mrb[0].mxu0
        %v2173 = vadd.f32 0.0, %v2172
        %v2174 = vpop.f32.mrb[0].mxu0
        %2175 = vmatprep.mubr.bf16.mxu0 0
        %2176 = vmatmul.mubr.bf16.gmra.mrb[0].mxu0 %v635
        %v2177 = vpop.f32.mrb[0].mxu0
        %v2178 = vadd.f32 0.0, %v2177
        %v2179 = vpop.f32.mrb[0].mxu0
        %v2180 = vpop.f32.mrb[0].mxu0
        %v2181 = vadd.f32 0.0, %v2180
        %v2182 = vpop.f32.mrb[0].mxu0
        %2183 = vmatprep.mubr.bf16.mxu0 0
        %2184 = vmatmul.mubr.bf16.gmra.mrb[0].mxu0 %v643
        %v2185 = vpop.f32.mrb[0].mxu0
        %v2186 = vadd.f32 0.0, %v2185
        %v2187 = vpop.f32.mrb[0].mxu0
        %v2188 = vpop.f32.mrb[0].mxu0
        %v2189 = vadd.f32 0.0, %v2188
        %v2190 = vpop.f32.mrb[0].mxu0
        %2191 = vmatprep.mubr.bf16.mxu0 0
        %2192 = vmatmul.mubr.bf16.gmra.mrb[0].mxu0 %v651
        %v2193 = vpop.f32.mrb[0].mxu0
        %v2194 = vadd.f32 0.0, %v2193
        %v2195 = vpop.f32.mrb[0].mxu0
        %v2196 = vpop.f32.mrb[0].mxu0
        %v2197 = vadd.f32 0.0, %v2196
        %v2198 = vpop.f32.mrb[0].mxu0
        %2199 = vmatprep.mubr.bf16.mxu0 0
        %2200 = vmatmul.mubr.bf16.gmra.mrb[0].mxu0 %v1367
        %v2201 = vpop.f32.mrb[0].mxu0
        %v2202 = vadd.f32 0.0, %v2201
        %v2203 = vpop.f32.mrb[0].mxu0
        %v2204 = vpop.f32.mrb[0].mxu0
        %v2205 = vadd.f32 0.0, %v2204
        %v2206 = vpop.f32.mrb[0].mxu0
        %2207 = vmatprep.mubr.bf16.mxu0 0
        %2208 = vmatmul.mubr.bf16.gmra.mrb[0].mxu0 %v2041
        %v2209 = vpop.f32.mrb[0].mxu0
        %v2210 = vadd.f32 0.0, %v2209
        %v2211 = vpop.f32.mrb[0].mxu0
        %v2212 = vpop.f32.mrb[0].mxu0
        %v2213 = vadd.f32 0.0, %v2212
        %v2214 = vpop.f32.mrb[0].mxu0
        %2215 = vmatprep.mubr.bf16.mxu0 0
        %2216 = vmatmul.mubr.bf16.gmra.mrb[0].mxu0 %v2044
        %v2217 = vpop.f32.mrb[0].mxu0
        %v2218 = vadd.f32 0.0, %v2217
        %v2219 = vpop.f32.mrb[0].mxu0
        %v2220 = vpop.f32.mrb[0].mxu0
        %v2221 = vadd.f32 0.0, %v2220
        %v2222 = vpop.f32.mrb[0].mxu0
        %2223 = vdwg.mxu0
        %v2224 = vadd.f32 %v1996, %v2130
        %v2225 = vadd.f32 %v1997, %v2133
        %v2226 = vadd.f32 %v1998, %v2138
        %v2227 = vadd.f32 %v1999, %v2141
        %v2228 = vadd.f32 %v2000, %v2146
        %v2229 = vadd.f32 %v2001, %v2149
        %v2230 = vadd.f32 %v2002, %v2154
        %v2231 = vadd.f32 %v2003, %v2157
        %v2232 = vadd.f32 %v2004, %v2162
        %v2233 = vadd.f32 %v2005, %v2165
        %v2234 = vadd.f32 %v2006, %v2170
        %v2235 = vadd.f32 %v2007, %v2173
        %v2236 = vadd.f32 %v2008, %v2178
        %v2237 = vadd.f32 %v2009, %v2181
        %v2238 = vadd.f32 %v2010, %v2186
        %v2239 = vadd.f32 %v2011, %v2189
        %v2240 = vadd.f32 %v2012, %v2194
        %v2241 = vadd.f32 %v2013, %v2197
        %v2242 = vadd.f32 %v2014, %v2202
        %v2243 = vadd.f32 %v2015, %v2205
        %v2244 = vadd.f32 %v2016, %v2210
        %v2245 = vadd.f32 %v2017, %v2213
        %v2246 = vadd.f32 %v2018, %v2218
        %v2247 = vadd.f32 %v2019, %v2221
        %s2248 = scalar_lea.vmem [#allocation5], 512
        %v2249 = vld [vmem:[%s2248] sm:$0xf]
        %v2250 = vld [vmem:[%s2248 + $0x4] sm:$0xf]
        %v2251 = vld [vmem:[%s2248 + $0x8] sm:$0xf]
        %v2252 = vld [vmem:[%s2248 + $0xc] sm:$0xf]
        %v2253 = vld [vmem:[%s2248 + $0x10] sm:$0xf]
        %v2254 = vld [vmem:[%s2248 + $0x14] sm:$0xf]
        %v2255 = vld [vmem:[%s2248 + $0x18] sm:$0xf]
        %v2256 = vld [vmem:[%s2248 + $0x1c] sm:$0xf]
        %v2257 = vld [vmem:[%s2248 + $0x20] sm:$0xf]
        %v2258 = vld [vmem:[%s2248 + $0x24] sm:$0xf]
        %v2259 = vld [vmem:[%s2248 + $0x28] sm:$0xf]
        %v2260 = vld [vmem:[%s2248 + $0x2c] sm:$0xf]
        %v2261 = vld [vmem:[%s2248 + $0x30] sm:$0xf]
        %v2262 = vld [vmem:[%s2248 + $0x34] sm:$0xf]
        %v2263 = vld [vmem:[%s2248 + $0x38] sm:$0xf]
        %v2264 = vld [vmem:[%s2248 + $0x3c] sm:$0xf]
        %v2265 = vrot.slane %v1817, 1
        %v2266 = vsel %vm885, %v1591, %v2265
        %v2285 = vunpack.c.l.b16 %v2249
        %v2286 = vunpack.c.l.b16 %v2250
        %v2287 = vunpack.c.l.b16 %v2251
        %v2288 = vunpack.c.l.b16 %v2252
        %v2289 = vunpack.c.l.b16 %v2253
        %v2290 = vunpack.c.l.b16 %v2254
        %v2291 = vunpack.c.l.b16 %v2255
        %v2292 = vunpack.c.l.b16 %v2256
        %v2293 = vunpack.c.l.b16 %v2257
        %v2294 = vunpack.c.l.b16 %v2258
        %v2295 = vunpack.c.l.b16 %v2259
        %v2296 = vunpack.c.l.b16 %v2260
        %v2297 = vunpack.c.l.b16 %v2261
        %v2298 = vunpack.c.l.b16 %v2262
        %v2299 = vunpack.c.l.b16 %v2263
        %v2300 = vunpack.c.l.b16 %v2264
        %v2301 = vpack.c.b16 %v2286, %v2285
        %v2302 = vpack.c.b16 %v2288, %v2287
        %v2303 = vpack.c.b16 %v2290, %v2289
        %v2304 = vpack.c.b16 %v2292, %v2291
        %v2305 = vpack.c.b16 %v2294, %v2293
        %v2306 = vpack.c.b16 %v2296, %v2295
        %v2307 = vpack.c.b16 %v2298, %v2297
        %v2308 = vpack.c.b16 %v2300, %v2299
        %2317 = vmatprep.subr.bf16.mxu0 0
        %2318 = vmatpush1.bf16.msra.mxu0 %v2301
        %2319 = vmatprep.subr.bf16.mxu0 0
        %2320 = vmatpush1.bf16.msra.mxu0 %v2302
        %2321 = vmatprep.subr.bf16.mxu0 0
        %2322 = vmatpush1.bf16.msra.mxu0 %v2303
        %2323 = vmatprep.subr.bf16.mxu0 0
        %2324 = vmatpush1.bf16.msra.mxu0 %v2304
        %2325 = vmatprep.subr.bf16.mxu0 0
        %2326 = vmatpush1.bf16.msra.mxu0 %v2305
        %2327 = vmatprep.subr.bf16.mxu0 0
        %2328 = vmatpush1.bf16.msra.mxu0 %v2306
        %2329 = vmatprep.subr.bf16.mxu0 0
        %2330 = vmatpush1.bf16.msra.mxu0 %v2307
        %2331 = vmatprep.subr.bf16.mxu0 0
        %2332 = vmatpush1.bf16.msra.mxu0 %v2308
        %2333 = vmatprep.subr.bf16.mxu0 0
        %2334 = vmatpush1.bf16.msra.mxu0 0
        %2335 = vmatprep.subr.bf16.mxu0 0
        %2336 = vmatpush1.bf16.msra.mxu0 0
        %2337 = vmatprep.subr.bf16.mxu0 0
        %2338 = vmatpush1.bf16.msra.mxu0 0
        %2339 = vmatprep.subr.bf16.mxu0 0
        %2340 = vmatpush1.bf16.msra.mxu0 0
        %2341 = vmatprep.subr.bf16.mxu0 0
        %2342 = vmatpush1.bf16.msra.mxu0 0
        %2343 = vmatprep.subr.bf16.mxu0 0
        %2344 = vmatpush1.bf16.msra.mxu0 0
        %2345 = vmatprep.subr.bf16.mxu0 0
        %2346 = vmatpush1.bf16.msra.mxu0 0
        %2347 = vmatprep.subr.bf16.mxu0 0
        %2348 = vmatpush1.bf16.msra.mxu0 0
        %2349 = vmatprep.mubr.bf16.mxu0 0
        %2350 = vmatmul.mubr.bf16.gmra.mrb[0].mxu0 %v892
        %v2351 = vpop.f32.mrb[0].mxu0
        %v2352 = vadd.f32 0.0, %v2351
        %v2353 = vpop.f32.mrb[0].mxu0
        %v2354 = vpop.f32.mrb[0].mxu0
        %v2355 = vadd.f32 0.0, %v2354
        %v2356 = vpop.f32.mrb[0].mxu0
        %2357 = vmatprep.mubr.bf16.mxu0 0
        %2358 = vmatmul.mubr.bf16.gmra.mrb[0].mxu0 %v894
        %v2359 = vpop.f32.mrb[0].mxu0
        %v2360 = vadd.f32 0.0, %v2359
        %v2361 = vpop.f32.mrb[0].mxu0
        %v2362 = vpop.f32.mrb[0].mxu0
        %v2363 = vadd.f32 0.0, %v2362
        %v2364 = vpop.f32.mrb[0].mxu0
        %2365 = vmatprep.mubr.bf16.mxu0 0
        %2366 = vmatmul.mubr.bf16.gmra.mrb[0].mxu0 %v896
        %v2367 = vpop.f32.mrb[0].mxu0
        %v2368 = vadd.f32 0.0, %v2367
        %v2369 = vpop.f32.mrb[0].mxu0
        %v2370 = vpop.f32.mrb[0].mxu0
        %v2371 = vadd.f32 0.0, %v2370
        %v2372 = vpop.f32.mrb[0].mxu0
        %2373 = vmatprep.mubr.bf16.mxu0 0
        %2374 = vmatmul.mubr.bf16.gmra.mrb[0].mxu0 %v898
        %v2375 = vpop.f32.mrb[0].mxu0
        %v2376 = vadd.f32 0.0, %v2375
        %v2377 = vpop.f32.mrb[0].mxu0
        %v2378 = vpop.f32.mrb[0].mxu0
        %v2379 = vadd.f32 0.0, %v2378
        %v2380 = vpop.f32.mrb[0].mxu0
        %2381 = vmatprep.mubr.bf16.mxu0 0
        %2382 = vmatmul.mubr.bf16.gmra.mrb[0].mxu0 %v900
        %v2383 = vpop.f32.mrb[0].mxu0
        %v2384 = vadd.f32 0.0, %v2383
        %v2385 = vpop.f32.mrb[0].mxu0
        %v2386 = vpop.f32.mrb[0].mxu0
        %v2387 = vadd.f32 0.0, %v2386
        %v2388 = vpop.f32.mrb[0].mxu0
        %2389 = vmatprep.mubr.bf16.mxu0 0
        %2390 = vmatmul.mubr.bf16.gmra.mrb[0].mxu0 %v902
        %v2391 = vpop.f32.mrb[0].mxu0
        %v2392 = vadd.f32 0.0, %v2391
        %v2393 = vpop.f32.mrb[0].mxu0
        %v2394 = vpop.f32.mrb[0].mxu0
        %v2395 = vadd.f32 0.0, %v2394
        %v2396 = vpop.f32.mrb[0].mxu0
        %2397 = vmatprep.mubr.bf16.mxu0 0
        %2398 = vmatmul.mubr.bf16.gmra.mrb[0].mxu0 %v904
        %v2399 = vpop.f32.mrb[0].mxu0
        %v2400 = vadd.f32 0.0, %v2399
        %v2401 = vpop.f32.mrb[0].mxu0
        %v2402 = vpop.f32.mrb[0].mxu0
        %v2403 = vadd.f32 0.0, %v2402
        %v2404 = vpop.f32.mrb[0].mxu0
        %2405 = vmatprep.mubr.bf16.mxu0 0
        %2406 = vmatmul.mubr.bf16.gmra.mrb[0].mxu0 %v906
        %v2407 = vpop.f32.mrb[0].mxu0
        %v2408 = vadd.f32 0.0, %v2407
        %v2409 = vpop.f32.mrb[0].mxu0
        %v2410 = vpop.f32.mrb[0].mxu0
        %v2411 = vadd.f32 0.0, %v2410
        %v2412 = vpop.f32.mrb[0].mxu0
        %2413 = vmatprep.mubr.bf16.mxu0 0
        %2414 = vmatmul.mubr.bf16.gmra.mrb[0].mxu0 %v908
        %v2415 = vpop.f32.mrb[0].mxu0
        %v2416 = vadd.f32 0.0, %v2415
        %v2417 = vpop.f32.mrb[0].mxu0
        %v2418 = vpop.f32.mrb[0].mxu0
        %v2419 = vadd.f32 0.0, %v2418
        %v2420 = vpop.f32.mrb[0].mxu0
        %2421 = vmatprep.mubr.bf16.mxu0 0
        %2422 = vmatmul.mubr.bf16.gmra.mrb[0].mxu0 %v1592
        %v2423 = vpop.f32.mrb[0].mxu0
        %v2424 = vadd.f32 0.0, %v2423
        %v2425 = vpop.f32.mrb[0].mxu0
        %v2426 = vpop.f32.mrb[0].mxu0
        %v2427 = vadd.f32 0.0, %v2426
        %v2428 = vpop.f32.mrb[0].mxu0
        %2429 = vmatprep.mubr.bf16.mxu0 0
        %2430 = vmatmul.mubr.bf16.gmra.mrb[0].mxu0 %v2266
        %v2431 = vpop.f32.mrb[0].mxu0
        %v2432 = vadd.f32 0.0, %v2431
        %v2433 = vpop.f32.mrb[0].mxu0
        %v2434 = vpop.f32.mrb[0].mxu0
        %v2435 = vadd.f32 0.0, %v2434
        %v2436 = vpop.f32.mrb[0].mxu0
        %2437 = vmatprep.mubr.bf16.mxu0 0
        %2438 = vmatmul.mubr.bf16.gmra.mrb[0].mxu0 %v2265
        %v2439 = vpop.f32.mrb[0].mxu0
        %v2440 = vadd.f32 0.0, %v2439
        %v2441 = vpop.f32.mrb[0].mxu0
        %v2442 = vpop.f32.mrb[0].mxu0
        %v2443 = vadd.f32 0.0, %v2442
        %v2444 = vpop.f32.mrb[0].mxu0
        %2445 = vdwg.mxu0
        %v2446 = vadd.f32 %v2224, %v2352
        %v2447 = vadd.f32 %v2225, %v2355
        %v2448 = vadd.f32 %v2226, %v2360
        %v2449 = vadd.f32 %v2227, %v2363
        %v2450 = vadd.f32 %v2228, %v2368
        %v2451 = vadd.f32 %v2229, %v2371
        %v2452 = vadd.f32 %v2230, %v2376
        %v2453 = vadd.f32 %v2231, %v2379
        %v2454 = vadd.f32 %v2232, %v2384
        %v2455 = vadd.f32 %v2233, %v2387
        %v2456 = vadd.f32 %v2234, %v2392
        %v2457 = vadd.f32 %v2235, %v2395
        %v2458 = vadd.f32 %v2236, %v2400
        %v2459 = vadd.f32 %v2237, %v2403
        %v2460 = vadd.f32 %v2238, %v2408
        %v2461 = vadd.f32 %v2239, %v2411
        %v2462 = vadd.f32 %v2240, %v2416
        %v2463 = vadd.f32 %v2241, %v2419
        %v2464 = vadd.f32 %v2242, %v2424
        %v2465 = vadd.f32 %v2243, %v2427
        %v2466 = vadd.f32 %v2244, %v2432
        %v2467 = vadd.f32 %v2245, %v2435
        %v2468 = vadd.f32 %v2246, %v2440
        %v2469 = vadd.f32 %v2247, %v2443
        %v2470 = vmax.f32 %v2446, 0.0
        %v2471 = vmax.f32 %v2447, 0.0
        %v2472 = vmax.f32 %v2448, 0.0
        %v2473 = vmax.f32 %v2449, 0.0
        %v2474 = vmax.f32 %v2450, 0.0
        %v2475 = vmax.f32 %v2451, 0.0
        %v2476 = vmax.f32 %v2452, 0.0
        %v2477 = vmax.f32 %v2453, 0.0
        %v2478 = vmax.f32 %v2454, 0.0
        %v2479 = vmax.f32 %v2455, 0.0
        %v2480 = vmax.f32 %v2456, 0.0
        %v2481 = vmax.f32 %v2457, 0.0
        %v2482 = vmax.f32 %v2458, 0.0
        %v2483 = vmax.f32 %v2459, 0.0
        %v2484 = vmax.f32 %v2460, 0.0
        %v2485 = vmax.f32 %v2461, 0.0
        %v2486 = vmax.f32 %v2462, 0.0
        %v2487 = vmax.f32 %v2463, 0.0
        %v2488 = vmax.f32 %v2464, 0.0
        %v2489 = vmax.f32 %v2465, 0.0
        %v2490 = vmax.f32 %v2466, 0.0
        %v2491 = vmax.f32 %v2467, 0.0
        %v2492 = vmax.f32 %v2468, 0.0
        %v2493 = vmax.f32 %v2469, 0.0
        %v2494 = vpack.c.bf16 %v2471, %v2470
        %v2495 = vpack.c.bf16 %v2473, %v2472
        %v2496 = vpack.c.bf16 %v2475, %v2474
        %v2497 = vpack.c.bf16 %v2477, %v2476
        %v2498 = vpack.c.bf16 %v2479, %v2478
        %v2499 = vpack.c.bf16 %v2481, %v2480
        %v2500 = vpack.c.bf16 %v2483, %v2482
        %v2501 = vpack.c.bf16 %v2485, %v2484
        %v2502 = vpack.c.bf16 %v2487, %v2486
        %v2503 = vpack.c.bf16 %v2489, %v2488
        %v2504 = vpack.c.bf16 %v2491, %v2490
        %v2505 = vpack.c.bf16 %v2493, %v2492
        %v2518 = vunpack.c.l.b16 %v2494
        %v2519 = vunpack.c.h.b16 %v2494
        %v2520 = vunpack.c.l.b16 %v2495
        %v2521 = vunpack.c.h.b16 %v2495
        %v2522 = vunpack.c.l.b16 %v2496
        %v2523 = vunpack.c.h.b16 %v2496
        %v2524 = vunpack.c.l.b16 %v2497
        %v2525 = vunpack.c.h.b16 %v2497
        %v2526 = vunpack.c.l.b16 %v2498
        %v2527 = vunpack.c.h.b16 %v2498
        %v2528 = vunpack.c.l.b16 %v2499
        %v2529 = vunpack.c.h.b16 %v2499
        %v2530 = vunpack.c.l.b16 %v2500
        %v2531 = vunpack.c.h.b16 %v2500
        %v2532 = vunpack.c.l.b16 %v2501
        %v2533 = vunpack.c.h.b16 %v2501
        %v2534 = vunpack.c.l.b16 %v2502
        %v2535 = vunpack.c.h.b16 %v2502
        %v2536 = vunpack.c.l.b16 %v2503
        %v2537 = vunpack.c.h.b16 %v2503
        %v2538 = vunpack.c.l.b16 %v2504
        %v2539 = vunpack.c.h.b16 %v2504
        %v2540 = vunpack.c.l.b16 %v2505
        %v2541 = vunpack.c.h.b16 %v2505
        %v2542 = vpack.c.b16 %v2518, %v2518
        %v2543 = vpack.c.b16 %v2519, %v2519
        %v2544 = vpack.c.b16 %v2520, %v2520
        %v2545 = vpack.c.b16 %v2521, %v2521
        %v2546 = vpack.c.b16 %v2522, %v2522
        %v2547 = vpack.c.b16 %v2523, %v2523
        %v2548 = vpack.c.b16 %v2524, %v2524
        %v2549 = vpack.c.b16 %v2525, %v2525
        %v2550 = vpack.c.b16 %v2526, %v2526
        %v2551 = vpack.c.b16 %v2527, %v2527
        %v2552 = vpack.c.b16 %v2528, %v2528
        %v2553 = vpack.c.b16 %v2529, %v2529
        %v2554 = vpack.c.b16 %v2530, %v2530
        %v2555 = vpack.c.b16 %v2531, %v2531
        %v2556 = vpack.c.b16 %v2532, %v2532
        %v2557 = vpack.c.b16 %v2533, %v2533
        %v2558 = vpack.c.b16 %v2534, %v2534
        %v2559 = vpack.c.b16 %v2535, %v2535
        %v2560 = vpack.c.b16 %v2536, %v2536
        %v2561 = vpack.c.b16 %v2537, %v2537
        %v2562 = vpack.c.b16 %v2538, %v2538
        %v2563 = vpack.c.b16 %v2539, %v2539
        %v2564 = vpack.c.b16 %v2540, %v2540
        %v2565 = vpack.c.b16 %v2541, %v2541
        %2590 = vst [vmem:[%s215] sm:$0xf] %v2542
        %2591 = vst [vmem:[%s215 + $0x4] sm:$0xf] %v2543
        %2592 = vst [vmem:[%s215 + $0x8] sm:$0xf] %v2544
        %2593 = vst [vmem:[%s215 + $0xc] sm:$0xf] %v2545
        %2594 = vst [vmem:[%s215 + $0x10] sm:$0xf] %v2546
        %2595 = vst [vmem:[%s215 + $0x14] sm:$0xf] %v2547
        %2596 = vst [vmem:[%s215 + $0x18] sm:$0xf] %v2548
        %2597 = vst [vmem:[%s215 + $0x1c] sm:$0xf] %v2549
        %2598 = vst [vmem:[%s215 + $0x20] sm:$0xf] %v2550
        %2599 = vst [vmem:[%s215 + $0x24] sm:$0xf] %v2551
        %2600 = vst [vmem:[%s215 + $0x28] sm:$0xf] %v2552
        %2601 = vst [vmem:[%s215 + $0x2c] sm:$0xf] %v2553
        %2602 = vst [vmem:[%s215 + $0x30] sm:$0xf] %v2554
        %2603 = vst [vmem:[%s215 + $0x34] sm:$0xf] %v2555
        %2604 = vst [vmem:[%s215 + $0x38] sm:$0xf] %v2556
        %2605 = vst [vmem:[%s215 + $0x3c] sm:$0xf] %v2557
        %2606 = vst [vmem:[%s215 + $0x40] sm:$0xf] %v2558
        %2607 = vst [vmem:[%s215 + $0x44] sm:$0xf] %v2559
        %2608 = vst [vmem:[%s215 + $0x48] sm:$0xf] %v2560
        %2609 = vst [vmem:[%s215 + $0x4c] sm:$0xf] %v2561
        %2610 = vst [vmem:[%s215 + $0x50] sm:$0xf] %v2562
        %2611 = vst [vmem:[%s215 + $0x54] sm:$0xf] %v2563
        %2612 = vst [vmem:[%s215 + $0x58] sm:$0xf] %v2564
        %2613 = vst [vmem:[%s215 + $0x5c] sm:$0x3] %v2565
        %s2614 = sand.u32 %s97, 1
        %s2615 = scalar_lea.sflag [#allocation4], %s2614
        %s2616 = sand.u32 %s97, 1
        %s2617 = smul.addr %s2616, 96
        %s2618 = scalar_lea.vmem [#allocation8], %s2617
        // Predicated region
        $region45: #{decoder_forward.5} parent=31 // pred_check
          %p2619 = pneg %p107
        $region46: #{decoder_forward.5} parent=31 // pred_check_branch
          %2621 = sbr.rel (%p2619) target = $region48
        $region47: #{decoder_forward.5} parent=31 // pred_region
          %s2623 = ssub.s32 1536, 1536
          %2624 = vsyncadd %s2615, %s2623
          %s2625 = smul.addr %s21, 24
          %s2626 = smul.addr %s2625, 64
          %s2627 = scalar_lea.hbm %s3, %s2626
          %s2628 = sshll.u32 %s2618, 4
          %s2629 = int_to_ptr.vmem [resolvable:$true] %s2628
          %2634 = dma.vmem_to_hbm [thread:$0]  %s2629, 1536, %s2627, %s2615, 64, 64, 4
        $region48: #{decoder_forward.5} parent=31 // pred_fallthru
          _
      $region32: #{decoder_forward.5} parent=5 // pred_fallthru
        _
      %p2635 = scmp.le.s32.totalorder 2, %s16
      // Predicated region
      $region49: #{decoder_forward.5} parent=5 // pred_check
        %p2636 = pneg %p2635
      $region50: #{decoder_forward.5} parent=5 // pred_check_branch
        %2638 = sbr.rel (%p2636) target = $region52
      $region51: #{decoder_forward.5} parent=5 // pred_region
        %s2639 = ssub.s32 %s16, 2
        // Predicated region
        $region53: #{decoder_forward.5} parent=51 // pred_check
          %p2640 = pneg %p113
        $region54: #{decoder_forward.5} parent=51 // pred_check_branch
          %2642 = sbr.rel (%p2640) target = $region56
        $region55: #{decoder_forward.5} parent=51 // pred_region
          %s2643 = sand.u32 %s98, 1
          %s2644 = scalar_lea.sflag [#allocation4], %s2643
          %s2645 = sand.u32 %s98, 1
          %s2646 = smul.addr %s2645, 96
          %s2647 = scalar_lea.vmem [#allocation8], %s2646
          %2648 = dma.done %s2644, 1536
        $region56: #{decoder_forward.5} parent=51 // pred_fallthru
          _
      $region52: #{decoder_forward.5} parent=5 // pred_fallthru
        _
    $region6: #{decoder_forward.5} parent=1 // loop_footer
      %s20 = sadd.s32 1, %s16
    $region7: #{decoder_forward.5} parent=1 // loop_footer_branch
      %15 = sbr.rel target = $region3
    $region8: #{decoder_forward.5} parent=1 // loop_exit
      _
    %2649 = vsyncpa [#allocation3], 1
    %s2650 = scalar_lea.sflag [#allocation3], 1
    %2651 = vsyncpa %s2650, 1
    %2652 = vsyncpa [#allocation6], 1
    %2653 = vsyncpa [#allocation4], 1
    %s2654 = scalar_lea.sflag [#allocation4], 1
    %2655 = vsyncpa %s2654, 1

// kernel: decoder_forward.4
$region0: #{decoder_forward.4}
  #allocation0 [shape = 'u32[]', space=smem, size = 0x4, offset = 0x4, fixed_abs, tag = 'smem constant byte address 0x4 - core index']
  #allocation1 [shape = 'u32[144,128]{1,0:T(1,128)}', space=vmem, size = 0x12000, scoped, tag = 'internal scratch']
  %s0 = inlined_call_operand.hbm [shape: bf16[2,256,128], index: 0, kind: input, shape index: {}]
  %s1 = inlined_call_operand.hbm [shape: bf16[2,256,128], index: 1, kind: input, shape index: {}]
  %s2 = inlined_call_operand.hbm [shape: bf16[3,3,128,128], index: 2, kind: input, shape index: {}]
  %s3 = inlined_call_operand.hbm [shape: bf16[3,3,128,128], index: 3, kind: input, shape index: {}]
  %s4 = inlined_call_operand.hbm [shape: f32[1,128], index: 4, kind: input, shape index: {}]
  %s5 = inlined_call_operand.hbm [shape: bf16[2,222,128], index: 5, kind: output, shape index: {}]
  %s6 = sld [smem:[#allocation0]]
  $region73: #{decoder_forward.4} parent=0
    _
  %s8 = ssub.s32 1, %s6
  %s9 = scalar_select 0, %s8, %s6
  $region1: #{decoder_forward.4} parent=0
    #allocation2 [shape = 'u8[131072]{0}', space=vmem, size = 0x20000, scoped, tag = 'input window, operand 0']
    #allocation3 [shape = 's32[2]{0}', space=sflag, size = 0x8, scoped, tag = 'scoped memory for decoder_forward.4']
    #allocation4 [shape = 's32[2]{0}', space=sflag, size = 0x8, scoped, tag = 'scoped memory for decoder_forward.4']
    #allocation5 [shape = 'u8[131072]{0}', space=vmem, size = 0x20000, scoped, tag = 'input window, operand 1']
    #allocation6 [shape = 's32[2]{0}', space=sflag, size = 0x8, scoped, tag = 'scoped memory for decoder_forward.4']
    #allocation7 [shape = 'u8[294912]{0}', space=vmem, size = 0x48000, scoped, tag = 'input window, operand 2, single buffered']
    #allocation8 [shape = 'u8[294912]{0}', space=vmem, size = 0x48000, scoped, tag = 'input window, operand 3, single buffered']
    #allocation9 [shape = 's32[1]{0}', space=sflag, size = 0x4, scoped, tag = 'scoped memory for decoder_forward.4']
    #allocation10 [shape = 'u8[512]{0}', space=vmem, size = 0x400, scoped, tag = 'input window, operand 4, single buffered']
    #allocation11 [shape = 'u8[114688]{0}', space=vmem, size = 0x1c000, scoped, tag = 'output window, operand 0']
    %10 = vsyncpa [#allocation3], 0
    %s11 = scalar_lea.sflag [#allocation3], 1
    %12 = vsyncpa %s11, 0
    %13 = vsyncpa [#allocation6], 0
    %s14 = scalar_lea.sflag [#allocation6], 1
    %15 = vsyncpa %s14, 0
    %16 = vsyncpa [#allocation9], 0
    %17 = vsyncpa [#allocation4], 0
    %s18 = scalar_lea.sflag [#allocation4], 1
    %19 = vsyncpa %s18, 0
    loop: start=0, step=1, limit=4
    $region2: #{decoder_forward.4} parent=1 // loop_pre_header
      _
    $region3: #{decoder_forward.4} parent=1 // loop_header
      %s21 = sphi 0, %s25
      %p22 = scmp.ge.s32.totalorder %s21, 4
      %s31 = sphi 0, %s33
      %s34 = sphi 0, %s31
      %s35 = sphi 0, %s34
      %s51 = sphi 0, %s35
      %s57 = sphi 0, %s59
      %s60 = sphi 0, %s57
      %s61 = sphi 0, %s60
      %s77 = sphi 0, %s61
      %s81 = sphi 0, %s81
      %s83 = sphi 0, %s81
      %s84 = sphi 0, %s83
      %s98 = sphi 0, %s84
      %s102 = sphi 0, %s102
      %s104 = sphi 0, %s102
      %s105 = sphi 0, %s104
      %s119 = sphi 0, %s105
      %s123 = sphi 0, %s123
      %s125 = sphi 0, %s123
      %s126 = sphi 0, %s125
      %s140 = sphi 0, %s126
      %s146 = sphi 0, %s148
      %s149 = sphi 0, %s146
      %s150 = sphi 0, %s149
      %s166 = sphi 0, %s150
    $region4: #{decoder_forward.4} parent=1 // loop_header_branch
      %24 = sbr.rel (%p22) target = $region8
    $region5: #{decoder_forward.4} parent=1 // loop_body
      %s26 = ssub.s32 %s21, 1
      %s27 = ssub.s32 %s21, 2
      %s28 = sadd.s32 %s21, 1
      %s29 = ssub.s32 %s21, %s28
      %p30 = scmp.eq.s32.totalorder %s29, 0
      %s32 = sadd.s32 %s31, 1
      %s33 = scalar_select %p30, %s31, %s32
      %p36 = pneg %p30
      %p37 = scmp.eq.s32.totalorder %s21, 1
      %p38 = por %p36, %p37
      %p39 = scmp.ne.s32.totalorder %s31, %s34
      %p40 = scmp.eq.s32.totalorder %s21, 0
      %p41 = por %p39, %p40
      %p42 = scmp.ne.s32.totalorder %s31, %s34
      %p43 = scmp.eq.s32.totalorder %s26, 1
      %p44 = por %p42, %p43
      %p45 = scmp.ne.s32.totalorder %s34, %s35
      %p46 = scmp.eq.s32.totalorder %s26, 0
      %p47 = por %p45, %p46
      %p48 = scmp.ne.s32.totalorder %s34, %s35
      %p49 = scmp.eq.s32.totalorder %s27, 1
      %p50 = por %p48, %p49
      %p52 = scmp.ne.s32.totalorder %s35, %s51
      %p53 = scmp.eq.s32.totalorder %s27, 0
      %p54 = por %p52, %p53
      %s55 = ssub.s32 %s21, %s28
      %p56 = scmp.eq.s32.totalorder %s55, 0
      %s58 = sadd.s32 %s57, 1
      %s59 = scalar_select %p56, %s57, %s58
      %p62 = pneg %p56
      %p63 = scmp.eq.s32.totalorder %s21, 1
      %p64 = por %p62, %p63
      %p65 = scmp.ne.s32.totalorder %s57, %s60
      %p66 = scmp.eq.s32.totalorder %s21, 0
      %p67 = por %p65, %p66
      %p68 = scmp.ne.s32.totalorder %s57, %s60
      %p69 = scmp.eq.s32.totalorder %s26, 1
      %p70 = por %p68, %p69
      %p71 = scmp.ne.s32.totalorder %s60, %s61
      %p72 = scmp.eq.s32.totalorder %s26, 0
      %p73 = por %p71, %p72
      %p74 = scmp.ne.s32.totalorder %s60, %s61
      %p75 = scmp.eq.s32.totalorder %s27, 1
      %p76 = por %p74, %p75
      %p78 = scmp.ne.s32.totalorder %s61, %s77
      %p79 = scmp.eq.s32.totalorder %s27, 0
      %p80 = por %p78, %p79
      %s82 = sadd.s32 %s81, 1
      %p85 = scmp.eq.s32.totalorder %s21, 1
      %p86 = scmp.ne.s32.totalorder %s81, %s83
      %p87 = scmp.eq.s32.totalorder %s21, 0
      %p88 = por %p86, %p87
      %p89 = scmp.ne.s32.totalorder %s81, %s83
      %p90 = scmp.eq.s32.totalorder %s26, 1
      %p91 = por %p89, %p90
      %p92 = scmp.ne.s32.totalorder %s83, %s84
      %p93 = scmp.eq.s32.totalorder %s26, 0
      %p94 = por %p92, %p93
      %p95 = scmp.ne.s32.totalorder %s83, %s84
      %p96 = scmp.eq.s32.totalorder %s27, 1
      %p97 = por %p95, %p96
      %p99 = scmp.ne.s32.totalorder %s84, %s98
      %p100 = scmp.eq.s32.totalorder %s27, 0
      %p101 = por %p99, %p100
      %s103 = sadd.s32 %s102, 1
      %p106 = scmp.eq.s32.totalorder %s21, 1
      %p107 = scmp.ne.s32.totalorder %s102, %s104
      %p108 = scmp.eq.s32.totalorder %s21, 0
      %p109 = por %p107, %p108
      %p110 = scmp.ne.s32.totalorder %s102, %s104
      %p111 = scmp.eq.s32.totalorder %s26, 1
      %p112 = por %p110, %p111
      %p113 = scmp.ne.s32.totalorder %s104, %s105
      %p114 = scmp.eq.s32.totalorder %s26, 0
      %p115 = por %p113, %p114
      %p116 = scmp.ne.s32.totalorder %s104, %s105
      %p117 = scmp.eq.s32.totalorder %s27, 1
      %p118 = por %p116, %p117
      %p120 = scmp.ne.s32.totalorder %s105, %s119
      %p121 = scmp.eq.s32.totalorder %s27, 0
      %p122 = por %p120, %p121
      %s124 = sadd.s32 %s123, 1
      %p127 = scmp.eq.s32.totalorder %s21, 1
      %p128 = scmp.ne.s32.totalorder %s123, %s125
      %p129 = scmp.eq.s32.totalorder %s21, 0
      %p130 = por %p128, %p129
      %p131 = scmp.ne.s32.totalorder %s123, %s125
      %p132 = scmp.eq.s32.totalorder %s26, 1
      %p133 = por %p131, %p132
      %p134 = scmp.ne.s32.totalorder %s125, %s126
      %p135 = scmp.eq.s32.totalorder %s26, 0
      %p136 = por %p134, %p135
      %p137 = scmp.ne.s32.totalorder %s125, %s126
      %p138 = scmp.eq.s32.totalorder %s27, 1
      %p139 = por %p137, %p138
      %p141 = scmp.ne.s32.totalorder %s126, %s140
      %p142 = scmp.eq.s32.totalorder %s27, 0
      %p143 = por %p141, %p142
      %s144 = ssub.s32 %s21, %s28
      %p145 = scmp.eq.s32.totalorder %s144, 0
      %s147 = sadd.s32 %s146, 1
      %s148 = scalar_select %p145, %s146, %s147
      %p151 = pneg %p145
      %p152 = scmp.eq.s32.totalorder %s21, 1
      %p153 = por %p151, %p152
      %p154 = scmp.ne.s32.totalorder %s146, %s149
      %p155 = scmp.eq.s32.totalorder %s21, 0
      %p156 = por %p154, %p155
      %p157 = scmp.ne.s32.totalorder %s146, %s149
      %p158 = scmp.eq.s32.totalorder %s26, 1
      %p159 = por %p157, %p158
      %p160 = scmp.ne.s32.totalorder %s149, %s150
      %p161 = scmp.eq.s32.totalorder %s26, 0
      %p162 = por %p160, %p161
      %p163 = scmp.ne.s32.totalorder %s149, %s150
      %p164 = scmp.eq.s32.totalorder %s27, 1
      %p165 = por %p163, %p164
      %p167 = scmp.ne.s32.totalorder %s150, %s166
      %p168 = scmp.eq.s32.totalorder %s27, 0
      %p169 = por %p167, %p168
      %p170 = scmp.le.s32.totalorder 1, %s21
      %p171 = scmp.lt.s32.totalorder %s21, 3
      %p172 = pnand %p170, %p171
      %p173 = pneg %p172
      // Predicated region
      $region9: #{decoder_forward.4} parent=5 // pred_check
        _
      $region10: #{decoder_forward.4} parent=5 // pred_check_branch
        %175 = sbr.rel (%p172) target = $region12
      $region11: #{decoder_forward.4} parent=5 // pred_region
        %s176 = ssub.s32 %s21, 1
        // Predicated region
        $region13: #{decoder_forward.4} parent=11 // pred_check
          %p177 = pneg %p94
        $region14: #{decoder_forward.4} parent=11 // pred_check_branch
          %179 = sbr.rel (%p177) target = $region16
        $region15: #{decoder_forward.4} parent=11 // pred_region
          %s181 = ssub.s32 9216, 9216
          %182 = vsyncadd [#allocation6], %s181
          %s183 = sshll.u32 [#allocation7], 4
          %s184 = int_to_ptr.vmem [resolvable:$true] %s183
          %189 = dma.hbm_to_vmem [thread:$0]  %s2, 9216, %s184, [#allocation6], 64, 64, 4
        $region16: #{decoder_forward.4} parent=11 // pred_fallthru
          _
        // Predicated region
        $region17: #{decoder_forward.4} parent=11 // pred_check
          %p190 = pneg %p115
        $region18: #{decoder_forward.4} parent=11 // pred_check_branch
          %192 = sbr.rel (%p190) target = $region20
        $region19: #{decoder_forward.4} parent=11 // pred_region
          %s194 = ssub.s32 9216, 9216
          %195 = vsyncadd [#allocation9], %s194
          %s196 = sshll.u32 [#allocation8], 4
          %s197 = int_to_ptr.vmem [resolvable:$true] %s196
          %202 = dma.hbm_to_vmem [thread:$0]  %s3, 9216, %s197, [#allocation9], 64, 64, 4
        $region20: #{decoder_forward.4} parent=11 // pred_fallthru
          _
        // Predicated region
        $region21: #{decoder_forward.4} parent=11 // pred_check
          %p203 = pneg %p136
        $region22: #{decoder_forward.4} parent=11 // pred_check_branch
          %205 = sbr.rel (%p203) target = $region24
        $region23: #{decoder_forward.4} parent=11 // pred_region
          %s207 = ssub.s32 16, 16
          %208 = vsyncadd [#allocation9], %s207
          %s210 = sshll.u32 [#allocation10], 4
          %s211 = int_to_ptr.vmem [resolvable:$true] %s210
          %213 = dma.hbm_to_vmem [thread:$0]  %s4, 16, %s211, [#allocation9]
        $region24: #{decoder_forward.4} parent=11 // pred_fallthru
          _
      $region12: #{decoder_forward.4} parent=5 // pred_fallthru
        _
      %p214 = scmp.lt.s32.totalorder %s21, 2
      // Predicated region
      $region25: #{decoder_forward.4} parent=5 // pred_check
        %p215 = pneg %p214
      $region26: #{decoder_forward.4} parent=5 // pred_check_branch
        %217 = sbr.rel (%p215) target = $region28
      $region27: #{decoder_forward.4} parent=5 // pred_region
        // Predicated region
        $region29: #{decoder_forward.4} parent=27 // pred_check
          %p218 = pneg %p41
        $region30: #{decoder_forward.4} parent=27 // pred_check_branch
          %220 = sbr.rel (%p218) target = $region32
        $region31: #{decoder_forward.4} parent=27 // pred_region
          %s221 = sand.u32 %s31, 1
          %s222 = scalar_lea.sflag [#allocation3], %s221
          %s223 = sand.u32 %s31, 1
          %s224 = smul.addr %s223, 128
          %s225 = scalar_lea.vmem [#allocation2], %s224
          %s227 = ssub.s32 2048, 2048
          %228 = vsyncadd %s222, %s227
          %s229 = smul.addr %s21, 32
          %s230 = smul.addr %s229, 64
          %s231 = scalar_lea.hbm %s0, %s230
          %s232 = sshll.u32 %s225, 4
          %s233 = int_to_ptr.vmem [resolvable:$true] %s232
          %238 = dma.hbm_to_vmem [thread:$0]  %s231, 2048, %s233, %s222, 64, 64, 4
        $region32: #{decoder_forward.4} parent=27 // pred_fallthru
          _
        // Predicated region
        $region33: #{decoder_forward.4} parent=27 // pred_check
          %p239 = pneg %p67
        $region34: #{decoder_forward.4} parent=27 // pred_check_branch
          %241 = sbr.rel (%p239) target = $region36
        $region35: #{decoder_forward.4} parent=27 // pred_region
          %s242 = sand.u32 %s21, 1
          %s243 = scalar_lea.sflag [#allocation6], %s242
          %s244 = sand.u32 %s57, 1
          %s245 = smul.addr %s244, 128
          %s246 = scalar_lea.vmem [#allocation5], %s245
          %s248 = ssub.s32 2048, 2048
          %249 = vsyncadd %s243, %s248
          %s250 = smul.addr %s21, 32
          %s251 = smul.addr %s250, 64
          %s252 = scalar_lea.hbm %s1, %s251
          %s253 = sshll.u32 %s246, 4
          %s254 = int_to_ptr.vmem [resolvable:$true] %s253
          %259 = dma.hbm_to_vmem [thread:$0]  %s252, 2048, %s254, %s243, 64, 64, 4
        $region36: #{decoder_forward.4} parent=27 // pred_fallthru
          _
      $region28: #{decoder_forward.4} parent=5 // pred_fallthru
        _
      %p260 = scmp.le.s32.totalorder 1, %s21
      %p261 = scmp.lt.s32.totalorder %s21, 3
      %p262 = pnand %p260, %p261
      %p263 = pneg %p262
      // Predicated region
      $region37: #{decoder_forward.4} parent=5 // pred_check
        _
      $region38: #{decoder_forward.4} parent=5 // pred_check_branch
        %265 = sbr.rel (%p262) target = $region40
      $region39: #{decoder_forward.4} parent=5 // pred_region
        %s266 = ssub.s32 %s21, 1
        %s267 = sand.u32 %s34, 1
        %s268 = scalar_lea.sflag [#allocation3], %s267
        %s269 = sand.u32 %s34, 1
        %s270 = smul.addr %s269, 128
        %s271 = scalar_lea.vmem [#allocation2], %s270
        // Predicated region
        $region41: #{decoder_forward.4} parent=39 // pred_check
          %p272 = pneg %p47
        $region42: #{decoder_forward.4} parent=39 // pred_check_branch
          %274 = sbr.rel (%p272) target = $region44
        $region43: #{decoder_forward.4} parent=39 // pred_region
          %275 = dma.done %s268, 2048
        $region44: #{decoder_forward.4} parent=39 // pred_fallthru
          _
        %s276 = sand.u32 %s26, 1
        %s277 = scalar_lea.sflag [#allocation6], %s276
        %s278 = sand.u32 %s60, 1
        %s279 = smul.addr %s278, 128
        %s280 = scalar_lea.vmem [#allocation5], %s279
        // Predicated region
        $region45: #{decoder_forward.4} parent=39 // pred_check
          %p281 = pneg %p73
        $region46: #{decoder_forward.4} parent=39 // pred_check_branch
          %283 = sbr.rel (%p281) target = $region48
        $region47: #{decoder_forward.4} parent=39 // pred_region
          %284 = dma.done %s277, 2048
        $region48: #{decoder_forward.4} parent=39 // pred_fallthru
          _
        // Predicated region
        $region49: #{decoder_forward.4} parent=39 // pred_check
          %p285 = pneg %p94
        $region50: #{decoder_forward.4} parent=39 // pred_check_branch
          %287 = sbr.rel (%p285) target = $region52
        $region51: #{decoder_forward.4} parent=39 // pred_region
          %288 = dma.done [#allocation6], 9216
        $region52: #{decoder_forward.4} parent=39 // pred_fallthru
          _
        // Predicated region
        $region53: #{decoder_forward.4} parent=39 // pred_check
          %p289 = pneg %p115
        $region54: #{decoder_forward.4} parent=39 // pred_check_branch
          %291 = sbr.rel (%p289) target = $region56
        $region55: #{decoder_forward.4} parent=39 // pred_region
          %292 = dma.done [#allocation9], 9216
        $region56: #{decoder_forward.4} parent=39 // pred_fallthru
          _
        // Predicated region
        $region57: #{decoder_forward.4} parent=39 // pred_check
          %p293 = pneg %p136
        $region58: #{decoder_forward.4} parent=39 // pred_check_branch
          %295 = sbr.rel (%p293) target = $region60
        $region59: #{decoder_forward.4} parent=39 // pred_region
          %296 = dma.done [#allocation9], 16
        $region60: #{decoder_forward.4} parent=39 // pred_fallthru
          _
        %s297 = sand.u32 %s34, 1
        %s298 = scalar_lea.sflag [#allocation3], %s297
        %s299 = sand.u32 %s34, 1
        %s300 = smul.addr %s299, 128
        %s301 = scalar_lea.vmem [#allocation2], %s300
        %p302 = pneg %p47
        %p303 = pneg %p44
        %s304 = sand.u32 %s26, 1
        %s305 = scalar_lea.sflag [#allocation6], %s304
        %s306 = sand.u32 %s60, 1
        %s307 = smul.addr %s306, 128
        %s308 = scalar_lea.vmem [#allocation5], %s307
        %p309 = pneg %p73
        %p310 = pneg %p70
        %p311 = pneg %p94
        %p312 = pneg %p91
        %p313 = pneg %p115
        %p314 = pneg %p112
        %p315 = pneg %p136
        %p316 = pneg %p133
        %p317 = pneg %p162
        %p318 = pneg %p159
        %s319 = sand.u32 %s149, 1
        %s320 = scalar_lea.sflag [#allocation4], %s319
        %s321 = sand.u32 %s149, 1
        %s322 = smul.addr %s321, 112
        %s323 = scalar_lea.vmem [#allocation11], %s322
        %v325 = vld [vmem:[#allocation10] sm:$0x1]
        %v327 = vlaneseq
        %v328 = vshrl.u32 %v327, 7
        %v329 = vsub.s32 0, %v328
        %v330 = vrot.slane %v325, %v329
        %v332 = vadd.f32 %v330, 0.0
        %v333 = vld [vmem:[%s271] sm:$0xf]
        %v334 = vld [vmem:[%s271 + $0x4] sm:$0xf]
        %v335 = vld [vmem:[%s271 + $0x8] sm:$0xf]
        %v336 = vld [vmem:[%s271 + $0xc] sm:$0xf]
        %v337 = vld [vmem:[%s271 + $0x10] sm:$0xf]
        %v338 = vld [vmem:[%s271 + $0x14] sm:$0xf]
        %v339 = vld [vmem:[%s271 + $0x18] sm:$0xf]
        %v340 = vld [vmem:[%s271 + $0x1c] sm:$0xf]
        %v341 = vld [vmem:[%s271 + $0x20] sm:$0xf]
        %v342 = vld [vmem:[%s271 + $0x24] sm:$0xf]
        %v343 = vld [vmem:[%s271 + $0x28] sm:$0xf]
        %v344 = vld [vmem:[%s271 + $0x2c] sm:$0xf]
        %v345 = vld [vmem:[%s271 + $0x30] sm:$0xf]
        %v346 = vld [vmem:[%s271 + $0x34] sm:$0xf]
        %v347 = vld [vmem:[%s271 + $0x38] sm:$0xf]
        %v348 = vld [vmem:[%s271 + $0x3c] sm:$0xf]
        %v349 = vld [vmem:[%s271 + $0x40] sm:$0xf]
        %v350 = vld [vmem:[%s271 + $0x44] sm:$0xf]
        %v351 = vld [vmem:[%s271 + $0x48] sm:$0xf]
        %v352 = vld [vmem:[%s271 + $0x4c] sm:$0xf]
        %v353 = vld [vmem:[%s271 + $0x50] sm:$0xf]
        %v354 = vld [vmem:[%s271 + $0x54] sm:$0xf]
        %v355 = vld [vmem:[%s271 + $0x58] sm:$0xf]
        %v356 = vld [vmem:[%s271 + $0x5c] sm:$0xf]
        %v357 = vld [vmem:[%s271 + $0x60] sm:$0xf]
        %v358 = vld [vmem:[%s271 + $0x64] sm:$0xf]
        %v359 = vld [vmem:[%s271 + $0x68] sm:$0xf]
        %v360 = vld [vmem:[%s271 + $0x6c] sm:$0xf]
        %v361 = vld [vmem:[%s271 + $0x70] sm:$0xf]
        %v362 = vld [vmem:[%s271 + $0x74] sm:$0xf]
        %v363 = vld [vmem:[%s271 + $0x78] sm:$0xf]
        %v364 = vld [vmem:[%s271 + $0x7c] sm:$0xf]
        %v365 = vld [vmem:[#allocation7] sm:$0xf]
        %v366 = vld [vmem:[#allocation7 + $0x4] sm:$0xf]
        %v367 = vld [vmem:[#allocation7 + $0x8] sm:$0xf]
        %v368 = vld [vmem:[#allocation7 + $0xc] sm:$0xf]
        %v369 = vld [vmem:[#allocation7 + $0x10] sm:$0xf]
        %v370 = vld [vmem:[#allocation7 + $0x14] sm:$0xf]
        %v371 = vld [vmem:[#allocation7 + $0x18] sm:$0xf]
        %v372 = vld [vmem:[#allocation7 + $0x1c] sm:$0xf]
        %v373 = vld [vmem:[#allocation7 + $0x20] sm:$0xf]
        %v374 = vld [vmem:[#allocation7 + $0x24] sm:$0xf]
        %v375 = vld [vmem:[#allocation7 + $0x28] sm:$0xf]
        %v376 = vld [vmem:[#allocation7 + $0x2c] sm:$0xf]
        %v377 = vld [vmem:[#allocation7 + $0x30] sm:$0xf]
        %v378 = vld [vmem:[#allocation7 + $0x34] sm:$0xf]
        %v379 = vld [vmem:[#allocation7 + $0x38] sm:$0xf]
        %v380 = vld [vmem:[#allocation7 + $0x3c] sm:$0xf]
        %v409 = vunpack.c.l.b16 %v333
        %v410 = vunpack.c.l.b16 %v334
        %v411 = vunpack.c.l.b16 %v335
        %v412 = vunpack.c.l.b16 %v336
        %v413 = vunpack.c.l.b16 %v337
        %v414 = vunpack.c.l.b16 %v338
        %v415 = vunpack.c.l.b16 %v339
        %v416 = vunpack.c.l.b16 %v340
        %v417 = vunpack.c.l.b16 %v341
        %v418 = vunpack.c.l.b16 %v342
        %v419 = vunpack.c.l.b16 %v343
        %v420 = vunpack.c.l.b16 %v344
        %v421 = vunpack.c.l.b16 %v345
        %v422 = vunpack.c.l.b16 %v346
        %v423 = vunpack.c.l.b16 %v347
        %v424 = vunpack.c.l.b16 %v348
        %v425 = vunpack.c.l.b16 %v349
        %v426 = vunpack.c.l.b16 %v350
        %v427 = vunpack.c.l.b16 %v351
        %v428 = vunpack.c.l.b16 %v352
        %v429 = vunpack.c.l.b16 %v353
        %v430 = vunpack.c.l.b16 %v354
        %v431 = vunpack.c.l.b16 %v355
        %v432 = vunpack.c.l.b16 %v356
        %v433 = vunpack.c.l.b16 %v357
        %v434 = vunpack.c.l.b16 %v358
        %v435 = vunpack.c.l.b16 %v359
        %v436 = vunpack.c.l.b16 %v360
        %v437 = vpack.c.b16 %v410, %v409
        %v438 = vpack.c.b16 %v412, %v411
        %v439 = vpack.c.b16 %v414, %v413
        %v440 = vpack.c.b16 %v416, %v415
        %v441 = vpack.c.b16 %v418, %v417
        %v442 = vpack.c.b16 %v420, %v419
        %v443 = vpack.c.b16 %v422, %v421
        %v444 = vpack.c.b16 %v424, %v423
        %v445 = vpack.c.b16 %v426, %v425
        %v446 = vpack.c.b16 %v428, %v427
        %v447 = vpack.c.b16 %v430, %v429
        %v448 = vpack.c.b16 %v432, %v431
        %v449 = vpack.c.b16 %v434, %v433
        %v450 = vpack.c.b16 %v436, %v435
        %v481 = vunpack.c.l.b16 %v365
        %v482 = vunpack.c.l.b16 %v366
        %v483 = vunpack.c.l.b16 %v367
        %v484 = vunpack.c.l.b16 %v368
        %v485 = vunpack.c.l.b16 %v369
        %v486 = vunpack.c.l.b16 %v370
        %v487 = vunpack.c.l.b16 %v371
        %v488 = vunpack.c.l.b16 %v372
        %v489 = vunpack.c.l.b16 %v373
        %v490 = vunpack.c.l.b16 %v374
        %v491 = vunpack.c.l.b16 %v375
        %v492 = vunpack.c.l.b16 %v376
        %v493 = vunpack.c.l.b16 %v377
        %v494 = vunpack.c.l.b16 %v378
        %v495 = vunpack.c.l.b16 %v379
        %v496 = vunpack.c.l.b16 %v380
        %v497 = vpack.c.b16 %v482, %v481
        %v498 = vpack.c.b16 %v484, %v483
        %v499 = vpack.c.b16 %v486, %v485
        %v500 = vpack.c.b16 %v488, %v487
        %v501 = vpack.c.b16 %v490, %v489
        %v502 = vpack.c.b16 %v492, %v491
        %v503 = vpack.c.b16 %v494, %v493
        %v504 = vpack.c.b16 %v496, %v495
        %513 = vmatprep.subr.bf16.mxu0 0
        %514 = vmatpush1.bf16.msra.mxu0 %v497
        %515 = vmatprep.subr.bf16.mxu0 0
        %516 = vmatpush1.bf16.msra.mxu0 %v498
        %517 = vmatprep.subr.bf16.mxu0 0
        %518 = vmatpush1.bf16.msra.mxu0 %v499
        %519 = vmatprep.subr.bf16.mxu0 0
        %520 = vmatpush1.bf16.msra.mxu0 %v500
        %521 = vmatprep.subr.bf16.mxu0 0
        %522 = vmatpush1.bf16.msra.mxu0 %v501
        %523 = vmatprep.subr.bf16.mxu0 0
        %524 = vmatpush1.bf16.msra.mxu0 %v502
        %525 = vmatprep.subr.bf16.mxu0 0
        %526 = vmatpush1.bf16.msra.mxu0 %v503
        %527 = vmatprep.subr.bf16.mxu0 0
        %528 = vmatpush1.bf16.msra.mxu0 %v504
        %529 = vmatprep.subr.bf16.mxu0 0
        %530 = vmatpush1.bf16.msra.mxu0 0
        %531 = vmatprep.subr.bf16.mxu0 0
        %532 = vmatpush1.bf16.msra.mxu0 0
        %533 = vmatprep.subr.bf16.mxu0 0
        %534 = vmatpush1.bf16.msra.mxu0 0
        %535 = vmatprep.subr.bf16.mxu0 0
        %536 = vmatpush1.bf16.msra.mxu0 0
        %537 = vmatprep.subr.bf16.mxu0 0
        %538 = vmatpush1.bf16.msra.mxu0 0
        %539 = vmatprep.subr.bf16.mxu0 0
        %540 = vmatpush1.bf16.msra.mxu0 0
        %541 = vmatprep.subr.bf16.mxu0 0
        %542 = vmatpush1.bf16.msra.mxu0 0
        %543 = vmatprep.subr.bf16.mxu0 0
        %544 = vmatpush1.bf16.msra.mxu0 0
        %545 = vmatprep.mubr.bf16.mxu0 0
        %546 = vmatmul.mubr.bf16.gmra.mrb[0].mxu0 %v437
        %v547 = vpop.f32.mrb[0].mxu0
        %v548 = vadd.f32 0.0, %v547
        %v549 = vpop.f32.mrb[0].mxu0
        %v550 = vpop.f32.mrb[0].mxu0
        %v551 = vadd.f32 0.0, %v550
        %v552 = vpop.f32.mrb[0].mxu0
        %553 = vmatprep.mubr.bf16.mxu0 0
        %554 = vmatmul.mubr.bf16.gmra.mrb[0].mxu0 %v438
        %v555 = vpop.f32.mrb[0].mxu0
        %v556 = vadd.f32 0.0, %v555
        %v557 = vpop.f32.mrb[0].mxu0
        %v558 = vpop.f32.mrb[0].mxu0
        %v559 = vadd.f32 0.0, %v558
        %v560 = vpop.f32.mrb[0].mxu0
        %561 = vmatprep.mubr.bf16.mxu0 0
        %562 = vmatmul.mubr.bf16.gmra.mrb[0].mxu0 %v439
        %v563 = vpop.f32.mrb[0].mxu0
        %v564 = vadd.f32 0.0, %v563
        %v565 = vpop.f32.mrb[0].mxu0
        %v566 = vpop.f32.mrb[0].mxu0
        %v567 = vadd.f32 0.0, %v566
        %v568 = vpop.f32.mrb[0].mxu0
        %569 = vmatprep.mubr.bf16.mxu0 0
        %570 = vmatmul.mubr.bf16.gmra.mrb[0].mxu0 %v440
        %v571 = vpop.f32.mrb[0].mxu0
        %v572 = vadd.f32 0.0, %v571
        %v573 = vpop.f32.mrb[0].mxu0
        %v574 = vpop.f32.mrb[0].mxu0
        %v575 = vadd.f32 0.0, %v574
        %v576 = vpop.f32.mrb[0].mxu0
        %577 = vmatprep.mubr.bf16.mxu0 0
        %578 = vmatmul.mubr.bf16.gmra.mrb[0].mxu0 %v441
        %v579 = vpop.f32.mrb[0].mxu0
        %v580 = vadd.f32 0.0, %v579
        %v581 = vpop.f32.mrb[0].mxu0
        %v582 = vpop.f32.mrb[0].mxu0
        %v583 = vadd.f32 0.0, %v582
        %v584 = vpop.f32.mrb[0].mxu0
        %585 = vmatprep.mubr.bf16.mxu0 0
        %586 = vmatmul.mubr.bf16.gmra.mrb[0].mxu0 %v442
        %v587 = vpop.f32.mrb[0].mxu0
        %v588 = vadd.f32 0.0, %v587
        %v589 = vpop.f32.mrb[0].mxu0
        %v590 = vpop.f32.mrb[0].mxu0
        %v591 = vadd.f32 0.0, %v590
        %v592 = vpop.f32.mrb[0].mxu0
        %593 = vmatprep.mubr.bf16.mxu0 0
        %594 = vmatmul.mubr.bf16.gmra.mrb[0].mxu0 %v443
        %v595 = vpop.f32.mrb[0].mxu0
        %v596 = vadd.f32 0.0, %v595
        %v597 = vpop.f32.mrb[0].mxu0
        %v598 = vpop.f32.mrb[0].mxu0
        %v599 = vadd.f32 0.0, %v598
        %v600 = vpop.f32.mrb[0].mxu0
        %601 = vmatprep.mubr.bf16.mxu0 0
        %602 = vmatmul.mubr.bf16.gmra.mrb[0].mxu0 %v444
        %v603 = vpop.f32.mrb[0].mxu0
        %v604 = vadd.f32 0.0, %v603
        %v605 = vpop.f32.mrb[0].mxu0
        %v606 = vpop.f32.mrb[0].mxu0
        %v607 = vadd.f32 0.0, %v606
        %v608 = vpop.f32.mrb[0].mxu0
        %609 = vmatprep.mubr.bf16.mxu0 0
        %610 = vmatmul.mubr.bf16.gmra.mrb[0].mxu0 %v445
        %v611 = vpop.f32.mrb[0].mxu0
        %v612 = vadd.f32 0.0, %v611
        %v613 = vpop.f32.mrb[0].mxu0
        %v614 = vpop.f32.mrb[0].mxu0
        %v615 = vadd.f32 0.0, %v614
        %v616 = vpop.f32.mrb[0].mxu0
        %617 = vmatprep.mubr.bf16.mxu0 0
        %618 = vmatmul.mubr.bf16.gmra.mrb[0].mxu0 %v446
        %v619 = vpop.f32.mrb[0].mxu0
        %v620 = vadd.f32 0.0, %v619
        %v621 = vpop.f32.mrb[0].mxu0
        %v622 = vpop.f32.mrb[0].mxu0
        %v623 = vadd.f32 0.0, %v622
        %v624 = vpop.f32.mrb[0].mxu0
        %625 = vmatprep.mubr.bf16.mxu0 0
        %626 = vmatmul.mubr.bf16.gmra.mrb[0].mxu0 %v447
        %v627 = vpop.f32.mrb[0].mxu0
        %v628 = vadd.f32 0.0, %v627
        %v629 = vpop.f32.mrb[0].mxu0
        %v630 = vpop.f32.mrb[0].mxu0
        %v631 = vadd.f32 0.0, %v630
        %v632 = vpop.f32.mrb[0].mxu0
        %633 = vmatprep.mubr.bf16.mxu0 0
        %634 = vmatmul.mubr.bf16.gmra.mrb[0].mxu0 %v448
        %v635 = vpop.f32.mrb[0].mxu0
        %v636 = vadd.f32 0.0, %v635
        %v637 = vpop.f32.mrb[0].mxu0
        %v638 = vpop.f32.mrb[0].mxu0
        %v639 = vadd.f32 0.0, %v638
        %v640 = vpop.f32.mrb[0].mxu0
        %641 = vmatprep.mubr.bf16.mxu0 0
        %642 = vmatmul.mubr.bf16.gmra.mrb[0].mxu0 %v449
        %v643 = vpop.f32.mrb[0].mxu0
        %v644 = vadd.f32 0.0, %v643
        %v645 = vpop.f32.mrb[0].mxu0
        %v646 = vpop.f32.mrb[0].mxu0
        %v647 = vadd.f32 0.0, %v646
        %v648 = vpop.f32.mrb[0].mxu0
        %649 = vmatprep.mubr.bf16.mxu0 0
        %650 = vmatmul.mubr.bf16.gmra.mrb[0].mxu0 %v450
        %v651 = vpop.f32.mrb[0].mxu0
        %v652 = vadd.f32 0.0, %v651
        %v653 = vpop.f32.mrb[0].mxu0
        %v654 = vpop.f32.mrb[0].mxu0
        %v655 = vadd.f32 0.0, %v654
        %v656 = vpop.f32.mrb[0].mxu0
        %657 = vdwg.mxu0
        %v658 = vadd.f32 %v332, %v548
        %v659 = vadd.f32 %v332, %v551
        %v660 = vadd.f32 %v332, %v556
        %v661 = vadd.f32 %v332, %v559
        %v662 = vadd.f32 %v332, %v564
        %v663 = vadd.f32 %v332, %v567
        %v664 = vadd.f32 %v332, %v572
        %v665 = vadd.f32 %v332, %v575
        %v666 = vadd.f32 %v332, %v580
        %v667 = vadd.f32 %v332, %v583
        %v668 = vadd.f32 %v332, %v588
        %v669 = vadd.f32 %v332, %v591
        %v670 = vadd.f32 %v332, %v596
        %v671 = vadd.f32 %v332, %v599
        %v672 = vadd.f32 %v332, %v604
        %v673 = vadd.f32 %v332, %v607
        %v674 = vadd.f32 %v332, %v612
        %v675 = vadd.f32 %v332, %v615
        %v676 = vadd.f32 %v332, %v620
        %v677 = vadd.f32 %v332, %v623
        %v678 = vadd.f32 %v332, %v628
        %v679 = vadd.f32 %v332, %v631
        %v680 = vadd.f32 %v332, %v636
        %v681 = vadd.f32 %v332, %v639
        %v682 = vadd.f32 %v332, %v644
        %v683 = vadd.f32 %v332, %v647
        %v684 = vadd.f32 %v332, %v652
        %v685 = vadd.f32 %v332, %v655
        %s686 = scalar_lea.vmem [#allocation7], 64
        %v687 = vld [vmem:[%s686] sm:$0xf]
        %v688 = vld [vmem:[%s686 + $0x4] sm:$0xf]
        %v689 = vld [vmem:[%s686 + $0x8] sm:$0xf]
        %v690 = vld [vmem:[%s686 + $0xc] sm:$0xf]
        %v691 = vld [vmem:[%s686 + $0x10] sm:$0xf]
        %v692 = vld [vmem:[%s686 + $0x14] sm:$0xf]
        %v693 = vld [vmem:[%s686 + $0x18] sm:$0xf]
        %v694 = vld [vmem:[%s686 + $0x1c] sm:$0xf]
        %v695 = vld [vmem:[%s686 + $0x20] sm:$0xf]
        %v696 = vld [vmem:[%s686 + $0x24] sm:$0xf]
        %v697 = vld [vmem:[%s686 + $0x28] sm:$0xf]
        %v698 = vld [vmem:[%s686 + $0x2c] sm:$0xf]
        %v699 = vld [vmem:[%s686 + $0x30] sm:$0xf]
        %v700 = vld [vmem:[%s686 + $0x34] sm:$0xf]
        %v701 = vld [vmem:[%s686 + $0x38] sm:$0xf]
        %v702 = vld [vmem:[%s686 + $0x3c] sm:$0xf]
        %vm703 = vsmask.f32 7424
        %v705 = vshrl.u32 %v437, 16
        %v707 = vshll.u32 %v437, 16
        %v709 = vrot.slane %v707, 1
        %v710 = vor.u32 %v705, %v709
        %v712 = vshll.u32 %v438, 16
        %v714 = vrot.slane %v712, 1
        %v715 = vsel %vm703, %v710, %v714
        %v716 = vshrl.u32 %v438, 16
        %v718 = vor.u32 %v716, %v714
        %v720 = vshll.u32 %v439, 16
        %v722 = vrot.slane %v720, 1
        %v723 = vsel %vm703, %v718, %v722
        %v724 = vshrl.u32 %v439, 16
        %v726 = vor.u32 %v724, %v722
        %v728 = vshll.u32 %v440, 16
        %v730 = vrot.slane %v728, 1
        %v731 = vsel %vm703, %v726, %v730
        %v732 = vshrl.u32 %v440, 16
        %v734 = vor.u32 %v732, %v730
        %v736 = vshll.u32 %v441, 16
        %v738 = vrot.slane %v736, 1
        %v739 = vsel %vm703, %v734, %v738
        %v740 = vshrl.u32 %v441, 16
        %v742 = vor.u32 %v740, %v738
        %v744 = vshll.u32 %v442, 16
        %v746 = vrot.slane %v744, 1
        %v747 = vsel %vm703, %v742, %v746
        %v748 = vshrl.u32 %v442, 16
        %v750 = vor.u32 %v748, %v746
        %v752 = vshll.u32 %v443, 16
        %v754 = vrot.slane %v752, 1
        %v755 = vsel %vm703, %v750, %v754
        %v756 = vshrl.u32 %v443, 16
        %v758 = vor.u32 %v756, %v754
        %v760 = vshll.u32 %v444, 16
        %v762 = vrot.slane %v760, 1
        %v763 = vsel %vm703, %v758, %v762
        %v764 = vshrl.u32 %v444, 16
        %v766 = vor.u32 %v764, %v762
        %v768 = vshll.u32 %v445, 16
        %v770 = vrot.slane %v768, 1
        %v771 = vsel %vm703, %v766, %v770
        %v772 = vshrl.u32 %v445, 16
        %v774 = vor.u32 %v772, %v770
        %v776 = vshll.u32 %v446, 16
        %v778 = vrot.slane %v776, 1
        %v779 = vsel %vm703, %v774, %v778
        %v780 = vshrl.u32 %v446, 16
        %v782 = vor.u32 %v780, %v778
        %v784 = vshll.u32 %v447, 16
        %v786 = vrot.slane %v784, 1
        %v787 = vsel %vm703, %v782, %v786
        %v788 = vshrl.u32 %v447, 16
        %v790 = vor.u32 %v788, %v786
        %v792 = vshll.u32 %v448, 16
        %v794 = vrot.slane %v792, 1
        %v795 = vsel %vm703, %v790, %v794
        %v796 = vshrl.u32 %v448, 16
        %v798 = vor.u32 %v796, %v794
        %v800 = vshll.u32 %v449, 16
        %v802 = vrot.slane %v800, 1
        %v803 = vsel %vm703, %v798, %v802
        %v804 = vshrl.u32 %v449, 16
        %v806 = vor.u32 %v804, %v802
        %v808 = vshll.u32 %v450, 16
        %v810 = vrot.slane %v808, 1
        %v811 = vsel %vm703, %v806, %v810
        %v812 = vshrl.u32 %v450, 16
        %v814 = vor.u32 %v812, %v810
        %v845 = vunpack.c.l.b16 %v687
        %v846 = vunpack.c.l.b16 %v688
        %v847 = vunpack.c.l.b16 %v689
        %v848 = vunpack.c.l.b16 %v690
        %v849 = vunpack.c.l.b16 %v691
        %v850 = vunpack.c.l.b16 %v692
        %v851 = vunpack.c.l.b16 %v693
        %v852 = vunpack.c.l.b16 %v694
        %v853 = vunpack.c.l.b16 %v695
        %v854 = vunpack.c.l.b16 %v696
        %v855 = vunpack.c.l.b16 %v697
        %v856 = vunpack.c.l.b16 %v698
        %v857 = vunpack.c.l.b16 %v699
        %v858 = vunpack.c.l.b16 %v700
        %v859 = vunpack.c.l.b16 %v701
        %v860 = vunpack.c.l.b16 %v702
        %v861 = vpack.c.b16 %v846, %v845
        %v862 = vpack.c.b16 %v848, %v847
        %v863 = vpack.c.b16 %v850, %v849
        %v864 = vpack.c.b16 %v852, %v851
        %v865 = vpack.c.b16 %v854, %v853
        %v866 = vpack.c.b16 %v856, %v855
        %v867 = vpack.c.b16 %v858, %v857
        %v868 = vpack.c.b16 %v860, %v859
        %877 = vmatprep.subr.bf16.mxu0 0
        %878 = vmatpush1.bf16.msra.mxu0 %v861
        %879 = vmatprep.subr.bf16.mxu0 0
        %880 = vmatpush1.bf16.msra.mxu0 %v862
        %881 = vmatprep.subr.bf16.mxu0 0
        %882 = vmatpush1.bf16.msra.mxu0 %v863
        %883 = vmatprep.subr.bf16.mxu0 0
        %884 = vmatpush1.bf16.msra.mxu0 %v864
        %885 = vmatprep.subr.bf16.mxu0 0
        %886 = vmatpush1.bf16.msra.mxu0 %v865
        %887 = vmatprep.subr.bf16.mxu0 0
        %888 = vmatpush1.bf16.msra.mxu0 %v866
        %889 = vmatprep.subr.bf16.mxu0 0
        %890 = vmatpush1.bf16.msra.mxu0 %v867
        %891 = vmatprep.subr.bf16.mxu0 0
        %892 = vmatpush1.bf16.msra.mxu0 %v868
        %893 = vmatprep.subr.bf16.mxu0 0
        %894 = vmatpush1.bf16.msra.mxu0 0
        %895 = vmatprep.subr.bf16.mxu0 0
        %896 = vmatpush1.bf16.msra.mxu0 0
        %897 = vmatprep.subr.bf16.mxu0 0
        %898 = vmatpush1.bf16.msra.mxu0 0
        %899 = vmatprep.subr.bf16.mxu0 0
        %900 = vmatpush1.bf16.msra.mxu0 0
        %901 = vmatprep.subr.bf16.mxu0 0
        %902 = vmatpush1.bf16.msra.mxu0 0
        %903 = vmatprep.subr.bf16.mxu0 0
        %904 = vmatpush1.bf16.msra.mxu0 0
        %905 = vmatprep.subr.bf16.mxu0 0
        %906 = vmatpush1.bf16.msra.mxu0 0
        %907 = vmatprep.subr.bf16.mxu0 0
        %908 = vmatpush1.bf16.msra.mxu0 0
        %909 = vmatprep.mubr.bf16.mxu0 0
        %910 = vmatmul.mubr.bf16.gmra.mrb[0].mxu0 %v715
        %v911 = vpop.f32.mrb[0].mxu0
        %v912 = vadd.f32 0.0, %v911
        %v913 = vpop.f32.mrb[0].mxu0
        %v914 = vpop.f32.mrb[0].mxu0
        %v915 = vadd.f32 0.0, %v914
        %v916 = vpop.f32.mrb[0].mxu0
        %917 = vmatprep.mubr.bf16.mxu0 0
        %918 = vmatmul.mubr.bf16.gmra.mrb[0].mxu0 %v723
        %v919 = vpop.f32.mrb[0].mxu0
        %v920 = vadd.f32 0.0, %v919
        %v921 = vpop.f32.mrb[0].mxu0
        %v922 = vpop.f32.mrb[0].mxu0
        %v923 = vadd.f32 0.0, %v922
        %v924 = vpop.f32.mrb[0].mxu0
        %925 = vmatprep.mubr.bf16.mxu0 0
        %926 = vmatmul.mubr.bf16.gmra.mrb[0].mxu0 %v731
        %v927 = vpop.f32.mrb[0].mxu0
        %v928 = vadd.f32 0.0, %v927
        %v929 = vpop.f32.mrb[0].mxu0
        %v930 = vpop.f32.mrb[0].mxu0
        %v931 = vadd.f32 0.0, %v930
        %v932 = vpop.f32.mrb[0].mxu0
        %933 = vmatprep.mubr.bf16.mxu0 0
        %934 = vmatmul.mubr.bf16.gmra.mrb[0].mxu0 %v739
        %v935 = vpop.f32.mrb[0].mxu0
        %v936 = vadd.f32 0.0, %v935
        %v937 = vpop.f32.mrb[0].mxu0
        %v938 = vpop.f32.mrb[0].mxu0
        %v939 = vadd.f32 0.0, %v938
        %v940 = vpop.f32.mrb[0].mxu0
        %941 = vmatprep.mubr.bf16.mxu0 0
        %942 = vmatmul.mubr.bf16.gmra.mrb[0].mxu0 %v747
        %v943 = vpop.f32.mrb[0].mxu0
        %v944 = vadd.f32 0.0, %v943
        %v945 = vpop.f32.mrb[0].mxu0
        %v946 = vpop.f32.mrb[0].mxu0
        %v947 = vadd.f32 0.0, %v946
        %v948 = vpop.f32.mrb[0].mxu0
        %949 = vmatprep.mubr.bf16.mxu0 0
        %950 = vmatmul.mubr.bf16.gmra.mrb[0].mxu0 %v755
        %v951 = vpop.f32.mrb[0].mxu0
        %v952 = vadd.f32 0.0, %v951
        %v953 = vpop.f32.mrb[0].mxu0
        %v954 = vpop.f32.mrb[0].mxu0
        %v955 = vadd.f32 0.0, %v954
        %v956 = vpop.f32.mrb[0].mxu0
        %957 = vmatprep.mubr.bf16.mxu0 0
        %958 = vmatmul.mubr.bf16.gmra.mrb[0].mxu0 %v763
        %v959 = vpop.f32.mrb[0].mxu0
        %v960 = vadd.f32 0.0, %v959
        %v961 = vpop.f32.mrb[0].mxu0
        %v962 = vpop.f32.mrb[0].mxu0
        %v963 = vadd.f32 0.0, %v962
        %v964 = vpop.f32.mrb[0].mxu0
        %965 = vmatprep.mubr.bf16.mxu0 0
        %966 = vmatmul.mubr.bf16.gmra.mrb[0].mxu0 %v771
        %v967 = vpop.f32.mrb[0].mxu0
        %v968 = vadd.f32 0.0, %v967
        %v969 = vpop.f32.mrb[0].mxu0
        %v970 = vpop.f32.mrb[0].mxu0
        %v971 = vadd.f32 0.0, %v970
        %v972 = vpop.f32.mrb[0].mxu0
        %973 = vmatprep.mubr.bf16.mxu0 0
        %974 = vmatmul.mubr.bf16.gmra.mrb[0].mxu0 %v779
        %v975 = vpop.f32.mrb[0].mxu0
        %v976 = vadd.f32 0.0, %v975
        %v977 = vpop.f32.mrb[0].mxu0
        %v978 = vpop.f32.mrb[0].mxu0
        %v979 = vadd.f32 0.0, %v978
        %v980 = vpop.f32.mrb[0].mxu0
        %981 = vmatprep.mubr.bf16.mxu0 0
        %982 = vmatmul.mubr.bf16.gmra.mrb[0].mxu0 %v787
        %v983 = vpop.f32.mrb[0].mxu0
        %v984 = vadd.f32 0.0, %v983
        %v985 = vpop.f32.mrb[0].mxu0
        %v986 = vpop.f32.mrb[0].mxu0
        %v987 = vadd.f32 0.0, %v986
        %v988 = vpop.f32.mrb[0].mxu0
        %989 = vmatprep.mubr.bf16.mxu0 0
        %990 = vmatmul.mubr.bf16.gmra.mrb[0].mxu0 %v795
        %v991 = vpop.f32.mrb[0].mxu0
        %v992 = vadd.f32 0.0, %v991
        %v993 = vpop.f32.mrb[0].mxu0
        %v994 = vpop.f32.mrb[0].mxu0
        %v995 = vadd.f32 0.0, %v994
        %v996 = vpop.f32.mrb[0].mxu0
        %997 = vmatprep.mubr.bf16.mxu0 0
        %998 = vmatmul.mubr.bf16.gmra.mrb[0].mxu0 %v803
        %v999 = vpop.f32.mrb[0].mxu0
        %v1000 = vadd.f32 0.0, %v999
        %v1001 = vpop.f32.mrb[0].mxu0
        %v1002 = vpop.f32.mrb[0].mxu0
        %v1003 = vadd.f32 0.0, %v1002
        %v1004 = vpop.f32.mrb[0].mxu0
        %1005 = vmatprep.mubr.bf16.mxu0 0
        %1006 = vmatmul.mubr.bf16.gmra.mrb[0].mxu0 %v811
        %v1007 = vpop.f32.mrb[0].mxu0
        %v1008 = vadd.f32 0.0, %v1007
        %v1009 = vpop.f32.mrb[0].mxu0
        %v1010 = vpop.f32.mrb[0].mxu0
        %v1011 = vadd.f32 0.0, %v1010
        %v1012 = vpop.f32.mrb[0].mxu0
        %1013 = vmatprep.mubr.bf16.mxu0 0
        %1014 = vmatmul.mubr.bf16.gmra.mrb[0].mxu0 %v814
        %v1015 = vpop.f32.mrb[0].mxu0
        %v1016 = vadd.f32 0.0, %v1015
        %v1017 = vpop.f32.mrb[0].mxu0
        %v1018 = vpop.f32.mrb[0].mxu0
        %v1019 = vadd.f32 0.0, %v1018
        %v1020 = vpop.f32.mrb[0].mxu0
        %1021 = vdwg.mxu0
        %v1022 = vadd.f32 %v658, %v912
        %v1023 = vadd.f32 %v659, %v915
        %v1024 = vadd.f32 %v660, %v920
        %v1025 = vadd.f32 %v661, %v923
        %v1026 = vadd.f32 %v662, %v928
        %v1027 = vadd.f32 %v663, %v931
        %v1028 = vadd.f32 %v664, %v936
        %v1029 = vadd.f32 %v665, %v939
        %v1030 = vadd.f32 %v666, %v944
        %v1031 = vadd.f32 %v667, %v947
        %v1032 = vadd.f32 %v668, %v952
        %v1033 = vadd.f32 %v669, %v955
        %v1034 = vadd.f32 %v670, %v960
        %v1035 = vadd.f32 %v671, %v963
        %v1036 = vadd.f32 %v672, %v968
        %v1037 = vadd.f32 %v673, %v971
        %v1038 = vadd.f32 %v674, %v976
        %v1039 = vadd.f32 %v675, %v979
        %v1040 = vadd.f32 %v676, %v984
        %v1041 = vadd.f32 %v677, %v987
        %v1042 = vadd.f32 %v678, %v992
        %v1043 = vadd.f32 %v679, %v995
        %v1044 = vadd.f32 %v680, %v1000
        %v1045 = vadd.f32 %v681, %v1003
        %v1046 = vadd.f32 %v682, %v1008
        %v1047 = vadd.f32 %v683, %v1011
        %v1048 = vadd.f32 %v684, %v1016
        %v1049 = vadd.f32 %v685, %v1019
        %s1050 = scalar_lea.vmem [#allocation7], 128
        %v1051 = vld [vmem:[%s1050] sm:$0xf]
        %v1052 = vld [vmem:[%s1050 + $0x4] sm:$0xf]
        %v1053 = vld [vmem:[%s1050 + $0x8] sm:$0xf]
        %v1054 = vld [vmem:[%s1050 + $0xc] sm:$0xf]
        %v1055 = vld [vmem:[%s1050 + $0x10] sm:$0xf]
        %v1056 = vld [vmem:[%s1050 + $0x14] sm:$0xf]
        %v1057 = vld [vmem:[%s1050 + $0x18] sm:$0xf]
        %v1058 = vld [vmem:[%s1050 + $0x1c] sm:$0xf]
        %v1059 = vld [vmem:[%s1050 + $0x20] sm:$0xf]
        %v1060 = vld [vmem:[%s1050 + $0x24] sm:$0xf]
        %v1061 = vld [vmem:[%s1050 + $0x28] sm:$0xf]
        %v1062 = vld [vmem:[%s1050 + $0x2c] sm:$0xf]
        %v1063 = vld [vmem:[%s1050 + $0x30] sm:$0xf]
        %v1064 = vld [vmem:[%s1050 + $0x34] sm:$0xf]
        %v1065 = vld [vmem:[%s1050 + $0x38] sm:$0xf]
        %v1066 = vld [vmem:[%s1050 + $0x3c] sm:$0xf]
        %vm1067 = vcmask 1046528
        %v1068 = vrot.slane %v437, 1
        %v1069 = vrot.slane %v438, 1
        %v1070 = vsel %vm1067, %v1068, %v1069
        %v1071 = vrot.slane %v439, 1
        %v1072 = vsel %vm1067, %v1069, %v1071
        %v1073 = vrot.slane %v440, 1
        %v1074 = vsel %vm1067, %v1071, %v1073
        %v1075 = vrot.slane %v441, 1
        %v1076 = vsel %vm1067, %v1073, %v1075
        %v1077 = vrot.slane %v442, 1
        %v1078 = vsel %vm1067, %v1075, %v1077
        %v1079 = vrot.slane %v443, 1
        %v1080 = vsel %vm1067, %v1077, %v1079
        %v1081 = vrot.slane %v444, 1
        %v1082 = vsel %vm1067, %v1079, %v1081
        %v1083 = vrot.slane %v445, 1
        %v1084 = vsel %vm1067, %v1081, %v1083
        %v1085 = vrot.slane %v446, 1
        %v1086 = vsel %vm1067, %v1083, %v1085
        %v1087 = vrot.slane %v447, 1
        %v1088 = vsel %vm1067, %v1085, %v1087
        %v1089 = vrot.slane %v448, 1
        %v1090 = vsel %vm1067, %v1087, %v1089
        %v1091 = vrot.slane %v449, 1
        %v1092 = vsel %vm1067, %v1089, %v1091
        %v1093 = vrot.slane %v450, 1
        %v1094 = vsel %vm1067, %v1091, %v1093
        %v1125 = vunpack.c.l.b16 %v1051
        %v1126 = vunpack.c.l.b16 %v1052
        %v1127 = vunpack.c.l.b16 %v1053
        %v1128 = vunpack.c.l.b16 %v1054
        %v1129 = vunpack.c.l.b16 %v1055
        %v1130 = vunpack.c.l.b16 %v1056
        %v1131 = vunpack.c.l.b16 %v1057
        %v1132 = vunpack.c.l.b16 %v1058
        %v1133 = vunpack.c.l.b16 %v1059
        %v1134 = vunpack.c.l.b16 %v1060
        %v1135 = vunpack.c.l.b16 %v1061
        %v1136 = vunpack.c.l.b16 %v1062
        %v1137 = vunpack.c.l.b16 %v1063
        %v1138 = vunpack.c.l.b16 %v1064
        %v1139 = vunpack.c.l.b16 %v1065
        %v1140 = vunpack.c.l.b16 %v1066
        %v1141 = vpack.c.b16 %v1126, %v1125
        %v1142 = vpack.c.b16 %v1128, %v1127
        %v1143 = vpack.c.b16 %v1130, %v1129
        %v1144 = vpack.c.b16 %v1132, %v1131
        %v1145 = vpack.c.b16 %v1134, %v1133
        %v1146 = vpack.c.b16 %v1136, %v1135
        %v1147 = vpack.c.b16 %v1138, %v1137
        %v1148 = vpack.c.b16 %v1140, %v1139
        %1157 = vmatprep.subr.bf16.mxu0 0
        %1158 = vmatpush1.bf16.msra.mxu0 %v1141
        %1159 = vmatprep.subr.bf16.mxu0 0
        %1160 = vmatpush1.bf16.msra.mxu0 %v1142
        %1161 = vmatprep.subr.bf16.mxu0 0
        %1162 = vmatpush1.bf16.msra.mxu0 %v1143
        %1163 = vmatprep.subr.bf16.mxu0 0
        %1164 = vmatpush1.bf16.msra.mxu0 %v1144
        %1165 = vmatprep.subr.bf16.mxu0 0
        %1166 = vmatpush1.bf16.msra.mxu0 %v1145
        %1167 = vmatprep.subr.bf16.mxu0 0
        %1168 = vmatpush1.bf16.msra.mxu0 %v1146
        %1169 = vmatprep.subr.bf16.mxu0 0
        %1170 = vmatpush1.bf16.msra.mxu0 %v1147
        %1171 = vmatprep.subr.bf16.mxu0 0
        %1172 = vmatpush1.bf16.msra.mxu0 %v1148
        %1173 = vmatprep.subr.bf16.mxu0 0
        %1174 = vmatpush1.bf16.msra.mxu0 0
        %1175 = vmatprep.subr.bf16.mxu0 0
        %1176 = vmatpush1.bf16.msra.mxu0 0
        %1177 = vmatprep.subr.bf16.mxu0 0
        %1178 = vmatpush1.bf16.msra.mxu0 0
        %1179 = vmatprep.subr.bf16.mxu0 0
        %1180 = vmatpush1.bf16.msra.mxu0 0
        %1181 = vmatprep.subr.bf16.mxu0 0
        %1182 = vmatpush1.bf16.msra.mxu0 0
        %1183 = vmatprep.subr.bf16.mxu0 0
        %1184 = vmatpush1.bf16.msra.mxu0 0
        %1185 = vmatprep.subr.bf16.mxu0 0
        %1186 = vmatpush1.bf16.msra.mxu0 0
        %1187 = vmatprep.subr.bf16.mxu0 0
        %1188 = vmatpush1.bf16.msra.mxu0 0
        %1189 = vmatprep.mubr.bf16.mxu0 0
        %1190 = vmatmul.mubr.bf16.gmra.mrb[0].mxu0 %v1070
        %v1191 = vpop.f32.mrb[0].mxu0
        %v1192 = vadd.f32 0.0, %v1191
        %v1193 = vpop.f32.mrb[0].mxu0
        %v1194 = vpop.f32.mrb[0].mxu0
        %v1195 = vadd.f32 0.0, %v1194
        %v1196 = vpop.f32.mrb[0].mxu0
        %1197 = vmatprep.mubr.bf16.mxu0 0
        %1198 = vmatmul.mubr.bf16.gmra.mrb[0].mxu0 %v1072
        %v1199 = vpop.f32.mrb[0].mxu0
        %v1200 = vadd.f32 0.0, %v1199
        %v1201 = vpop.f32.mrb[0].mxu0
        %v1202 = vpop.f32.mrb[0].mxu0
        %v1203 = vadd.f32 0.0, %v1202
        %v1204 = vpop.f32.mrb[0].mxu0
        %1205 = vmatprep.mubr.bf16.mxu0 0
        %1206 = vmatmul.mubr.bf16.gmra.mrb[0].mxu0 %v1074
        %v1207 = vpop.f32.mrb[0].mxu0
        %v1208 = vadd.f32 0.0, %v1207
        %v1209 = vpop.f32.mrb[0].mxu0
        %v1210 = vpop.f32.mrb[0].mxu0
        %v1211 = vadd.f32 0.0, %v1210
        %v1212 = vpop.f32.mrb[0].mxu0
        %1213 = vmatprep.mubr.bf16.mxu0 0
        %1214 = vmatmul.mubr.bf16.gmra.mrb[0].mxu0 %v1076
        %v1215 = vpop.f32.mrb[0].mxu0
        %v1216 = vadd.f32 0.0, %v1215
        %v1217 = vpop.f32.mrb[0].mxu0
        %v1218 = vpop.f32.mrb[0].mxu0
        %v1219 = vadd.f32 0.0, %v1218
        %v1220 = vpop.f32.mrb[0].mxu0
        %1221 = vmatprep.mubr.bf16.mxu0 0
        %1222 = vmatmul.mubr.bf16.gmra.mrb[0].mxu0 %v1078
        %v1223 = vpop.f32.mrb[0].mxu0
        %v1224 = vadd.f32 0.0, %v1223
        %v1225 = vpop.f32.mrb[0].mxu0
        %v1226 = vpop.f32.mrb[0].mxu0
        %v1227 = vadd.f32 0.0, %v1226
        %v1228 = vpop.f32.mrb[0].mxu0
        %1229 = vmatprep.mubr.bf16.mxu0 0
        %1230 = vmatmul.mubr.bf16.gmra.mrb[0].mxu0 %v1080
        %v1231 = vpop.f32.mrb[0].mxu0
        %v1232 = vadd.f32 0.0, %v1231
        %v1233 = vpop.f32.mrb[0].mxu0
        %v1234 = vpop.f32.mrb[0].mxu0
        %v1235 = vadd.f32 0.0, %v1234
        %v1236 = vpop.f32.mrb[0].mxu0
        %1237 = vmatprep.mubr.bf16.mxu0 0
        %1238 = vmatmul.mubr.bf16.gmra.mrb[0].mxu0 %v1082
        %v1239 = vpop.f32.mrb[0].mxu0
        %v1240 = vadd.f32 0.0, %v1239
        %v1241 = vpop.f32.mrb[0].mxu0
        %v1242 = vpop.f32.mrb[0].mxu0
        %v1243 = vadd.f32 0.0, %v1242
        %v1244 = vpop.f32.mrb[0].mxu0
        %1245 = vmatprep.mubr.bf16.mxu0 0
        %1246 = vmatmul.mubr.bf16.gmra.mrb[0].mxu0 %v1084
        %v1247 = vpop.f32.mrb[0].mxu0
        %v1248 = vadd.f32 0.0, %v1247
        %v1249 = vpop.f32.mrb[0].mxu0
        %v1250 = vpop.f32.mrb[0].mxu0
        %v1251 = vadd.f32 0.0, %v1250
        %v1252 = vpop.f32.mrb[0].mxu0
        %1253 = vmatprep.mubr.bf16.mxu0 0
        %1254 = vmatmul.mubr.bf16.gmra.mrb[0].mxu0 %v1086
        %v1255 = vpop.f32.mrb[0].mxu0
        %v1256 = vadd.f32 0.0, %v1255
        %v1257 = vpop.f32.mrb[0].mxu0
        %v1258 = vpop.f32.mrb[0].mxu0
        %v1259 = vadd.f32 0.0, %v1258
        %v1260 = vpop.f32.mrb[0].mxu0
        %1261 = vmatprep.mubr.bf16.mxu0 0
        %1262 = vmatmul.mubr.bf16.gmra.mrb[0].mxu0 %v1088
        %v1263 = vpop.f32.mrb[0].mxu0
        %v1264 = vadd.f32 0.0, %v1263
        %v1265 = vpop.f32.mrb[0].mxu0
        %v1266 = vpop.f32.mrb[0].mxu0
        %v1267 = vadd.f32 0.0, %v1266
        %v1268 = vpop.f32.mrb[0].mxu0
        %1269 = vmatprep.mubr.bf16.mxu0 0
        %1270 = vmatmul.mubr.bf16.gmra.mrb[0].mxu0 %v1090
        %v1271 = vpop.f32.mrb[0].mxu0
        %v1272 = vadd.f32 0.0, %v1271
        %v1273 = vpop.f32.mrb[0].mxu0
        %v1274 = vpop.f32.mrb[0].mxu0
        %v1275 = vadd.f32 0.0, %v1274
        %v1276 = vpop.f32.mrb[0].mxu0
        %1277 = vmatprep.mubr.bf16.mxu0 0
        %1278 = vmatmul.mubr.bf16.gmra.mrb[0].mxu0 %v1092
        %v1279 = vpop.f32.mrb[0].mxu0
        %v1280 = vadd.f32 0.0, %v1279
        %v1281 = vpop.f32.mrb[0].mxu0
        %v1282 = vpop.f32.mrb[0].mxu0
        %v1283 = vadd.f32 0.0, %v1282
        %v1284 = vpop.f32.mrb[0].mxu0
        %1285 = vmatprep.mubr.bf16.mxu0 0
        %1286 = vmatmul.mubr.bf16.gmra.mrb[0].mxu0 %v1094
        %v1287 = vpop.f32.mrb[0].mxu0
        %v1288 = vadd.f32 0.0, %v1287
        %v1289 = vpop.f32.mrb[0].mxu0
        %v1290 = vpop.f32.mrb[0].mxu0
        %v1291 = vadd.f32 0.0, %v1290
        %v1292 = vpop.f32.mrb[0].mxu0
        %1293 = vmatprep.mubr.bf16.mxu0 0
        %1294 = vmatmul.mubr.bf16.gmra.mrb[0].mxu0 %v1093
        %v1295 = vpop.f32.mrb[0].mxu0
        %v1296 = vadd.f32 0.0, %v1295
        %v1297 = vpop.f32.mrb[0].mxu0
        %v1298 = vpop.f32.mrb[0].mxu0
        %v1299 = vadd.f32 0.0, %v1298
        %v1300 = vpop.f32.mrb[0].mxu0
        %1301 = vdwg.mxu0
        %v1302 = vadd.f32 %v1022, %v1192
        %v1303 = vadd.f32 %v1023, %v1195
        %v1304 = vadd.f32 %v1024, %v1200
        %v1305 = vadd.f32 %v1025, %v1203
        %v1306 = vadd.f32 %v1026, %v1208
        %v1307 = vadd.f32 %v1027, %v1211
        %v1308 = vadd.f32 %v1028, %v1216
        %v1309 = vadd.f32 %v1029, %v1219
        %v1310 = vadd.f32 %v1030, %v1224
        %v1311 = vadd.f32 %v1031, %v1227
        %v1312 = vadd.f32 %v1032, %v1232
        %v1313 = vadd.f32 %v1033, %v1235
        %v1314 = vadd.f32 %v1034, %v1240
        %v1315 = vadd.f32 %v1035, %v1243
        %v1316 = vadd.f32 %v1036, %v1248
        %v1317 = vadd.f32 %v1037, %v1251
        %v1318 = vadd.f32 %v1038, %v1256
        %v1319 = vadd.f32 %v1039, %v1259
        %v1320 = vadd.f32 %v1040, %v1264
        %v1321 = vadd.f32 %v1041, %v1267
        %v1322 = vadd.f32 %v1042, %v1272
        %v1323 = vadd.f32 %v1043, %v1275
        %v1324 = vadd.f32 %v1044, %v1280
        %v1325 = vadd.f32 %v1045, %v1283
        %v1326 = vadd.f32 %v1046, %v1288
        %v1327 = vadd.f32 %v1047, %v1291
        %v1328 = vadd.f32 %v1048, %v1296
        %v1329 = vadd.f32 %v1049, %v1299
        %s1330 = scalar_lea.vmem [#allocation7], 192
        %v1331 = vld [vmem:[%s1330] sm:$0xf]
        %v1332 = vld [vmem:[%s1330 + $0x4] sm:$0xf]
        %v1333 = vld [vmem:[%s1330 + $0x8] sm:$0xf]
        %v1334 = vld [vmem:[%s1330 + $0xc] sm:$0xf]
        %v1335 = vld [vmem:[%s1330 + $0x10] sm:$0xf]
        %v1336 = vld [vmem:[%s1330 + $0x14] sm:$0xf]
        %v1337 = vld [vmem:[%s1330 + $0x18] sm:$0xf]
        %v1338 = vld [vmem:[%s1330 + $0x1c] sm:$0xf]
        %v1339 = vld [vmem:[%s1330 + $0x20] sm:$0xf]
        %v1340 = vld [vmem:[%s1330 + $0x24] sm:$0xf]
        %v1341 = vld [vmem:[%s1330 + $0x28] sm:$0xf]
        %v1342 = vld [vmem:[%s1330 + $0x2c] sm:$0xf]
        %v1343 = vld [vmem:[%s1330 + $0x30] sm:$0xf]
        %v1344 = vld [vmem:[%s1330 + $0x34] sm:$0xf]
        %v1345 = vld [vmem:[%s1330 + $0x38] sm:$0xf]
        %v1346 = vld [vmem:[%s1330 + $0x3c] sm:$0xf]
        %v1349 = vunpack.c.l.b16 %v361
        %v1350 = vunpack.c.l.b16 %v362
        %v1351 = vpack.c.b16 %v1350, %v1349
        %v1369 = vunpack.c.l.b16 %v1331
        %v1370 = vunpack.c.l.b16 %v1332
        %v1371 = vunpack.c.l.b16 %v1333
        %v1372 = vunpack.c.l.b16 %v1334
        %v1373 = vunpack.c.l.b16 %v1335
        %v1374 = vunpack.c.l.b16 %v1336
        %v1375 = vunpack.c.l.b16 %v1337
        %v1376 = vunpack.c.l.b16 %v1338
        %v1377 = vunpack.c.l.b16 %v1339
        %v1378 = vunpack.c.l.b16 %v1340
        %v1379 = vunpack.c.l.b16 %v1341
        %v1380 = vunpack.c.l.b16 %v1342
        %v1381 = vunpack.c.l.b16 %v1343
        %v1382 = vunpack.c.l.b16 %v1344
        %v1383 = vunpack.c.l.b16 %v1345
        %v1384 = vunpack.c.l.b16 %v1346
        %v1385 = vpack.c.b16 %v1370, %v1369
        %v1386 = vpack.c.b16 %v1372, %v1371
        %v1387 = vpack.c.b16 %v1374, %v1373
        %v1388 = vpack.c.b16 %v1376, %v1375
        %v1389 = vpack.c.b16 %v1378, %v1377
        %v1390 = vpack.c.b16 %v1380, %v1379
        %v1391 = vpack.c.b16 %v1382, %v1381
        %v1392 = vpack.c.b16 %v1384, %v1383
        %1401 = vmatprep.subr.bf16.mxu0 0
        %1402 = vmatpush1.bf16.msra.mxu0 %v1385
        %1403 = vmatprep.subr.bf16.mxu0 0
        %1404 = vmatpush1.bf16.msra.mxu0 %v1386
        %1405 = vmatprep.subr.bf16.mxu0 0
        %1406 = vmatpush1.bf16.msra.mxu0 %v1387
        %1407 = vmatprep.subr.bf16.mxu0 0
        %1408 = vmatpush1.bf16.msra.mxu0 %v1388
        %1409 = vmatprep.subr.bf16.mxu0 0
        %1410 = vmatpush1.bf16.msra.mxu0 %v1389
        %1411 = vmatprep.subr.bf16.mxu0 0
        %1412 = vmatpush1.bf16.msra.mxu0 %v1390
        %1413 = vmatprep.subr.bf16.mxu0 0
        %1414 = vmatpush1.bf16.msra.mxu0 %v1391
        %1415 = vmatprep.subr.bf16.mxu0 0
        %1416 = vmatpush1.bf16.msra.mxu0 %v1392
        %1417 = vmatprep.subr.bf16.mxu0 0
        %1418 = vmatpush1.bf16.msra.mxu0 0
        %1419 = vmatprep.subr.bf16.mxu0 0
        %1420 = vmatpush1.bf16.msra.mxu0 0
        %1421 = vmatprep.subr.bf16.mxu0 0
        %1422 = vmatpush1.bf16.msra.mxu0 0
        %1423 = vmatprep.subr.bf16.mxu0 0
        %1424 = vmatpush1.bf16.msra.mxu0 0
        %1425 = vmatprep.subr.bf16.mxu0 0
        %1426 = vmatpush1.bf16.msra.mxu0 0
        %1427 = vmatprep.subr.bf16.mxu0 0
        %1428 = vmatpush1.bf16.msra.mxu0 0
        %1429 = vmatprep.subr.bf16.mxu0 0
        %1430 = vmatpush1.bf16.msra.mxu0 0
        %1431 = vmatprep.subr.bf16.mxu0 0
        %1432 = vmatpush1.bf16.msra.mxu0 0
        %1433 = vmatprep.mubr.bf16.mxu0 0
        %1434 = vmatmul.mubr.bf16.gmra.mrb[0].mxu0 %v438
        %v1435 = vpop.f32.mrb[0].mxu0
        %v1436 = vadd.f32 0.0, %v1435
        %v1437 = vpop.f32.mrb[0].mxu0
        %v1438 = vpop.f32.mrb[0].mxu0
        %v1439 = vadd.f32 0.0, %v1438
        %v1440 = vpop.f32.mrb[0].mxu0
        %1441 = vmatprep.mubr.bf16.mxu0 0
        %1442 = vmatmul.mubr.bf16.gmra.mrb[0].mxu0 %v439
        %v1443 = vpop.f32.mrb[0].mxu0
        %v1444 = vadd.f32 0.0, %v1443
        %v1445 = vpop.f32.mrb[0].mxu0
        %v1446 = vpop.f32.mrb[0].mxu0
        %v1447 = vadd.f32 0.0, %v1446
        %v1448 = vpop.f32.mrb[0].mxu0
        %1449 = vmatprep.mubr.bf16.mxu0 0
        %1450 = vmatmul.mubr.bf16.gmra.mrb[0].mxu0 %v440
        %v1451 = vpop.f32.mrb[0].mxu0
        %v1452 = vadd.f32 0.0, %v1451
        %v1453 = vpop.f32.mrb[0].mxu0
        %v1454 = vpop.f32.mrb[0].mxu0
        %v1455 = vadd.f32 0.0, %v1454
        %v1456 = vpop.f32.mrb[0].mxu0
        %1457 = vmatprep.mubr.bf16.mxu0 0
        %1458 = vmatmul.mubr.bf16.gmra.mrb[0].mxu0 %v441
        %v1459 = vpop.f32.mrb[0].mxu0
        %v1460 = vadd.f32 0.0, %v1459
        %v1461 = vpop.f32.mrb[0].mxu0
        %v1462 = vpop.f32.mrb[0].mxu0
        %v1463 = vadd.f32 0.0, %v1462
        %v1464 = vpop.f32.mrb[0].mxu0
        %1465 = vmatprep.mubr.bf16.mxu0 0
        %1466 = vmatmul.mubr.bf16.gmra.mrb[0].mxu0 %v442
        %v1467 = vpop.f32.mrb[0].mxu0
        %v1468 = vadd.f32 0.0, %v1467
        %v1469 = vpop.f32.mrb[0].mxu0
        %v1470 = vpop.f32.mrb[0].mxu0
        %v1471 = vadd.f32 0.0, %v1470
        %v1472 = vpop.f32.mrb[0].mxu0
        %1473 = vmatprep.mubr.bf16.mxu0 0
        %1474 = vmatmul.mubr.bf16.gmra.mrb[0].mxu0 %v443
        %v1475 = vpop.f32.mrb[0].mxu0
        %v1476 = vadd.f32 0.0, %v1475
        %v1477 = vpop.f32.mrb[0].mxu0
        %v1478 = vpop.f32.mrb[0].mxu0
        %v1479 = vadd.f32 0.0, %v1478
        %v1480 = vpop.f32.mrb[0].mxu0
        %1481 = vmatprep.mubr.bf16.mxu0 0
        %1482 = vmatmul.mubr.bf16.gmra.mrb[0].mxu0 %v444
        %v1483 = vpop.f32.mrb[0].mxu0
        %v1484 = vadd.f32 0.0, %v1483
        %v1485 = vpop.f32.mrb[0].mxu0
        %v1486 = vpop.f32.mrb[0].mxu0
        %v1487 = vadd.f32 0.0, %v1486
        %v1488 = vpop.f32.mrb[0].mxu0
        %1489 = vmatprep.mubr.bf16.mxu0 0
        %1490 = vmatmul.mubr.bf16.gmra.mrb[0].mxu0 %v445
        %v1491 = vpop.f32.mrb[0].mxu0
        %v1492 = vadd.f32 0.0, %v1491
        %v1493 = vpop.f32.mrb[0].mxu0
        %v1494 = vpop.f32.mrb[0].mxu0
        %v1495 = vadd.f32 0.0, %v1494
        %v1496 = vpop.f32.mrb[0].mxu0
        %1497 = vmatprep.mubr.bf16.mxu0 0
        %1498 = vmatmul.mubr.bf16.gmra.mrb[0].mxu0 %v446
        %v1499 = vpop.f32.mrb[0].mxu0
        %v1500 = vadd.f32 0.0, %v1499
        %v1501 = vpop.f32.mrb[0].mxu0
        %v1502 = vpop.f32.mrb[0].mxu0
        %v1503 = vadd.f32 0.0, %v1502
        %v1504 = vpop.f32.mrb[0].mxu0
        %1505 = vmatprep.mubr.bf16.mxu0 0
        %1506 = vmatmul.mubr.bf16.gmra.mrb[0].mxu0 %v447
        %v1507 = vpop.f32.mrb[0].mxu0
        %v1508 = vadd.f32 0.0, %v1507
        %v1509 = vpop.f32.mrb[0].mxu0
        %v1510 = vpop.f32.mrb[0].mxu0
        %v1511 = vadd.f32 0.0, %v1510
        %v1512 = vpop.f32.mrb[0].mxu0
        %1513 = vmatprep.mubr.bf16.mxu0 0
        %1514 = vmatmul.mubr.bf16.gmra.mrb[0].mxu0 %v448
        %v1515 = vpop.f32.mrb[0].mxu0
        %v1516 = vadd.f32 0.0, %v1515
        %v1517 = vpop.f32.mrb[0].mxu0
        %v1518 = vpop.f32.mrb[0].mxu0
        %v1519 = vadd.f32 0.0, %v1518
        %v1520 = vpop.f32.mrb[0].mxu0
        %1521 = vmatprep.mubr.bf16.mxu0 0
        %1522 = vmatmul.mubr.bf16.gmra.mrb[0].mxu0 %v449
        %v1523 = vpop.f32.mrb[0].mxu0
        %v1524 = vadd.f32 0.0, %v1523
        %v1525 = vpop.f32.mrb[0].mxu0
        %v1526 = vpop.f32.mrb[0].mxu0
        %v1527 = vadd.f32 0.0, %v1526
        %v1528 = vpop.f32.mrb[0].mxu0
        %1529 = vmatprep.mubr.bf16.mxu0 0
        %1530 = vmatmul.mubr.bf16.gmra.mrb[0].mxu0 %v450
        %v1531 = vpop.f32.mrb[0].mxu0
        %v1532 = vadd.f32 0.0, %v1531
        %v1533 = vpop.f32.mrb[0].mxu0
        %v1534 = vpop.f32.mrb[0].mxu0
        %v1535 = vadd.f32 0.0, %v1534
        %v1536 = vpop.f32.mrb[0].mxu0
        %1537 = vmatprep.mubr.bf16.mxu0 0
        %1538 = vmatmul.mubr.bf16.gmra.mrb[0].mxu0 %v1351
        %v1539 = vpop.f32.mrb[0].mxu0
        %v1540 = vadd.f32 0.0, %v1539
        %v1541 = vpop.f32.mrb[0].mxu0
        %v1542 = vpop.f32.mrb[0].mxu0
        %v1543 = vadd.f32 0.0, %v1542
        %v1544 = vpop.f32.mrb[0].mxu0
        %1545 = vdwg.mxu0
        %v1546 = vadd.f32 %v1302, %v1436
        %v1547 = vadd.f32 %v1303, %v1439
        %v1548 = vadd.f32 %v1304, %v1444
        %v1549 = vadd.f32 %v1305, %v1447
        %v1550 = vadd.f32 %v1306, %v1452
        %v1551 = vadd.f32 %v1307, %v1455
        %v1552 = vadd.f32 %v1308, %v1460
        %v1553 = vadd.f32 %v1309, %v1463
        %v1554 = vadd.f32 %v1310, %v1468
        %v1555 = vadd.f32 %v1311, %v1471
        %v1556 = vadd.f32 %v1312, %v1476
        %v1557 = vadd.f32 %v1313, %v1479
        %v1558 = vadd.f32 %v1314, %v1484
        %v1559 = vadd.f32 %v1315, %v1487
        %v1560 = vadd.f32 %v1316, %v1492
        %v1561 = vadd.f32 %v1317, %v1495
        %v1562 = vadd.f32 %v1318, %v1500
        %v1563 = vadd.f32 %v1319, %v1503
        %v1564 = vadd.f32 %v1320, %v1508
        %v1565 = vadd.f32 %v1321, %v1511
        %v1566 = vadd.f32 %v1322, %v1516
        %v1567 = vadd.f32 %v1323, %v1519
        %v1568 = vadd.f32 %v1324, %v1524
        %v1569 = vadd.f32 %v1325, %v1527
        %v1570 = vadd.f32 %v1326, %v1532
        %v1571 = vadd.f32 %v1327, %v1535
        %v1572 = vadd.f32 %v1328, %v1540
        %v1573 = vadd.f32 %v1329, %v1543
        %s1574 = scalar_lea.vmem [#allocation7], 256
        %v1575 = vld [vmem:[%s1574] sm:$0xf]
        %v1576 = vld [vmem:[%s1574 + $0x4] sm:$0xf]
        %v1577 = vld [vmem:[%s1574 + $0x8] sm:$0xf]
        %v1578 = vld [vmem:[%s1574 + $0xc] sm:$0xf]
        %v1579 = vld [vmem:[%s1574 + $0x10] sm:$0xf]
        %v1580 = vld [vmem:[%s1574 + $0x14] sm:$0xf]
        %v1581 = vld [vmem:[%s1574 + $0x18] sm:$0xf]
        %v1582 = vld [vmem:[%s1574 + $0x1c] sm:$0xf]
        %v1583 = vld [vmem:[%s1574 + $0x20] sm:$0xf]
        %v1584 = vld [vmem:[%s1574 + $0x24] sm:$0xf]
        %v1585 = vld [vmem:[%s1574 + $0x28] sm:$0xf]
        %v1586 = vld [vmem:[%s1574 + $0x2c] sm:$0xf]
        %v1587 = vld [vmem:[%s1574 + $0x30] sm:$0xf]
        %v1588 = vld [vmem:[%s1574 + $0x34] sm:$0xf]
        %v1589 = vld [vmem:[%s1574 + $0x38] sm:$0xf]
        %v1590 = vld [vmem:[%s1574 + $0x3c] sm:$0xf]
        %v1592 = vshll.u32 %v1351, 16
        %v1594 = vrot.slane %v1592, 1
        %v1595 = vsel %vm703, %v814, %v1594
        %v1596 = vshrl.u32 %v1351, 16
        %v1598 = vor.u32 %v1596, %v1594
        %v1617 = vunpack.c.l.b16 %v1575
        %v1618 = vunpack.c.l.b16 %v1576
        %v1619 = vunpack.c.l.b16 %v1577
        %v1620 = vunpack.c.l.b16 %v1578
        %v1621 = vunpack.c.l.b16 %v1579
        %v1622 = vunpack.c.l.b16 %v1580
        %v1623 = vunpack.c.l.b16 %v1581
        %v1624 = vunpack.c.l.b16 %v1582
        %v1625 = vunpack.c.l.b16 %v1583
        %v1626 = vunpack.c.l.b16 %v1584
        %v1627 = vunpack.c.l.b16 %v1585
        %v1628 = vunpack.c.l.b16 %v1586
        %v1629 = vunpack.c.l.b16 %v1587
        %v1630 = vunpack.c.l.b16 %v1588
        %v1631 = vunpack.c.l.b16 %v1589
        %v1632 = vunpack.c.l.b16 %v1590
        %v1633 = vpack.c.b16 %v1618, %v1617
        %v1634 = vpack.c.b16 %v1620, %v1619
        %v1635 = vpack.c.b16 %v1622, %v1621
        %v1636 = vpack.c.b16 %v1624, %v1623
        %v1637 = vpack.c.b16 %v1626, %v1625
        %v1638 = vpack.c.b16 %v1628, %v1627
        %v1639 = vpack.c.b16 %v1630, %v1629
        %v1640 = vpack.c.b16 %v1632, %v1631
        %1649 = vmatprep.subr.bf16.mxu0 0
        %1650 = vmatpush1.bf16.msra.mxu0 %v1633
        %1651 = vmatprep.subr.bf16.mxu0 0
        %1652 = vmatpush1.bf16.msra.mxu0 %v1634
        %1653 = vmatprep.subr.bf16.mxu0 0
        %1654 = vmatpush1.bf16.msra.mxu0 %v1635
        %1655 = vmatprep.subr.bf16.mxu0 0
        %1656 = vmatpush1.bf16.msra.mxu0 %v1636
        %1657 = vmatprep.subr.bf16.mxu0 0
        %1658 = vmatpush1.bf16.msra.mxu0 %v1637
        %1659 = vmatprep.subr.bf16.mxu0 0
        %1660 = vmatpush1.bf16.msra.mxu0 %v1638
        %1661 = vmatprep.subr.bf16.mxu0 0
        %1662 = vmatpush1.bf16.msra.mxu0 %v1639
        %1663 = vmatprep.subr.bf16.mxu0 0
        %1664 = vmatpush1.bf16.msra.mxu0 %v1640
        %1665 = vmatprep.subr.bf16.mxu0 0
        %1666 = vmatpush1.bf16.msra.mxu0 0
        %1667 = vmatprep.subr.bf16.mxu0 0
        %1668 = vmatpush1.bf16.msra.mxu0 0
        %1669 = vmatprep.subr.bf16.mxu0 0
        %1670 = vmatpush1.bf16.msra.mxu0 0
        %1671 = vmatprep.subr.bf16.mxu0 0
        %1672 = vmatpush1.bf16.msra.mxu0 0
        %1673 = vmatprep.subr.bf16.mxu0 0
        %1674 = vmatpush1.bf16.msra.mxu0 0
        %1675 = vmatprep.subr.bf16.mxu0 0
        %1676 = vmatpush1.bf16.msra.mxu0 0
        %1677 = vmatprep.subr.bf16.mxu0 0
        %1678 = vmatpush1.bf16.msra.mxu0 0
        %1679 = vmatprep.subr.bf16.mxu0 0
        %1680 = vmatpush1.bf16.msra.mxu0 0
        %1681 = vmatprep.mubr.bf16.mxu0 0
        %1682 = vmatmul.mubr.bf16.gmra.mrb[0].mxu0 %v723
        %v1683 = vpop.f32.mrb[0].mxu0
        %v1684 = vadd.f32 0.0, %v1683
        %v1685 = vpop.f32.mrb[0].mxu0
        %v1686 = vpop.f32.mrb[0].mxu0
        %v1687 = vadd.f32 0.0, %v1686
        %v1688 = vpop.f32.mrb[0].mxu0
        %1689 = vmatprep.mubr.bf16.mxu0 0
        %1690 = vmatmul.mubr.bf16.gmra.mrb[0].mxu0 %v731
        %v1691 = vpop.f32.mrb[0].mxu0
        %v1692 = vadd.f32 0.0, %v1691
        %v1693 = vpop.f32.mrb[0].mxu0
        %v1694 = vpop.f32.mrb[0].mxu0
        %v1695 = vadd.f32 0.0, %v1694
        %v1696 = vpop.f32.mrb[0].mxu0
        %1697 = vmatprep.mubr.bf16.mxu0 0
        %1698 = vmatmul.mubr.bf16.gmra.mrb[0].mxu0 %v739
        %v1699 = vpop.f32.mrb[0].mxu0
        %v1700 = vadd.f32 0.0, %v1699
        %v1701 = vpop.f32.mrb[0].mxu0
        %v1702 = vpop.f32.mrb[0].mxu0
        %v1703 = vadd.f32 0.0, %v1702
        %v1704 = vpop.f32.mrb[0].mxu0
        %1705 = vmatprep.mubr.bf16.mxu0 0
        %1706 = vmatmul.mubr.bf16.gmra.mrb[0].mxu0 %v747
        %v1707 = vpop.f32.mrb[0].mxu0
        %v1708 = vadd.f32 0.0, %v1707
        %v1709 = vpop.f32.mrb[0].mxu0
        %v1710 = vpop.f32.mrb[0].mxu0
        %v1711 = vadd.f32 0.0, %v1710
        %v1712 = vpop.f32.mrb[0].mxu0
        %1713 = vmatprep.mubr.bf16.mxu0 0
        %1714 = vmatmul.mubr.bf16.gmra.mrb[0].mxu0 %v755
        %v1715 = vpop.f32.mrb[0].mxu0
        %v1716 = vadd.f32 0.0, %v1715
        %v1717 = vpop.f32.mrb[0].mxu0
        %v1718 = vpop.f32.mrb[0].mxu0
        %v1719 = vadd.f32 0.0, %v1718
        %v1720 = vpop.f32.mrb[0].mxu0
        %1721 = vmatprep.mubr.bf16.mxu0 0
        %1722 = vmatmul.mubr.bf16.gmra.mrb[0].mxu0 %v763
        %v1723 = vpop.f32.mrb[0].mxu0
        %v1724 = vadd.f32 0.0, %v1723
        %v1725 = vpop.f32.mrb[0].mxu0
        %v1726 = vpop.f32.mrb[0].mxu0
        %v1727 = vadd.f32 0.0, %v1726
        %v1728 = vpop.f32.mrb[0].mxu0
        %1729 = vmatprep.mubr.bf16.mxu0 0
        %1730 = vmatmul.mubr.bf16.gmra.mrb[0].mxu0 %v771
        %v1731 = vpop.f32.mrb[0].mxu0
        %v1732 = vadd.f32 0.0, %v1731
        %v1733 = vpop.f32.mrb[0].mxu0
        %v1734 = vpop.f32.mrb[0].mxu0
        %v1735 = vadd.f32 0.0, %v1734
        %v1736 = vpop.f32.mrb[0].mxu0
        %1737 = vmatprep.mubr.bf16.mxu0 0
        %1738 = vmatmul.mubr.bf16.gmra.mrb[0].mxu0 %v779
        %v1739 = vpop.f32.mrb[0].mxu0
        %v1740 = vadd.f32 0.0, %v1739
        %v1741 = vpop.f32.mrb[0].mxu0
        %v1742 = vpop.f32.mrb[0].mxu0
        %v1743 = vadd.f32 0.0, %v1742
        %v1744 = vpop.f32.mrb[0].mxu0
        %1745 = vmatprep.mubr.bf16.mxu0 0
        %1746 = vmatmul.mubr.bf16.gmra.mrb[0].mxu0 %v787
        %v1747 = vpop.f32.mrb[0].mxu0
        %v1748 = vadd.f32 0.0, %v1747
        %v1749 = vpop.f32.mrb[0].mxu0
        %v1750 = vpop.f32.mrb[0].mxu0
        %v1751 = vadd.f32 0.0, %v1750
        %v1752 = vpop.f32.mrb[0].mxu0
        %1753 = vmatprep.mubr.bf16.mxu0 0
        %1754 = vmatmul.mubr.bf16.gmra.mrb[0].mxu0 %v795
        %v1755 = vpop.f32.mrb[0].mxu0
        %v1756 = vadd.f32 0.0, %v1755
        %v1757 = vpop.f32.mrb[0].mxu0
        %v1758 = vpop.f32.mrb[0].mxu0
        %v1759 = vadd.f32 0.0, %v1758
        %v1760 = vpop.f32.mrb[0].mxu0
        %1761 = vmatprep.mubr.bf16.mxu0 0
        %1762 = vmatmul.mubr.bf16.gmra.mrb[0].mxu0 %v803
        %v1763 = vpop.f32.mrb[0].mxu0
        %v1764 = vadd.f32 0.0, %v1763
        %v1765 = vpop.f32.mrb[0].mxu0
        %v1766 = vpop.f32.mrb[0].mxu0
        %v1767 = vadd.f32 0.0, %v1766
        %v1768 = vpop.f32.mrb[0].mxu0
        %1769 = vmatprep.mubr.bf16.mxu0 0
        %1770 = vmatmul.mubr.bf16.gmra.mrb[0].mxu0 %v811
        %v1771 = vpop.f32.mrb[0].mxu0
        %v1772 = vadd.f32 0.0, %v1771
        %v1773 = vpop.f32.mrb[0].mxu0
        %v1774 = vpop.f32.mrb[0].mxu0
        %v1775 = vadd.f32 0.0, %v1774
        %v1776 = vpop.f32.mrb[0].mxu0
        %1777 = vmatprep.mubr.bf16.mxu0 0
        %1778 = vmatmul.mubr.bf16.gmra.mrb[0].mxu0 %v1595
        %v1779 = vpop.f32.mrb[0].mxu0
        %v1780 = vadd.f32 0.0, %v1779
        %v1781 = vpop.f32.mrb[0].mxu0
        %v1782 = vpop.f32.mrb[0].mxu0
        %v1783 = vadd.f32 0.0, %v1782
        %v1784 = vpop.f32.mrb[0].mxu0
        %1785 = vmatprep.mubr.bf16.mxu0 0
        %1786 = vmatmul.mubr.bf16.gmra.mrb[0].mxu0 %v1598
        %v1787 = vpop.f32.mrb[0].mxu0
        %v1788 = vadd.f32 0.0, %v1787
        %v1789 = vpop.f32.mrb[0].mxu0
        %v1790 = vpop.f32.mrb[0].mxu0
        %v1791 = vadd.f32 0.0, %v1790
        %v1792 = vpop.f32.mrb[0].mxu0
        %1793 = vdwg.mxu0
        %v1794 = vadd.f32 %v1546, %v1684
        %v1795 = vadd.f32 %v1547, %v1687
        %v1796 = vadd.f32 %v1548, %v1692
        %v1797 = vadd.f32 %v1549, %v1695
        %v1798 = vadd.f32 %v1550, %v1700
        %v1799 = vadd.f32 %v1551, %v1703
        %v1800 = vadd.f32 %v1552, %v1708
        %v1801 = vadd.f32 %v1553, %v1711
        %v1802 = vadd.f32 %v1554, %v1716
        %v1803 = vadd.f32 %v1555, %v1719
        %v1804 = vadd.f32 %v1556, %v1724
        %v1805 = vadd.f32 %v1557, %v1727
        %v1806 = vadd.f32 %v1558, %v1732
        %v1807 = vadd.f32 %v1559, %v1735
        %v1808 = vadd.f32 %v1560, %v1740
        %v1809 = vadd.f32 %v1561, %v1743
        %v1810 = vadd.f32 %v1562, %v1748
        %v1811 = vadd.f32 %v1563, %v1751
        %v1812 = vadd.f32 %v1564, %v1756
        %v1813 = vadd.f32 %v1565, %v1759
        %v1814 = vadd.f32 %v1566, %v1764
        %v1815 = vadd.f32 %v1567, %v1767
        %v1816 = vadd.f32 %v1568, %v1772
        %v1817 = vadd.f32 %v1569, %v1775
        %v1818 = vadd.f32 %v1570, %v1780
        %v1819 = vadd.f32 %v1571, %v1783
        %v1820 = vadd.f32 %v1572, %v1788
        %v1821 = vadd.f32 %v1573, %v1791
        %s1822 = scalar_lea.vmem [#allocation7], 320
        %v1823 = vld [vmem:[%s1822] sm:$0xf]
        %v1824 = vld [vmem:[%s1822 + $0x4] sm:$0xf]
        %v1825 = vld [vmem:[%s1822 + $0x8] sm:$0xf]
        %v1826 = vld [vmem:[%s1822 + $0xc] sm:$0xf]
        %v1827 = vld [vmem:[%s1822 + $0x10] sm:$0xf]
        %v1828 = vld [vmem:[%s1822 + $0x14] sm:$0xf]
        %v1829 = vld [vmem:[%s1822 + $0x18] sm:$0xf]
        %v1830 = vld [vmem:[%s1822 + $0x1c] sm:$0xf]
        %v1831 = vld [vmem:[%s1822 + $0x20] sm:$0xf]
        %v1832 = vld [vmem:[%s1822 + $0x24] sm:$0xf]
        %v1833 = vld [vmem:[%s1822 + $0x28] sm:$0xf]
        %v1834 = vld [vmem:[%s1822 + $0x2c] sm:$0xf]
        %v1835 = vld [vmem:[%s1822 + $0x30] sm:$0xf]
        %v1836 = vld [vmem:[%s1822 + $0x34] sm:$0xf]
        %v1837 = vld [vmem:[%s1822 + $0x38] sm:$0xf]
        %v1838 = vld [vmem:[%s1822 + $0x3c] sm:$0xf]
        %v1839 = vrot.slane %v1351, 1
        %v1840 = vsel %vm1067, %v1093, %v1839
        %v1859 = vunpack.c.l.b16 %v1823
        %v1860 = vunpack.c.l.b16 %v1824
        %v1861 = vunpack.c.l.b16 %v1825
        %v1862 = vunpack.c.l.b16 %v1826
        %v1863 = vunpack.c.l.b16 %v1827
        %v1864 = vunpack.c.l.b16 %v1828
        %v1865 = vunpack.c.l.b16 %v1829
        %v1866 = vunpack.c.l.b16 %v1830
        %v1867 = vunpack.c.l.b16 %v1831
        %v1868 = vunpack.c.l.b16 %v1832
        %v1869 = vunpack.c.l.b16 %v1833
        %v1870 = vunpack.c.l.b16 %v1834
        %v1871 = vunpack.c.l.b16 %v1835
        %v1872 = vunpack.c.l.b16 %v1836
        %v1873 = vunpack.c.l.b16 %v1837
        %v1874 = vunpack.c.l.b16 %v1838
        %v1875 = vpack.c.b16 %v1860, %v1859
        %v1876 = vpack.c.b16 %v1862, %v1861
        %v1877 = vpack.c.b16 %v1864, %v1863
        %v1878 = vpack.c.b16 %v1866, %v1865
        %v1879 = vpack.c.b16 %v1868, %v1867
        %v1880 = vpack.c.b16 %v1870, %v1869
        %v1881 = vpack.c.b16 %v1872, %v1871
        %v1882 = vpack.c.b16 %v1874, %v1873
        %1891 = vmatprep.subr.bf16.mxu0 0
        %1892 = vmatpush1.bf16.msra.mxu0 %v1875
        %1893 = vmatprep.subr.bf16.mxu0 0
        %1894 = vmatpush1.bf16.msra.mxu0 %v1876
        %1895 = vmatprep.subr.bf16.mxu0 0
        %1896 = vmatpush1.bf16.msra.mxu0 %v1877
        %1897 = vmatprep.subr.bf16.mxu0 0
        %1898 = vmatpush1.bf16.msra.mxu0 %v1878
        %1899 = vmatprep.subr.bf16.mxu0 0
        %1900 = vmatpush1.bf16.msra.mxu0 %v1879
        %1901 = vmatprep.subr.bf16.mxu0 0
        %1902 = vmatpush1.bf16.msra.mxu0 %v1880
        %1903 = vmatprep.subr.bf16.mxu0 0
        %1904 = vmatpush1.bf16.msra.mxu0 %v1881
        %1905 = vmatprep.subr.bf16.mxu0 0
        %1906 = vmatpush1.bf16.msra.mxu0 %v1882
        %1907 = vmatprep.subr.bf16.mxu0 0
        %1908 = vmatpush1.bf16.msra.mxu0 0
        %1909 = vmatprep.subr.bf16.mxu0 0
        %1910 = vmatpush1.bf16.msra.mxu0 0
        %1911 = vmatprep.subr.bf16.mxu0 0
        %1912 = vmatpush1.bf16.msra.mxu0 0
        %1913 = vmatprep.subr.bf16.mxu0 0
        %1914 = vmatpush1.bf16.msra.mxu0 0
        %1915 = vmatprep.subr.bf16.mxu0 0
        %1916 = vmatpush1.bf16.msra.mxu0 0
        %1917 = vmatprep.subr.bf16.mxu0 0
        %1918 = vmatpush1.bf16.msra.mxu0 0
        %1919 = vmatprep.subr.bf16.mxu0 0
        %1920 = vmatpush1.bf16.msra.mxu0 0
        %1921 = vmatprep.subr.bf16.mxu0 0
        %1922 = vmatpush1.bf16.msra.mxu0 0
        %1923 = vmatprep.mubr.bf16.mxu0 0
        %1924 = vmatmul.mubr.bf16.gmra.mrb[0].mxu0 %v1072
        %v1925 = vpop.f32.mrb[0].mxu0
        %v1926 = vadd.f32 0.0, %v1925
        %v1927 = vpop.f32.mrb[0].mxu0
        %v1928 = vpop.f32.mrb[0].mxu0
        %v1929 = vadd.f32 0.0, %v1928
        %v1930 = vpop.f32.mrb[0].mxu0
        %1931 = vmatprep.mubr.bf16.mxu0 0
        %1932 = vmatmul.mubr.bf16.gmra.mrb[0].mxu0 %v1074
        %v1933 = vpop.f32.mrb[0].mxu0
        %v1934 = vadd.f32 0.0, %v1933
        %v1935 = vpop.f32.mrb[0].mxu0
        %v1936 = vpop.f32.mrb[0].mxu0
        %v1937 = vadd.f32 0.0, %v1936
        %v1938 = vpop.f32.mrb[0].mxu0
        %1939 = vmatprep.mubr.bf16.mxu0 0
        %1940 = vmatmul.mubr.bf16.gmra.mrb[0].mxu0 %v1076
        %v1941 = vpop.f32.mrb[0].mxu0
        %v1942 = vadd.f32 0.0, %v1941
        %v1943 = vpop.f32.mrb[0].mxu0
        %v1944 = vpop.f32.mrb[0].mxu0
        %v1945 = vadd.f32 0.0, %v1944
        %v1946 = vpop.f32.mrb[0].mxu0
        %1947 = vmatprep.mubr.bf16.mxu0 0
        %1948 = vmatmul.mubr.bf16.gmra.mrb[0].mxu0 %v1078
        %v1949 = vpop.f32.mrb[0].mxu0
        %v1950 = vadd.f32 0.0, %v1949
        %v1951 = vpop.f32.mrb[0].mxu0
        %v1952 = vpop.f32.mrb[0].mxu0
        %v1953 = vadd.f32 0.0, %v1952
        %v1954 = vpop.f32.mrb[0].mxu0
        %1955 = vmatprep.mubr.bf16.mxu0 0
        %1956 = vmatmul.mubr.bf16.gmra.mrb[0].mxu0 %v1080
        %v1957 = vpop.f32.mrb[0].mxu0
        %v1958 = vadd.f32 0.0, %v1957
        %v1959 = vpop.f32.mrb[0].mxu0
        %v1960 = vpop.f32.mrb[0].mxu0
        %v1961 = vadd.f32 0.0, %v1960
        %v1962 = vpop.f32.mrb[0].mxu0
        %1963 = vmatprep.mubr.bf16.mxu0 0
        %1964 = vmatmul.mubr.bf16.gmra.mrb[0].mxu0 %v1082
        %v1965 = vpop.f32.mrb[0].mxu0
        %v1966 = vadd.f32 0.0, %v1965
        %v1967 = vpop.f32.mrb[0].mxu0
        %v1968 = vpop.f32.mrb[0].mxu0
        %v1969 = vadd.f32 0.0, %v1968
        %v1970 = vpop.f32.mrb[0].mxu0
        %1971 = vmatprep.mubr.bf16.mxu0 0
        %1972 = vmatmul.mubr.bf16.gmra.mrb[0].mxu0 %v1084
        %v1973 = vpop.f32.mrb[0].mxu0
        %v1974 = vadd.f32 0.0, %v1973
        %v1975 = vpop.f32.mrb[0].mxu0
        %v1976 = vpop.f32.mrb[0].mxu0
        %v1977 = vadd.f32 0.0, %v1976
        %v1978 = vpop.f32.mrb[0].mxu0
        %1979 = vmatprep.mubr.bf16.mxu0 0
        %1980 = vmatmul.mubr.bf16.gmra.mrb[0].mxu0 %v1086
        %v1981 = vpop.f32.mrb[0].mxu0
        %v1982 = vadd.f32 0.0, %v1981
        %v1983 = vpop.f32.mrb[0].mxu0
        %v1984 = vpop.f32.mrb[0].mxu0
        %v1985 = vadd.f32 0.0, %v1984
        %v1986 = vpop.f32.mrb[0].mxu0
        %1987 = vmatprep.mubr.bf16.mxu0 0
        %1988 = vmatmul.mubr.bf16.gmra.mrb[0].mxu0 %v1088
        %v1989 = vpop.f32.mrb[0].mxu0
        %v1990 = vadd.f32 0.0, %v1989
        %v1991 = vpop.f32.mrb[0].mxu0
        %v1992 = vpop.f32.mrb[0].mxu0
        %v1993 = vadd.f32 0.0, %v1992
        %v1994 = vpop.f32.mrb[0].mxu0
        %1995 = vmatprep.mubr.bf16.mxu0 0
        %1996 = vmatmul.mubr.bf16.gmra.mrb[0].mxu0 %v1090
        %v1997 = vpop.f32.mrb[0].mxu0
        %v1998 = vadd.f32 0.0, %v1997
        %v1999 = vpop.f32.mrb[0].mxu0
        %v2000 = vpop.f32.mrb[0].mxu0
        %v2001 = vadd.f32 0.0, %v2000
        %v2002 = vpop.f32.mrb[0].mxu0
        %2003 = vmatprep.mubr.bf16.mxu0 0
        %2004 = vmatmul.mubr.bf16.gmra.mrb[0].mxu0 %v1092
        %v2005 = vpop.f32.mrb[0].mxu0
        %v2006 = vadd.f32 0.0, %v2005
        %v2007 = vpop.f32.mrb[0].mxu0
        %v2008 = vpop.f32.mrb[0].mxu0
        %v2009 = vadd.f32 0.0, %v2008
        %v2010 = vpop.f32.mrb[0].mxu0
        %2011 = vmatprep.mubr.bf16.mxu0 0
        %2012 = vmatmul.mubr.bf16.gmra.mrb[0].mxu0 %v1094
        %v2013 = vpop.f32.mrb[0].mxu0
        %v2014 = vadd.f32 0.0, %v2013
        %v2015 = vpop.f32.mrb[0].mxu0
        %v2016 = vpop.f32.mrb[0].mxu0
        %v2017 = vadd.f32 0.0, %v2016
        %v2018 = vpop.f32.mrb[0].mxu0
        %2019 = vmatprep.mubr.bf16.mxu0 0
        %2020 = vmatmul.mubr.bf16.gmra.mrb[0].mxu0 %v1840
        %v2021 = vpop.f32.mrb[0].mxu0
        %v2022 = vadd.f32 0.0, %v2021
        %v2023 = vpop.f32.mrb[0].mxu0
        %v2024 = vpop.f32.mrb[0].mxu0
        %v2025 = vadd.f32 0.0, %v2024
        %v2026 = vpop.f32.mrb[0].mxu0
        %2027 = vmatprep.mubr.bf16.mxu0 0
        %2028 = vmatmul.mubr.bf16.gmra.mrb[0].mxu0 %v1839
        %v2029 = vpop.f32.mrb[0].mxu0
        %v2030 = vadd.f32 0.0, %v2029
        %v2031 = vpop.f32.mrb[0].mxu0
        %v2032 = vpop.f32.mrb[0].mxu0
        %v2033 = vadd.f32 0.0, %v2032
        %v2034 = vpop.f32.mrb[0].mxu0
        %2035 = vdwg.mxu0
        %v2036 = vadd.f32 %v1794, %v1926
        %v2037 = vadd.f32 %v1795, %v1929
        %v2038 = vadd.f32 %v1796, %v1934
        %v2039 = vadd.f32 %v1797, %v1937
        %v2040 = vadd.f32 %v1798, %v1942
        %v2041 = vadd.f32 %v1799, %v1945
        %v2042 = vadd.f32 %v1800, %v1950
        %v2043 = vadd.f32 %v1801, %v1953
        %v2044 = vadd.f32 %v1802, %v1958
        %v2045 = vadd.f32 %v1803, %v1961
        %v2046 = vadd.f32 %v1804, %v1966
        %v2047 = vadd.f32 %v1805, %v1969
        %v2048 = vadd.f32 %v1806, %v1974
        %v2049 = vadd.f32 %v1807, %v1977
        %v2050 = vadd.f32 %v1808, %v1982
        %v2051 = vadd.f32 %v1809, %v1985
        %v2052 = vadd.f32 %v1810, %v1990
        %v2053 = vadd.f32 %v1811, %v1993
        %v2054 = vadd.f32 %v1812, %v1998
        %v2055 = vadd.f32 %v1813, %v2001
        %v2056 = vadd.f32 %v1814, %v2006
        %v2057 = vadd.f32 %v1815, %v2009
        %v2058 = vadd.f32 %v1816, %v2014
        %v2059 = vadd.f32 %v1817, %v2017
        %v2060 = vadd.f32 %v1818, %v2022
        %v2061 = vadd.f32 %v1819, %v2025
        %v2062 = vadd.f32 %v1820, %v2030
        %v2063 = vadd.f32 %v1821, %v2033
        %s2064 = scalar_lea.vmem [#allocation7], 384
        %v2065 = vld [vmem:[%s2064] sm:$0xf]
        %v2066 = vld [vmem:[%s2064 + $0x4] sm:$0xf]
        %v2067 = vld [vmem:[%s2064 + $0x8] sm:$0xf]
        %v2068 = vld [vmem:[%s2064 + $0xc] sm:$0xf]
        %v2069 = vld [vmem:[%s2064 + $0x10] sm:$0xf]
        %v2070 = vld [vmem:[%s2064 + $0x14] sm:$0xf]
        %v2071 = vld [vmem:[%s2064 + $0x18] sm:$0xf]
        %v2072 = vld [vmem:[%s2064 + $0x1c] sm:$0xf]
        %v2073 = vld [vmem:[%s2064 + $0x20] sm:$0xf]
        %v2074 = vld [vmem:[%s2064 + $0x24] sm:$0xf]
        %v2075 = vld [vmem:[%s2064 + $0x28] sm:$0xf]
        %v2076 = vld [vmem:[%s2064 + $0x2c] sm:$0xf]
        %v2077 = vld [vmem:[%s2064 + $0x30] sm:$0xf]
        %v2078 = vld [vmem:[%s2064 + $0x34] sm:$0xf]
        %v2079 = vld [vmem:[%s2064 + $0x38] sm:$0xf]
        %v2080 = vld [vmem:[%s2064 + $0x3c] sm:$0xf]
        %v2083 = vunpack.c.l.b16 %v363
        %v2084 = vunpack.c.l.b16 %v364
        %v2085 = vpack.c.b16 %v2084, %v2083
        %v2103 = vunpack.c.l.b16 %v2065
        %v2104 = vunpack.c.l.b16 %v2066
        %v2105 = vunpack.c.l.b16 %v2067
        %v2106 = vunpack.c.l.b16 %v2068
        %v2107 = vunpack.c.l.b16 %v2069
        %v2108 = vunpack.c.l.b16 %v2070
        %v2109 = vunpack.c.l.b16 %v2071
        %v2110 = vunpack.c.l.b16 %v2072
        %v2111 = vunpack.c.l.b16 %v2073
        %v2112 = vunpack.c.l.b16 %v2074
        %v2113 = vunpack.c.l.b16 %v2075
        %v2114 = vunpack.c.l.b16 %v2076
        %v2115 = vunpack.c.l.b16 %v2077
        %v2116 = vunpack.c.l.b16 %v2078
        %v2117 = vunpack.c.l.b16 %v2079
        %v2118 = vunpack.c.l.b16 %v2080
        %v2119 = vpack.c.b16 %v2104, %v2103
        %v2120 = vpack.c.b16 %v2106, %v2105
        %v2121 = vpack.c.b16 %v2108, %v2107
        %v2122 = vpack.c.b16 %v2110, %v2109
        %v2123 = vpack.c.b16 %v2112, %v2111
        %v2124 = vpack.c.b16 %v2114, %v2113
        %v2125 = vpack.c.b16 %v2116, %v2115
        %v2126 = vpack.c.b16 %v2118, %v2117
        %2135 = vmatprep.subr.bf16.mxu0 0
        %2136 = vmatpush1.bf16.msra.mxu0 %v2119
        %2137 = vmatprep.subr.bf16.mxu0 0
        %2138 = vmatpush1.bf16.msra.mxu0 %v2120
        %2139 = vmatprep.subr.bf16.mxu0 0
        %2140 = vmatpush1.bf16.msra.mxu0 %v2121
        %2141 = vmatprep.subr.bf16.mxu0 0
        %2142 = vmatpush1.bf16.msra.mxu0 %v2122
        %2143 = vmatprep.subr.bf16.mxu0 0
        %2144 = vmatpush1.bf16.msra.mxu0 %v2123
        %2145 = vmatprep.subr.bf16.mxu0 0
        %2146 = vmatpush1.bf16.msra.mxu0 %v2124
        %2147 = vmatprep.subr.bf16.mxu0 0
        %2148 = vmatpush1.bf16.msra.mxu0 %v2125
        %2149 = vmatprep.subr.bf16.mxu0 0
        %2150 = vmatpush1.bf16.msra.mxu0 %v2126
        %2151 = vmatprep.subr.bf16.mxu0 0
        %2152 = vmatpush1.bf16.msra.mxu0 0
        %2153 = vmatprep.subr.bf16.mxu0 0
        %2154 = vmatpush1.bf16.msra.mxu0 0
        %2155 = vmatprep.subr.bf16.mxu0 0
        %2156 = vmatpush1.bf16.msra.mxu0 0
        %2157 = vmatprep.subr.bf16.mxu0 0
        %2158 = vmatpush1.bf16.msra.mxu0 0
        %2159 = vmatprep.subr.bf16.mxu0 0
        %2160 = vmatpush1.bf16.msra.mxu0 0
        %2161 = vmatprep.subr.bf16.mxu0 0
        %2162 = vmatpush1.bf16.msra.mxu0 0
        %2163 = vmatprep.subr.bf16.mxu0 0
        %2164 = vmatpush1.bf16.msra.mxu0 0
        %2165 = vmatprep.subr.bf16.mxu0 0
        %2166 = vmatpush1.bf16.msra.mxu0 0
        %2167 = vmatprep.mubr.bf16.mxu0 0
        %2168 = vmatmul.mubr.bf16.gmra.mrb[0].mxu0 %v439
        %v2169 = vpop.f32.mrb[0].mxu0
        %v2170 = vadd.f32 0.0, %v2169
        %v2171 = vpop.f32.mrb[0].mxu0
        %v2172 = vpop.f32.mrb[0].mxu0
        %v2173 = vadd.f32 0.0, %v2172
        %v2174 = vpop.f32.mrb[0].mxu0
        %2175 = vmatprep.mubr.bf16.mxu0 0
        %2176 = vmatmul.mubr.bf16.gmra.mrb[0].mxu0 %v440
        %v2177 = vpop.f32.mrb[0].mxu0
        %v2178 = vadd.f32 0.0, %v2177
        %v2179 = vpop.f32.mrb[0].mxu0
        %v2180 = vpop.f32.mrb[0].mxu0
        %v2181 = vadd.f32 0.0, %v2180
        %v2182 = vpop.f32.mrb[0].mxu0
        %2183 = vmatprep.mubr.bf16.mxu0 0
        %2184 = vmatmul.mubr.bf16.gmra.mrb[0].mxu0 %v441
        %v2185 = vpop.f32.mrb[0].mxu0
        %v2186 = vadd.f32 0.0, %v2185
        %v2187 = vpop.f32.mrb[0].mxu0
        %v2188 = vpop.f32.mrb[0].mxu0
        %v2189 = vadd.f32 0.0, %v2188
        %v2190 = vpop.f32.mrb[0].mxu0
        %2191 = vmatprep.mubr.bf16.mxu0 0
        %2192 = vmatmul.mubr.bf16.gmra.mrb[0].mxu0 %v442
        %v2193 = vpop.f32.mrb[0].mxu0
        %v2194 = vadd.f32 0.0, %v2193
        %v2195 = vpop.f32.mrb[0].mxu0
        %v2196 = vpop.f32.mrb[0].mxu0
        %v2197 = vadd.f32 0.0, %v2196
        %v2198 = vpop.f32.mrb[0].mxu0
        %2199 = vmatprep.mubr.bf16.mxu0 0
        %2200 = vmatmul.mubr.bf16.gmra.mrb[0].mxu0 %v443
        %v2201 = vpop.f32.mrb[0].mxu0
        %v2202 = vadd.f32 0.0, %v2201
        %v2203 = vpop.f32.mrb[0].mxu0
        %v2204 = vpop.f32.mrb[0].mxu0
        %v2205 = vadd.f32 0.0, %v2204
        %v2206 = vpop.f32.mrb[0].mxu0
        %2207 = vmatprep.mubr.bf16.mxu0 0
        %2208 = vmatmul.mubr.bf16.gmra.mrb[0].mxu0 %v444
        %v2209 = vpop.f32.mrb[0].mxu0
        %v2210 = vadd.f32 0.0, %v2209
        %v2211 = vpop.f32.mrb[0].mxu0
        %v2212 = vpop.f32.mrb[0].mxu0
        %v2213 = vadd.f32 0.0, %v2212
        %v2214 = vpop.f32.mrb[0].mxu0
        %2215 = vmatprep.mubr.bf16.mxu0 0
        %2216 = vmatmul.mubr.bf16.gmra.mrb[0].mxu0 %v445
        %v2217 = vpop.f32.mrb[0].mxu0
        %v2218 = vadd.f32 0.0, %v2217
        %v2219 = vpop.f32.mrb[0].mxu0
        %v2220 = vpop.f32.mrb[0].mxu0
        %v2221 = vadd.f32 0.0, %v2220
        %v2222 = vpop.f32.mrb[0].mxu0
        %2223 = vmatprep.mubr.bf16.mxu0 0
        %2224 = vmatmul.mubr.bf16.gmra.mrb[0].mxu0 %v446
        %v2225 = vpop.f32.mrb[0].mxu0
        %v2226 = vadd.f32 0.0, %v2225
        %v2227 = vpop.f32.mrb[0].mxu0
        %v2228 = vpop.f32.mrb[0].mxu0
        %v2229 = vadd.f32 0.0, %v2228
        %v2230 = vpop.f32.mrb[0].mxu0
        %2231 = vmatprep.mubr.bf16.mxu0 0
        %2232 = vmatmul.mubr.bf16.gmra.mrb[0].mxu0 %v447
        %v2233 = vpop.f32.mrb[0].mxu0
        %v2234 = vadd.f32 0.0, %v2233
        %v2235 = vpop.f32.mrb[0].mxu0
        %v2236 = vpop.f32.mrb[0].mxu0
        %v2237 = vadd.f32 0.0, %v2236
        %v2238 = vpop.f32.mrb[0].mxu0
        %2239 = vmatprep.mubr.bf16.mxu0 0
        %2240 = vmatmul.mubr.bf16.gmra.mrb[0].mxu0 %v448
        %v2241 = vpop.f32.mrb[0].mxu0
        %v2242 = vadd.f32 0.0, %v2241
        %v2243 = vpop.f32.mrb[0].mxu0
        %v2244 = vpop.f32.mrb[0].mxu0
        %v2245 = vadd.f32 0.0, %v2244
        %v2246 = vpop.f32.mrb[0].mxu0
        %2247 = vmatprep.mubr.bf16.mxu0 0
        %2248 = vmatmul.mubr.bf16.gmra.mrb[0].mxu0 %v449
        %v2249 = vpop.f32.mrb[0].mxu0
        %v2250 = vadd.f32 0.0, %v2249
        %v2251 = vpop.f32.mrb[0].mxu0
        %v2252 = vpop.f32.mrb[0].mxu0
        %v2253 = vadd.f32 0.0, %v2252
        %v2254 = vpop.f32.mrb[0].mxu0
        %2255 = vmatprep.mubr.bf16.mxu0 0
        %2256 = vmatmul.mubr.bf16.gmra.mrb[0].mxu0 %v450
        %v2257 = vpop.f32.mrb[0].mxu0
        %v2258 = vadd.f32 0.0, %v2257
        %v2259 = vpop.f32.mrb[0].mxu0
        %v2260 = vpop.f32.mrb[0].mxu0
        %v2261 = vadd.f32 0.0, %v2260
        %v2262 = vpop.f32.mrb[0].mxu0
        %2263 = vmatprep.mubr.bf16.mxu0 0
        %2264 = vmatmul.mubr.bf16.gmra.mrb[0].mxu0 %v1351
        %v2265 = vpop.f32.mrb[0].mxu0
        %v2266 = vadd.f32 0.0, %v2265
        %v2267 = vpop.f32.mrb[0].mxu0
        %v2268 = vpop.f32.mrb[0].mxu0
        %v2269 = vadd.f32 0.0, %v2268
        %v2270 = vpop.f32.mrb[0].mxu0
        %2271 = vmatprep.mubr.bf16.mxu0 0
        %2272 = vmatmul.mubr.bf16.gmra.mrb[0].mxu0 %v2085
        %v2273 = vpop.f32.mrb[0].mxu0
        %v2274 = vadd.f32 0.0, %v2273
        %v2275 = vpop.f32.mrb[0].mxu0
        %v2276 = vpop.f32.mrb[0].mxu0
        %v2277 = vadd.f32 0.0, %v2276
        %v2278 = vpop.f32.mrb[0].mxu0
        %2279 = vdwg.mxu0
        %v2280 = vadd.f32 %v2036, %v2170
        %v2281 = vadd.f32 %v2037, %v2173
        %v2282 = vadd.f32 %v2038, %v2178
        %v2283 = vadd.f32 %v2039, %v2181
        %v2284 = vadd.f32 %v2040, %v2186
        %v2285 = vadd.f32 %v2041, %v2189
        %v2286 = vadd.f32 %v2042, %v2194
        %v2287 = vadd.f32 %v2043, %v2197
        %v2288 = vadd.f32 %v2044, %v2202
        %v2289 = vadd.f32 %v2045, %v2205
        %v2290 = vadd.f32 %v2046, %v2210
        %v2291 = vadd.f32 %v2047, %v2213
        %v2292 = vadd.f32 %v2048, %v2218
        %v2293 = vadd.f32 %v2049, %v2221
        %v2294 = vadd.f32 %v2050, %v2226
        %v2295 = vadd.f32 %v2051, %v2229
        %v2296 = vadd.f32 %v2052, %v2234
        %v2297 = vadd.f32 %v2053, %v2237
        %v2298 = vadd.f32 %v2054, %v2242
        %v2299 = vadd.f32 %v2055, %v2245
        %v2300 = vadd.f32 %v2056, %v2250
        %v2301 = vadd.f32 %v2057, %v2253
        %v2302 = vadd.f32 %v2058, %v2258
        %v2303 = vadd.f32 %v2059, %v2261
        %v2304 = vadd.f32 %v2060, %v2266
        %v2305 = vadd.f32 %v2061, %v2269
        %v2306 = vadd.f32 %v2062, %v2274
        %v2307 = vadd.f32 %v2063, %v2277
        %s2308 = scalar_lea.vmem [#allocation7], 448
        %v2309 = vld [vmem:[%s2308] sm:$0xf]
        %v2310 = vld [vmem:[%s2308 + $0x4] sm:$0xf]
        %v2311 = vld [vmem:[%s2308 + $0x8] sm:$0xf]
        %v2312 = vld [vmem:[%s2308 + $0xc] sm:$0xf]
        %v2313 = vld [vmem:[%s2308 + $0x10] sm:$0xf]
        %v2314 = vld [vmem:[%s2308 + $0x14] sm:$0xf]
        %v2315 = vld [vmem:[%s2308 + $0x18] sm:$0xf]
        %v2316 = vld [vmem:[%s2308 + $0x1c] sm:$0xf]
        %v2317 = vld [vmem:[%s2308 + $0x20] sm:$0xf]
        %v2318 = vld [vmem:[%s2308 + $0x24] sm:$0xf]
        %v2319 = vld [vmem:[%s2308 + $0x28] sm:$0xf]
        %v2320 = vld [vmem:[%s2308 + $0x2c] sm:$0xf]
        %v2321 = vld [vmem:[%s2308 + $0x30] sm:$0xf]
        %v2322 = vld [vmem:[%s2308 + $0x34] sm:$0xf]
        %v2323 = vld [vmem:[%s2308 + $0x38] sm:$0xf]
        %v2324 = vld [vmem:[%s2308 + $0x3c] sm:$0xf]
        %v2326 = vshll.u32 %v2085, 16
        %v2328 = vrot.slane %v2326, 1
        %v2329 = vsel %vm703, %v1598, %v2328
        %v2330 = vshrl.u32 %v2085, 16
        %v2332 = vor.u32 %v2330, %v2328
        %v2351 = vunpack.c.l.b16 %v2309
        %v2352 = vunpack.c.l.b16 %v2310
        %v2353 = vunpack.c.l.b16 %v2311
        %v2354 = vunpack.c.l.b16 %v2312
        %v2355 = vunpack.c.l.b16 %v2313
        %v2356 = vunpack.c.l.b16 %v2314
        %v2357 = vunpack.c.l.b16 %v2315
        %v2358 = vunpack.c.l.b16 %v2316
        %v2359 = vunpack.c.l.b16 %v2317
        %v2360 = vunpack.c.l.b16 %v2318
        %v2361 = vunpack.c.l.b16 %v2319
        %v2362 = vunpack.c.l.b16 %v2320
        %v2363 = vunpack.c.l.b16 %v2321
        %v2364 = vunpack.c.l.b16 %v2322
        %v2365 = vunpack.c.l.b16 %v2323
        %v2366 = vunpack.c.l.b16 %v2324
        %v2367 = vpack.c.b16 %v2352, %v2351
        %v2368 = vpack.c.b16 %v2354, %v2353
        %v2369 = vpack.c.b16 %v2356, %v2355
        %v2370 = vpack.c.b16 %v2358, %v2357
        %v2371 = vpack.c.b16 %v2360, %v2359
        %v2372 = vpack.c.b16 %v2362, %v2361
        %v2373 = vpack.c.b16 %v2364, %v2363
        %v2374 = vpack.c.b16 %v2366, %v2365
        %2383 = vmatprep.subr.bf16.mxu0 0
        %2384 = vmatpush1.bf16.msra.mxu0 %v2367
        %2385 = vmatprep.subr.bf16.mxu0 0
        %2386 = vmatpush1.bf16.msra.mxu0 %v2368
        %2387 = vmatprep.subr.bf16.mxu0 0
        %2388 = vmatpush1.bf16.msra.mxu0 %v2369
        %2389 = vmatprep.subr.bf16.mxu0 0
        %2390 = vmatpush1.bf16.msra.mxu0 %v2370
        %2391 = vmatprep.subr.bf16.mxu0 0
        %2392 = vmatpush1.bf16.msra.mxu0 %v2371
        %2393 = vmatprep.subr.bf16.mxu0 0
        %2394 = vmatpush1.bf16.msra.mxu0 %v2372
        %2395 = vmatprep.subr.bf16.mxu0 0
        %2396 = vmatpush1.bf16.msra.mxu0 %v2373
        %2397 = vmatprep.subr.bf16.mxu0 0
        %2398 = vmatpush1.bf16.msra.mxu0 %v2374
        %2399 = vmatprep.subr.bf16.mxu0 0
        %2400 = vmatpush1.bf16.msra.mxu0 0
        %2401 = vmatprep.subr.bf16.mxu0 0
        %2402 = vmatpush1.bf16.msra.mxu0 0
        %2403 = vmatprep.subr.bf16.mxu0 0
        %2404 = vmatpush1.bf16.msra.mxu0 0
        %2405 = vmatprep.subr.bf16.mxu0 0
        %2406 = vmatpush1.bf16.msra.mxu0 0
        %2407 = vmatprep.subr.bf16.mxu0 0
        %2408 = vmatpush1.bf16.msra.mxu0 0
        %2409 = vmatprep.subr.bf16.mxu0 0
        %2410 = vmatpush1.bf16.msra.mxu0 0
        %2411 = vmatprep.subr.bf16.mxu0 0
        %2412 = vmatpush1.bf16.msra.mxu0 0
        %2413 = vmatprep.subr.bf16.mxu0 0
        %2414 = vmatpush1.bf16.msra.mxu0 0
        %2415 = vmatprep.mubr.bf16.mxu0 0
        %2416 = vmatmul.mubr.bf16.gmra.mrb[0].mxu0 %v731
        %v2417 = vpop.f32.mrb[0].mxu0
        %v2418 = vadd.f32 0.0, %v2417
        %v2419 = vpop.f32.mrb[0].mxu0
        %v2420 = vpop.f32.mrb[0].mxu0
        %v2421 = vadd.f32 0.0, %v2420
        %v2422 = vpop.f32.mrb[0].mxu0
        %2423 = vmatprep.mubr.bf16.mxu0 0
        %2424 = vmatmul.mubr.bf16.gmra.mrb[0].mxu0 %v739
        %v2425 = vpop.f32.mrb[0].mxu0
        %v2426 = vadd.f32 0.0, %v2425
        %v2427 = vpop.f32.mrb[0].mxu0
        %v2428 = vpop.f32.mrb[0].mxu0
        %v2429 = vadd.f32 0.0, %v2428
        %v2430 = vpop.f32.mrb[0].mxu0
        %2431 = vmatprep.mubr.bf16.mxu0 0
        %2432 = vmatmul.mubr.bf16.gmra.mrb[0].mxu0 %v747
        %v2433 = vpop.f32.mrb[0].mxu0
        %v2434 = vadd.f32 0.0, %v2433
        %v2435 = vpop.f32.mrb[0].mxu0
        %v2436 = vpop.f32.mrb[0].mxu0
        %v2437 = vadd.f32 0.0, %v2436
        %v2438 = vpop.f32.mrb[0].mxu0
        %2439 = vmatprep.mubr.bf16.mxu0 0
        %2440 = vmatmul.mubr.bf16.gmra.mrb[0].mxu0 %v755
        %v2441 = vpop.f32.mrb[0].mxu0
        %v2442 = vadd.f32 0.0, %v2441
        %v2443 = vpop.f32.mrb[0].mxu0
        %v2444 = vpop.f32.mrb[0].mxu0
        %v2445 = vadd.f32 0.0, %v2444
        %v2446 = vpop.f32.mrb[0].mxu0
        %2447 = vmatprep.mubr.bf16.mxu0 0
        %2448 = vmatmul.mubr.bf16.gmra.mrb[0].mxu0 %v763
        %v2449 = vpop.f32.mrb[0].mxu0
        %v2450 = vadd.f32 0.0, %v2449
        %v2451 = vpop.f32.mrb[0].mxu0
        %v2452 = vpop.f32.mrb[0].mxu0
        %v2453 = vadd.f32 0.0, %v2452
        %v2454 = vpop.f32.mrb[0].mxu0
        %2455 = vmatprep.mubr.bf16.mxu0 0
        %2456 = vmatmul.mubr.bf16.gmra.mrb[0].mxu0 %v771
        %v2457 = vpop.f32.mrb[0].mxu0
        %v2458 = vadd.f32 0.0, %v2457
        %v2459 = vpop.f32.mrb[0].mxu0
        %v2460 = vpop.f32.mrb[0].mxu0
        %v2461 = vadd.f32 0.0, %v2460
        %v2462 = vpop.f32.mrb[0].mxu0
        %2463 = vmatprep.mubr.bf16.mxu0 0
        %2464 = vmatmul.mubr.bf16.gmra.mrb[0].mxu0 %v779
        %v2465 = vpop.f32.mrb[0].mxu0
        %v2466 = vadd.f32 0.0, %v2465
        %v2467 = vpop.f32.mrb[0].mxu0
        %v2468 = vpop.f32.mrb[0].mxu0
        %v2469 = vadd.f32 0.0, %v2468
        %v2470 = vpop.f32.mrb[0].mxu0
        %2471 = vmatprep.mubr.bf16.mxu0 0
        %2472 = vmatmul.mubr.bf16.gmra.mrb[0].mxu0 %v787
        %v2473 = vpop.f32.mrb[0].mxu0
        %v2474 = vadd.f32 0.0, %v2473
        %v2475 = vpop.f32.mrb[0].mxu0
        %v2476 = vpop.f32.mrb[0].mxu0
        %v2477 = vadd.f32 0.0, %v2476
        %v2478 = vpop.f32.mrb[0].mxu0
        %2479 = vmatprep.mubr.bf16.mxu0 0
        %2480 = vmatmul.mubr.bf16.gmra.mrb[0].mxu0 %v795
        %v2481 = vpop.f32.mrb[0].mxu0
        %v2482 = vadd.f32 0.0, %v2481
        %v2483 = vpop.f32.mrb[0].mxu0
        %v2484 = vpop.f32.mrb[0].mxu0
        %v2485 = vadd.f32 0.0, %v2484
        %v2486 = vpop.f32.mrb[0].mxu0
        %2487 = vmatprep.mubr.bf16.mxu0 0
        %2488 = vmatmul.mubr.bf16.gmra.mrb[0].mxu0 %v803
        %v2489 = vpop.f32.mrb[0].mxu0
        %v2490 = vadd.f32 0.0, %v2489
        %v2491 = vpop.f32.mrb[0].mxu0
        %v2492 = vpop.f32.mrb[0].mxu0
        %v2493 = vadd.f32 0.0, %v2492
        %v2494 = vpop.f32.mrb[0].mxu0
        %2495 = vmatprep.mubr.bf16.mxu0 0
        %2496 = vmatmul.mubr.bf16.gmra.mrb[0].mxu0 %v811
        %v2497 = vpop.f32.mrb[0].mxu0
        %v2498 = vadd.f32 0.0, %v2497
        %v2499 = vpop.f32.mrb[0].mxu0
        %v2500 = vpop.f32.mrb[0].mxu0
        %v2501 = vadd.f32 0.0, %v2500
        %v2502 = vpop.f32.mrb[0].mxu0
        %2503 = vmatprep.mubr.bf16.mxu0 0
        %2504 = vmatmul.mubr.bf16.gmra.mrb[0].mxu0 %v1595
        %v2505 = vpop.f32.mrb[0].mxu0
        %v2506 = vadd.f32 0.0, %v2505
        %v2507 = vpop.f32.mrb[0].mxu0
        %v2508 = vpop.f32.mrb[0].mxu0
        %v2509 = vadd.f32 0.0, %v2508
        %v2510 = vpop.f32.mrb[0].mxu0
        %2511 = vmatprep.mubr.bf16.mxu0 0
        %2512 = vmatmul.mubr.bf16.gmra.mrb[0].mxu0 %v2329
        %v2513 = vpop.f32.mrb[0].mxu0
        %v2514 = vadd.f32 0.0, %v2513
        %v2515 = vpop.f32.mrb[0].mxu0
        %v2516 = vpop.f32.mrb[0].mxu0
        %v2517 = vadd.f32 0.0, %v2516
        %v2518 = vpop.f32.mrb[0].mxu0
        %2519 = vmatprep.mubr.bf16.mxu0 0
        %2520 = vmatmul.mubr.bf16.gmra.mrb[0].mxu0 %v2332
        %v2521 = vpop.f32.mrb[0].mxu0
        %v2522 = vadd.f32 0.0, %v2521
        %v2523 = vpop.f32.mrb[0].mxu0
        %v2524 = vpop.f32.mrb[0].mxu0
        %v2525 = vadd.f32 0.0, %v2524
        %v2526 = vpop.f32.mrb[0].mxu0
        %2527 = vdwg.mxu0
        %v2528 = vadd.f32 %v2280, %v2418
        %v2529 = vadd.f32 %v2281, %v2421
        %v2530 = vadd.f32 %v2282, %v2426
        %v2531 = vadd.f32 %v2283, %v2429
        %v2532 = vadd.f32 %v2284, %v2434
        %v2533 = vadd.f32 %v2285, %v2437
        %v2534 = vadd.f32 %v2286, %v2442
        %v2535 = vadd.f32 %v2287, %v2445
        %v2536 = vadd.f32 %v2288, %v2450
        %v2537 = vadd.f32 %v2289, %v2453
        %v2538 = vadd.f32 %v2290, %v2458
        %v2539 = vadd.f32 %v2291, %v2461
        %v2540 = vadd.f32 %v2292, %v2466
        %v2541 = vadd.f32 %v2293, %v2469
        %v2542 = vadd.f32 %v2294, %v2474
        %v2543 = vadd.f32 %v2295, %v2477
        %v2544 = vadd.f32 %v2296, %v2482
        %v2545 = vadd.f32 %v2297, %v2485
        %v2546 = vadd.f32 %v2298, %v2490
        %v2547 = vadd.f32 %v2299, %v2493
        %v2548 = vadd.f32 %v2300, %v2498
        %v2549 = vadd.f32 %v2301, %v2501
        %v2550 = vadd.f32 %v2302, %v2506
        %v2551 = vadd.f32 %v2303, %v2509
        %v2552 = vadd.f32 %v2304, %v2514
        %v2553 = vadd.f32 %v2305, %v2517
        %v2554 = vadd.f32 %v2306, %v2522
        %v2555 = vadd.f32 %v2307, %v2525
        %s2556 = scalar_lea.vmem [#allocation7], 512
        %v2557 = vld [vmem:[%s2556] sm:$0xf]
        %v2558 = vld [vmem:[%s2556 + $0x4] sm:$0xf]
        %v2559 = vld [vmem:[%s2556 + $0x8] sm:$0xf]
        %v2560 = vld [vmem:[%s2556 + $0xc] sm:$0xf]
        %v2561 = vld [vmem:[%s2556 + $0x10] sm:$0xf]
        %v2562 = vld [vmem:[%s2556 + $0x14] sm:$0xf]
        %v2563 = vld [vmem:[%s2556 + $0x18] sm:$0xf]
        %v2564 = vld [vmem:[%s2556 + $0x1c] sm:$0xf]
        %v2565 = vld [vmem:[%s2556 + $0x20] sm:$0xf]
        %v2566 = vld [vmem:[%s2556 + $0x24] sm:$0xf]
        %v2567 = vld [vmem:[%s2556 + $0x28] sm:$0xf]
        %v2568 = vld [vmem:[%s2556 + $0x2c] sm:$0xf]
        %v2569 = vld [vmem:[%s2556 + $0x30] sm:$0xf]
        %v2570 = vld [vmem:[%s2556 + $0x34] sm:$0xf]
        %v2571 = vld [vmem:[%s2556 + $0x38] sm:$0xf]
        %v2572 = vld [vmem:[%s2556 + $0x3c] sm:$0xf]
        %v2573 = vrot.slane %v2085, 1
        %v2574 = vsel %vm1067, %v1839, %v2573
        %v2593 = vunpack.c.l.b16 %v2557
        %v2594 = vunpack.c.l.b16 %v2558
        %v2595 = vunpack.c.l.b16 %v2559
        %v2596 = vunpack.c.l.b16 %v2560
        %v2597 = vunpack.c.l.b16 %v2561
        %v2598 = vunpack.c.l.b16 %v2562
        %v2599 = vunpack.c.l.b16 %v2563
        %v2600 = vunpack.c.l.b16 %v2564
        %v2601 = vunpack.c.l.b16 %v2565
        %v2602 = vunpack.c.l.b16 %v2566
        %v2603 = vunpack.c.l.b16 %v2567
        %v2604 = vunpack.c.l.b16 %v2568
        %v2605 = vunpack.c.l.b16 %v2569
        %v2606 = vunpack.c.l.b16 %v2570
        %v2607 = vunpack.c.l.b16 %v2571
        %v2608 = vunpack.c.l.b16 %v2572
        %v2609 = vpack.c.b16 %v2594, %v2593
        %v2610 = vpack.c.b16 %v2596, %v2595
        %v2611 = vpack.c.b16 %v2598, %v2597
        %v2612 = vpack.c.b16 %v2600, %v2599
        %v2613 = vpack.c.b16 %v2602, %v2601
        %v2614 = vpack.c.b16 %v2604, %v2603
        %v2615 = vpack.c.b16 %v2606, %v2605
        %v2616 = vpack.c.b16 %v2608, %v2607
        %2625 = vmatprep.subr.bf16.mxu0 0
        %2626 = vmatpush1.bf16.msra.mxu0 %v2609
        %2627 = vmatprep.subr.bf16.mxu0 0
        %2628 = vmatpush1.bf16.msra.mxu0 %v2610
        %2629 = vmatprep.subr.bf16.mxu0 0
        %2630 = vmatpush1.bf16.msra.mxu0 %v2611
        %2631 = vmatprep.subr.bf16.mxu0 0
        %2632 = vmatpush1.bf16.msra.mxu0 %v2612
        %2633 = vmatprep.subr.bf16.mxu0 0
        %2634 = vmatpush1.bf16.msra.mxu0 %v2613
        %2635 = vmatprep.subr.bf16.mxu0 0
        %2636 = vmatpush1.bf16.msra.mxu0 %v2614
        %2637 = vmatprep.subr.bf16.mxu0 0
        %2638 = vmatpush1.bf16.msra.mxu0 %v2615
        %2639 = vmatprep.subr.bf16.mxu0 0
        %2640 = vmatpush1.bf16.msra.mxu0 %v2616
        %2641 = vmatprep.subr.bf16.mxu0 0
        %2642 = vmatpush1.bf16.msra.mxu0 0
        %2643 = vmatprep.subr.bf16.mxu0 0
        %2644 = vmatpush1.bf16.msra.mxu0 0
        %2645 = vmatprep.subr.bf16.mxu0 0
        %2646 = vmatpush1.bf16.msra.mxu0 0
        %2647 = vmatprep.subr.bf16.mxu0 0
        %2648 = vmatpush1.bf16.msra.mxu0 0
        %2649 = vmatprep.subr.bf16.mxu0 0
        %2650 = vmatpush1.bf16.msra.mxu0 0
        %2651 = vmatprep.subr.bf16.mxu0 0
        %2652 = vmatpush1.bf16.msra.mxu0 0
        %2653 = vmatprep.subr.bf16.mxu0 0
        %2654 = vmatpush1.bf16.msra.mxu0 0
        %2655 = vmatprep.subr.bf16.mxu0 0
        %2656 = vmatpush1.bf16.msra.mxu0 0
        %2657 = vmatprep.mubr.bf16.mxu0 0
        %2658 = vmatmul.mubr.bf16.gmra.mrb[0].mxu0 %v1074
        %v2659 = vpop.f32.mrb[0].mxu0
        %v2660 = vadd.f32 0.0, %v2659
        %v2661 = vpop.f32.mrb[0].mxu0
        %v2662 = vpop.f32.mrb[0].mxu0
        %v2663 = vadd.f32 0.0, %v2662
        %v2664 = vpop.f32.mrb[0].mxu0
        %2665 = vmatprep.mubr.bf16.mxu0 0
        %2666 = vmatmul.mubr.bf16.gmra.mrb[0].mxu0 %v1076
        %v2667 = vpop.f32.mrb[0].mxu0
        %v2668 = vadd.f32 0.0, %v2667
        %v2669 = vpop.f32.mrb[0].mxu0
        %v2670 = vpop.f32.mrb[0].mxu0
        %v2671 = vadd.f32 0.0, %v2670
        %v2672 = vpop.f32.mrb[0].mxu0
        %2673 = vmatprep.mubr.bf16.mxu0 0
        %2674 = vmatmul.mubr.bf16.gmra.mrb[0].mxu0 %v1078
        %v2675 = vpop.f32.mrb[0].mxu0
        %v2676 = vadd.f32 0.0, %v2675
        %v2677 = vpop.f32.mrb[0].mxu0
        %v2678 = vpop.f32.mrb[0].mxu0
        %v2679 = vadd.f32 0.0, %v2678
        %v2680 = vpop.f32.mrb[0].mxu0
        %2681 = vmatprep.mubr.bf16.mxu0 0
        %2682 = vmatmul.mubr.bf16.gmra.mrb[0].mxu0 %v1080
        %v2683 = vpop.f32.mrb[0].mxu0
        %v2684 = vadd.f32 0.0, %v2683
        %v2685 = vpop.f32.mrb[0].mxu0
        %v2686 = vpop.f32.mrb[0].mxu0
        %v2687 = vadd.f32 0.0, %v2686
        %v2688 = vpop.f32.mrb[0].mxu0
        %2689 = vmatprep.mubr.bf16.mxu0 0
        %2690 = vmatmul.mubr.bf16.gmra.mrb[0].mxu0 %v1082
        %v2691 = vpop.f32.mrb[0].mxu0
        %v2692 = vadd.f32 0.0, %v2691
        %v2693 = vpop.f32.mrb[0].mxu0
        %v2694 = vpop.f32.mrb[0].mxu0
        %v2695 = vadd.f32 0.0, %v2694
        %v2696 = vpop.f32.mrb[0].mxu0
        %2697 = vmatprep.mubr.bf16.mxu0 0
        %2698 = vmatmul.mubr.bf16.gmra.mrb[0].mxu0 %v1084
        %v2699 = vpop.f32.mrb[0].mxu0
        %v2700 = vadd.f32 0.0, %v2699
        %v2701 = vpop.f32.mrb[0].mxu0
        %v2702 = vpop.f32.mrb[0].mxu0
        %v2703 = vadd.f32 0.0, %v2702
        %v2704 = vpop.f32.mrb[0].mxu0
        %2705 = vmatprep.mubr.bf16.mxu0 0
        %2706 = vmatmul.mubr.bf16.gmra.mrb[0].mxu0 %v1086
        %v2707 = vpop.f32.mrb[0].mxu0
        %v2708 = vadd.f32 0.0, %v2707
        %v2709 = vpop.f32.mrb[0].mxu0
        %v2710 = vpop.f32.mrb[0].mxu0
        %v2711 = vadd.f32 0.0, %v2710
        %v2712 = vpop.f32.mrb[0].mxu0
        %2713 = vmatprep.mubr.bf16.mxu0 0
        %2714 = vmatmul.mubr.bf16.gmra.mrb[0].mxu0 %v1088
        %v2715 = vpop.f32.mrb[0].mxu0
        %v2716 = vadd.f32 0.0, %v2715
        %v2717 = vpop.f32.mrb[0].mxu0
        %v2718 = vpop.f32.mrb[0].mxu0
        %v2719 = vadd.f32 0.0, %v2718
        %v2720 = vpop.f32.mrb[0].mxu0
        %2721 = vmatprep.mubr.bf16.mxu0 0
        %2722 = vmatmul.mubr.bf16.gmra.mrb[0].mxu0 %v1090
        %v2723 = vpop.f32.mrb[0].mxu0
        %v2724 = vadd.f32 0.0, %v2723
        %v2725 = vpop.f32.mrb[0].mxu0
        %v2726 = vpop.f32.mrb[0].mxu0
        %v2727 = vadd.f32 0.0, %v2726
        %v2728 = vpop.f32.mrb[0].mxu0
        %2729 = vmatprep.mubr.bf16.mxu0 0
        %2730 = vmatmul.mubr.bf16.gmra.mrb[0].mxu0 %v1092
        %v2731 = vpop.f32.mrb[0].mxu0
        %v2732 = vadd.f32 0.0, %v2731
        %v2733 = vpop.f32.mrb[0].mxu0
        %v2734 = vpop.f32.mrb[0].mxu0
        %v2735 = vadd.f32 0.0, %v2734
        %v2736 = vpop.f32.mrb[0].mxu0
        %2737 = vmatprep.mubr.bf16.mxu0 0
        %2738 = vmatmul.mubr.bf16.gmra.mrb[0].mxu0 %v1094
        %v2739 = vpop.f32.mrb[0].mxu0
        %v2740 = vadd.f32 0.0, %v2739
        %v2741 = vpop.f32.mrb[0].mxu0
        %v2742 = vpop.f32.mrb[0].mxu0
        %v2743 = vadd.f32 0.0, %v2742
        %v2744 = vpop.f32.mrb[0].mxu0
        %2745 = vmatprep.mubr.bf16.mxu0 0
        %2746 = vmatmul.mubr.bf16.gmra.mrb[0].mxu0 %v1840
        %v2747 = vpop.f32.mrb[0].mxu0
        %v2748 = vadd.f32 0.0, %v2747
        %v2749 = vpop.f32.mrb[0].mxu0
        %v2750 = vpop.f32.mrb[0].mxu0
        %v2751 = vadd.f32 0.0, %v2750
        %v2752 = vpop.f32.mrb[0].mxu0
        %2753 = vmatprep.mubr.bf16.mxu0 0
        %2754 = vmatmul.mubr.bf16.gmra.mrb[0].mxu0 %v2574
        %v2755 = vpop.f32.mrb[0].mxu0
        %v2756 = vadd.f32 0.0, %v2755
        %v2757 = vpop.f32.mrb[0].mxu0
        %v2758 = vpop.f32.mrb[0].mxu0
        %v2759 = vadd.f32 0.0, %v2758
        %v2760 = vpop.f32.mrb[0].mxu0
        %2761 = vmatprep.mubr.bf16.mxu0 0
        %2762 = vmatmul.mubr.bf16.gmra.mrb[0].mxu0 %v2573
        %v2763 = vpop.f32.mrb[0].mxu0
        %v2764 = vadd.f32 0.0, %v2763
        %v2765 = vpop.f32.mrb[0].mxu0
        %v2766 = vpop.f32.mrb[0].mxu0
        %v2767 = vadd.f32 0.0, %v2766
        %v2768 = vpop.f32.mrb[0].mxu0
        %2769 = vdwg.mxu0
        %v2770 = vadd.f32 %v2528, %v2660
        %v2771 = vadd.f32 %v2529, %v2663
        %v2772 = vadd.f32 %v2530, %v2668
        %v2773 = vadd.f32 %v2531, %v2671
        %v2774 = vadd.f32 %v2532, %v2676
        %v2775 = vadd.f32 %v2533, %v2679
        %v2776 = vadd.f32 %v2534, %v2684
        %v2777 = vadd.f32 %v2535, %v2687
        %v2778 = vadd.f32 %v2536, %v2692
        %v2779 = vadd.f32 %v2537, %v2695
        %v2780 = vadd.f32 %v2538, %v2700
        %v2781 = vadd.f32 %v2539, %v2703
        %v2782 = vadd.f32 %v2540, %v2708
        %v2783 = vadd.f32 %v2541, %v2711
        %v2784 = vadd.f32 %v2542, %v2716
        %v2785 = vadd.f32 %v2543, %v2719
        %v2786 = vadd.f32 %v2544, %v2724
        %v2787 = vadd.f32 %v2545, %v2727
        %v2788 = vadd.f32 %v2546, %v2732
        %v2789 = vadd.f32 %v2547, %v2735
        %v2790 = vadd.f32 %v2548, %v2740
        %v2791 = vadd.f32 %v2549, %v2743
        %v2792 = vadd.f32 %v2550, %v2748
        %v2793 = vadd.f32 %v2551, %v2751
        %v2794 = vadd.f32 %v2552, %v2756
        %v2795 = vadd.f32 %v2553, %v2759
        %v2796 = vadd.f32 %v2554, %v2764
        %v2797 = vadd.f32 %v2555, %v2767
        %v2798 = vld [vmem:[%s280] sm:$0xf]
        %v2799 = vld [vmem:[%s280 + $0x4] sm:$0xf]
        %v2800 = vld [vmem:[%s280 + $0x8] sm:$0xf]
        %v2801 = vld [vmem:[%s280 + $0xc] sm:$0xf]
        %v2802 = vld [vmem:[%s280 + $0x10] sm:$0xf]
        %v2803 = vld [vmem:[%s280 + $0x14] sm:$0xf]
        %v2804 = vld [vmem:[%s280 + $0x18] sm:$0xf]
        %v2805 = vld [vmem:[%s280 + $0x1c] sm:$0xf]
        %v2806 = vld [vmem:[%s280 + $0x20] sm:$0xf]
        %v2807 = vld [vmem:[%s280 + $0x24] sm:$0xf]
        %v2808 = vld [vmem:[%s280 + $0x28] sm:$0xf]
        %v2809 = vld [vmem:[%s280 + $0x2c] sm:$0xf]
        %v2810 = vld [vmem:[%s280 + $0x30] sm:$0xf]
        %v2811 = vld [vmem:[%s280 + $0x34] sm:$0xf]
        %v2812 = vld [vmem:[%s280 + $0x38] sm:$0xf]
        %v2813 = vld [vmem:[%s280 + $0x3c] sm:$0xf]
        %v2814 = vld [vmem:[%s280 + $0x40] sm:$0xf]
        %v2815 = vld [vmem:[%s280 + $0x44] sm:$0xf]
        %v2816 = vld [vmem:[%s280 + $0x48] sm:$0xf]
        %v2817 = vld [vmem:[%s280 + $0x4c] sm:$0xf]
        %v2818 = vld [vmem:[%s280 + $0x50] sm:$0xf]
        %v2819 = vld [vmem:[%s280 + $0x54] sm:$0xf]
        %v2820 = vld [vmem:[%s280 + $0x58] sm:$0xf]
        %v2821 = vld [vmem:[%s280 + $0x5c] sm:$0xf]
        %v2822 = vld [vmem:[%s280 + $0x60] sm:$0xf]
        %v2823 = vld [vmem:[%s280 + $0x64] sm:$0xf]
        %v2824 = vld [vmem:[%s280 + $0x68] sm:$0xf]
        %v2825 = vld [vmem:[%s280 + $0x6c] sm:$0xf]
        %v2826 = vld [vmem:[%s280 + $0x70] sm:$0xf]
        %v2827 = vld [vmem:[%s280 + $0x74] sm:$0xf]
        %v2828 = vld [vmem:[%s280 + $0x78] sm:$0xf]
        %v2829 = vld [vmem:[%s280 + $0x7c] sm:$0xf]
        %v2830 = vld [vmem:[#allocation8] sm:$0xf]
        %v2831 = vld [vmem:[#allocation8 + $0x4] sm:$0xf]
        %v2832 = vld [vmem:[#allocation8 + $0x8] sm:$0xf]
        %v2833 = vld [vmem:[#allocation8 + $0xc] sm:$0xf]
        %v2834 = vld [vmem:[#allocation8 + $0x10] sm:$0xf]
        %v2835 = vld [vmem:[#allocation8 + $0x14] sm:$0xf]
        %v2836 = vld [vmem:[#allocation8 + $0x18] sm:$0xf]
        %v2837 = vld [vmem:[#allocation8 + $0x1c] sm:$0xf]
        %v2838 = vld [vmem:[#allocation8 + $0x20] sm:$0xf]
        %v2839 = vld [vmem:[#allocation8 + $0x24] sm:$0xf]
        %v2840 = vld [vmem:[#allocation8 + $0x28] sm:$0xf]
        %v2841 = vld [vmem:[#allocation8 + $0x2c] sm:$0xf]
        %v2842 = vld [vmem:[#allocation8 + $0x30] sm:$0xf]
        %v2843 = vld [vmem:[#allocation8 + $0x34] sm:$0xf]
        %v2844 = vld [vmem:[#allocation8 + $0x38] sm:$0xf]
        %v2845 = vld [vmem:[#allocation8 + $0x3c] sm:$0xf]
        %v2874 = vunpack.c.l.b16 %v2798
        %v2875 = vunpack.c.l.b16 %v2799
        %v2876 = vunpack.c.l.b16 %v2800
        %v2877 = vunpack.c.l.b16 %v2801
        %v2878 = vunpack.c.l.b16 %v2802
        %v2879 = vunpack.c.l.b16 %v2803
        %v2880 = vunpack.c.l.b16 %v2804
        %v2881 = vunpack.c.l.b16 %v2805
        %v2882 = vunpack.c.l.b16 %v2806
        %v2883 = vunpack.c.l.b16 %v2807
        %v2884 = vunpack.c.l.b16 %v2808
        %v2885 = vunpack.c.l.b16 %v2809
        %v2886 = vunpack.c.l.b16 %v2810
        %v2887 = vunpack.c.l.b16 %v2811
        %v2888 = vunpack.c.l.b16 %v2812
        %v2889 = vunpack.c.l.b16 %v2813
        %v2890 = vunpack.c.l.b16 %v2814
        %v2891 = vunpack.c.l.b16 %v2815
        %v2892 = vunpack.c.l.b16 %v2816
        %v2893 = vunpack.c.l.b16 %v2817
        %v2894 = vunpack.c.l.b16 %v2818
        %v2895 = vunpack.c.l.b16 %v2819
        %v2896 = vunpack.c.l.b16 %v2820
        %v2897 = vunpack.c.l.b16 %v2821
        %v2898 = vunpack.c.l.b16 %v2822
        %v2899 = vunpack.c.l.b16 %v2823
        %v2900 = vunpack.c.l.b16 %v2824
        %v2901 = vunpack.c.l.b16 %v2825
        %v2902 = vpack.c.b16 %v2875, %v2874
        %v2903 = vpack.c.b16 %v2877, %v2876
        %v2904 = vpack.c.b16 %v2879, %v2878
        %v2905 = vpack.c.b16 %v2881, %v2880
        %v2906 = vpack.c.b16 %v2883, %v2882
        %v2907 = vpack.c.b16 %v2885, %v2884
        %v2908 = vpack.c.b16 %v2887, %v2886
        %v2909 = vpack.c.b16 %v2889, %v2888
        %v2910 = vpack.c.b16 %v2891, %v2890
        %v2911 = vpack.c.b16 %v2893, %v2892
        %v2912 = vpack.c.b16 %v2895, %v2894
        %v2913 = vpack.c.b16 %v2897, %v2896
        %v2914 = vpack.c.b16 %v2899, %v2898
        %v2915 = vpack.c.b16 %v2901, %v2900
        %v2946 = vunpack.c.l.b16 %v2830
        %v2947 = vunpack.c.l.b16 %v2831
        %v2948 = vunpack.c.l.b16 %v2832
        %v2949 = vunpack.c.l.b16 %v2833
        %v2950 = vunpack.c.l.b16 %v2834
        %v2951 = vunpack.c.l.b16 %v2835
        %v2952 = vunpack.c.l.b16 %v2836
        %v2953 = vunpack.c.l.b16 %v2837
        %v2954 = vunpack.c.l.b16 %v2838
        %v2955 = vunpack.c.l.b16 %v2839
        %v2956 = vunpack.c.l.b16 %v2840
        %v2957 = vunpack.c.l.b16 %v2841
        %v2958 = vunpack.c.l.b16 %v2842
        %v2959 = vunpack.c.l.b16 %v2843
        %v2960 = vunpack.c.l.b16 %v2844
        %v2961 = vunpack.c.l.b16 %v2845
        %v2962 = vpack.c.b16 %v2947, %v2946
        %v2963 = vpack.c.b16 %v2949, %v2948
        %v2964 = vpack.c.b16 %v2951, %v2950
        %v2965 = vpack.c.b16 %v2953, %v2952
        %v2966 = vpack.c.b16 %v2955, %v2954
        %v2967 = vpack.c.b16 %v2957, %v2956
        %v2968 = vpack.c.b16 %v2959, %v2958
        %v2969 = vpack.c.b16 %v2961, %v2960
        %2978 = vmatprep.subr.bf16.mxu0 0
        %2979 = vmatpush1.bf16.msra.mxu0 %v2962
        %2980 = vmatprep.subr.bf16.mxu0 0
        %2981 = vmatpush1.bf16.msra.mxu0 %v2963
        %2982 = vmatprep.subr.bf16.mxu0 0
        %2983 = vmatpush1.bf16.msra.mxu0 %v2964
        %2984 = vmatprep.subr.bf16.mxu0 0
        %2985 = vmatpush1.bf16.msra.mxu0 %v2965
        %2986 = vmatprep.subr.bf16.mxu0 0
        %2987 = vmatpush1.bf16.msra.mxu0 %v2966
        %2988 = vmatprep.subr.bf16.mxu0 0
        %2989 = vmatpush1.bf16.msra.mxu0 %v2967
        %2990 = vmatprep.subr.bf16.mxu0 0
        %2991 = vmatpush1.bf16.msra.mxu0 %v2968
        %2992 = vmatprep.subr.bf16.mxu0 0
        %2993 = vmatpush1.bf16.msra.mxu0 %v2969
        %2994 = vmatprep.subr.bf16.mxu0 0
        %2995 = vmatpush1.bf16.msra.mxu0 0
        %2996 = vmatprep.subr.bf16.mxu0 0
        %2997 = vmatpush1.bf16.msra.mxu0 0
        %2998 = vmatprep.subr.bf16.mxu0 0
        %2999 = vmatpush1.bf16.msra.mxu0 0
        %3000 = vmatprep.subr.bf16.mxu0 0
        %3001 = vmatpush1.bf16.msra.mxu0 0
        %3002 = vmatprep.subr.bf16.mxu0 0
        %3003 = vmatpush1.bf16.msra.mxu0 0
        %3004 = vmatprep.subr.bf16.mxu0 0
        %3005 = vmatpush1.bf16.msra.mxu0 0
        %3006 = vmatprep.subr.bf16.mxu0 0
        %3007 = vmatpush1.bf16.msra.mxu0 0
        %3008 = vmatprep.subr.bf16.mxu0 0
        %3009 = vmatpush1.bf16.msra.mxu0 0
        %3010 = vmatprep.mubr.bf16.mxu0 0
        %3011 = vmatmul.mubr.bf16.gmra.mrb[0].mxu0 %v2902
        %v3012 = vpop.f32.mrb[0].mxu0
        %v3013 = vadd.f32 0.0, %v3012
        %v3014 = vpop.f32.mrb[0].mxu0
        %v3015 = vpop.f32.mrb[0].mxu0
        %v3016 = vadd.f32 0.0, %v3015
        %v3017 = vpop.f32.mrb[0].mxu0
        %3018 = vmatprep.mubr.bf16.mxu0 0
        %3019 = vmatmul.mubr.bf16.gmra.mrb[0].mxu0 %v2903
        %v3020 = vpop.f32.mrb[0].mxu0
        %v3021 = vadd.f32 0.0, %v3020
        %v3022 = vpop.f32.mrb[0].mxu0
        %v3023 = vpop.f32.mrb[0].mxu0
        %v3024 = vadd.f32 0.0, %v3023
        %v3025 = vpop.f32.mrb[0].mxu0
        %3026 = vmatprep.mubr.bf16.mxu0 0
        %3027 = vmatmul.mubr.bf16.gmra.mrb[0].mxu0 %v2904
        %v3028 = vpop.f32.mrb[0].mxu0
        %v3029 = vadd.f32 0.0, %v3028
        %v3030 = vpop.f32.mrb[0].mxu0
        %v3031 = vpop.f32.mrb[0].mxu0
        %v3032 = vadd.f32 0.0, %v3031
        %v3033 = vpop.f32.mrb[0].mxu0
        %3034 = vmatprep.mubr.bf16.mxu0 0
        %3035 = vmatmul.mubr.bf16.gmra.mrb[0].mxu0 %v2905
        %v3036 = vpop.f32.mrb[0].mxu0
        %v3037 = vadd.f32 0.0, %v3036
        %v3038 = vpop.f32.mrb[0].mxu0
        %v3039 = vpop.f32.mrb[0].mxu0
        %v3040 = vadd.f32 0.0, %v3039
        %v3041 = vpop.f32.mrb[0].mxu0
        %3042 = vmatprep.mubr.bf16.mxu0 0
        %3043 = vmatmul.mubr.bf16.gmra.mrb[0].mxu0 %v2906
        %v3044 = vpop.f32.mrb[0].mxu0
        %v3045 = vadd.f32 0.0, %v3044
        %v3046 = vpop.f32.mrb[0].mxu0
        %v3047 = vpop.f32.mrb[0].mxu0
        %v3048 = vadd.f32 0.0, %v3047
        %v3049 = vpop.f32.mrb[0].mxu0
        %3050 = vmatprep.mubr.bf16.mxu0 0
        %3051 = vmatmul.mubr.bf16.gmra.mrb[0].mxu0 %v2907
        %v3052 = vpop.f32.mrb[0].mxu0
        %v3053 = vadd.f32 0.0, %v3052
        %v3054 = vpop.f32.mrb[0].mxu0
        %v3055 = vpop.f32.mrb[0].mxu0
        %v3056 = vadd.f32 0.0, %v3055
        %v3057 = vpop.f32.mrb[0].mxu0
        %3058 = vmatprep.mubr.bf16.mxu0 0
        %3059 = vmatmul.mubr.bf16.gmra.mrb[0].mxu0 %v2908
        %v3060 = vpop.f32.mrb[0].mxu0
        %v3061 = vadd.f32 0.0, %v3060
        %v3062 = vpop.f32.mrb[0].mxu0
        %v3063 = vpop.f32.mrb[0].mxu0
        %v3064 = vadd.f32 0.0, %v3063
        %v3065 = vpop.f32.mrb[0].mxu0
        %3066 = vmatprep.mubr.bf16.mxu0 0
        %3067 = vmatmul.mubr.bf16.gmra.mrb[0].mxu0 %v2909
        %v3068 = vpop.f32.mrb[0].mxu0
        %v3069 = vadd.f32 0.0, %v3068
        %v3070 = vpop.f32.mrb[0].mxu0
        %v3071 = vpop.f32.mrb[0].mxu0
        %v3072 = vadd.f32 0.0, %v3071
        %v3073 = vpop.f32.mrb[0].mxu0
        %3074 = vmatprep.mubr.bf16.mxu0 0
        %3075 = vmatmul.mubr.bf16.gmra.mrb[0].mxu0 %v2910
        %v3076 = vpop.f32.mrb[0].mxu0
        %v3077 = vadd.f32 0.0, %v3076
        %v3078 = vpop.f32.mrb[0].mxu0
        %v3079 = vpop.f32.mrb[0].mxu0
        %v3080 = vadd.f32 0.0, %v3079
        %v3081 = vpop.f32.mrb[0].mxu0
        %3082 = vmatprep.mubr.bf16.mxu0 0
        %3083 = vmatmul.mubr.bf16.gmra.mrb[0].mxu0 %v2911
        %v3084 = vpop.f32.mrb[0].mxu0
        %v3085 = vadd.f32 0.0, %v3084
        %v3086 = vpop.f32.mrb[0].mxu0
        %v3087 = vpop.f32.mrb[0].mxu0
        %v3088 = vadd.f32 0.0, %v3087
        %v3089 = vpop.f32.mrb[0].mxu0
        %3090 = vmatprep.mubr.bf16.mxu0 0
        %3091 = vmatmul.mubr.bf16.gmra.mrb[0].mxu0 %v2912
        %v3092 = vpop.f32.mrb[0].mxu0
        %v3093 = vadd.f32 0.0, %v3092
        %v3094 = vpop.f32.mrb[0].mxu0
        %v3095 = vpop.f32.mrb[0].mxu0
        %v3096 = vadd.f32 0.0, %v3095
        %v3097 = vpop.f32.mrb[0].mxu0
        %3098 = vmatprep.mubr.bf16.mxu0 0
        %3099 = vmatmul.mubr.bf16.gmra.mrb[0].mxu0 %v2913
        %v3100 = vpop.f32.mrb[0].mxu0
        %v3101 = vadd.f32 0.0, %v3100
        %v3102 = vpop.f32.mrb[0].mxu0
        %v3103 = vpop.f32.mrb[0].mxu0
        %v3104 = vadd.f32 0.0, %v3103
        %v3105 = vpop.f32.mrb[0].mxu0
        %3106 = vmatprep.mubr.bf16.mxu0 0
        %3107 = vmatmul.mubr.bf16.gmra.mrb[0].mxu0 %v2914
        %v3108 = vpop.f32.mrb[0].mxu0
        %v3109 = vadd.f32 0.0, %v3108
        %v3110 = vpop.f32.mrb[0].mxu0
        %v3111 = vpop.f32.mrb[0].mxu0
        %v3112 = vadd.f32 0.0, %v3111
        %v3113 = vpop.f32.mrb[0].mxu0
        %3114 = vmatprep.mubr.bf16.mxu0 0
        %3115 = vmatmul.mubr.bf16.gmra.mrb[0].mxu0 %v2915
        %v3116 = vpop.f32.mrb[0].mxu0
        %v3117 = vadd.f32 0.0, %v3116
        %v3118 = vpop.f32.mrb[0].mxu0
        %v3119 = vpop.f32.mrb[0].mxu0
        %v3120 = vadd.f32 0.0, %v3119
        %v3121 = vpop.f32.mrb[0].mxu0
        %3122 = vdwg.mxu0
        %v3123 = vadd.f32 %v2770, %v3013
        %v3124 = vadd.f32 %v2771, %v3016
        %v3125 = vadd.f32 %v2772, %v3021
        %v3126 = vadd.f32 %v2773, %v3024
        %v3127 = vadd.f32 %v2774, %v3029
        %v3128 = vadd.f32 %v2775, %v3032
        %v3129 = vadd.f32 %v2776, %v3037
        %v3130 = vadd.f32 %v2777, %v3040
        %v3131 = vadd.f32 %v2778, %v3045
        %v3132 = vadd.f32 %v2779, %v3048
        %v3133 = vadd.f32 %v2780, %v3053
        %v3134 = vadd.f32 %v2781, %v3056
        %v3135 = vadd.f32 %v2782, %v3061
        %v3136 = vadd.f32 %v2783, %v3064
        %v3137 = vadd.f32 %v2784, %v3069
        %v3138 = vadd.f32 %v2785, %v3072
        %v3139 = vadd.f32 %v2786, %v3077
        %v3140 = vadd.f32 %v2787, %v3080
        %v3141 = vadd.f32 %v2788, %v3085
        %v3142 = vadd.f32 %v2789, %v3088
        %v3143 = vadd.f32 %v2790, %v3093
        %v3144 = vadd.f32 %v2791, %v3096
        %v3145 = vadd.f32 %v2792, %v3101
        %v3146 = vadd.f32 %v2793, %v3104
        %v3147 = vadd.f32 %v2794, %v3109
        %v3148 = vadd.f32 %v2795, %v3112
        %v3149 = vadd.f32 %v2796, %v3117
        %v3150 = vadd.f32 %v2797, %v3120
        %s3151 = scalar_lea.vmem [#allocation8], 64
        %v3152 = vld [vmem:[%s3151] sm:$0xf]
        %v3153 = vld [vmem:[%s3151 + $0x4] sm:$0xf]
        %v3154 = vld [vmem:[%s3151 + $0x8] sm:$0xf]
        %v3155 = vld [vmem:[%s3151 + $0xc] sm:$0xf]
        %v3156 = vld [vmem:[%s3151 + $0x10] sm:$0xf]
        %v3157 = vld [vmem:[%s3151 + $0x14] sm:$0xf]
        %v3158 = vld [vmem:[%s3151 + $0x18] sm:$0xf]
        %v3159 = vld [vmem:[%s3151 + $0x1c] sm:$0xf]
        %v3160 = vld [vmem:[%s3151 + $0x20] sm:$0xf]
        %v3161 = vld [vmem:[%s3151 + $0x24] sm:$0xf]
        %v3162 = vld [vmem:[%s3151 + $0x28] sm:$0xf]
        %v3163 = vld [vmem:[%s3151 + $0x2c] sm:$0xf]
        %v3164 = vld [vmem:[%s3151 + $0x30] sm:$0xf]
        %v3165 = vld [vmem:[%s3151 + $0x34] sm:$0xf]
        %v3166 = vld [vmem:[%s3151 + $0x38] sm:$0xf]
        %v3167 = vld [vmem:[%s3151 + $0x3c] sm:$0xf]
        %v3169 = vshrl.u32 %v2902, 16
        %v3171 = vshll.u32 %v2902, 16
        %v3173 = vrot.slane %v3171, 1
        %v3174 = vor.u32 %v3169, %v3173
        %v3176 = vshll.u32 %v2903, 16
        %v3178 = vrot.slane %v3176, 1
        %v3179 = vsel %vm703, %v3174, %v3178
        %v3180 = vshrl.u32 %v2903, 16
        %v3182 = vor.u32 %v3180, %v3178
        %v3184 = vshll.u32 %v2904, 16
        %v3186 = vrot.slane %v3184, 1
        %v3187 = vsel %vm703, %v3182, %v3186
        %v3188 = vshrl.u32 %v2904, 16
        %v3190 = vor.u32 %v3188, %v3186
        %v3192 = vshll.u32 %v2905, 16
        %v3194 = vrot.slane %v3192, 1
        %v3195 = vsel %vm703, %v3190, %v3194
        %v3196 = vshrl.u32 %v2905, 16
        %v3198 = vor.u32 %v3196, %v3194
        %v3200 = vshll.u32 %v2906, 16
        %v3202 = vrot.slane %v3200, 1
        %v3203 = vsel %vm703, %v3198, %v3202
        %v3204 = vshrl.u32 %v2906, 16
        %v3206 = vor.u32 %v3204, %v3202
        %v3208 = vshll.u32 %v2907, 16
        %v3210 = vrot.slane %v3208, 1
        %v3211 = vsel %vm703, %v3206, %v3210
        %v3212 = vshrl.u32 %v2907, 16
        %v3214 = vor.u32 %v3212, %v3210
        %v3216 = vshll.u32 %v2908, 16
        %v3218 = vrot.slane %v3216, 1
        %v3219 = vsel %vm703, %v3214, %v3218
        %v3220 = vshrl.u32 %v2908, 16
        %v3222 = vor.u32 %v3220, %v3218
        %v3224 = vshll.u32 %v2909, 16
        %v3226 = vrot.slane %v3224, 1
        %v3227 = vsel %vm703, %v3222, %v3226
        %v3228 = vshrl.u32 %v2909, 16
        %v3230 = vor.u32 %v3228, %v3226
        %v3232 = vshll.u32 %v2910, 16
        %v3234 = vrot.slane %v3232, 1
        %v3235 = vsel %vm703, %v3230, %v3234
        %v3236 = vshrl.u32 %v2910, 16
        %v3238 = vor.u32 %v3236, %v3234
        %v3240 = vshll.u32 %v2911, 16
        %v3242 = vrot.slane %v3240, 1
        %v3243 = vsel %vm703, %v3238, %v3242
        %v3244 = vshrl.u32 %v2911, 16
        %v3246 = vor.u32 %v3244, %v3242
        %v3248 = vshll.u32 %v2912, 16
        %v3250 = vrot.slane %v3248, 1
        %v3251 = vsel %vm703, %v3246, %v3250
        %v3252 = vshrl.u32 %v2912, 16
        %v3254 = vor.u32 %v3252, %v3250
        %v3256 = vshll.u32 %v2913, 16
        %v3258 = vrot.slane %v3256, 1
        %v3259 = vsel %vm703, %v3254, %v3258
        %v3260 = vshrl.u32 %v2913, 16
        %v3262 = vor.u32 %v3260, %v3258
        %v3264 = vshll.u32 %v2914, 16
        %v3266 = vrot.slane %v3264, 1
        %v3267 = vsel %vm703, %v3262, %v3266
        %v3268 = vshrl.u32 %v2914, 16
        %v3270 = vor.u32 %v3268, %v3266
        %v3272 = vshll.u32 %v2915, 16
        %v3274 = vrot.slane %v3272, 1
        %v3275 = vsel %vm703, %v3270, %v3274
        %v3276 = vshrl.u32 %v2915, 16
        %v3278 = vor.u32 %v3276, %v3274
        %v3309 = vunpack.c.l.b16 %v3152
        %v3310 = vunpack.c.l.b16 %v3153
        %v3311 = vunpack.c.l.b16 %v3154
        %v3312 = vunpack.c.l.b16 %v3155
        %v3313 = vunpack.c.l.b16 %v3156
        %v3314 = vunpack.c.l.b16 %v3157
        %v3315 = vunpack.c.l.b16 %v3158
        %v3316 = vunpack.c.l.b16 %v3159
        %v3317 = vunpack.c.l.b16 %v3160
        %v3318 = vunpack.c.l.b16 %v3161
        %v3319 = vunpack.c.l.b16 %v3162
        %v3320 = vunpack.c.l.b16 %v3163
        %v3321 = vunpack.c.l.b16 %v3164
        %v3322 = vunpack.c.l.b16 %v3165
        %v3323 = vunpack.c.l.b16 %v3166
        %v3324 = vunpack.c.l.b16 %v3167
        %v3325 = vpack.c.b16 %v3310, %v3309
        %v3326 = vpack.c.b16 %v3312, %v3311
        %v3327 = vpack.c.b16 %v3314, %v3313
        %v3328 = vpack.c.b16 %v3316, %v3315
        %v3329 = vpack.c.b16 %v3318, %v3317
        %v3330 = vpack.c.b16 %v3320, %v3319
        %v3331 = vpack.c.b16 %v3322, %v3321
        %v3332 = vpack.c.b16 %v3324, %v3323
        %3341 = vmatprep.subr.bf16.mxu0 0
        %3342 = vmatpush1.bf16.msra.mxu0 %v3325
        %3343 = vmatprep.subr.bf16.mxu0 0
        %3344 = vmatpush1.bf16.msra.mxu0 %v3326
        %3345 = vmatprep.subr.bf16.mxu0 0
        %3346 = vmatpush1.bf16.msra.mxu0 %v3327
        %3347 = vmatprep.subr.bf16.mxu0 0
        %3348 = vmatpush1.bf16.msra.mxu0 %v3328
        %3349 = vmatprep.subr.bf16.mxu0 0
        %3350 = vmatpush1.bf16.msra.mxu0 %v3329
        %3351 = vmatprep.subr.bf16.mxu0 0
        %3352 = vmatpush1.bf16.msra.mxu0 %v3330
        %3353 = vmatprep.subr.bf16.mxu0 0
        %3354 = vmatpush1.bf16.msra.mxu0 %v3331
        %3355 = vmatprep.subr.bf16.mxu0 0
        %3356 = vmatpush1.bf16.msra.mxu0 %v3332
        %3357 = vmatprep.subr.bf16.mxu0 0
        %3358 = vmatpush1.bf16.msra.mxu0 0
        %3359 = vmatprep.subr.bf16.mxu0 0
        %3360 = vmatpush1.bf16.msra.mxu0 0
        %3361 = vmatprep.subr.bf16.mxu0 0
        %3362 = vmatpush1.bf16.msra.mxu0 0
        %3363 = vmatprep.subr.bf16.mxu0 0
        %3364 = vmatpush1.bf16.msra.mxu0 0
        %3365 = vmatprep.subr.bf16.mxu0 0
        %3366 = vmatpush1.bf16.msra.mxu0 0
        %3367 = vmatprep.subr.bf16.mxu0 0
        %3368 = vmatpush1.bf16.msra.mxu0 0
        %3369 = vmatprep.subr.bf16.mxu0 0
        %3370 = vmatpush1.bf16.msra.mxu0 0
        %3371 = vmatprep.subr.bf16.mxu0 0
        %3372 = vmatpush1.bf16.msra.mxu0 0
        %3373 = vmatprep.mubr.bf16.mxu0 0
        %3374 = vmatmul.mubr.bf16.gmra.mrb[0].mxu0 %v3179
        %v3375 = vpop.f32.mrb[0].mxu0
        %v3376 = vadd.f32 0.0, %v3375
        %v3377 = vpop.f32.mrb[0].mxu0
        %v3378 = vpop.f32.mrb[0].mxu0
        %v3379 = vadd.f32 0.0, %v3378
        %v3380 = vpop.f32.mrb[0].mxu0
        %3381 = vmatprep.mubr.bf16.mxu0 0
        %3382 = vmatmul.mubr.bf16.gmra.mrb[0].mxu0 %v3187
        %v3383 = vpop.f32.mrb[0].mxu0
        %v3384 = vadd.f32 0.0, %v3383
        %v3385 = vpop.f32.mrb[0].mxu0
        %v3386 = vpop.f32.mrb[0].mxu0
        %v3387 = vadd.f32 0.0, %v3386
        %v3388 = vpop.f32.mrb[0].mxu0
        %3389 = vmatprep.mubr.bf16.mxu0 0
        %3390 = vmatmul.mubr.bf16.gmra.mrb[0].mxu0 %v3195
        %v3391 = vpop.f32.mrb[0].mxu0
        %v3392 = vadd.f32 0.0, %v3391
        %v3393 = vpop.f32.mrb[0].mxu0
        %v3394 = vpop.f32.mrb[0].mxu0
        %v3395 = vadd.f32 0.0, %v3394
        %v3396 = vpop.f32.mrb[0].mxu0
        %3397 = vmatprep.mubr.bf16.mxu0 0
        %3398 = vmatmul.mubr.bf16.gmra.mrb[0].mxu0 %v3203
        %v3399 = vpop.f32.mrb[0].mxu0
        %v3400 = vadd.f32 0.0, %v3399
        %v3401 = vpop.f32.mrb[0].mxu0
        %v3402 = vpop.f32.mrb[0].mxu0
        %v3403 = vadd.f32 0.0, %v3402
        %v3404 = vpop.f32.mrb[0].mxu0
        %3405 = vmatprep.mubr.bf16.mxu0 0
        %3406 = vmatmul.mubr.bf16.gmra.mrb[0].mxu0 %v3211
        %v3407 = vpop.f32.mrb[0].mxu0
        %v3408 = vadd.f32 0.0, %v3407
        %v3409 = vpop.f32.mrb[0].mxu0
        %v3410 = vpop.f32.mrb[0].mxu0
        %v3411 = vadd.f32 0.0, %v3410
        %v3412 = vpop.f32.mrb[0].mxu0
        %3413 = vmatprep.mubr.bf16.mxu0 0
        %3414 = vmatmul.mubr.bf16.gmra.mrb[0].mxu0 %v3219
        %v3415 = vpop.f32.mrb[0].mxu0
        %v3416 = vadd.f32 0.0, %v3415
        %v3417 = vpop.f32.mrb[0].mxu0
        %v3418 = vpop.f32.mrb[0].mxu0
        %v3419 = vadd.f32 0.0, %v3418
        %v3420 = vpop.f32.mrb[0].mxu0
        %3421 = vmatprep.mubr.bf16.mxu0 0
        %3422 = vmatmul.mubr.bf16.gmra.mrb[0].mxu0 %v3227
        %v3423 = vpop.f32.mrb[0].mxu0
        %v3424 = vadd.f32 0.0, %v3423
        %v3425 = vpop.f32.mrb[0].mxu0
        %v3426 = vpop.f32.mrb[0].mxu0
        %v3427 = vadd.f32 0.0, %v3426
        %v3428 = vpop.f32.mrb[0].mxu0
        %3429 = vmatprep.mubr.bf16.mxu0 0
        %3430 = vmatmul.mubr.bf16.gmra.mrb[0].mxu0 %v3235
        %v3431 = vpop.f32.mrb[0].mxu0
        %v3432 = vadd.f32 0.0, %v3431
        %v3433 = vpop.f32.mrb[0].mxu0
        %v3434 = vpop.f32.mrb[0].mxu0
        %v3435 = vadd.f32 0.0, %v3434
        %v3436 = vpop.f32.mrb[0].mxu0
        %3437 = vmatprep.mubr.bf16.mxu0 0
        %3438 = vmatmul.mubr.bf16.gmra.mrb[0].mxu0 %v3243
        %v3439 = vpop.f32.mrb[0].mxu0
        %v3440 = vadd.f32 0.0, %v3439
        %v3441 = vpop.f32.mrb[0].mxu0
        %v3442 = vpop.f32.mrb[0].mxu0
        %v3443 = vadd.f32 0.0, %v3442
        %v3444 = vpop.f32.mrb[0].mxu0
        %3445 = vmatprep.mubr.bf16.mxu0 0
        %3446 = vmatmul.mubr.bf16.gmra.mrb[0].mxu0 %v3251
        %v3447 = vpop.f32.mrb[0].mxu0
        %v3448 = vadd.f32 0.0, %v3447
        %v3449 = vpop.f32.mrb[0].mxu0
        %v3450 = vpop.f32.mrb[0].mxu0
        %v3451 = vadd.f32 0.0, %v3450
        %v3452 = vpop.f32.mrb[0].mxu0
        %3453 = vmatprep.mubr.bf16.mxu0 0
        %3454 = vmatmul.mubr.bf16.gmra.mrb[0].mxu0 %v3259
        %v3455 = vpop.f32.mrb[0].mxu0
        %v3456 = vadd.f32 0.0, %v3455
        %v3457 = vpop.f32.mrb[0].mxu0
        %v3458 = vpop.f32.mrb[0].mxu0
        %v3459 = vadd.f32 0.0, %v3458
        %v3460 = vpop.f32.mrb[0].mxu0
        %3461 = vmatprep.mubr.bf16.mxu0 0
        %3462 = vmatmul.mubr.bf16.gmra.mrb[0].mxu0 %v3267
        %v3463 = vpop.f32.mrb[0].mxu0
        %v3464 = vadd.f32 0.0, %v3463
        %v3465 = vpop.f32.mrb[0].mxu0
        %v3466 = vpop.f32.mrb[0].mxu0
        %v3467 = vadd.f32 0.0, %v3466
        %v3468 = vpop.f32.mrb[0].mxu0
        %3469 = vmatprep.mubr.bf16.mxu0 0
        %3470 = vmatmul.mubr.bf16.gmra.mrb[0].mxu0 %v3275
        %v3471 = vpop.f32.mrb[0].mxu0
        %v3472 = vadd.f32 0.0, %v3471
        %v3473 = vpop.f32.mrb[0].mxu0
        %v3474 = vpop.f32.mrb[0].mxu0
        %v3475 = vadd.f32 0.0, %v3474
        %v3476 = vpop.f32.mrb[0].mxu0
        %3477 = vmatprep.mubr.bf16.mxu0 0
        %3478 = vmatmul.mubr.bf16.gmra.mrb[0].mxu0 %v3278
        %v3479 = vpop.f32.mrb[0].mxu0
        %v3480 = vadd.f32 0.0, %v3479
        %v3481 = vpop.f32.mrb[0].mxu0
        %v3482 = vpop.f32.mrb[0].mxu0
        %v3483 = vadd.f32 0.0, %v3482
        %v3484 = vpop.f32.mrb[0].mxu0
        %3485 = vdwg.mxu0
        %v3486 = vadd.f32 %v3123, %v3376
        %v3487 = vadd.f32 %v3124, %v3379
        %v3488 = vadd.f32 %v3125, %v3384
        %v3489 = vadd.f32 %v3126, %v3387
        %v3490 = vadd.f32 %v3127, %v3392
        %v3491 = vadd.f32 %v3128, %v3395
        %v3492 = vadd.f32 %v3129, %v3400
        %v3493 = vadd.f32 %v3130, %v3403
        %v3494 = vadd.f32 %v3131, %v3408
        %v3495 = vadd.f32 %v3132, %v3411
        %v3496 = vadd.f32 %v3133, %v3416
        %v3497 = vadd.f32 %v3134, %v3419
        %v3498 = vadd.f32 %v3135, %v3424
        %v3499 = vadd.f32 %v3136, %v3427
        %v3500 = vadd.f32 %v3137, %v3432
        %v3501 = vadd.f32 %v3138, %v3435
        %v3502 = vadd.f32 %v3139, %v3440
        %v3503 = vadd.f32 %v3140, %v3443
        %v3504 = vadd.f32 %v3141, %v3448
        %v3505 = vadd.f32 %v3142, %v3451
        %v3506 = vadd.f32 %v3143, %v3456
        %v3507 = vadd.f32 %v3144, %v3459
        %v3508 = vadd.f32 %v3145, %v3464
        %v3509 = vadd.f32 %v3146, %v3467
        %v3510 = vadd.f32 %v3147, %v3472
        %v3511 = vadd.f32 %v3148, %v3475
        %v3512 = vadd.f32 %v3149, %v3480
        %v3513 = vadd.f32 %v3150, %v3483
        %s3514 = scalar_lea.vmem [#allocation8], 128
        %v3515 = vld [vmem:[%s3514] sm:$0xf]
        %v3516 = vld [vmem:[%s3514 + $0x4] sm:$0xf]
        %v3517 = vld [vmem:[%s3514 + $0x8] sm:$0xf]
        %v3518 = vld [vmem:[%s3514 + $0xc] sm:$0xf]
        %v3519 = vld [vmem:[%s3514 + $0x10] sm:$0xf]
        %v3520 = vld [vmem:[%s3514 + $0x14] sm:$0xf]
        %v3521 = vld [vmem:[%s3514 + $0x18] sm:$0xf]
        %v3522 = vld [vmem:[%s3514 + $0x1c] sm:$0xf]
        %v3523 = vld [vmem:[%s3514 + $0x20] sm:$0xf]
        %v3524 = vld [vmem:[%s3514 + $0x24] sm:$0xf]
        %v3525 = vld [vmem:[%s3514 + $0x28] sm:$0xf]
        %v3526 = vld [vmem:[%s3514 + $0x2c] sm:$0xf]
        %v3527 = vld [vmem:[%s3514 + $0x30] sm:$0xf]
        %v3528 = vld [vmem:[%s3514 + $0x34] sm:$0xf]
        %v3529 = vld [vmem:[%s3514 + $0x38] sm:$0xf]
        %v3530 = vld [vmem:[%s3514 + $0x3c] sm:$0xf]
        %v3531 = vrot.slane %v2902, 1
        %v3532 = vrot.slane %v2903, 1
        %v3533 = vsel %vm1067, %v3531, %v3532
        %v3534 = vrot.slane %v2904, 1
        %v3535 = vsel %vm1067, %v3532, %v3534
        %v3536 = vrot.slane %v2905, 1
        %v3537 = vsel %vm1067, %v3534, %v3536
        %v3538 = vrot.slane %v2906, 1
        %v3539 = vsel %vm1067, %v3536, %v3538
        %v3540 = vrot.slane %v2907, 1
        %v3541 = vsel %vm1067, %v3538, %v3540
        %v3542 = vrot.slane %v2908, 1
        %v3543 = vsel %vm1067, %v3540, %v3542
        %v3544 = vrot.slane %v2909, 1
        %v3545 = vsel %vm1067, %v3542, %v3544
        %v3546 = vrot.slane %v2910, 1
        %v3547 = vsel %vm1067, %v3544, %v3546
        %v3548 = vrot.slane %v2911, 1
        %v3549 = vsel %vm1067, %v3546, %v3548
        %v3550 = vrot.slane %v2912, 1
        %v3551 = vsel %vm1067, %v3548, %v3550
        %v3552 = vrot.slane %v2913, 1
        %v3553 = vsel %vm1067, %v3550, %v3552
        %v3554 = vrot.slane %v2914, 1
        %v3555 = vsel %vm1067, %v3552, %v3554
        %v3556 = vrot.slane %v2915, 1
        %v3557 = vsel %vm1067, %v3554, %v3556
        %v3588 = vunpack.c.l.b16 %v3515
        %v3589 = vunpack.c.l.b16 %v3516
        %v3590 = vunpack.c.l.b16 %v3517
        %v3591 = vunpack.c.l.b16 %v3518
        %v3592 = vunpack.c.l.b16 %v3519
        %v3593 = vunpack.c.l.b16 %v3520
        %v3594 = vunpack.c.l.b16 %v3521
        %v3595 = vunpack.c.l.b16 %v3522
        %v3596 = vunpack.c.l.b16 %v3523
        %v3597 = vunpack.c.l.b16 %v3524
        %v3598 = vunpack.c.l.b16 %v3525
        %v3599 = vunpack.c.l.b16 %v3526
        %v3600 = vunpack.c.l.b16 %v3527
        %v3601 = vunpack.c.l.b16 %v3528
        %v3602 = vunpack.c.l.b16 %v3529
        %v3603 = vunpack.c.l.b16 %v3530
        %v3604 = vpack.c.b16 %v3589, %v3588
        %v3605 = vpack.c.b16 %v3591, %v3590
        %v3606 = vpack.c.b16 %v3593, %v3592
        %v3607 = vpack.c.b16 %v3595, %v3594
        %v3608 = vpack.c.b16 %v3597, %v3596
        %v3609 = vpack.c.b16 %v3599, %v3598
        %v3610 = vpack.c.b16 %v3601, %v3600
        %v3611 = vpack.c.b16 %v3603, %v3602
        %3620 = vmatprep.subr.bf16.mxu0 0
        %3621 = vmatpush1.bf16.msra.mxu0 %v3604
        %3622 = vmatprep.subr.bf16.mxu0 0
        %3623 = vmatpush1.bf16.msra.mxu0 %v3605
        %3624 = vmatprep.subr.bf16.mxu0 0
        %3625 = vmatpush1.bf16.msra.mxu0 %v3606
        %3626 = vmatprep.subr.bf16.mxu0 0
        %3627 = vmatpush1.bf16.msra.mxu0 %v3607
        %3628 = vmatprep.subr.bf16.mxu0 0
        %3629 = vmatpush1.bf16.msra.mxu0 %v3608
        %3630 = vmatprep.subr.bf16.mxu0 0
        %3631 = vmatpush1.bf16.msra.mxu0 %v3609
        %3632 = vmatprep.subr.bf16.mxu0 0
        %3633 = vmatpush1.bf16.msra.mxu0 %v3610
        %3634 = vmatprep.subr.bf16.mxu0 0
        %3635 = vmatpush1.bf16.msra.mxu0 %v3611
        %3636 = vmatprep.subr.bf16.mxu0 0
        %3637 = vmatpush1.bf16.msra.mxu0 0
        %3638 = vmatprep.subr.bf16.mxu0 0
        %3639 = vmatpush1.bf16.msra.mxu0 0
        %3640 = vmatprep.subr.bf16.mxu0 0
        %3641 = vmatpush1.bf16.msra.mxu0 0
        %3642 = vmatprep.subr.bf16.mxu0 0
        %3643 = vmatpush1.bf16.msra.mxu0 0
        %3644 = vmatprep.subr.bf16.mxu0 0
        %3645 = vmatpush1.bf16.msra.mxu0 0
        %3646 = vmatprep.subr.bf16.mxu0 0
        %3647 = vmatpush1.bf16.msra.mxu0 0
        %3648 = vmatprep.subr.bf16.mxu0 0
        %3649 = vmatpush1.bf16.msra.mxu0 0
        %3650 = vmatprep.subr.bf16.mxu0 0
        %3651 = vmatpush1.bf16.msra.mxu0 0
        %3652 = vmatprep.mubr.bf16.mxu0 0
        %3653 = vmatmul.mubr.bf16.gmra.mrb[0].mxu0 %v3533
        %v3654 = vpop.f32.mrb[0].mxu0
        %v3655 = vadd.f32 0.0, %v3654
        %v3656 = vpop.f32.mrb[0].mxu0
        %v3657 = vpop.f32.mrb[0].mxu0
        %v3658 = vadd.f32 0.0, %v3657
        %v3659 = vpop.f32.mrb[0].mxu0
        %3660 = vmatprep.mubr.bf16.mxu0 0
        %3661 = vmatmul.mubr.bf16.gmra.mrb[0].mxu0 %v3535
        %v3662 = vpop.f32.mrb[0].mxu0
        %v3663 = vadd.f32 0.0, %v3662
        %v3664 = vpop.f32.mrb[0].mxu0
        %v3665 = vpop.f32.mrb[0].mxu0
        %v3666 = vadd.f32 0.0, %v3665
        %v3667 = vpop.f32.mrb[0].mxu0
        %3668 = vmatprep.mubr.bf16.mxu0 0
        %3669 = vmatmul.mubr.bf16.gmra.mrb[0].mxu0 %v3537
        %v3670 = vpop.f32.mrb[0].mxu0
        %v3671 = vadd.f32 0.0, %v3670
        %v3672 = vpop.f32.mrb[0].mxu0
        %v3673 = vpop.f32.mrb[0].mxu0
        %v3674 = vadd.f32 0.0, %v3673
        %v3675 = vpop.f32.mrb[0].mxu0
        %3676 = vmatprep.mubr.bf16.mxu0 0
        %3677 = vmatmul.mubr.bf16.gmra.mrb[0].mxu0 %v3539
        %v3678 = vpop.f32.mrb[0].mxu0
        %v3679 = vadd.f32 0.0, %v3678
        %v3680 = vpop.f32.mrb[0].mxu0
        %v3681 = vpop.f32.mrb[0].mxu0
        %v3682 = vadd.f32 0.0, %v3681
        %v3683 = vpop.f32.mrb[0].mxu0
        %3684 = vmatprep.mubr.bf16.mxu0 0
        %3685 = vmatmul.mubr.bf16.gmra.mrb[0].mxu0 %v3541
        %v3686 = vpop.f32.mrb[0].mxu0
        %v3687 = vadd.f32 0.0, %v3686
        %v3688 = vpop.f32.mrb[0].mxu0
        %v3689 = vpop.f32.mrb[0].mxu0
        %v3690 = vadd.f32 0.0, %v3689
        %v3691 = vpop.f32.mrb[0].mxu0
        %3692 = vmatprep.mubr.bf16.mxu0 0
        %3693 = vmatmul.mubr.bf16.gmra.mrb[0].mxu0 %v3543
        %v3694 = vpop.f32.mrb[0].mxu0
        %v3695 = vadd.f32 0.0, %v3694
        %v3696 = vpop.f32.mrb[0].mxu0
        %v3697 = vpop.f32.mrb[0].mxu0
        %v3698 = vadd.f32 0.0, %v3697
        %v3699 = vpop.f32.mrb[0].mxu0
        %3700 = vmatprep.mubr.bf16.mxu0 0
        %3701 = vmatmul.mubr.bf16.gmra.mrb[0].mxu0 %v3545
        %v3702 = vpop.f32.mrb[0].mxu0
        %v3703 = vadd.f32 0.0, %v3702
        %v3704 = vpop.f32.mrb[0].mxu0
        %v3705 = vpop.f32.mrb[0].mxu0
        %v3706 = vadd.f32 0.0, %v3705
        %v3707 = vpop.f32.mrb[0].mxu0
        %3708 = vmatprep.mubr.bf16.mxu0 0
        %3709 = vmatmul.mubr.bf16.gmra.mrb[0].mxu0 %v3547
        %v3710 = vpop.f32.mrb[0].mxu0
        %v3711 = vadd.f32 0.0, %v3710
        %v3712 = vpop.f32.mrb[0].mxu0
        %v3713 = vpop.f32.mrb[0].mxu0
        %v3714 = vadd.f32 0.0, %v3713
        %v3715 = vpop.f32.mrb[0].mxu0
        %3716 = vmatprep.mubr.bf16.mxu0 0
        %3717 = vmatmul.mubr.bf16.gmra.mrb[0].mxu0 %v3549
        %v3718 = vpop.f32.mrb[0].mxu0
        %v3719 = vadd.f32 0.0, %v3718
        %v3720 = vpop.f32.mrb[0].mxu0
        %v3721 = vpop.f32.mrb[0].mxu0
        %v3722 = vadd.f32 0.0, %v3721
        %v3723 = vpop.f32.mrb[0].mxu0
        %3724 = vmatprep.mubr.bf16.mxu0 0
        %3725 = vmatmul.mubr.bf16.gmra.mrb[0].mxu0 %v3551
        %v3726 = vpop.f32.mrb[0].mxu0
        %v3727 = vadd.f32 0.0, %v3726
        %v3728 = vpop.f32.mrb[0].mxu0
        %v3729 = vpop.f32.mrb[0].mxu0
        %v3730 = vadd.f32 0.0, %v3729
        %v3731 = vpop.f32.mrb[0].mxu0
        %3732 = vmatprep.mubr.bf16.mxu0 0
        %3733 = vmatmul.mubr.bf16.gmra.mrb[0].mxu0 %v3553
        %v3734 = vpop.f32.mrb[0].mxu0
        %v3735 = vadd.f32 0.0, %v3734
        %v3736 = vpop.f32.mrb[0].mxu0
        %v3737 = vpop.f32.mrb[0].mxu0
        %v3738 = vadd.f32 0.0, %v3737
        %v3739 = vpop.f32.mrb[0].mxu0
        %3740 = vmatprep.mubr.bf16.mxu0 0
        %3741 = vmatmul.mubr.bf16.gmra.mrb[0].mxu0 %v3555
        %v3742 = vpop.f32.mrb[0].mxu0
        %v3743 = vadd.f32 0.0, %v3742
        %v3744 = vpop.f32.mrb[0].mxu0
        %v3745 = vpop.f32.mrb[0].mxu0
        %v3746 = vadd.f32 0.0, %v3745
        %v3747 = vpop.f32.mrb[0].mxu0
        %3748 = vmatprep.mubr.bf16.mxu0 0
        %3749 = vmatmul.mubr.bf16.gmra.mrb[0].mxu0 %v3557
        %v3750 = vpop.f32.mrb[0].mxu0
        %v3751 = vadd.f32 0.0, %v3750
        %v3752 = vpop.f32.mrb[0].mxu0
        %v3753 = vpop.f32.mrb[0].mxu0
        %v3754 = vadd.f32 0.0, %v3753
        %v3755 = vpop.f32.mrb[0].mxu0
        %3756 = vmatprep.mubr.bf16.mxu0 0
        %3757 = vmatmul.mubr.bf16.gmra.mrb[0].mxu0 %v3556
        %v3758 = vpop.f32.mrb[0].mxu0
        %v3759 = vadd.f32 0.0, %v3758
        %v3760 = vpop.f32.mrb[0].mxu0
        %v3761 = vpop.f32.mrb[0].mxu0
        %v3762 = vadd.f32 0.0, %v3761
        %v3763 = vpop.f32.mrb[0].mxu0
        %3764 = vdwg.mxu0
        %v3765 = vadd.f32 %v3486, %v3655
        %v3766 = vadd.f32 %v3487, %v3658
        %v3767 = vadd.f32 %v3488, %v3663
        %v3768 = vadd.f32 %v3489, %v3666
        %v3769 = vadd.f32 %v3490, %v3671
        %v3770 = vadd.f32 %v3491, %v3674
        %v3771 = vadd.f32 %v3492, %v3679
        %v3772 = vadd.f32 %v3493, %v3682
        %v3773 = vadd.f32 %v3494, %v3687
        %v3774 = vadd.f32 %v3495, %v3690
        %v3775 = vadd.f32 %v3496, %v3695
        %v3776 = vadd.f32 %v3497, %v3698
        %v3777 = vadd.f32 %v3498, %v3703
        %v3778 = vadd.f32 %v3499, %v3706
        %v3779 = vadd.f32 %v3500, %v3711
        %v3780 = vadd.f32 %v3501, %v3714
        %v3781 = vadd.f32 %v3502, %v3719
        %v3782 = vadd.f32 %v3503, %v3722
        %v3783 = vadd.f32 %v3504, %v3727
        %v3784 = vadd.f32 %v3505, %v3730
        %v3785 = vadd.f32 %v3506, %v3735
        %v3786 = vadd.f32 %v3507, %v3738
        %v3787 = vadd.f32 %v3508, %v3743
        %v3788 = vadd.f32 %v3509, %v3746
        %v3789 = vadd.f32 %v3510, %v3751
        %v3790 = vadd.f32 %v3511, %v3754
        %v3791 = vadd.f32 %v3512, %v3759
        %v3792 = vadd.f32 %v3513, %v3762
        %s3793 = scalar_lea.vmem [#allocation8], 192
        %v3794 = vld [vmem:[%s3793] sm:$0xf]
        %v3795 = vld [vmem:[%s3793 + $0x4] sm:$0xf]
        %v3796 = vld [vmem:[%s3793 + $0x8] sm:$0xf]
        %v3797 = vld [vmem:[%s3793 + $0xc] sm:$0xf]
        %v3798 = vld [vmem:[%s3793 + $0x10] sm:$0xf]
        %v3799 = vld [vmem:[%s3793 + $0x14] sm:$0xf]
        %v3800 = vld [vmem:[%s3793 + $0x18] sm:$0xf]
        %v3801 = vld [vmem:[%s3793 + $0x1c] sm:$0xf]
        %v3802 = vld [vmem:[%s3793 + $0x20] sm:$0xf]
        %v3803 = vld [vmem:[%s3793 + $0x24] sm:$0xf]
        %v3804 = vld [vmem:[%s3793 + $0x28] sm:$0xf]
        %v3805 = vld [vmem:[%s3793 + $0x2c] sm:$0xf]
        %v3806 = vld [vmem:[%s3793 + $0x30] sm:$0xf]
        %v3807 = vld [vmem:[%s3793 + $0x34] sm:$0xf]
        %v3808 = vld [vmem:[%s3793 + $0x38] sm:$0xf]
        %v3809 = vld [vmem:[%s3793 + $0x3c] sm:$0xf]
        %v3812 = vunpack.c.l.b16 %v2826
        %v3813 = vunpack.c.l.b16 %v2827
        %v3814 = vpack.c.b16 %v3813, %v3812
        %v3832 = vunpack.c.l.b16 %v3794
        %v3833 = vunpack.c.l.b16 %v3795
        %v3834 = vunpack.c.l.b16 %v3796
        %v3835 = vunpack.c.l.b16 %v3797
        %v3836 = vunpack.c.l.b16 %v3798
        %v3837 = vunpack.c.l.b16 %v3799
        %v3838 = vunpack.c.l.b16 %v3800
        %v3839 = vunpack.c.l.b16 %v3801
        %v3840 = vunpack.c.l.b16 %v3802
        %v3841 = vunpack.c.l.b16 %v3803
        %v3842 = vunpack.c.l.b16 %v3804
        %v3843 = vunpack.c.l.b16 %v3805
        %v3844 = vunpack.c.l.b16 %v3806
        %v3845 = vunpack.c.l.b16 %v3807
        %v3846 = vunpack.c.l.b16 %v3808
        %v3847 = vunpack.c.l.b16 %v3809
        %v3848 = vpack.c.b16 %v3833, %v3832
        %v3849 = vpack.c.b16 %v3835, %v3834
        %v3850 = vpack.c.b16 %v3837, %v3836
        %v3851 = vpack.c.b16 %v3839, %v3838
        %v3852 = vpack.c.b16 %v3841, %v3840
        %v3853 = vpack.c.b16 %v3843, %v3842
        %v3854 = vpack.c.b16 %v3845, %v3844
        %v3855 = vpack.c.b16 %v3847, %v3846
        %3864 = vmatprep.subr.bf16.mxu0 0
        %3865 = vmatpush1.bf16.msra.mxu0 %v3848
        %3866 = vmatprep.subr.bf16.mxu0 0
        %3867 = vmatpush1.bf16.msra.mxu0 %v3849
        %3868 = vmatprep.subr.bf16.mxu0 0
        %3869 = vmatpush1.bf16.msra.mxu0 %v3850
        %3870 = vmatprep.subr.bf16.mxu0 0
        %3871 = vmatpush1.bf16.msra.mxu0 %v3851
        %3872 = vmatprep.subr.bf16.mxu0 0
        %3873 = vmatpush1.bf16.msra.mxu0 %v3852
        %3874 = vmatprep.subr.bf16.mxu0 0
        %3875 = vmatpush1.bf16.msra.mxu0 %v3853
        %3876 = vmatprep.subr.bf16.mxu0 0
        %3877 = vmatpush1.bf16.msra.mxu0 %v3854
        %3878 = vmatprep.subr.bf16.mxu0 0
        %3879 = vmatpush1.bf16.msra.mxu0 %v3855
        %3880 = vmatprep.subr.bf16.mxu0 0
        %3881 = vmatpush1.bf16.msra.mxu0 0
        %3882 = vmatprep.subr.bf16.mxu0 0
        %3883 = vmatpush1.bf16.msra.mxu0 0
        %3884 = vmatprep.subr.bf16.mxu0 0
        %3885 = vmatpush1.bf16.msra.mxu0 0
        %3886 = vmatprep.subr.bf16.mxu0 0
        %3887 = vmatpush1.bf16.msra.mxu0 0
        %3888 = vmatprep.subr.bf16.mxu0 0
        %3889 = vmatpush1.bf16.msra.mxu0 0
        %3890 = vmatprep.subr.bf16.mxu0 0
        %3891 = vmatpush1.bf16.msra.mxu0 0
        %3892 = vmatprep.subr.bf16.mxu0 0
        %3893 = vmatpush1.bf16.msra.mxu0 0
        %3894 = vmatprep.subr.bf16.mxu0 0
        %3895 = vmatpush1.bf16.msra.mxu0 0
        %3896 = vmatprep.mubr.bf16.mxu0 0
        %3897 = vmatmul.mubr.bf16.gmra.mrb[0].mxu0 %v2903
        %v3898 = vpop.f32.mrb[0].mxu0
        %v3899 = vadd.f32 0.0, %v3898
        %v3900 = vpop.f32.mrb[0].mxu0
        %v3901 = vpop.f32.mrb[0].mxu0
        %v3902 = vadd.f32 0.0, %v3901
        %v3903 = vpop.f32.mrb[0].mxu0
        %3904 = vmatprep.mubr.bf16.mxu0 0
        %3905 = vmatmul.mubr.bf16.gmra.mrb[0].mxu0 %v2904
        %v3906 = vpop.f32.mrb[0].mxu0
        %v3907 = vadd.f32 0.0, %v3906
        %v3908 = vpop.f32.mrb[0].mxu0
        %v3909 = vpop.f32.mrb[0].mxu0
        %v3910 = vadd.f32 0.0, %v3909
        %v3911 = vpop.f32.mrb[0].mxu0
        %3912 = vmatprep.mubr.bf16.mxu0 0
        %3913 = vmatmul.mubr.bf16.gmra.mrb[0].mxu0 %v2905
        %v3914 = vpop.f32.mrb[0].mxu0
        %v3915 = vadd.f32 0.0, %v3914
        %v3916 = vpop.f32.mrb[0].mxu0
        %v3917 = vpop.f32.mrb[0].mxu0
        %v3918 = vadd.f32 0.0, %v3917
        %v3919 = vpop.f32.mrb[0].mxu0
        %3920 = vmatprep.mubr.bf16.mxu0 0
        %3921 = vmatmul.mubr.bf16.gmra.mrb[0].mxu0 %v2906
        %v3922 = vpop.f32.mrb[0].mxu0
        %v3923 = vadd.f32 0.0, %v3922
        %v3924 = vpop.f32.mrb[0].mxu0
        %v3925 = vpop.f32.mrb[0].mxu0
        %v3926 = vadd.f32 0.0, %v3925
        %v3927 = vpop.f32.mrb[0].mxu0
        %3928 = vmatprep.mubr.bf16.mxu0 0
        %3929 = vmatmul.mubr.bf16.gmra.mrb[0].mxu0 %v2907
        %v3930 = vpop.f32.mrb[0].mxu0
        %v3931 = vadd.f32 0.0, %v3930
        %v3932 = vpop.f32.mrb[0].mxu0
        %v3933 = vpop.f32.mrb[0].mxu0
        %v3934 = vadd.f32 0.0, %v3933
        %v3935 = vpop.f32.mrb[0].mxu0
        %3936 = vmatprep.mubr.bf16.mxu0 0
        %3937 = vmatmul.mubr.bf16.gmra.mrb[0].mxu0 %v2908
        %v3938 = vpop.f32.mrb[0].mxu0
        %v3939 = vadd.f32 0.0, %v3938
        %v3940 = vpop.f32.mrb[0].mxu0
        %v3941 = vpop.f32.mrb[0].mxu0
        %v3942 = vadd.f32 0.0, %v3941
        %v3943 = vpop.f32.mrb[0].mxu0
        %3944 = vmatprep.mubr.bf16.mxu0 0
        %3945 = vmatmul.mubr.bf16.gmra.mrb[0].mxu0 %v2909
        %v3946 = vpop.f32.mrb[0].mxu0
        %v3947 = vadd.f32 0.0, %v3946
        %v3948 = vpop.f32.mrb[0].mxu0
        %v3949 = vpop.f32.mrb[0].mxu0
        %v3950 = vadd.f32 0.0, %v3949
        %v3951 = vpop.f32.mrb[0].mxu0
        %3952 = vmatprep.mubr.bf16.mxu0 0
        %3953 = vmatmul.mubr.bf16.gmra.mrb[0].mxu0 %v2910
        %v3954 = vpop.f32.mrb[0].mxu0
        %v3955 = vadd.f32 0.0, %v3954
        %v3956 = vpop.f32.mrb[0].mxu0
        %v3957 = vpop.f32.mrb[0].mxu0
        %v3958 = vadd.f32 0.0, %v3957
        %v3959 = vpop.f32.mrb[0].mxu0
        %3960 = vmatprep.mubr.bf16.mxu0 0
        %3961 = vmatmul.mubr.bf16.gmra.mrb[0].mxu0 %v2911
        %v3962 = vpop.f32.mrb[0].mxu0
        %v3963 = vadd.f32 0.0, %v3962
        %v3964 = vpop.f32.mrb[0].mxu0
        %v3965 = vpop.f32.mrb[0].mxu0
        %v3966 = vadd.f32 0.0, %v3965
        %v3967 = vpop.f32.mrb[0].mxu0
        %3968 = vmatprep.mubr.bf16.mxu0 0
        %3969 = vmatmul.mubr.bf16.gmra.mrb[0].mxu0 %v2912
        %v3970 = vpop.f32.mrb[0].mxu0
        %v3971 = vadd.f32 0.0, %v3970
        %v3972 = vpop.f32.mrb[0].mxu0
        %v3973 = vpop.f32.mrb[0].mxu0
        %v3974 = vadd.f32 0.0, %v3973
        %v3975 = vpop.f32.mrb[0].mxu0
        %3976 = vmatprep.mubr.bf16.mxu0 0
        %3977 = vmatmul.mubr.bf16.gmra.mrb[0].mxu0 %v2913
        %v3978 = vpop.f32.mrb[0].mxu0
        %v3979 = vadd.f32 0.0, %v3978
        %v3980 = vpop.f32.mrb[0].mxu0
        %v3981 = vpop.f32.mrb[0].mxu0
        %v3982 = vadd.f32 0.0, %v3981
        %v3983 = vpop.f32.mrb[0].mxu0
        %3984 = vmatprep.mubr.bf16.mxu0 0
        %3985 = vmatmul.mubr.bf16.gmra.mrb[0].mxu0 %v2914
        %v3986 = vpop.f32.mrb[0].mxu0
        %v3987 = vadd.f32 0.0, %v3986
        %v3988 = vpop.f32.mrb[0].mxu0
        %v3989 = vpop.f32.mrb[0].mxu0
        %v3990 = vadd.f32 0.0, %v3989
        %v3991 = vpop.f32.mrb[0].mxu0
        %3992 = vmatprep.mubr.bf16.mxu0 0
        %3993 = vmatmul.mubr.bf16.gmra.mrb[0].mxu0 %v2915
        %v3994 = vpop.f32.mrb[0].mxu0
        %v3995 = vadd.f32 0.0, %v3994
        %v3996 = vpop.f32.mrb[0].mxu0
        %v3997 = vpop.f32.mrb[0].mxu0
        %v3998 = vadd.f32 0.0, %v3997
        %v3999 = vpop.f32.mrb[0].mxu0
        %4000 = vmatprep.mubr.bf16.mxu0 0
        %4001 = vmatmul.mubr.bf16.gmra.mrb[0].mxu0 %v3814
        %v4002 = vpop.f32.mrb[0].mxu0
        %v4003 = vadd.f32 0.0, %v4002
        %v4004 = vpop.f32.mrb[0].mxu0
        %v4005 = vpop.f32.mrb[0].mxu0
        %v4006 = vadd.f32 0.0, %v4005
        %v4007 = vpop.f32.mrb[0].mxu0
        %4008 = vdwg.mxu0
        %v4009 = vadd.f32 %v3765, %v3899
        %v4010 = vadd.f32 %v3766, %v3902
        %v4011 = vadd.f32 %v3767, %v3907
        %v4012 = vadd.f32 %v3768, %v3910
        %v4013 = vadd.f32 %v3769, %v3915
        %v4014 = vadd.f32 %v3770, %v3918
        %v4015 = vadd.f32 %v3771, %v3923
        %v4016 = vadd.f32 %v3772, %v3926
        %v4017 = vadd.f32 %v3773, %v3931
        %v4018 = vadd.f32 %v3774, %v3934
        %v4019 = vadd.f32 %v3775, %v3939
        %v4020 = vadd.f32 %v3776, %v3942
        %v4021 = vadd.f32 %v3777, %v3947
        %v4022 = vadd.f32 %v3778, %v3950
        %v4023 = vadd.f32 %v3779, %v3955
        %v4024 = vadd.f32 %v3780, %v3958
        %v4025 = vadd.f32 %v3781, %v3963
        %v4026 = vadd.f32 %v3782, %v3966
        %v4027 = vadd.f32 %v3783, %v3971
        %v4028 = vadd.f32 %v3784, %v3974
        %v4029 = vadd.f32 %v3785, %v3979
        %v4030 = vadd.f32 %v3786, %v3982
        %v4031 = vadd.f32 %v3787, %v3987
        %v4032 = vadd.f32 %v3788, %v3990
        %v4033 = vadd.f32 %v3789, %v3995
        %v4034 = vadd.f32 %v3790, %v3998
        %v4035 = vadd.f32 %v3791, %v4003
        %v4036 = vadd.f32 %v3792, %v4006
        %s4037 = scalar_lea.vmem [#allocation8], 256
        %v4038 = vld [vmem:[%s4037] sm:$0xf]
        %v4039 = vld [vmem:[%s4037 + $0x4] sm:$0xf]
        %v4040 = vld [vmem:[%s4037 + $0x8] sm:$0xf]
        %v4041 = vld [vmem:[%s4037 + $0xc] sm:$0xf]
        %v4042 = vld [vmem:[%s4037 + $0x10] sm:$0xf]
        %v4043 = vld [vmem:[%s4037 + $0x14] sm:$0xf]
        %v4044 = vld [vmem:[%s4037 + $0x18] sm:$0xf]
        %v4045 = vld [vmem:[%s4037 + $0x1c] sm:$0xf]
        %v4046 = vld [vmem:[%s4037 + $0x20] sm:$0xf]
        %v4047 = vld [vmem:[%s4037 + $0x24] sm:$0xf]
        %v4048 = vld [vmem:[%s4037 + $0x28] sm:$0xf]
        %v4049 = vld [vmem:[%s4037 + $0x2c] sm:$0xf]
        %v4050 = vld [vmem:[%s4037 + $0x30] sm:$0xf]
        %v4051 = vld [vmem:[%s4037 + $0x34] sm:$0xf]
        %v4052 = vld [vmem:[%s4037 + $0x38] sm:$0xf]
        %v4053 = vld [vmem:[%s4037 + $0x3c] sm:$0xf]
        %v4055 = vshll.u32 %v3814, 16
        %v4057 = vrot.slane %v4055, 1
        %v4058 = vsel %vm703, %v3278, %v4057
        %v4059 = vshrl.u32 %v3814, 16
        %v4061 = vor.u32 %v4059, %v4057
        %v4080 = vunpack.c.l.b16 %v4038
        %v4081 = vunpack.c.l.b16 %v4039
        %v4082 = vunpack.c.l.b16 %v4040
        %v4083 = vunpack.c.l.b16 %v4041
        %v4084 = vunpack.c.l.b16 %v4042
        %v4085 = vunpack.c.l.b16 %v4043
        %v4086 = vunpack.c.l.b16 %v4044
        %v4087 = vunpack.c.l.b16 %v4045
        %v4088 = vunpack.c.l.b16 %v4046
        %v4089 = vunpack.c.l.b16 %v4047
        %v4090 = vunpack.c.l.b16 %v4048
        %v4091 = vunpack.c.l.b16 %v4049
        %v4092 = vunpack.c.l.b16 %v4050
        %v4093 = vunpack.c.l.b16 %v4051
        %v4094 = vunpack.c.l.b16 %v4052
        %v4095 = vunpack.c.l.b16 %v4053
        %v4096 = vpack.c.b16 %v4081, %v4080
        %v4097 = vpack.c.b16 %v4083, %v4082
        %v4098 = vpack.c.b16 %v4085, %v4084
        %v4099 = vpack.c.b16 %v4087, %v4086
        %v4100 = vpack.c.b16 %v4089, %v4088
        %v4101 = vpack.c.b16 %v4091, %v4090
        %v4102 = vpack.c.b16 %v4093, %v4092
        %v4103 = vpack.c.b16 %v4095, %v4094
        %4112 = vmatprep.subr.bf16.mxu0 0
        %4113 = vmatpush1.bf16.msra.mxu0 %v4096
        %4114 = vmatprep.subr.bf16.mxu0 0
        %4115 = vmatpush1.bf16.msra.mxu0 %v4097
        %4116 = vmatprep.subr.bf16.mxu0 0
        %4117 = vmatpush1.bf16.msra.mxu0 %v4098
        %4118 = vmatprep.subr.bf16.mxu0 0
        %4119 = vmatpush1.bf16.msra.mxu0 %v4099
        %4120 = vmatprep.subr.bf16.mxu0 0
        %4121 = vmatpush1.bf16.msra.mxu0 %v4100
        %4122 = vmatprep.subr.bf16.mxu0 0
        %4123 = vmatpush1.bf16.msra.mxu0 %v4101
        %4124 = vmatprep.subr.bf16.mxu0 0
        %4125 = vmatpush1.bf16.msra.mxu0 %v4102
        %4126 = vmatprep.subr.bf16.mxu0 0
        %4127 = vmatpush1.bf16.msra.mxu0 %v4103
        %4128 = vmatprep.subr.bf16.mxu0 0
        %4129 = vmatpush1.bf16.msra.mxu0 0
        %4130 = vmatprep.subr.bf16.mxu0 0
        %4131 = vmatpush1.bf16.msra.mxu0 0
        %4132 = vmatprep.subr.bf16.mxu0 0
        %4133 = vmatpush1.bf16.msra.mxu0 0
        %4134 = vmatprep.subr.bf16.mxu0 0
        %4135 = vmatpush1.bf16.msra.mxu0 0
        %4136 = vmatprep.subr.bf16.mxu0 0
        %4137 = vmatpush1.bf16.msra.mxu0 0
        %4138 = vmatprep.subr.bf16.mxu0 0
        %4139 = vmatpush1.bf16.msra.mxu0 0
        %4140 = vmatprep.subr.bf16.mxu0 0
        %4141 = vmatpush1.bf16.msra.mxu0 0
        %4142 = vmatprep.subr.bf16.mxu0 0
        %4143 = vmatpush1.bf16.msra.mxu0 0
        %4144 = vmatprep.mubr.bf16.mxu0 0
        %4145 = vmatmul.mubr.bf16.gmra.mrb[0].mxu0 %v3187
        %v4146 = vpop.f32.mrb[0].mxu0
        %v4147 = vadd.f32 0.0, %v4146
        %v4148 = vpop.f32.mrb[0].mxu0
        %v4149 = vpop.f32.mrb[0].mxu0
        %v4150 = vadd.f32 0.0, %v4149
        %v4151 = vpop.f32.mrb[0].mxu0
        %4152 = vmatprep.mubr.bf16.mxu0 0
        %4153 = vmatmul.mubr.bf16.gmra.mrb[0].mxu0 %v3195
        %v4154 = vpop.f32.mrb[0].mxu0
        %v4155 = vadd.f32 0.0, %v4154
        %v4156 = vpop.f32.mrb[0].mxu0
        %v4157 = vpop.f32.mrb[0].mxu0
        %v4158 = vadd.f32 0.0, %v4157
        %v4159 = vpop.f32.mrb[0].mxu0
        %4160 = vmatprep.mubr.bf16.mxu0 0
        %4161 = vmatmul.mubr.bf16.gmra.mrb[0].mxu0 %v3203
        %v4162 = vpop.f32.mrb[0].mxu0
        %v4163 = vadd.f32 0.0, %v4162
        %v4164 = vpop.f32.mrb[0].mxu0
        %v4165 = vpop.f32.mrb[0].mxu0
        %v4166 = vadd.f32 0.0, %v4165
        %v4167 = vpop.f32.mrb[0].mxu0
        %4168 = vmatprep.mubr.bf16.mxu0 0
        %4169 = vmatmul.mubr.bf16.gmra.mrb[0].mxu0 %v3211
        %v4170 = vpop.f32.mrb[0].mxu0
        %v4171 = vadd.f32 0.0, %v4170
        %v4172 = vpop.f32.mrb[0].mxu0
        %v4173 = vpop.f32.mrb[0].mxu0
        %v4174 = vadd.f32 0.0, %v4173
        %v4175 = vpop.f32.mrb[0].mxu0
        %4176 = vmatprep.mubr.bf16.mxu0 0
        %4177 = vmatmul.mubr.bf16.gmra.mrb[0].mxu0 %v3219
        %v4178 = vpop.f32.mrb[0].mxu0
        %v4179 = vadd.f32 0.0, %v4178
        %v4180 = vpop.f32.mrb[0].mxu0
        %v4181 = vpop.f32.mrb[0].mxu0
        %v4182 = vadd.f32 0.0, %v4181
        %v4183 = vpop.f32.mrb[0].mxu0
        %4184 = vmatprep.mubr.bf16.mxu0 0
        %4185 = vmatmul.mubr.bf16.gmra.mrb[0].mxu0 %v3227
        %v4186 = vpop.f32.mrb[0].mxu0
        %v4187 = vadd.f32 0.0, %v4186
        %v4188 = vpop.f32.mrb[0].mxu0
        %v4189 = vpop.f32.mrb[0].mxu0
        %v4190 = vadd.f32 0.0, %v4189
        %v4191 = vpop.f32.mrb[0].mxu0
        %4192 = vmatprep.mubr.bf16.mxu0 0
        %4193 = vmatmul.mubr.bf16.gmra.mrb[0].mxu0 %v3235
        %v4194 = vpop.f32.mrb[0].mxu0
        %v4195 = vadd.f32 0.0, %v4194
        %v4196 = vpop.f32.mrb[0].mxu0
        %v4197 = vpop.f32.mrb[0].mxu0
        %v4198 = vadd.f32 0.0, %v4197
        %v4199 = vpop.f32.mrb[0].mxu0
        %4200 = vmatprep.mubr.bf16.mxu0 0
        %4201 = vmatmul.mubr.bf16.gmra.mrb[0].mxu0 %v3243
        %v4202 = vpop.f32.mrb[0].mxu0
        %v4203 = vadd.f32 0.0, %v4202
        %v4204 = vpop.f32.mrb[0].mxu0
        %v4205 = vpop.f32.mrb[0].mxu0
        %v4206 = vadd.f32 0.0, %v4205
        %v4207 = vpop.f32.mrb[0].mxu0
        %4208 = vmatprep.mubr.bf16.mxu0 0
        %4209 = vmatmul.mubr.bf16.gmra.mrb[0].mxu0 %v3251
        %v4210 = vpop.f32.mrb[0].mxu0
        %v4211 = vadd.f32 0.0, %v4210
        %v4212 = vpop.f32.mrb[0].mxu0
        %v4213 = vpop.f32.mrb[0].mxu0
        %v4214 = vadd.f32 0.0, %v4213
        %v4215 = vpop.f32.mrb[0].mxu0
        %4216 = vmatprep.mubr.bf16.mxu0 0
        %4217 = vmatmul.mubr.bf16.gmra.mrb[0].mxu0 %v3259
        %v4218 = vpop.f32.mrb[0].mxu0
        %v4219 = vadd.f32 0.0, %v4218
        %v4220 = vpop.f32.mrb[0].mxu0
        %v4221 = vpop.f32.mrb[0].mxu0
        %v4222 = vadd.f32 0.0, %v4221
        %v4223 = vpop.f32.mrb[0].mxu0
        %4224 = vmatprep.mubr.bf16.mxu0 0
        %4225 = vmatmul.mubr.bf16.gmra.mrb[0].mxu0 %v3267
        %v4226 = vpop.f32.mrb[0].mxu0
        %v4227 = vadd.f32 0.0, %v4226
        %v4228 = vpop.f32.mrb[0].mxu0
        %v4229 = vpop.f32.mrb[0].mxu0
        %v4230 = vadd.f32 0.0, %v4229
        %v4231 = vpop.f32.mrb[0].mxu0
        %4232 = vmatprep.mubr.bf16.mxu0 0
        %4233 = vmatmul.mubr.bf16.gmra.mrb[0].mxu0 %v3275
        %v4234 = vpop.f32.mrb[0].mxu0
        %v4235 = vadd.f32 0.0, %v4234
        %v4236 = vpop.f32.mrb[0].mxu0
        %v4237 = vpop.f32.mrb[0].mxu0
        %v4238 = vadd.f32 0.0, %v4237
        %v4239 = vpop.f32.mrb[0].mxu0
        %4240 = vmatprep.mubr.bf16.mxu0 0
        %4241 = vmatmul.mubr.bf16.gmra.mrb[0].mxu0 %v4058
        %v4242 = vpop.f32.mrb[0].mxu0
        %v4243 = vadd.f32 0.0, %v4242
        %v4244 = vpop.f32.mrb[0].mxu0
        %v4245 = vpop.f32.mrb[0].mxu0
        %v4246 = vadd.f32 0.0, %v4245
        %v4247 = vpop.f32.mrb[0].mxu0
        %4248 = vmatprep.mubr.bf16.mxu0 0
        %4249 = vmatmul.mubr.bf16.gmra.mrb[0].mxu0 %v4061
        %v4250 = vpop.f32.mrb[0].mxu0
        %v4251 = vadd.f32 0.0, %v4250
        %v4252 = vpop.f32.mrb[0].mxu0
        %v4253 = vpop.f32.mrb[0].mxu0
        %v4254 = vadd.f32 0.0, %v4253
        %v4255 = vpop.f32.mrb[0].mxu0
        %4256 = vdwg.mxu0
        %v4257 = vadd.f32 %v4009, %v4147
        %v4258 = vadd.f32 %v4010, %v4150
        %v4259 = vadd.f32 %v4011, %v4155
        %v4260 = vadd.f32 %v4012, %v4158
        %v4261 = vadd.f32 %v4013, %v4163
        %v4262 = vadd.f32 %v4014, %v4166
        %v4263 = vadd.f32 %v4015, %v4171
        %v4264 = vadd.f32 %v4016, %v4174
        %v4265 = vadd.f32 %v4017, %v4179
        %v4266 = vadd.f32 %v4018, %v4182
        %v4267 = vadd.f32 %v4019, %v4187
        %v4268 = vadd.f32 %v4020, %v4190
        %v4269 = vadd.f32 %v4021, %v4195
        %v4270 = vadd.f32 %v4022, %v4198
        %v4271 = vadd.f32 %v4023, %v4203
        %v4272 = vadd.f32 %v4024, %v4206
        %v4273 = vadd.f32 %v4025, %v4211
        %v4274 = vadd.f32 %v4026, %v4214
        %v4275 = vadd.f32 %v4027, %v4219
        %v4276 = vadd.f32 %v4028, %v4222
        %v4277 = vadd.f32 %v4029, %v4227
        %v4278 = vadd.f32 %v4030, %v4230
        %v4279 = vadd.f32 %v4031, %v4235
        %v4280 = vadd.f32 %v4032, %v4238
        %v4281 = vadd.f32 %v4033, %v4243
        %v4282 = vadd.f32 %v4034, %v4246
        %v4283 = vadd.f32 %v4035, %v4251
        %v4284 = vadd.f32 %v4036, %v4254
        %s4285 = scalar_lea.vmem [#allocation8], 320
        %v4286 = vld [vmem:[%s4285] sm:$0xf]
        %v4287 = vld [vmem:[%s4285 + $0x4] sm:$0xf]
        %v4288 = vld [vmem:[%s4285 + $0x8] sm:$0xf]
        %v4289 = vld [vmem:[%s4285 + $0xc] sm:$0xf]
        %v4290 = vld [vmem:[%s4285 + $0x10] sm:$0xf]
        %v4291 = vld [vmem:[%s4285 + $0x14] sm:$0xf]
        %v4292 = vld [vmem:[%s4285 + $0x18] sm:$0xf]
        %v4293 = vld [vmem:[%s4285 + $0x1c] sm:$0xf]
        %v4294 = vld [vmem:[%s4285 + $0x20] sm:$0xf]
        %v4295 = vld [vmem:[%s4285 + $0x24] sm:$0xf]
        %v4296 = vld [vmem:[%s4285 + $0x28] sm:$0xf]
        %v4297 = vld [vmem:[%s4285 + $0x2c] sm:$0xf]
        %v4298 = vld [vmem:[%s4285 + $0x30] sm:$0xf]
        %v4299 = vld [vmem:[%s4285 + $0x34] sm:$0xf]
        %v4300 = vld [vmem:[%s4285 + $0x38] sm:$0xf]
        %v4301 = vld [vmem:[%s4285 + $0x3c] sm:$0xf]
        %v4302 = vrot.slane %v3814, 1
        %v4303 = vsel %vm1067, %v3556, %v4302
        %v4322 = vunpack.c.l.b16 %v4286
        %v4323 = vunpack.c.l.b16 %v4287
        %v4324 = vunpack.c.l.b16 %v4288
        %v4325 = vunpack.c.l.b16 %v4289
        %v4326 = vunpack.c.l.b16 %v4290
        %v4327 = vunpack.c.l.b16 %v4291
        %v4328 = vunpack.c.l.b16 %v4292
        %v4329 = vunpack.c.l.b16 %v4293
        %v4330 = vunpack.c.l.b16 %v4294
        %v4331 = vunpack.c.l.b16 %v4295
        %v4332 = vunpack.c.l.b16 %v4296
        %v4333 = vunpack.c.l.b16 %v4297
        %v4334 = vunpack.c.l.b16 %v4298
        %v4335 = vunpack.c.l.b16 %v4299
        %v4336 = vunpack.c.l.b16 %v4300
        %v4337 = vunpack.c.l.b16 %v4301
        %v4338 = vpack.c.b16 %v4323, %v4322
        %v4339 = vpack.c.b16 %v4325, %v4324
        %v4340 = vpack.c.b16 %v4327, %v4326
        %v4341 = vpack.c.b16 %v4329, %v4328
        %v4342 = vpack.c.b16 %v4331, %v4330
        %v4343 = vpack.c.b16 %v4333, %v4332
        %v4344 = vpack.c.b16 %v4335, %v4334
        %v4345 = vpack.c.b16 %v4337, %v4336
        %4354 = vmatprep.subr.bf16.mxu0 0
        %4355 = vmatpush1.bf16.msra.mxu0 %v4338
        %4356 = vmatprep.subr.bf16.mxu0 0
        %4357 = vmatpush1.bf16.msra.mxu0 %v4339
        %4358 = vmatprep.subr.bf16.mxu0 0
        %4359 = vmatpush1.bf16.msra.mxu0 %v4340
        %4360 = vmatprep.subr.bf16.mxu0 0
        %4361 = vmatpush1.bf16.msra.mxu0 %v4341
        %4362 = vmatprep.subr.bf16.mxu0 0
        %4363 = vmatpush1.bf16.msra.mxu0 %v4342
        %4364 = vmatprep.subr.bf16.mxu0 0
        %4365 = vmatpush1.bf16.msra.mxu0 %v4343
        %4366 = vmatprep.subr.bf16.mxu0 0
        %4367 = vmatpush1.bf16.msra.mxu0 %v4344
        %4368 = vmatprep.subr.bf16.mxu0 0
        %4369 = vmatpush1.bf16.msra.mxu0 %v4345
        %4370 = vmatprep.subr.bf16.mxu0 0
        %4371 = vmatpush1.bf16.msra.mxu0 0
        %4372 = vmatprep.subr.bf16.mxu0 0
        %4373 = vmatpush1.bf16.msra.mxu0 0
        %4374 = vmatprep.subr.bf16.mxu0 0
        %4375 = vmatpush1.bf16.msra.mxu0 0
        %4376 = vmatprep.subr.bf16.mxu0 0
        %4377 = vmatpush1.bf16.msra.mxu0 0
        %4378 = vmatprep.subr.bf16.mxu0 0
        %4379 = vmatpush1.bf16.msra.mxu0 0
        %4380 = vmatprep.subr.bf16.mxu0 0
        %4381 = vmatpush1.bf16.msra.mxu0 0
        %4382 = vmatprep.subr.bf16.mxu0 0
        %4383 = vmatpush1.bf16.msra.mxu0 0
        %4384 = vmatprep.subr.bf16.mxu0 0
        %4385 = vmatpush1.bf16.msra.mxu0 0
        %4386 = vmatprep.mubr.bf16.mxu0 0
        %4387 = vmatmul.mubr.bf16.gmra.mrb[0].mxu0 %v3535
        %v4388 = vpop.f32.mrb[0].mxu0
        %v4389 = vadd.f32 0.0, %v4388
        %v4390 = vpop.f32.mrb[0].mxu0
        %v4391 = vpop.f32.mrb[0].mxu0
        %v4392 = vadd.f32 0.0, %v4391
        %v4393 = vpop.f32.mrb[0].mxu0
        %4394 = vmatprep.mubr.bf16.mxu0 0
        %4395 = vmatmul.mubr.bf16.gmra.mrb[0].mxu0 %v3537
        %v4396 = vpop.f32.mrb[0].mxu0
        %v4397 = vadd.f32 0.0, %v4396
        %v4398 = vpop.f32.mrb[0].mxu0
        %v4399 = vpop.f32.mrb[0].mxu0
        %v4400 = vadd.f32 0.0, %v4399
        %v4401 = vpop.f32.mrb[0].mxu0
        %4402 = vmatprep.mubr.bf16.mxu0 0
        %4403 = vmatmul.mubr.bf16.gmra.mrb[0].mxu0 %v3539
        %v4404 = vpop.f32.mrb[0].mxu0
        %v4405 = vadd.f32 0.0, %v4404
        %v4406 = vpop.f32.mrb[0].mxu0
        %v4407 = vpop.f32.mrb[0].mxu0
        %v4408 = vadd.f32 0.0, %v4407
        %v4409 = vpop.f32.mrb[0].mxu0
        %4410 = vmatprep.mubr.bf16.mxu0 0
        %4411 = vmatmul.mubr.bf16.gmra.mrb[0].mxu0 %v3541
        %v4412 = vpop.f32.mrb[0].mxu0
        %v4413 = vadd.f32 0.0, %v4412
        %v4414 = vpop.f32.mrb[0].mxu0
        %v4415 = vpop.f32.mrb[0].mxu0
        %v4416 = vadd.f32 0.0, %v4415
        %v4417 = vpop.f32.mrb[0].mxu0
        %4418 = vmatprep.mubr.bf16.mxu0 0
        %4419 = vmatmul.mubr.bf16.gmra.mrb[0].mxu0 %v3543
        %v4420 = vpop.f32.mrb[0].mxu0
        %v4421 = vadd.f32 0.0, %v4420
        %v4422 = vpop.f32.mrb[0].mxu0
        %v4423 = vpop.f32.mrb[0].mxu0
        %v4424 = vadd.f32 0.0, %v4423
        %v4425 = vpop.f32.mrb[0].mxu0
        %4426 = vmatprep.mubr.bf16.mxu0 0
        %4427 = vmatmul.mubr.bf16.gmra.mrb[0].mxu0 %v3545
        %v4428 = vpop.f32.mrb[0].mxu0
        %v4429 = vadd.f32 0.0, %v4428
        %v4430 = vpop.f32.mrb[0].mxu0
        %v4431 = vpop.f32.mrb[0].mxu0
        %v4432 = vadd.f32 0.0, %v4431
        %v4433 = vpop.f32.mrb[0].mxu0
        %4434 = vmatprep.mubr.bf16.mxu0 0
        %4435 = vmatmul.mubr.bf16.gmra.mrb[0].mxu0 %v3547
        %v4436 = vpop.f32.mrb[0].mxu0
        %v4437 = vadd.f32 0.0, %v4436
        %v4438 = vpop.f32.mrb[0].mxu0
        %v4439 = vpop.f32.mrb[0].mxu0
        %v4440 = vadd.f32 0.0, %v4439
        %v4441 = vpop.f32.mrb[0].mxu0
        %4442 = vmatprep.mubr.bf16.mxu0 0
        %4443 = vmatmul.mubr.bf16.gmra.mrb[0].mxu0 %v3549
        %v4444 = vpop.f32.mrb[0].mxu0
        %v4445 = vadd.f32 0.0, %v4444
        %v4446 = vpop.f32.mrb[0].mxu0
        %v4447 = vpop.f32.mrb[0].mxu0
        %v4448 = vadd.f32 0.0, %v4447
        %v4449 = vpop.f32.mrb[0].mxu0
        %4450 = vmatprep.mubr.bf16.mxu0 0
        %4451 = vmatmul.mubr.bf16.gmra.mrb[0].mxu0 %v3551
        %v4452 = vpop.f32.mrb[0].mxu0
        %v4453 = vadd.f32 0.0, %v4452
        %v4454 = vpop.f32.mrb[0].mxu0
        %v4455 = vpop.f32.mrb[0].mxu0
        %v4456 = vadd.f32 0.0, %v4455
        %v4457 = vpop.f32.mrb[0].mxu0
        %4458 = vmatprep.mubr.bf16.mxu0 0
        %4459 = vmatmul.mubr.bf16.gmra.mrb[0].mxu0 %v3553
        %v4460 = vpop.f32.mrb[0].mxu0
        %v4461 = vadd.f32 0.0, %v4460
        %v4462 = vpop.f32.mrb[0].mxu0
        %v4463 = vpop.f32.mrb[0].mxu0
        %v4464 = vadd.f32 0.0, %v4463
        %v4465 = vpop.f32.mrb[0].mxu0
        %4466 = vmatprep.mubr.bf16.mxu0 0
        %4467 = vmatmul.mubr.bf16.gmra.mrb[0].mxu0 %v3555
        %v4468 = vpop.f32.mrb[0].mxu0
        %v4469 = vadd.f32 0.0, %v4468
        %v4470 = vpop.f32.mrb[0].mxu0
        %v4471 = vpop.f32.mrb[0].mxu0
        %v4472 = vadd.f32 0.0, %v4471
        %v4473 = vpop.f32.mrb[0].mxu0
        %4474 = vmatprep.mubr.bf16.mxu0 0
        %4475 = vmatmul.mubr.bf16.gmra.mrb[0].mxu0 %v3557
        %v4476 = vpop.f32.mrb[0].mxu0
        %v4477 = vadd.f32 0.0, %v4476
        %v4478 = vpop.f32.mrb[0].mxu0
        %v4479 = vpop.f32.mrb[0].mxu0
        %v4480 = vadd.f32 0.0, %v4479
        %v4481 = vpop.f32.mrb[0].mxu0
        %4482 = vmatprep.mubr.bf16.mxu0 0
        %4483 = vmatmul.mubr.bf16.gmra.mrb[0].mxu0 %v4303
        %v4484 = vpop.f32.mrb[0].mxu0
        %v4485 = vadd.f32 0.0, %v4484
        %v4486 = vpop.f32.mrb[0].mxu0
        %v4487 = vpop.f32.mrb[0].mxu0
        %v4488 = vadd.f32 0.0, %v4487
        %v4489 = vpop.f32.mrb[0].mxu0
        %4490 = vmatprep.mubr.bf16.mxu0 0
        %4491 = vmatmul.mubr.bf16.gmra.mrb[0].mxu0 %v4302
        %v4492 = vpop.f32.mrb[0].mxu0
        %v4493 = vadd.f32 0.0, %v4492
        %v4494 = vpop.f32.mrb[0].mxu0
        %v4495 = vpop.f32.mrb[0].mxu0
        %v4496 = vadd.f32 0.0, %v4495
        %v4497 = vpop.f32.mrb[0].mxu0
        %4498 = vdwg.mxu0
        %v4499 = vadd.f32 %v4257, %v4389
        %v4500 = vadd.f32 %v4258, %v4392
        %v4501 = vadd.f32 %v4259, %v4397
        %v4502 = vadd.f32 %v4260, %v4400
        %v4503 = vadd.f32 %v4261, %v4405
        %v4504 = vadd.f32 %v4262, %v4408
        %v4505 = vadd.f32 %v4263, %v4413
        %v4506 = vadd.f32 %v4264, %v4416
        %v4507 = vadd.f32 %v4265, %v4421
        %v4508 = vadd.f32 %v4266, %v4424
        %v4509 = vadd.f32 %v4267, %v4429
        %v4510 = vadd.f32 %v4268, %v4432
        %v4511 = vadd.f32 %v4269, %v4437
        %v4512 = vadd.f32 %v4270, %v4440
        %v4513 = vadd.f32 %v4271, %v4445
        %v4514 = vadd.f32 %v4272, %v4448
        %v4515 = vadd.f32 %v4273, %v4453
        %v4516 = vadd.f32 %v4274, %v4456
        %v4517 = vadd.f32 %v4275, %v4461
        %v4518 = vadd.f32 %v4276, %v4464
        %v4519 = vadd.f32 %v4277, %v4469
        %v4520 = vadd.f32 %v4278, %v4472
        %v4521 = vadd.f32 %v4279, %v4477
        %v4522 = vadd.f32 %v4280, %v4480
        %v4523 = vadd.f32 %v4281, %v4485
        %v4524 = vadd.f32 %v4282, %v4488
        %v4525 = vadd.f32 %v4283, %v4493
        %v4526 = vadd.f32 %v4284, %v4496
        %s4527 = scalar_lea.vmem [#allocation8], 384
        %v4528 = vld [vmem:[%s4527] sm:$0xf]
        %v4529 = vld [vmem:[%s4527 + $0x4] sm:$0xf]
        %v4530 = vld [vmem:[%s4527 + $0x8] sm:$0xf]
        %v4531 = vld [vmem:[%s4527 + $0xc] sm:$0xf]
        %v4532 = vld [vmem:[%s4527 + $0x10] sm:$0xf]
        %v4533 = vld [vmem:[%s4527 + $0x14] sm:$0xf]
        %v4534 = vld [vmem:[%s4527 + $0x18] sm:$0xf]
        %v4535 = vld [vmem:[%s4527 + $0x1c] sm:$0xf]
        %v4536 = vld [vmem:[%s4527 + $0x20] sm:$0xf]
        %v4537 = vld [vmem:[%s4527 + $0x24] sm:$0xf]
        %v4538 = vld [vmem:[%s4527 + $0x28] sm:$0xf]
        %v4539 = vld [vmem:[%s4527 + $0x2c] sm:$0xf]
        %v4540 = vld [vmem:[%s4527 + $0x30] sm:$0xf]
        %v4541 = vld [vmem:[%s4527 + $0x34] sm:$0xf]
        %v4542 = vld [vmem:[%s4527 + $0x38] sm:$0xf]
        %v4543 = vld [vmem:[%s4527 + $0x3c] sm:$0xf]
        %v4546 = vunpack.c.l.b16 %v2828
        %v4547 = vunpack.c.l.b16 %v2829
        %v4548 = vpack.c.b16 %v4547, %v4546
        %v4566 = vunpack.c.l.b16 %v4528
        %v4567 = vunpack.c.l.b16 %v4529
        %v4568 = vunpack.c.l.b16 %v4530
        %v4569 = vunpack.c.l.b16 %v4531
        %v4570 = vunpack.c.l.b16 %v4532
        %v4571 = vunpack.c.l.b16 %v4533
        %v4572 = vunpack.c.l.b16 %v4534
        %v4573 = vunpack.c.l.b16 %v4535
        %v4574 = vunpack.c.l.b16 %v4536
        %v4575 = vunpack.c.l.b16 %v4537
        %v4576 = vunpack.c.l.b16 %v4538
        %v4577 = vunpack.c.l.b16 %v4539
        %v4578 = vunpack.c.l.b16 %v4540
        %v4579 = vunpack.c.l.b16 %v4541
        %v4580 = vunpack.c.l.b16 %v4542
        %v4581 = vunpack.c.l.b16 %v4543
        %v4582 = vpack.c.b16 %v4567, %v4566
        %v4583 = vpack.c.b16 %v4569, %v4568
        %v4584 = vpack.c.b16 %v4571, %v4570
        %v4585 = vpack.c.b16 %v4573, %v4572
        %v4586 = vpack.c.b16 %v4575, %v4574
        %v4587 = vpack.c.b16 %v4577, %v4576
        %v4588 = vpack.c.b16 %v4579, %v4578
        %v4589 = vpack.c.b16 %v4581, %v4580
        %4598 = vmatprep.subr.bf16.mxu0 0
        %4599 = vmatpush1.bf16.msra.mxu0 %v4582
        %4600 = vmatprep.subr.bf16.mxu0 0
        %4601 = vmatpush1.bf16.msra.mxu0 %v4583
        %4602 = vmatprep.subr.bf16.mxu0 0
        %4603 = vmatpush1.bf16.msra.mxu0 %v4584
        %4604 = vmatprep.subr.bf16.mxu0 0
        %4605 = vmatpush1.bf16.msra.mxu0 %v4585
        %4606 = vmatprep.subr.bf16.mxu0 0
        %4607 = vmatpush1.bf16.msra.mxu0 %v4586
        %4608 = vmatprep.subr.bf16.mxu0 0
        %4609 = vmatpush1.bf16.msra.mxu0 %v4587
        %4610 = vmatprep.subr.bf16.mxu0 0
        %4611 = vmatpush1.bf16.msra.mxu0 %v4588
        %4612 = vmatprep.subr.bf16.mxu0 0
        %4613 = vmatpush1.bf16.msra.mxu0 %v4589
        %4614 = vmatprep.subr.bf16.mxu0 0
        %4615 = vmatpush1.bf16.msra.mxu0 0
        %4616 = vmatprep.subr.bf16.mxu0 0
        %4617 = vmatpush1.bf16.msra.mxu0 0
        %4618 = vmatprep.subr.bf16.mxu0 0
        %4619 = vmatpush1.bf16.msra.mxu0 0
        %4620 = vmatprep.subr.bf16.mxu0 0
        %4621 = vmatpush1.bf16.msra.mxu0 0
        %4622 = vmatprep.subr.bf16.mxu0 0
        %4623 = vmatpush1.bf16.msra.mxu0 0
        %4624 = vmatprep.subr.bf16.mxu0 0
        %4625 = vmatpush1.bf16.msra.mxu0 0
        %4626 = vmatprep.subr.bf16.mxu0 0
        %4627 = vmatpush1.bf16.msra.mxu0 0
        %4628 = vmatprep.subr.bf16.mxu0 0
        %4629 = vmatpush1.bf16.msra.mxu0 0
        %4630 = vmatprep.mubr.bf16.mxu0 0
        %4631 = vmatmul.mubr.bf16.gmra.mrb[0].mxu0 %v2904
        %v4632 = vpop.f32.mrb[0].mxu0
        %v4633 = vadd.f32 0.0, %v4632
        %v4634 = vpop.f32.mrb[0].mxu0
        %v4635 = vpop.f32.mrb[0].mxu0
        %v4636 = vadd.f32 0.0, %v4635
        %v4637 = vpop.f32.mrb[0].mxu0
        %4638 = vmatprep.mubr.bf16.mxu0 0
        %4639 = vmatmul.mubr.bf16.gmra.mrb[0].mxu0 %v2905
        %v4640 = vpop.f32.mrb[0].mxu0
        %v4641 = vadd.f32 0.0, %v4640
        %v4642 = vpop.f32.mrb[0].mxu0
        %v4643 = vpop.f32.mrb[0].mxu0
        %v4644 = vadd.f32 0.0, %v4643
        %v4645 = vpop.f32.mrb[0].mxu0
        %4646 = vmatprep.mubr.bf16.mxu0 0
        %4647 = vmatmul.mubr.bf16.gmra.mrb[0].mxu0 %v2906
        %v4648 = vpop.f32.mrb[0].mxu0
        %v4649 = vadd.f32 0.0, %v4648
        %v4650 = vpop.f32.mrb[0].mxu0
        %v4651 = vpop.f32.mrb[0].mxu0
        %v4652 = vadd.f32 0.0, %v4651
        %v4653 = vpop.f32.mrb[0].mxu0
        %4654 = vmatprep.mubr.bf16.mxu0 0
        %4655 = vmatmul.mubr.bf16.gmra.mrb[0].mxu0 %v2907
        %v4656 = vpop.f32.mrb[0].mxu0
        %v4657 = vadd.f32 0.0, %v4656
        %v4658 = vpop.f32.mrb[0].mxu0
        %v4659 = vpop.f32.mrb[0].mxu0
        %v4660 = vadd.f32 0.0, %v4659
        %v4661 = vpop.f32.mrb[0].mxu0
        %4662 = vmatprep.mubr.bf16.mxu0 0
        %4663 = vmatmul.mubr.bf16.gmra.mrb[0].mxu0 %v2908
        %v4664 = vpop.f32.mrb[0].mxu0
        %v4665 = vadd.f32 0.0, %v4664
        %v4666 = vpop.f32.mrb[0].mxu0
        %v4667 = vpop.f32.mrb[0].mxu0
        %v4668 = vadd.f32 0.0, %v4667
        %v4669 = vpop.f32.mrb[0].mxu0
        %4670 = vmatprep.mubr.bf16.mxu0 0
        %4671 = vmatmul.mubr.bf16.gmra.mrb[0].mxu0 %v2909
        %v4672 = vpop.f32.mrb[0].mxu0
        %v4673 = vadd.f32 0.0, %v4672
        %v4674 = vpop.f32.mrb[0].mxu0
        %v4675 = vpop.f32.mrb[0].mxu0
        %v4676 = vadd.f32 0.0, %v4675
        %v4677 = vpop.f32.mrb[0].mxu0
        %4678 = vmatprep.mubr.bf16.mxu0 0
        %4679 = vmatmul.mubr.bf16.gmra.mrb[0].mxu0 %v2910
        %v4680 = vpop.f32.mrb[0].mxu0
        %v4681 = vadd.f32 0.0, %v4680
        %v4682 = vpop.f32.mrb[0].mxu0
        %v4683 = vpop.f32.mrb[0].mxu0
        %v4684 = vadd.f32 0.0, %v4683
        %v4685 = vpop.f32.mrb[0].mxu0
        %4686 = vmatprep.mubr.bf16.mxu0 0
        %4687 = vmatmul.mubr.bf16.gmra.mrb[0].mxu0 %v2911
        %v4688 = vpop.f32.mrb[0].mxu0
        %v4689 = vadd.f32 0.0, %v4688
        %v4690 = vpop.f32.mrb[0].mxu0
        %v4691 = vpop.f32.mrb[0].mxu0
        %v4692 = vadd.f32 0.0, %v4691
        %v4693 = vpop.f32.mrb[0].mxu0
        %4694 = vmatprep.mubr.bf16.mxu0 0
        %4695 = vmatmul.mubr.bf16.gmra.mrb[0].mxu0 %v2912
        %v4696 = vpop.f32.mrb[0].mxu0
        %v4697 = vadd.f32 0.0, %v4696
        %v4698 = vpop.f32.mrb[0].mxu0
        %v4699 = vpop.f32.mrb[0].mxu0
        %v4700 = vadd.f32 0.0, %v4699
        %v4701 = vpop.f32.mrb[0].mxu0
        %4702 = vmatprep.mubr.bf16.mxu0 0
        %4703 = vmatmul.mubr.bf16.gmra.mrb[0].mxu0 %v2913
        %v4704 = vpop.f32.mrb[0].mxu0
        %v4705 = vadd.f32 0.0, %v4704
        %v4706 = vpop.f32.mrb[0].mxu0
        %v4707 = vpop.f32.mrb[0].mxu0
        %v4708 = vadd.f32 0.0, %v4707
        %v4709 = vpop.f32.mrb[0].mxu0
        %4710 = vmatprep.mubr.bf16.mxu0 0
        %4711 = vmatmul.mubr.bf16.gmra.mrb[0].mxu0 %v2914
        %v4712 = vpop.f32.mrb[0].mxu0
        %v4713 = vadd.f32 0.0, %v4712
        %v4714 = vpop.f32.mrb[0].mxu0
        %v4715 = vpop.f32.mrb[0].mxu0
        %v4716 = vadd.f32 0.0, %v4715
        %v4717 = vpop.f32.mrb[0].mxu0
        %4718 = vmatprep.mubr.bf16.mxu0 0
        %4719 = vmatmul.mubr.bf16.gmra.mrb[0].mxu0 %v2915
        %v4720 = vpop.f32.mrb[0].mxu0
        %v4721 = vadd.f32 0.0, %v4720
        %v4722 = vpop.f32.mrb[0].mxu0
        %v4723 = vpop.f32.mrb[0].mxu0
        %v4724 = vadd.f32 0.0, %v4723
        %v4725 = vpop.f32.mrb[0].mxu0
        %4726 = vmatprep.mubr.bf16.mxu0 0
        %4727 = vmatmul.mubr.bf16.gmra.mrb[0].mxu0 %v3814
        %v4728 = vpop.f32.mrb[0].mxu0
        %v4729 = vadd.f32 0.0, %v4728
        %v4730 = vpop.f32.mrb[0].mxu0
        %v4731 = vpop.f32.mrb[0].mxu0
        %v4732 = vadd.f32 0.0, %v4731
        %v4733 = vpop.f32.mrb[0].mxu0
        %4734 = vmatprep.mubr.bf16.mxu0 0
        %4735 = vmatmul.mubr.bf16.gmra.mrb[0].mxu0 %v4548
        %v4736 = vpop.f32.mrb[0].mxu0
        %v4737 = vadd.f32 0.0, %v4736
        %v4738 = vpop.f32.mrb[0].mxu0
        %v4739 = vpop.f32.mrb[0].mxu0
        %v4740 = vadd.f32 0.0, %v4739
        %v4741 = vpop.f32.mrb[0].mxu0
        %4742 = vdwg.mxu0
        %v4743 = vadd.f32 %v4499, %v4633
        %v4744 = vadd.f32 %v4500, %v4636
        %v4745 = vadd.f32 %v4501, %v4641
        %v4746 = vadd.f32 %v4502, %v4644
        %v4747 = vadd.f32 %v4503, %v4649
        %v4748 = vadd.f32 %v4504, %v4652
        %v4749 = vadd.f32 %v4505, %v4657
        %v4750 = vadd.f32 %v4506, %v4660
        %v4751 = vadd.f32 %v4507, %v4665
        %v4752 = vadd.f32 %v4508, %v4668
        %v4753 = vadd.f32 %v4509, %v4673
        %v4754 = vadd.f32 %v4510, %v4676
        %v4755 = vadd.f32 %v4511, %v4681
        %v4756 = vadd.f32 %v4512, %v4684
        %v4757 = vadd.f32 %v4513, %v4689
        %v4758 = vadd.f32 %v4514, %v4692
        %v4759 = vadd.f32 %v4515, %v4697
        %v4760 = vadd.f32 %v4516, %v4700
        %v4761 = vadd.f32 %v4517, %v4705
        %v4762 = vadd.f32 %v4518, %v4708
        %v4763 = vadd.f32 %v4519, %v4713
        %v4764 = vadd.f32 %v4520, %v4716
        %v4765 = vadd.f32 %v4521, %v4721
        %v4766 = vadd.f32 %v4522, %v4724
        %v4767 = vadd.f32 %v4523, %v4729
        %v4768 = vadd.f32 %v4524, %v4732
        %v4769 = vadd.f32 %v4525, %v4737
        %v4770 = vadd.f32 %v4526, %v4740
        %s4771 = scalar_lea.vmem [#allocation8], 448
        %v4772 = vld [vmem:[%s4771] sm:$0xf]
        %v4773 = vld [vmem:[%s4771 + $0x4] sm:$0xf]
        %v4774 = vld [vmem:[%s4771 + $0x8] sm:$0xf]
        %v4775 = vld [vmem:[%s4771 + $0xc] sm:$0xf]
        %v4776 = vld [vmem:[%s4771 + $0x10] sm:$0xf]
        %v4777 = vld [vmem:[%s4771 + $0x14] sm:$0xf]
        %v4778 = vld [vmem:[%s4771 + $0x18] sm:$0xf]
        %v4779 = vld [vmem:[%s4771 + $0x1c] sm:$0xf]
        %v4780 = vld [vmem:[%s4771 + $0x20] sm:$0xf]
        %v4781 = vld [vmem:[%s4771 + $0x24] sm:$0xf]
        %v4782 = vld [vmem:[%s4771 + $0x28] sm:$0xf]
        %v4783 = vld [vmem:[%s4771 + $0x2c] sm:$0xf]
        %v4784 = vld [vmem:[%s4771 + $0x30] sm:$0xf]
        %v4785 = vld [vmem:[%s4771 + $0x34] sm:$0xf]
        %v4786 = vld [vmem:[%s4771 + $0x38] sm:$0xf]
        %v4787 = vld [vmem:[%s4771 + $0x3c] sm:$0xf]
        %v4789 = vshll.u32 %v4548, 16
        %v4791 = vrot.slane %v4789, 1
        %v4792 = vsel %vm703, %v4061, %v4791
        %v4793 = vshrl.u32 %v4548, 16
        %v4795 = vor.u32 %v4793, %v4791
        %v4814 = vunpack.c.l.b16 %v4772
        %v4815 = vunpack.c.l.b16 %v4773
        %v4816 = vunpack.c.l.b16 %v4774
        %v4817 = vunpack.c.l.b16 %v4775
        %v4818 = vunpack.c.l.b16 %v4776
        %v4819 = vunpack.c.l.b16 %v4777
        %v4820 = vunpack.c.l.b16 %v4778
        %v4821 = vunpack.c.l.b16 %v4779
        %v4822 = vunpack.c.l.b16 %v4780
        %v4823 = vunpack.c.l.b16 %v4781
        %v4824 = vunpack.c.l.b16 %v4782
        %v4825 = vunpack.c.l.b16 %v4783
        %v4826 = vunpack.c.l.b16 %v4784
        %v4827 = vunpack.c.l.b16 %v4785
        %v4828 = vunpack.c.l.b16 %v4786
        %v4829 = vunpack.c.l.b16 %v4787
        %v4830 = vpack.c.b16 %v4815, %v4814
        %v4831 = vpack.c.b16 %v4817, %v4816
        %v4832 = vpack.c.b16 %v4819, %v4818
        %v4833 = vpack.c.b16 %v4821, %v4820
        %v4834 = vpack.c.b16 %v4823, %v4822
        %v4835 = vpack.c.b16 %v4825, %v4824
        %v4836 = vpack.c.b16 %v4827, %v4826
        %v4837 = vpack.c.b16 %v4829, %v4828
        %4846 = vmatprep.subr.bf16.mxu0 0
        %4847 = vmatpush1.bf16.msra.mxu0 %v4830
        %4848 = vmatprep.subr.bf16.mxu0 0
        %4849 = vmatpush1.bf16.msra.mxu0 %v4831
        %4850 = vmatprep.subr.bf16.mxu0 0
        %4851 = vmatpush1.bf16.msra.mxu0 %v4832
        %4852 = vmatprep.subr.bf16.mxu0 0
        %4853 = vmatpush1.bf16.msra.mxu0 %v4833
        %4854 = vmatprep.subr.bf16.mxu0 0
        %4855 = vmatpush1.bf16.msra.mxu0 %v4834
        %4856 = vmatprep.subr.bf16.mxu0 0
        %4857 = vmatpush1.bf16.msra.mxu0 %v4835
        %4858 = vmatprep.subr.bf16.mxu0 0
        %4859 = vmatpush1.bf16.msra.mxu0 %v4836
        %4860 = vmatprep.subr.bf16.mxu0 0
        %4861 = vmatpush1.bf16.msra.mxu0 %v4837
        %4862 = vmatprep.subr.bf16.mxu0 0
        %4863 = vmatpush1.bf16.msra.mxu0 0
        %4864 = vmatprep.subr.bf16.mxu0 0
        %4865 = vmatpush1.bf16.msra.mxu0 0
        %4866 = vmatprep.subr.bf16.mxu0 0
        %4867 = vmatpush1.bf16.msra.mxu0 0
        %4868 = vmatprep.subr.bf16.mxu0 0
        %4869 = vmatpush1.bf16.msra.mxu0 0
        %4870 = vmatprep.subr.bf16.mxu0 0
        %4871 = vmatpush1.bf16.msra.mxu0 0
        %4872 = vmatprep.subr.bf16.mxu0 0
        %4873 = vmatpush1.bf16.msra.mxu0 0
        %4874 = vmatprep.subr.bf16.mxu0 0
        %4875 = vmatpush1.bf16.msra.mxu0 0
        %4876 = vmatprep.subr.bf16.mxu0 0
        %4877 = vmatpush1.bf16.msra.mxu0 0
        %4878 = vmatprep.mubr.bf16.mxu0 0
        %4879 = vmatmul.mubr.bf16.gmra.mrb[0].mxu0 %v3195
        %v4880 = vpop.f32.mrb[0].mxu0
        %v4881 = vadd.f32 0.0, %v4880
        %v4882 = vpop.f32.mrb[0].mxu0
        %v4883 = vpop.f32.mrb[0].mxu0
        %v4884 = vadd.f32 0.0, %v4883
        %v4885 = vpop.f32.mrb[0].mxu0
        %4886 = vmatprep.mubr.bf16.mxu0 0
        %4887 = vmatmul.mubr.bf16.gmra.mrb[0].mxu0 %v3203
        %v4888 = vpop.f32.mrb[0].mxu0
        %v4889 = vadd.f32 0.0, %v4888
        %v4890 = vpop.f32.mrb[0].mxu0
        %v4891 = vpop.f32.mrb[0].mxu0
        %v4892 = vadd.f32 0.0, %v4891
        %v4893 = vpop.f32.mrb[0].mxu0
        %4894 = vmatprep.mubr.bf16.mxu0 0
        %4895 = vmatmul.mubr.bf16.gmra.mrb[0].mxu0 %v3211
        %v4896 = vpop.f32.mrb[0].mxu0
        %v4897 = vadd.f32 0.0, %v4896
        %v4898 = vpop.f32.mrb[0].mxu0
        %v4899 = vpop.f32.mrb[0].mxu0
        %v4900 = vadd.f32 0.0, %v4899
        %v4901 = vpop.f32.mrb[0].mxu0
        %4902 = vmatprep.mubr.bf16.mxu0 0
        %4903 = vmatmul.mubr.bf16.gmra.mrb[0].mxu0 %v3219
        %v4904 = vpop.f32.mrb[0].mxu0
        %v4905 = vadd.f32 0.0, %v4904
        %v4906 = vpop.f32.mrb[0].mxu0
        %v4907 = vpop.f32.mrb[0].mxu0
        %v4908 = vadd.f32 0.0, %v4907
        %v4909 = vpop.f32.mrb[0].mxu0
        %4910 = vmatprep.mubr.bf16.mxu0 0
        %4911 = vmatmul.mubr.bf16.gmra.mrb[0].mxu0 %v3227
        %v4912 = vpop.f32.mrb[0].mxu0
        %v4913 = vadd.f32 0.0, %v4912
        %v4914 = vpop.f32.mrb[0].mxu0
        %v4915 = vpop.f32.mrb[0].mxu0
        %v4916 = vadd.f32 0.0, %v4915
        %v4917 = vpop.f32.mrb[0].mxu0
        %4918 = vmatprep.mubr.bf16.mxu0 0
        %4919 = vmatmul.mubr.bf16.gmra.mrb[0].mxu0 %v3235
        %v4920 = vpop.f32.mrb[0].mxu0
        %v4921 = vadd.f32 0.0, %v4920
        %v4922 = vpop.f32.mrb[0].mxu0
        %v4923 = vpop.f32.mrb[0].mxu0
        %v4924 = vadd.f32 0.0, %v4923
        %v4925 = vpop.f32.mrb[0].mxu0
        %4926 = vmatprep.mubr.bf16.mxu0 0
        %4927 = vmatmul.mubr.bf16.gmra.mrb[0].mxu0 %v3243
        %v4928 = vpop.f32.mrb[0].mxu0
        %v4929 = vadd.f32 0.0, %v4928
        %v4930 = vpop.f32.mrb[0].mxu0
        %v4931 = vpop.f32.mrb[0].mxu0
        %v4932 = vadd.f32 0.0, %v4931
        %v4933 = vpop.f32.mrb[0].mxu0
        %4934 = vmatprep.mubr.bf16.mxu0 0
        %4935 = vmatmul.mubr.bf16.gmra.mrb[0].mxu0 %v3251
        %v4936 = vpop.f32.mrb[0].mxu0
        %v4937 = vadd.f32 0.0, %v4936
        %v4938 = vpop.f32.mrb[0].mxu0
        %v4939 = vpop.f32.mrb[0].mxu0
        %v4940 = vadd.f32 0.0, %v4939
        %v4941 = vpop.f32.mrb[0].mxu0
        %4942 = vmatprep.mubr.bf16.mxu0 0
        %4943 = vmatmul.mubr.bf16.gmra.mrb[0].mxu0 %v3259
        %v4944 = vpop.f32.mrb[0].mxu0
        %v4945 = vadd.f32 0.0, %v4944
        %v4946 = vpop.f32.mrb[0].mxu0
        %v4947 = vpop.f32.mrb[0].mxu0
        %v4948 = vadd.f32 0.0, %v4947
        %v4949 = vpop.f32.mrb[0].mxu0
        %4950 = vmatprep.mubr.bf16.mxu0 0
        %4951 = vmatmul.mubr.bf16.gmra.mrb[0].mxu0 %v3267
        %v4952 = vpop.f32.mrb[0].mxu0
        %v4953 = vadd.f32 0.0, %v4952
        %v4954 = vpop.f32.mrb[0].mxu0
        %v4955 = vpop.f32.mrb[0].mxu0
        %v4956 = vadd.f32 0.0, %v4955
        %v4957 = vpop.f32.mrb[0].mxu0
        %4958 = vmatprep.mubr.bf16.mxu0 0
        %4959 = vmatmul.mubr.bf16.gmra.mrb[0].mxu0 %v3275
        %v4960 = vpop.f32.mrb[0].mxu0
        %v4961 = vadd.f32 0.0, %v4960
        %v4962 = vpop.f32.mrb[0].mxu0
        %v4963 = vpop.f32.mrb[0].mxu0
        %v4964 = vadd.f32 0.0, %v4963
        %v4965 = vpop.f32.mrb[0].mxu0
        %4966 = vmatprep.mubr.bf16.mxu0 0
        %4967 = vmatmul.mubr.bf16.gmra.mrb[0].mxu0 %v4058
        %v4968 = vpop.f32.mrb[0].mxu0
        %v4969 = vadd.f32 0.0, %v4968
        %v4970 = vpop.f32.mrb[0].mxu0
        %v4971 = vpop.f32.mrb[0].mxu0
        %v4972 = vadd.f32 0.0, %v4971
        %v4973 = vpop.f32.mrb[0].mxu0
        %4974 = vmatprep.mubr.bf16.mxu0 0
        %4975 = vmatmul.mubr.bf16.gmra.mrb[0].mxu0 %v4792
        %v4976 = vpop.f32.mrb[0].mxu0
        %v4977 = vadd.f32 0.0, %v4976
        %v4978 = vpop.f32.mrb[0].mxu0
        %v4979 = vpop.f32.mrb[0].mxu0
        %v4980 = vadd.f32 0.0, %v4979
        %v4981 = vpop.f32.mrb[0].mxu0
        %4982 = vmatprep.mubr.bf16.mxu0 0
        %4983 = vmatmul.mubr.bf16.gmra.mrb[0].mxu0 %v4795
        %v4984 = vpop.f32.mrb[0].mxu0
        %v4985 = vadd.f32 0.0, %v4984
        %v4986 = vpop.f32.mrb[0].mxu0
        %v4987 = vpop.f32.mrb[0].mxu0
        %v4988 = vadd.f32 0.0, %v4987
        %v4989 = vpop.f32.mrb[0].mxu0
        %4990 = vdwg.mxu0
        %v4991 = vadd.f32 %v4743, %v4881
        %v4992 = vadd.f32 %v4744, %v4884
        %v4993 = vadd.f32 %v4745, %v4889
        %v4994 = vadd.f32 %v4746, %v4892
        %v4995 = vadd.f32 %v4747, %v4897
        %v4996 = vadd.f32 %v4748, %v4900
        %v4997 = vadd.f32 %v4749, %v4905
        %v4998 = vadd.f32 %v4750, %v4908
        %v4999 = vadd.f32 %v4751, %v4913
        %v5000 = vadd.f32 %v4752, %v4916
        %v5001 = vadd.f32 %v4753, %v4921
        %v5002 = vadd.f32 %v4754, %v4924
        %v5003 = vadd.f32 %v4755, %v4929
        %v5004 = vadd.f32 %v4756, %v4932
        %v5005 = vadd.f32 %v4757, %v4937
        %v5006 = vadd.f32 %v4758, %v4940
        %v5007 = vadd.f32 %v4759, %v4945
        %v5008 = vadd.f32 %v4760, %v4948
        %v5009 = vadd.f32 %v4761, %v4953
        %v5010 = vadd.f32 %v4762, %v4956
        %v5011 = vadd.f32 %v4763, %v4961
        %v5012 = vadd.f32 %v4764, %v4964
        %v5013 = vadd.f32 %v4765, %v4969
        %v5014 = vadd.f32 %v4766, %v4972
        %v5015 = vadd.f32 %v4767, %v4977
        %v5016 = vadd.f32 %v4768, %v4980
        %v5017 = vadd.f32 %v4769, %v4985
        %v5018 = vadd.f32 %v4770, %v4988
        %s5019 = scalar_lea.vmem [#allocation8], 512
        %v5020 = vld [vmem:[%s5019] sm:$0xf]
        %v5021 = vld [vmem:[%s5019 + $0x4] sm:$0xf]
        %v5022 = vld [vmem:[%s5019 + $0x8] sm:$0xf]
        %v5023 = vld [vmem:[%s5019 + $0xc] sm:$0xf]
        %v5024 = vld [vmem:[%s5019 + $0x10] sm:$0xf]
        %v5025 = vld [vmem:[%s5019 + $0x14] sm:$0xf]
        %v5026 = vld [vmem:[%s5019 + $0x18] sm:$0xf]
        %v5027 = vld [vmem:[%s5019 + $0x1c] sm:$0xf]
        %v5028 = vld [vmem:[%s5019 + $0x20] sm:$0xf]
        %v5029 = vld [vmem:[%s5019 + $0x24] sm:$0xf]
        %v5030 = vld [vmem:[%s5019 + $0x28] sm:$0xf]
        %v5031 = vld [vmem:[%s5019 + $0x2c] sm:$0xf]
        %v5032 = vld [vmem:[%s5019 + $0x30] sm:$0xf]
        %v5033 = vld [vmem:[%s5019 + $0x34] sm:$0xf]
        %v5034 = vld [vmem:[%s5019 + $0x38] sm:$0xf]
        %v5035 = vld [vmem:[%s5019 + $0x3c] sm:$0xf]
        %v5036 = vrot.slane %v4548, 1
        %v5037 = vsel %vm1067, %v4302, %v5036
        %v5056 = vunpack.c.l.b16 %v5020
        %v5057 = vunpack.c.l.b16 %v5021
        %v5058 = vunpack.c.l.b16 %v5022
        %v5059 = vunpack.c.l.b16 %v5023
        %v5060 = vunpack.c.l.b16 %v5024
        %v5061 = vunpack.c.l.b16 %v5025
        %v5062 = vunpack.c.l.b16 %v5026
        %v5063 = vunpack.c.l.b16 %v5027
        %v5064 = vunpack.c.l.b16 %v5028
        %v5065 = vunpack.c.l.b16 %v5029
        %v5066 = vunpack.c.l.b16 %v5030
        %v5067 = vunpack.c.l.b16 %v5031
        %v5068 = vunpack.c.l.b16 %v5032
        %v5069 = vunpack.c.l.b16 %v5033
        %v5070 = vunpack.c.l.b16 %v5034
        %v5071 = vunpack.c.l.b16 %v5035
        %v5072 = vpack.c.b16 %v5057, %v5056
        %v5073 = vpack.c.b16 %v5059, %v5058
        %v5074 = vpack.c.b16 %v5061, %v5060
        %v5075 = vpack.c.b16 %v5063, %v5062
        %v5076 = vpack.c.b16 %v5065, %v5064
        %v5077 = vpack.c.b16 %v5067, %v5066
        %v5078 = vpack.c.b16 %v5069, %v5068
        %v5079 = vpack.c.b16 %v5071, %v5070
        %5088 = vmatprep.subr.bf16.mxu0 0
        %5089 = vmatpush1.bf16.msra.mxu0 %v5072
        %5090 = vmatprep.subr.bf16.mxu0 0
        %5091 = vmatpush1.bf16.msra.mxu0 %v5073
        %5092 = vmatprep.subr.bf16.mxu0 0
        %5093 = vmatpush1.bf16.msra.mxu0 %v5074
        %5094 = vmatprep.subr.bf16.mxu0 0
        %5095 = vmatpush1.bf16.msra.mxu0 %v5075
        %5096 = vmatprep.subr.bf16.mxu0 0
        %5097 = vmatpush1.bf16.msra.mxu0 %v5076
        %5098 = vmatprep.subr.bf16.mxu0 0
        %5099 = vmatpush1.bf16.msra.mxu0 %v5077
        %5100 = vmatprep.subr.bf16.mxu0 0
        %5101 = vmatpush1.bf16.msra.mxu0 %v5078
        %5102 = vmatprep.subr.bf16.mxu0 0
        %5103 = vmatpush1.bf16.msra.mxu0 %v5079
        %5104 = vmatprep.subr.bf16.mxu0 0
        %5105 = vmatpush1.bf16.msra.mxu0 0
        %5106 = vmatprep.subr.bf16.mxu0 0
        %5107 = vmatpush1.bf16.msra.mxu0 0
        %5108 = vmatprep.subr.bf16.mxu0 0
        %5109 = vmatpush1.bf16.msra.mxu0 0
        %5110 = vmatprep.subr.bf16.mxu0 0
        %5111 = vmatpush1.bf16.msra.mxu0 0
        %5112 = vmatprep.subr.bf16.mxu0 0
        %5113 = vmatpush1.bf16.msra.mxu0 0
        %5114 = vmatprep.subr.bf16.mxu0 0
        %5115 = vmatpush1.bf16.msra.mxu0 0
        %5116 = vmatprep.subr.bf16.mxu0 0
        %5117 = vmatpush1.bf16.msra.mxu0 0
        %5118 = vmatprep.subr.bf16.mxu0 0
        %5119 = vmatpush1.bf16.msra.mxu0 0
        %5120 = vmatprep.mubr.bf16.mxu0 0
        %5121 = vmatmul.mubr.bf16.gmra.mrb[0].mxu0 %v3537
        %v5122 = vpop.f32.mrb[0].mxu0
        %v5123 = vadd.f32 0.0, %v5122
        %v5124 = vpop.f32.mrb[0].mxu0
        %v5125 = vpop.f32.mrb[0].mxu0
        %v5126 = vadd.f32 0.0, %v5125
        %v5127 = vpop.f32.mrb[0].mxu0
        %5128 = vmatprep.mubr.bf16.mxu0 0
        %5129 = vmatmul.mubr.bf16.gmra.mrb[0].mxu0 %v3539
        %v5130 = vpop.f32.mrb[0].mxu0
        %v5131 = vadd.f32 0.0, %v5130
        %v5132 = vpop.f32.mrb[0].mxu0
        %v5133 = vpop.f32.mrb[0].mxu0
        %v5134 = vadd.f32 0.0, %v5133
        %v5135 = vpop.f32.mrb[0].mxu0
        %5136 = vmatprep.mubr.bf16.mxu0 0
        %5137 = vmatmul.mubr.bf16.gmra.mrb[0].mxu0 %v3541
        %v5138 = vpop.f32.mrb[0].mxu0
        %v5139 = vadd.f32 0.0, %v5138
        %v5140 = vpop.f32.mrb[0].mxu0
        %v5141 = vpop.f32.mrb[0].mxu0
        %v5142 = vadd.f32 0.0, %v5141
        %v5143 = vpop.f32.mrb[0].mxu0
        %5144 = vmatprep.mubr.bf16.mxu0 0
        %5145 = vmatmul.mubr.bf16.gmra.mrb[0].mxu0 %v3543
        %v5146 = vpop.f32.mrb[0].mxu0
        %v5147 = vadd.f32 0.0, %v5146
        %v5148 = vpop.f32.mrb[0].mxu0
        %v5149 = vpop.f32.mrb[0].mxu0
        %v5150 = vadd.f32 0.0, %v5149
        %v5151 = vpop.f32.mrb[0].mxu0
        %5152 = vmatprep.mubr.bf16.mxu0 0
        %5153 = vmatmul.mubr.bf16.gmra.mrb[0].mxu0 %v3545
        %v5154 = vpop.f32.mrb[0].mxu0
        %v5155 = vadd.f32 0.0, %v5154
        %v5156 = vpop.f32.mrb[0].mxu0
        %v5157 = vpop.f32.mrb[0].mxu0
        %v5158 = vadd.f32 0.0, %v5157
        %v5159 = vpop.f32.mrb[0].mxu0
        %5160 = vmatprep.mubr.bf16.mxu0 0
        %5161 = vmatmul.mubr.bf16.gmra.mrb[0].mxu0 %v3547
        %v5162 = vpop.f32.mrb[0].mxu0
        %v5163 = vadd.f32 0.0, %v5162
        %v5164 = vpop.f32.mrb[0].mxu0
        %v5165 = vpop.f32.mrb[0].mxu0
        %v5166 = vadd.f32 0.0, %v5165
        %v5167 = vpop.f32.mrb[0].mxu0
        %5168 = vmatprep.mubr.bf16.mxu0 0
        %5169 = vmatmul.mubr.bf16.gmra.mrb[0].mxu0 %v3549
        %v5170 = vpop.f32.mrb[0].mxu0
        %v5171 = vadd.f32 0.0, %v5170
        %v5172 = vpop.f32.mrb[0].mxu0
        %v5173 = vpop.f32.mrb[0].mxu0
        %v5174 = vadd.f32 0.0, %v5173
        %v5175 = vpop.f32.mrb[0].mxu0
        %5176 = vmatprep.mubr.bf16.mxu0 0
        %5177 = vmatmul.mubr.bf16.gmra.mrb[0].mxu0 %v3551
        %v5178 = vpop.f32.mrb[0].mxu0
        %v5179 = vadd.f32 0.0, %v5178
        %v5180 = vpop.f32.mrb[0].mxu0
        %v5181 = vpop.f32.mrb[0].mxu0
        %v5182 = vadd.f32 0.0, %v5181
        %v5183 = vpop.f32.mrb[0].mxu0
        %5184 = vmatprep.mubr.bf16.mxu0 0
        %5185 = vmatmul.mubr.bf16.gmra.mrb[0].mxu0 %v3553
        %v5186 = vpop.f32.mrb[0].mxu0
        %v5187 = vadd.f32 0.0, %v5186
        %v5188 = vpop.f32.mrb[0].mxu0
        %v5189 = vpop.f32.mrb[0].mxu0
        %v5190 = vadd.f32 0.0, %v5189
        %v5191 = vpop.f32.mrb[0].mxu0
        %5192 = vmatprep.mubr.bf16.mxu0 0
        %5193 = vmatmul.mubr.bf16.gmra.mrb[0].mxu0 %v3555
        %v5194 = vpop.f32.mrb[0].mxu0
        %v5195 = vadd.f32 0.0, %v5194
        %v5196 = vpop.f32.mrb[0].mxu0
        %v5197 = vpop.f32.mrb[0].mxu0
        %v5198 = vadd.f32 0.0, %v5197
        %v5199 = vpop.f32.mrb[0].mxu0
        %5200 = vmatprep.mubr.bf16.mxu0 0
        %5201 = vmatmul.mubr.bf16.gmra.mrb[0].mxu0 %v3557
        %v5202 = vpop.f32.mrb[0].mxu0
        %v5203 = vadd.f32 0.0, %v5202
        %v5204 = vpop.f32.mrb[0].mxu0
        %v5205 = vpop.f32.mrb[0].mxu0
        %v5206 = vadd.f32 0.0, %v5205
        %v5207 = vpop.f32.mrb[0].mxu0
        %5208 = vmatprep.mubr.bf16.mxu0 0
        %5209 = vmatmul.mubr.bf16.gmra.mrb[0].mxu0 %v4303
        %v5210 = vpop.f32.mrb[0].mxu0
        %v5211 = vadd.f32 0.0, %v5210
        %v5212 = vpop.f32.mrb[0].mxu0
        %v5213 = vpop.f32.mrb[0].mxu0
        %v5214 = vadd.f32 0.0, %v5213
        %v5215 = vpop.f32.mrb[0].mxu0
        %5216 = vmatprep.mubr.bf16.mxu0 0
        %5217 = vmatmul.mubr.bf16.gmra.mrb[0].mxu0 %v5037
        %v5218 = vpop.f32.mrb[0].mxu0
        %v5219 = vadd.f32 0.0, %v5218
        %v5220 = vpop.f32.mrb[0].mxu0
        %v5221 = vpop.f32.mrb[0].mxu0
        %v5222 = vadd.f32 0.0, %v5221
        %v5223 = vpop.f32.mrb[0].mxu0
        %5224 = vmatprep.mubr.bf16.mxu0 0
        %5225 = vmatmul.mubr.bf16.gmra.mrb[0].mxu0 %v5036
        %v5226 = vpop.f32.mrb[0].mxu0
        %v5227 = vadd.f32 0.0, %v5226
        %v5228 = vpop.f32.mrb[0].mxu0
        %v5229 = vpop.f32.mrb[0].mxu0
        %v5230 = vadd.f32 0.0, %v5229
        %v5231 = vpop.f32.mrb[0].mxu0
        %5232 = vdwg.mxu0
        %v5233 = vadd.f32 %v4991, %v5123
        %v5234 = vadd.f32 %v4992, %v5126
        %v5235 = vadd.f32 %v4993, %v5131
        %v5236 = vadd.f32 %v4994, %v5134
        %v5237 = vadd.f32 %v4995, %v5139
        %v5238 = vadd.f32 %v4996, %v5142
        %v5239 = vadd.f32 %v4997, %v5147
        %v5240 = vadd.f32 %v4998, %v5150
        %v5241 = vadd.f32 %v4999, %v5155
        %v5242 = vadd.f32 %v5000, %v5158
        %v5243 = vadd.f32 %v5001, %v5163
        %v5244 = vadd.f32 %v5002, %v5166
        %v5245 = vadd.f32 %v5003, %v5171
        %v5246 = vadd.f32 %v5004, %v5174
        %v5247 = vadd.f32 %v5005, %v5179
        %v5248 = vadd.f32 %v5006, %v5182
        %v5249 = vadd.f32 %v5007, %v5187
        %v5250 = vadd.f32 %v5008, %v5190
        %v5251 = vadd.f32 %v5009, %v5195
        %v5252 = vadd.f32 %v5010, %v5198
        %v5253 = vadd.f32 %v5011, %v5203
        %v5254 = vadd.f32 %v5012, %v5206
        %v5255 = vadd.f32 %v5013, %v5211
        %v5256 = vadd.f32 %v5014, %v5214
        %v5257 = vadd.f32 %v5015, %v5219
        %v5258 = vadd.f32 %v5016, %v5222
        %v5259 = vadd.f32 %v5017, %v5227
        %v5260 = vadd.f32 %v5018, %v5230
        %v5261 = vmax.f32 %v5233, 0.0
        %v5262 = vmax.f32 %v5234, 0.0
        %v5263 = vmax.f32 %v5235, 0.0
        %v5264 = vmax.f32 %v5236, 0.0
        %v5265 = vmax.f32 %v5237, 0.0
        %v5266 = vmax.f32 %v5238, 0.0
        %v5267 = vmax.f32 %v5239, 0.0
        %v5268 = vmax.f32 %v5240, 0.0
        %v5269 = vmax.f32 %v5241, 0.0
        %v5270 = vmax.f32 %v5242, 0.0
        %v5271 = vmax.f32 %v5243, 0.0
        %v5272 = vmax.f32 %v5244, 0.0
        %v5273 = vmax.f32 %v5245, 0.0
        %v5274 = vmax.f32 %v5246, 0.0
        %v5275 = vmax.f32 %v5247, 0.0
        %v5276 = vmax.f32 %v5248, 0.0
        %v5277 = vmax.f32 %v5249, 0.0
        %v5278 = vmax.f32 %v5250, 0.0
        %v5279 = vmax.f32 %v5251, 0.0
        %v5280 = vmax.f32 %v5252, 0.0
        %v5281 = vmax.f32 %v5253, 0.0
        %v5282 = vmax.f32 %v5254, 0.0
        %v5283 = vmax.f32 %v5255, 0.0
        %v5284 = vmax.f32 %v5256, 0.0
        %v5285 = vmax.f32 %v5257, 0.0
        %v5286 = vmax.f32 %v5258, 0.0
        %v5287 = vmax.f32 %v5259, 0.0
        %v5288 = vmax.f32 %v5260, 0.0
        %v5289 = vpack.c.bf16 %v5262, %v5261
        %v5290 = vpack.c.bf16 %v5264, %v5263
        %v5291 = vpack.c.bf16 %v5266, %v5265
        %v5292 = vpack.c.bf16 %v5268, %v5267
        %v5293 = vpack.c.bf16 %v5270, %v5269
        %v5294 = vpack.c.bf16 %v5272, %v5271
        %v5295 = vpack.c.bf16 %v5274, %v5273
        %v5296 = vpack.c.bf16 %v5276, %v5275
        %v5297 = vpack.c.bf16 %v5278, %v5277
        %v5298 = vpack.c.bf16 %v5280, %v5279
        %v5299 = vpack.c.bf16 %v5282, %v5281
        %v5300 = vpack.c.bf16 %v5284, %v5283
        %v5301 = vpack.c.bf16 %v5286, %v5285
        %v5302 = vpack.c.bf16 %v5288, %v5287
        %v5317 = vunpack.c.l.b16 %v5289
        %v5318 = vunpack.c.h.b16 %v5289
        %v5319 = vunpack.c.l.b16 %v5290
        %v5320 = vunpack.c.h.b16 %v5290
        %v5321 = vunpack.c.l.b16 %v5291
        %v5322 = vunpack.c.h.b16 %v5291
        %v5323 = vunpack.c.l.b16 %v5292
        %v5324 = vunpack.c.h.b16 %v5292
        %v5325 = vunpack.c.l.b16 %v5293
        %v5326 = vunpack.c.h.b16 %v5293
        %v5327 = vunpack.c.l.b16 %v5294
        %v5328 = vunpack.c.h.b16 %v5294
        %v5329 = vunpack.c.l.b16 %v5295
        %v5330 = vunpack.c.h.b16 %v5295
        %v5331 = vunpack.c.l.b16 %v5296
        %v5332 = vunpack.c.h.b16 %v5296
        %v5333 = vunpack.c.l.b16 %v5297
        %v5334 = vunpack.c.h.b16 %v5297
        %v5335 = vunpack.c.l.b16 %v5298
        %v5336 = vunpack.c.h.b16 %v5298
        %v5337 = vunpack.c.l.b16 %v5299
        %v5338 = vunpack.c.h.b16 %v5299
        %v5339 = vunpack.c.l.b16 %v5300
        %v5340 = vunpack.c.h.b16 %v5300
        %v5341 = vunpack.c.l.b16 %v5301
        %v5342 = vunpack.c.h.b16 %v5301
        %v5343 = vunpack.c.l.b16 %v5302
        %v5344 = vunpack.c.h.b16 %v5302
        %v5345 = vpack.c.b16 %v5317, %v5317
        %v5346 = vpack.c.b16 %v5318, %v5318
        %v5347 = vpack.c.b16 %v5319, %v5319
        %v5348 = vpack.c.b16 %v5320, %v5320
        %v5349 = vpack.c.b16 %v5321, %v5321
        %v5350 = vpack.c.b16 %v5322, %v5322
        %v5351 = vpack.c.b16 %v5323, %v5323
        %v5352 = vpack.c.b16 %v5324, %v5324
        %v5353 = vpack.c.b16 %v5325, %v5325
        %v5354 = vpack.c.b16 %v5326, %v5326
        %v5355 = vpack.c.b16 %v5327, %v5327
        %v5356 = vpack.c.b16 %v5328, %v5328
        %v5357 = vpack.c.b16 %v5329, %v5329
        %v5358 = vpack.c.b16 %v5330, %v5330
        %v5359 = vpack.c.b16 %v5331, %v5331
        %v5360 = vpack.c.b16 %v5332, %v5332
        %v5361 = vpack.c.b16 %v5333, %v5333
        %v5362 = vpack.c.b16 %v5334, %v5334
        %v5363 = vpack.c.b16 %v5335, %v5335
        %v5364 = vpack.c.b16 %v5336, %v5336
        %v5365 = vpack.c.b16 %v5337, %v5337
        %v5366 = vpack.c.b16 %v5338, %v5338
        %v5367 = vpack.c.b16 %v5339, %v5339
        %v5368 = vpack.c.b16 %v5340, %v5340
        %v5369 = vpack.c.b16 %v5341, %v5341
        %v5370 = vpack.c.b16 %v5342, %v5342
        %v5371 = vpack.c.b16 %v5343, %v5343
        %v5372 = vpack.c.b16 %v5344, %v5344
        %5401 = vst [vmem:[%s323] sm:$0xf] %v5345
        %5402 = vst [vmem:[%s323 + $0x4] sm:$0xf] %v5346
        %5403 = vst [vmem:[%s323 + $0x8] sm:$0xf] %v5347
        %5404 = vst [vmem:[%s323 + $0xc] sm:$0xf] %v5348
        %5405 = vst [vmem:[%s323 + $0x10] sm:$0xf] %v5349
        %5406 = vst [vmem:[%s323 + $0x14] sm:$0xf] %v5350
        %5407 = vst [vmem:[%s323 + $0x18] sm:$0xf] %v5351
        %5408 = vst [vmem:[%s323 + $0x1c] sm:$0xf] %v5352
        %5409 = vst [vmem:[%s323 + $0x20] sm:$0xf] %v5353
        %5410 = vst [vmem:[%s323 + $0x24] sm:$0xf] %v5354
        %5411 = vst [vmem:[%s323 + $0x28] sm:$0xf] %v5355
        %5412 = vst [vmem:[%s323 + $0x2c] sm:$0xf] %v5356
        %5413 = vst [vmem:[%s323 + $0x30] sm:$0xf] %v5357
        %5414 = vst [vmem:[%s323 + $0x34] sm:$0xf] %v5358
        %5415 = vst [vmem:[%s323 + $0x38] sm:$0xf] %v5359
        %5416 = vst [vmem:[%s323 + $0x3c] sm:$0xf] %v5360
        %5417 = vst [vmem:[%s323 + $0x40] sm:$0xf] %v5361
        %5418 = vst [vmem:[%s323 + $0x44] sm:$0xf] %v5362
        %5419 = vst [vmem:[%s323 + $0x48] sm:$0xf] %v5363
        %5420 = vst [vmem:[%s323 + $0x4c] sm:$0xf] %v5364
        %5421 = vst [vmem:[%s323 + $0x50] sm:$0xf] %v5365
        %5422 = vst [vmem:[%s323 + $0x54] sm:$0xf] %v5366
        %5423 = vst [vmem:[%s323 + $0x58] sm:$0xf] %v5367
        %5424 = vst [vmem:[%s323 + $0x5c] sm:$0xf] %v5368
        %5425 = vst [vmem:[%s323 + $0x60] sm:$0xf] %v5369
        %5426 = vst [vmem:[%s323 + $0x64] sm:$0xf] %v5370
        %5427 = vst [vmem:[%s323 + $0x68] sm:$0xf] %v5371
        %5428 = vst [vmem:[%s323 + $0x6c] sm:$0x7] %v5372
        %s5429 = sand.u32 %s149, 1
        %s5430 = scalar_lea.sflag [#allocation4], %s5429
        %s5431 = sand.u32 %s149, 1
        %s5432 = smul.addr %s5431, 112
        %s5433 = scalar_lea.vmem [#allocation11], %s5432
        // Predicated region
        $region61: #{decoder_forward.4} parent=39 // pred_check
          %p5434 = pneg %p159
        $region62: #{decoder_forward.4} parent=39 // pred_check_branch
          %5436 = sbr.rel (%p5434) target = $region64
        $region63: #{decoder_forward.4} parent=39 // pred_region
          %s5438 = ssub.s32 1792, 1792
          %5439 = vsyncadd %s5430, %s5438
          %s5440 = smul.addr %s26, 28
          %s5441 = smul.addr %s5440, 64
          %s5442 = scalar_lea.hbm %s5, %s5441
          %s5443 = sshll.u32 %s5433, 4
          %s5444 = int_to_ptr.vmem [resolvable:$true] %s5443
          %5449 = dma.vmem_to_hbm [thread:$0]  %s5444, 1792, %s5442, %s5430, 64, 64, 4
        $region64: #{decoder_forward.4} parent=39 // pred_fallthru
          _
      $region40: #{decoder_forward.4} parent=5 // pred_fallthru
        _
      %p5450 = scmp.le.s32.totalorder 2, %s21
      // Predicated region
      $region65: #{decoder_forward.4} parent=5 // pred_check
        %p5451 = pneg %p5450
      $region66: #{decoder_forward.4} parent=5 // pred_check_branch
        %5453 = sbr.rel (%p5451) target = $region68
      $region67: #{decoder_forward.4} parent=5 // pred_region
        %s5454 = ssub.s32 %s21, 2
        // Predicated region
        $region69: #{decoder_forward.4} parent=67 // pred_check
          %p5455 = pneg %p165
        $region70: #{decoder_forward.4} parent=67 // pred_check_branch
          %5457 = sbr.rel (%p5455) target = $region72
        $region71: #{decoder_forward.4} parent=67 // pred_region
          %s5458 = sand.u32 %s150, 1
          %s5459 = scalar_lea.sflag [#allocation4], %s5458
          %s5460 = sand.u32 %s150, 1
          %s5461 = smul.addr %s5460, 112
          %s5462 = scalar_lea.vmem [#allocation11], %s5461
          %5463 = dma.done %s5459, 1792
        $region72: #{decoder_forward.4} parent=67 // pred_fallthru
          _
      $region68: #{decoder_forward.4} parent=5 // pred_fallthru
        _
    $region6: #{decoder_forward.4} parent=1 // loop_footer
      %s25 = sadd.s32 1, %s21
    $region7: #{decoder_forward.4} parent=1 // loop_footer_branch
      %20 = sbr.rel target = $region3
    $region8: #{decoder_forward.4} parent=1 // loop_exit
      _
    %5464 = vsyncpa [#allocation3], 1
    %s5465 = scalar_lea.sflag [#allocation3], 1
    %5466 = vsyncpa %s5465, 1
    %5467 = vsyncpa [#allocation6], 1
    %s5468 = scalar_lea.sflag [#allocation6], 1
    %5469 = vsyncpa %s5468, 1
    %5470 = vsyncpa [#allocation9], 1
    %5471 = vsyncpa [#allocation4], 1
    %s5472 = scalar_lea.sflag [#allocation4], 1
    %5473 = vsyncpa %s5472, 1

</llo_original>
